<compile_context>
chip_gen: v6e
topology: v6e:2x2x1
jax: 0.10.0
libtpu: 0.0.40
codegen_flags: <defaults>
</compile_context>

<pallas_src>
import functools

import jax
import jax.numpy as jnp
from jax.experimental import pallas as pl
from jax.experimental.pallas import tpu as pltpu

BN_EPS = 1e-5
COMPUTE_DTYPE = jnp.bfloat16          # MXU operand dtype; accumulation / epilogue stay f32
RP_ALIGN = 16                         # per-image padded-row alignment (bf16 sublane pack)
PW_TILE_TARGET = 1024                 # pointwise row-tile target; sweep 512 (v7x) .. 2048 (v5e/v6e)
VMEM_LIMIT_BYTES = 48 * 1024 * 1024   # > 32 MiB scoped default, < 64 MiB v7x physical VMEM


# ----------------------------------------------------------------------------
# small host-side helpers
# ----------------------------------------------------------------------------
def _round_up(a, m):
    return ((a + m - 1) // m) * m


def _pick_row_tile(total, target):
    """Largest multiple of 16 dividing `total`, <= target, preferring >= 2 grid steps."""
    cap = min(target, total // 2) if total >= 32 else total
    cap = max(16, cap - cap % 16)
    t = cap
    while t > 16 and total % t != 0:
        t -= 16
    return t if total % t == 0 else total


# ----------------------------------------------------------------------------
# Pallas kernels
# ----------------------------------------------------------------------------
def _pw_dual_kernel(x_ref, w_ref, b_ref, oa_ref, ob_ref, *, mid):
    """cv1: single (Cin, 2*mid) 1x1-conv matmul + BN bias + SiLU, split into x1 / x2."""
    y = jnp.dot(x_ref[...], w_ref[...], preferred_element_type=jnp.float32) + b_ref[...]
    y = y * pl.reciprocal(1.0 + jnp.exp(-y), approx=True)          # SiLU (EUP reciprocal)
    oa_ref[...] = y[:, :mid].astype(oa_ref.dtype)
    ob_ref[...] = y[:, mid:].astype(ob_ref.dtype)


def _pw_concat_kernel(*refs, n_parts):
    """cv2: 1x1 conv + BN + SiLU over the implicit concat of n_parts inputs (no HBM concat)."""
    parts = refs[:n_parts]
    w_ref, b_ref, o_ref = refs[n_parts:]
    # TODO(synk): when mid is 128-aligned a single K=(n_parts*mid) dot would fill the MXU better.
    acc = jnp.dot(parts[0][...], w_ref[0], preferred_element_type=jnp.float32)
    for p in range(1, n_parts):
        acc = acc + jnp.dot(parts[p][...], w_ref[p], preferred_element_type=jnp.float32)
    y = acc + b_ref[...]
    y = y * pl.reciprocal(1.0 + jnp.exp(-y), approx=True)
    # Pad rows stay unmasked: from_padded_rows() only reads the interior.
    o_ref[...] = y.astype(o_ref.dtype)


def _conv3x3_kernel(*refs, wp, has_res):
    """3x3 conv + BN + SiLU (+ residual) on one padded image / one cout chunk, no im2col.

    Rows are the flattened zero-padded image ((H+2)*(W+2) real rows, channels on lanes).
    The *input* pad rows are zeroed with the (Rp, 1) interior mask, the dy = +/-1 taps reuse
    two pre-shifted copies of the input, and the dx = +/-1 taps shift the per-column f32 partial
    sums by one row.  Interior output rows are exact; pad rows are "don't care" (every consumer
    either masks its own input or slices the interior away)."""
    if has_res:
        x_ref, r_ref, w_ref, b_ref, m_ref, o_ref = refs
    else:
        x_ref, w_ref, b_ref, m_ref, o_ref = refs
        r_ref = None

    x0 = x_ref[0] * m_ref[...]                          # (Rp, Cin) bf16, pad rows forced to 0
    rp = x0.shape[0]
    xf = x0.astype(jnp.float32)                         # 32-bit sublane rotate path (exact)
    xm = pltpu.roll(xf, shift=wp, axis=0).astype(COMPUTE_DTYPE)        # xm[r] = x0[r - wp]
    xp = pltpu.roll(xf, shift=rp - wp, axis=0).astype(COMPUTE_DTYPE)   # xp[r] = x0[r + wp]

    acc = None
    for dx in (-1, 0, 1):
        kw = dx + 1
        part = jnp.dot(xm, w_ref[kw], preferred_element_type=jnp.float32)
        part = part + jnp.dot(x0, w_ref[3 + kw], preferred_element_type=jnp.float32)
        part = part + jnp.dot(xp, w_ref[6 + kw], preferred_element_type=jnp.float32)
        if dx != 0:
            part = pltpu.roll(part, shift=(-dx) % rp, axis=0)          # align the dx tap rows
        acc = part if acc is None else acc + part

    y = acc + b_ref[...]
    y = y * pl.reciprocal(1.0 + jnp.exp(-y), approx=True)              # SiLU
    if has_res:
        y = y + r_ref[0].astype(jnp.float32)                           # shortcut
    o_ref[0] = y.astype(o_ref.dtype)


# ----------------------------------------------------------------------------
# pallas_call wrappers
# ----------------------------------------------------------------------------
def pw_conv_dual(x2d, w2d, b2, mid, tile_m):
    """x2d: (M, Cin) bf16; w2d: (Cin, 2*mid) bf16; returns (x1, x2) each (M, mid) bf16."""
    M, cin = x2d.shape
    two_mid = w2d.shape[-1]
    kern = functools.partial(_pw_dual_kernel, mid=mid)
    return pl.pallas_call(
        kern,
        out_shape=(jax.ShapeDtypeStruct((M, mid), COMPUTE_DTYPE),
                   jax.ShapeDtypeStruct((M, mid), COMPUTE_DTYPE)),
        grid=(M // tile_m,),
        in_specs=[
            pl.BlockSpec((tile_m, cin), lambda i: (i, 0)),
            pl.BlockSpec((cin, two_mid), lambda i: (0, 0)),
            pl.BlockSpec((1, two_mid), lambda i: (0, 0)),
        ],
        out_specs=(
            pl.BlockSpec((tile_m, mid), lambda i: (i, 0)),
            pl.BlockSpec((tile_m, mid), lambda i: (i, 0)),
        ),
        compiler_params=pltpu.CompilerParams(
            dimension_semantics=("parallel",),
            vmem_limit_bytes=VMEM_LIMIT_BYTES),
    )(x2d, w2d, b2)


def pw_conv_concat(parts, w3, b2, tile_m):
    """parts: list of (M, mid) bf16; w3: (P, mid, Cout) bf16; returns (M, Cout) bf16."""
    P = len(parts)
    M, mid = parts[0].shape
    cout = w3.shape[-1]
    kern = functools.partial(_pw_concat_kernel, n_parts=P)
    in_specs = [pl.BlockSpec((tile_m, mid), lambda i: (i, 0)) for _ in range(P)]
    in_specs += [
        pl.BlockSpec((P, mid, cout), lambda i: (0, 0, 0)),
        pl.BlockSpec((1, cout), lambda i: (0, 0)),
    ]
    return pl.pallas_call(
        kern,
        out_shape=jax.ShapeDtypeStruct((M, cout), COMPUTE_DTYPE),
        grid=(M // tile_m,),
        in_specs=in_specs,
        out_specs=pl.BlockSpec((tile_m, cout), lambda i: (i, 0)),
        compiler_params=pltpu.CompilerParams(
            dimension_semantics=("parallel",),
            vmem_limit_bytes=VMEM_LIMIT_BYTES),
    )(*parts, w3, b2)


def conv3x3(x3d, w_taps, b2, mask_img, W, residual=None):
    """x3d: (N, Rp, Cin) bf16 padded-row layout; returns (N, Rp, Cout) bf16 (same layout)."""
    N, Rp, cin = x3d.shape
    cout = w_taps.shape[-1]
    wp = W + 2
    has_res = residual is not None
    # cout chunk: 256 matches the 2x256^2 MXU on v6e/v7x; drop to 128 when that's all that divides.
    if cout > 256 and cout % 256 == 0:
        cc = 256
    elif cout > 128 and cout % 128 == 0:
        cc = 128
    else:
        cc = cout
    kern = functools.partial(_conv3x3_kernel, wp=wp, has_res=has_res)
    in_specs = [pl.BlockSpec((1, Rp, cin), lambda n, c: (n, 0, 0))]
    args = [x3d]
    if has_res:
        in_specs.append(pl.BlockSpec((1, Rp, cc), lambda n, c: (n, 0, c)))
        args.append(residual)
    in_specs += [
        pl.BlockSpec((9, cin, cc), lambda n, c: (0, 0, c)),
        pl.BlockSpec((1, cc), lambda n, c: (0, c)),
        pl.BlockSpec((Rp, 1), lambda n, c: (0, 0)),
    ]
    args += [w_taps, b2, mask_img]
    return pl.pallas_call(
        kern,
        out_shape=jax.ShapeDtypeStruct((N, Rp, cout), COMPUTE_DTYPE),
        grid=(N, cout // cc),
        in_specs=in_specs,
        out_specs=pl.BlockSpec((1, Rp, cc), lambda n, c: (n, 0, c)),
        compiler_params=pltpu.CompilerParams(
            dimension_semantics=("parallel", "parallel"),
            vmem_limit_bytes=VMEM_LIMIT_BYTES),
    )(*args)


# ----------------------------------------------------------------------------
# layout / BN-folding glue (boundary only; no per-layer HBM copies)
# ----------------------------------------------------------------------------
def to_padded_rows(x_nchw, Rp):
    N, C, H, W = x_nchw.shape
    x = jnp.transpose(x_nchw, (0, 2, 3, 1))                       # NHWC
    x = jnp.pad(x, ((0, 0), (1, 1), (1, 1), (0, 0)))              # spatial zero pad
    x = x.reshape(N, (H + 2) * (W + 2), C)
    x = jnp.pad(x, ((0, 0), (0, Rp - (H + 2) * (W + 2)), (0, 0)))
    return x.astype(COMPUTE_DTYPE)


def from_padded_rows(rows, N, H, W, Rp):
    c = rows.shape[-1]
    y = rows.reshape(N, Rp, c)[:, :(H + 2) * (W + 2), :]
    y = y.reshape(N, H + 2, W + 2, c)[:, 1:H + 1, 1:W + 1, :]
    return jnp.transpose(y, (0, 3, 1, 2)).astype(jnp.float32)     # NCHW f32


def make_interior_mask(H, W, Rp):
    """(Rp, 1) mask: 1 on interior pixels of the flattened padded image, 0 elsewhere (device jnp)."""
    Wp = W + 2
    r = jnp.arange(Rp, dtype=jnp.int32)
    h = r // Wp
    w = r % Wp
    interior = (r < (H + 2) * Wp) & (h >= 1) & (h <= H) & (w >= 1) & (w <= W)
    return interior.astype(COMPUTE_DTYPE).reshape(Rp, 1)


def fold_bn(conv):
    scale = conv["gamma"] / jnp.sqrt(conv["var"] + BN_EPS)
    bias = conv["beta"] - conv["mean"] * scale
    w = conv["w"] * scale[:, None, None, None]                    # (Cout, Cin, k, k)
    return w, bias


def prep_pw(conv):
    w, b = fold_bn(conv)
    w2d = jnp.transpose(w[:, :, 0, 0], (1, 0)).astype(COMPUTE_DTYPE)   # (Cin, Cout)
    return w2d, b.reshape(1, -1).astype(jnp.float32)


def prep_3x3(conv):
    w, b = fold_bn(conv)                                          # (Cout, Cin, 3, 3)
    cout, cin = w.shape[0], w.shape[1]
    wt = jnp.transpose(w, (2, 3, 1, 0)).reshape(9, cin, cout).astype(COMPUTE_DTYPE)
    return wt, b.reshape(1, -1).astype(jnp.float32)


def prepare_c2f(params):
    """Fold BN + transpose + bf16-cast every weight once (hoisted out of the forward)."""
    mid = params["mid"]
    n_parts = len(params["bottlenecks"]) + 2
    w1, b1 = prep_pw(params["cv1"])
    w2, b2 = prep_pw(params["cv2"])
    prep = {
        "mid": mid,
        "w1": w1, "b1": b1,
        "w2": w2.reshape(n_parts, mid, w2.shape[-1]), "b2": b2,
        "bottlenecks": [],
    }
    for bp in params["bottlenecks"]:
        wA, bA = prep_3x3(bp["cv1"])
        wB, bB = prep_3x3(bp["cv2"])
        prep["bottlenecks"].append({"wA": wA, "bA": bA, "wB": wB, "bB": bB})
    return prep


# ----------------------------------------------------------------------------
# C2f params + forward (Pallas)
# ----------------------------------------------------------------------------
def init_conv(key, cin, cout, k):
    return {
        "w": jax.random.normal(key, (cout, cin, k, k), jnp.float32) * 0.1,
        "gamma": jnp.ones((cout,), jnp.float32),
        "beta": jnp.zeros((cout,), jnp.float32),
        "mean": jnp.zeros((cout,), jnp.float32),
        "var": jnp.ones((cout,), jnp.float32),
    }


def init_c2f(key, cin, cout, n=1, e=0.5):
    mid = int(cout * e)
    keys = jax.random.split(key, 2 + 2 * n)
    params = {
        "mid": mid,
        "cv1": init_conv(keys[0], cin, 2 * mid, 1),
        "cv2": init_conv(keys[1], (n + 2) * mid, cout, 1),
        "bottlenecks": [],
    }
    for i in range(n):
        params["bottlenecks"].append({
            "cv1": init_conv(keys[2 + 2 * i], mid, mid, 3),
            "cv2": init_conv(keys[3 + 2 * i], mid, mid, 3),
        })
    return params


def c2f_forward(x_nchw, prep):
    N, cin, H, W = x_nchw.shape
    mid = prep["mid"]
    real = (H + 2) * (W + 2)
    Rp = _round_up(real, RP_ALIGN)                    # decoupled from the pointwise row tile
    M = N * Rp
    tile_m = _pick_row_tile(M, PW_TILE_TARGET)
    mask_img = make_interior_mask(H, W, Rp)

    x_rows = to_padded_rows(x_nchw, Rp).reshape(M, cin)

    x1, x2 = pw_conv_dual(x_rows, prep["w1"], prep["b1"], mid, tile_m)   # torch.chunk fused away

    parts = [x1, x2]
    x2_img = x2.reshape(N, Rp, mid)
    for bw in prep["bottlenecks"]:
        t = conv3x3(x2_img, bw["wA"], bw["bA"], mask_img, W)
        x2_img = conv3x3(t, bw["wB"], bw["bB"], mask_img, W, residual=x2_img)   # shortcut
        parts.append(x2_img.reshape(M, mid))

    out_rows = pw_conv_concat(parts, prep["w2"], prep["b2"], tile_m)     # torch.cat fused away
    return from_padded_rows(out_rows, N, H, W, Rp)


# ----------------------------------------------------------------------------
# pure-JAX f32 reference (lax.conv) for verification
# ----------------------------------------------------------------------------
def conv_bn_silu_ref(x_nhwc, conv, residual=None):
    w, bias = fold_bn(conv)
    k = w.shape[-1]
    p = (k - 1) // 2
    y = jax.lax.conv_general_dilated(
        x_nhwc, jnp.transpose(w, (2, 3, 1, 0)), (1, 1), [(p, p), (p, p)],
        dimension_numbers=("NHWC", "HWIO", "NHWC"))
    y = y + bias
    y = y * jax.nn.sigmoid(y)
    return y if residual is None else y + residual


def c2f_forward_ref(x_nchw, params):
    x = jnp.transpose(x_nchw, (0, 2, 3, 1))
    mid = params["mid"]
    y0 = conv_bn_silu_ref(x, params["cv1"])
    x1, x2 = y0[..., :mid], y0[..., mid:]
    ys = [x1, x2]
    for bp in params["bottlenecks"]:
        t = conv_bn_silu_ref(x2, bp["cv1"])
        x2 = conv_bn_silu_ref(t, bp["cv2"], residual=x2)
        ys.append(x2)
    cat = jnp.concatenate(ys, axis=-1)
    out = conv_bn_silu_ref(cat, params["cv2"])
    return jnp.transpose(out, (0, 3, 1, 2))


# ----------------------------------------------------------------------------
if __name__ == "__main__":
    key = jax.random.PRNGKey(0)
    kx, kp = jax.random.split(key)

    N, Cin, H, W = 2, 8, 16, 16
    Cout, n_bottleneck = 8, 2

    x = jax.random.normal(kx, (N, Cin, H, W), jnp.float32)
    params = init_c2f(kp, Cin, Cout, n=n_bottleneck, e=0.5)
    prep = prepare_c2f(params)

    fwd = jax.jit(lambda xx: c2f_forward(xx, prep))
    out = jax.block_until_ready(fwd(x))
    ref = jax.block_until_ready(c2f_forward_ref(x, params))

    assert out.shape == (N, Cout, H, W), out.shape
    max_err = float(jnp.max(jnp.abs(out - ref)))
    # bf16 MXU operands + approx EUP reciprocal -> loosened tolerance (accumulation stays f32)
    assert jnp.allclose(out, ref, atol=2e-2, rtol=2e-2), max_err
    print("KERNEL_OK")
</pallas_src>

<mosaic_0001>
module attributes {stable_mosaic.version = 11 : i64} {
  func.func @_pw_dual_kernel(%arg0: i32, %arg1: memref<336x8xbf16, #tpu.memory_space<vmem>>, %arg2: memref<8x8xbf16, #tpu.memory_space<vmem>>, %arg3: memref<1x8xf32, #tpu.memory_space<vmem>>, %arg4: memref<336x4xbf16, #tpu.memory_space<vmem>>, %arg5: memref<336x4xbf16, #tpu.memory_space<vmem>>) attributes {dimension_semantics = [#tpu.dimension_semantics<parallel>], iteration_bounds = array<i64: 2>, scalar_prefetch = 0 : i64, scratch_operands = 0 : i64, tpu.core_type = #tpu.core_type<tc>, window_params = [{transform_indices = @transform_0, window_bounds = array<i64: 336, 8>}, {pipeline_mode = #tpu.pipeline_mode<synchronous>, transform_indices = @transform_1, window_bounds = array<i64: 8, 8>}, {pipeline_mode = #tpu.pipeline_mode<synchronous>, transform_indices = @transform_2, window_bounds = array<i64: 1, 8>}, {transform_indices = @transform_3, window_bounds = array<i64: 336, 4>}, {transform_indices = @transform_4, window_bounds = array<i64: 336, 4>}]} {
    %c0 = arith.constant 0 : index
    %c0_0 = arith.constant 0 : index
    %0 = vector.load %arg1[%c0, %c0_0] : memref<336x8xbf16, #tpu.memory_space<vmem>>, vector<336x8xbf16>
    %c0_1 = arith.constant 0 : index
    %c0_2 = arith.constant 0 : index
    %1 = vector.load %arg2[%c0_1, %c0_2] : memref<8x8xbf16, #tpu.memory_space<vmem>>, vector<8x8xbf16>
    %cst = arith.constant dense<0.000000e+00> : vector<336x8xf32>
    %2 = tpu.matmul %0, %1, %cst {dimension_numbers = #tpu.dot_dimension_numbers<[1], [0], [0], [1], [0, 0, 1, 1], [], []>} : vector<336x8xbf16>, vector<8x8xbf16>, vector<336x8xf32> -> vector<336x8xf32>
    %c0_3 = arith.constant 0 : index
    %c0_4 = arith.constant 0 : index
    %3 = vector.load %arg3[%c0_3, %c0_4] : memref<1x8xf32, #tpu.memory_space<vmem>>, vector<1x8xf32>
    %4 = vector.broadcast %3 : vector<1x8xf32> to vector<336x8xf32>
    %5 = arith.addf %2, %4 : vector<336x8xf32>
    %cst_5 = arith.constant 0.000000e+00 : f32
    %6 = vector.broadcast %cst_5 : f32 to vector<336x8xf32>
    %7 = arith.subf %6, %5 : vector<336x8xf32>
    %8 = math.exp %7 : vector<336x8xf32>
    %cst_6 = arith.constant 1.000000e+00 : f32
    %9 = vector.broadcast %cst_6 : f32 to vector<336x8xf32>
    %10 = arith.addf %9, %8 : vector<336x8xf32>
    %11 = tpu.reciprocal %10 {approx = true} : vector<336x8xf32> -> vector<336x8xf32>
    %12 = arith.mulf %5, %11 : vector<336x8xf32>
    %13 = vector.extract_strided_slice %12 {offsets = [0, 0], sizes = [336, 4], strides = [1, 1]} : vector<336x8xf32> to vector<336x4xf32>
    %14 = arith.truncf %13 : vector<336x4xf32> to vector<336x4xbf16>
    %c0_7 = arith.constant 0 : index
    %c0_8 = arith.constant 0 : index
    %15 = vector.load %arg4[%c0_7, %c0_8] : memref<336x4xbf16, #tpu.memory_space<vmem>>, vector<336x4xbf16>
    tpu.vector_store %arg4[%c0_7, %c0_8], %14 {strides = array<i32>} : memref<336x4xbf16, #tpu.memory_space<vmem>>, vector<336x4xbf16>,
    %16 = vector.extract_strided_slice %12 {offsets = [0, 4], sizes = [336, 4], strides = [1, 1]} : vector<336x8xf32> to vector<336x4xf32>
    %17 = arith.truncf %16 : vector<336x4xf32> to vector<336x4xbf16>
    %c0_9 = arith.constant 0 : index
    %c0_10 = arith.constant 0 : index
    %18 = vector.load %arg5[%c0_9, %c0_10] : memref<336x4xbf16, #tpu.memory_space<vmem>>, vector<336x4xbf16>
    tpu.vector_store %arg5[%c0_9, %c0_10], %17 {strides = array<i32>} : memref<336x4xbf16, #tpu.memory_space<vmem>>, vector<336x4xbf16>,
    return
  }
  func.func @transform_0(%arg0: i32) -> (i32, i32) {
    %c0_i32 = arith.constant 0 : i32
    %c0_i32_0 = arith.constant 0 : i32
    return %arg0, %c0_i32 : i32, i32
  }
  func.func @transform_1(%arg0: i32) -> (i32, i32) {
    %c0_i32 = arith.constant 0 : i32
    %c0_i32_0 = arith.constant 0 : i32
    %c0_i32_1 = arith.constant 0 : i32
    return %c0_i32, %c0_i32_0 : i32, i32
  }
  func.func @transform_2(%arg0: i32) -> (i32, i32) {
    %c0_i32 = arith.constant 0 : i32
    %c0_i32_0 = arith.constant 0 : i32
    %c0_i32_1 = arith.constant 0 : i32
    return %c0_i32, %c0_i32_0 : i32, i32
  }
  func.func @transform_3(%arg0: i32) -> (i32, i32) {
    %c0_i32 = arith.constant 0 : i32
    %c0_i32_0 = arith.constant 0 : i32
    return %arg0, %c0_i32 : i32, i32
  }
  func.func @transform_4(%arg0: i32) -> (i32, i32) {
    %c0_i32 = arith.constant 0 : i32
    %c0_i32_0 = arith.constant 0 : i32
    return %arg0, %c0_i32 : i32, i32
  }
}

module attributes {stable_mosaic.version = 11 : i64} {
  func.func @_conv3x3_kernel(%arg0: i32, %arg1: i32, %arg2: memref<1x336x4xbf16, #tpu.memory_space<vmem>>, %arg3: memref<1x336x4xbf16, #tpu.memory_space<vmem>>, %arg4: memref<9x4x4xbf16, #tpu.memory_space<vmem>>, %arg5: memref<1x4xf32, #tpu.memory_space<vmem>>, %arg6: memref<336x1xbf16, #tpu.memory_space<vmem>>, %arg7: memref<1x336x4xbf16, #tpu.memory_space<vmem>>) attributes {dimension_semantics = [#tpu.dimension_semantics<parallel>, #tpu.dimension_semantics<parallel>], iteration_bounds = array<i64: 2, 1>, scalar_prefetch = 0 : i64, scratch_operands = 0 : i64, tpu.core_type = #tpu.core_type<tc>, window_params = [{transform_indices = @transform_0, window_bounds = array<i64: 1, 336, 4>}, {transform_indices = @transform_1, window_bounds = array<i64: 1, 336, 4>}, {transform_indices = @transform_2, window_bounds = array<i64: 9, 4, 4>}, {transform_indices = @transform_3, window_bounds = array<i64: 1, 4>}, {pipeline_mode = #tpu.pipeline_mode<synchronous>, transform_indices = @transform_4, window_bounds = array<i64: 336, 1>}, {transform_indices = @transform_5, window_bounds = array<i64: 1, 336, 4>}]} {
    %c0 = arith.constant 0 : index
    %c0_0 = arith.constant 0 : index
    %c0_1 = arith.constant 0 : index
    %0 = vector.load %arg2[%c0, %c0_0, %c0_1] : memref<1x336x4xbf16, #tpu.memory_space<vmem>>, vector<1x336x4xbf16>
    %1 = vector.shape_cast %0 : vector<1x336x4xbf16> to vector<336x4xbf16>
    %c0_2 = arith.constant 0 : index
    %c0_3 = arith.constant 0 : index
    %2 = vector.load %arg6[%c0_2, %c0_3] : memref<336x1xbf16, #tpu.memory_space<vmem>>, vector<336x1xbf16>
    %3 = vector.broadcast %2 : vector<336x1xbf16> to vector<336x4xbf16>
    %4 = arith.mulf %1, %3 : vector<336x4xbf16>
    %5 = arith.extf %4 : vector<336x4xbf16> to vector<336x4xf32>
    %c18_i32 = arith.constant 18 : i32
    %6 = tpu.dynamic_rotate %5 by %c18_i32 dim 0 : vector<336x4xf32>, i32 -> vector<336x4xf32>
    %7 = arith.truncf %6 : vector<336x4xf32> to vector<336x4xbf16>
    %c318_i32 = arith.constant 318 : i32
    %8 = tpu.dynamic_rotate %5 by %c318_i32 dim 0 : vector<336x4xf32>, i32 -> vector<336x4xf32>
    %9 = arith.truncf %8 : vector<336x4xf32> to vector<336x4xbf16>
    %c0_4 = arith.constant 0 : index
    %c0_5 = arith.constant 0 : index
    %c0_6 = arith.constant 0 : index
    %10 = vector.load %arg4[%c0_4, %c0_5, %c0_6] : memref<9x4x4xbf16, #tpu.memory_space<vmem>>, vector<1x4x4xbf16>
    %11 = vector.shape_cast %10 : vector<1x4x4xbf16> to vector<4x4xbf16>
    %cst = arith.constant dense<0.000000e+00> : vector<336x4xf32>
    %12 = tpu.matmul %7, %11, %cst {dimension_numbers = #tpu.dot_dimension_numbers<[1], [0], [0], [1], [0, 0, 1, 1], [], []>} : vector<336x4xbf16>, vector<4x4xbf16>, vector<336x4xf32> -> vector<336x4xf32>
    %c3 = arith.constant 3 : index
    %c0_7 = arith.constant 0 : index
    %c0_8 = arith.constant 0 : index
    %13 = vector.load %arg4[%c3, %c0_7, %c0_8] : memref<9x4x4xbf16, #tpu.memory_space<vmem>>, vector<1x4x4xbf16>
    %14 = vector.shape_cast %13 : vector<1x4x4xbf16> to vector<4x4xbf16>
    %cst_9 = arith.constant dense<0.000000e+00> : vector<336x4xf32>
    %15 = tpu.matmul %4, %14, %cst_9 {dimension_numbers = #tpu.dot_dimension_numbers<[1], [0], [0], [1], [0, 0, 1, 1], [], []>} : vector<336x4xbf16>, vector<4x4xbf16>, vector<336x4xf32> -> vector<336x4xf32>
    %16 = arith.addf %12, %15 : vector<336x4xf32>
    %c6 = arith.constant 6 : index
    %c0_10 = arith.constant 0 : index
    %c0_11 = arith.constant 0 : index
    %17 = vector.load %arg4[%c6, %c0_10, %c0_11] : memref<9x4x4xbf16, #tpu.memory_space<vmem>>, vector<1x4x4xbf16>
    %18 = vector.shape_cast %17 : vector<1x4x4xbf16> to vector<4x4xbf16>
    %cst_12 = arith.constant dense<0.000000e+00> : vector<336x4xf32>
    %19 = tpu.matmul %9, %18, %cst_12 {dimension_numbers = #tpu.dot_dimension_numbers<[1], [0], [0], [1], [0, 0, 1, 1], [], []>} : vector<336x4xbf16>, vector<4x4xbf16>, vector<336x4xf32> -> vector<336x4xf32>
    %20 = arith.addf %16, %19 : vector<336x4xf32>
    %c1_i32 = arith.constant 1 : i32
    %21 = tpu.dynamic_rotate %20 by %c1_i32 dim 0 : vector<336x4xf32>, i32 -> vector<336x4xf32>
    %c1 = arith.constant 1 : index
    %c0_13 = arith.constant 0 : index
    %c0_14 = arith.constant 0 : index
    %22 = vector.load %arg4[%c1, %c0_13, %c0_14] : memref<9x4x4xbf16, #tpu.memory_space<vmem>>, vector<1x4x4xbf16>
    %23 = vector.shape_cast %22 : vector<1x4x4xbf16> to vector<4x4xbf16>
    %cst_15 = arith.constant dense<0.000000e+00> : vector<336x4xf32>
    %24 = tpu.matmul %7, %23, %cst_15 {dimension_numbers = #tpu.dot_dimension_numbers<[1], [0], [0], [1], [0, 0, 1, 1], [], []>} : vector<336x4xbf16>, vector<4x4xbf16>, vector<336x4xf32> -> vector<336x4xf32>
    %c4 = arith.constant 4 : index
    %c0_16 = arith.constant 0 : index
    %c0_17 = arith.constant 0 : index
    %25 = vector.load %arg4[%c4, %c0_16, %c0_17] : memref<9x4x4xbf16, #tpu.memory_space<vmem>>, vector<1x4x4xbf16>
    %26 = vector.shape_cast %25 : vector<1x4x4xbf16> to vector<4x4xbf16>
    %cst_18 = arith.constant dense<0.000000e+00> : vector<336x4xf32>
    %27 = tpu.matmul %4, %26, %cst_18 {dimension_numbers = #tpu.dot_dimension_numbers<[1], [0], [0], [1], [0, 0, 1, 1], [], []>} : vector<336x4xbf16>, vector<4x4xbf16>, vector<336x4xf32> -> vector<336x4xf32>
    %28 = arith.addf %24, %27 : vector<336x4xf32>
    %c7 = arith.constant 7 : index
    %c0_19 = arith.constant 0 : index
    %c0_20 = arith.constant 0 : index
    %29 = vector.load %arg4[%c7, %c0_19, %c0_20] : memref<9x4x4xbf16, #tpu.memory_space<vmem>>, vector<1x4x4xbf16>
    %30 = vector.shape_cast %29 : vector<1x4x4xbf16> to vector<4x4xbf16>
    %cst_21 = arith.constant dense<0.000000e+00> : vector<336x4xf32>
    %31 = tpu.matmul %9, %30, %cst_21 {dimension_numbers = #tpu.dot_dimension_numbers<[1], [0], [0], [1], [0, 0, 1, 1], [], []>} : vector<336x4xbf16>, vector<4x4xbf16>, vector<336x4xf32> -> vector<336x4xf32>
    %32 = arith.addf %28, %31 : vector<336x4xf32>
    %33 = arith.addf %21, %32 : vector<336x4xf32>
    %c2 = arith.constant 2 : index
    %c0_22 = arith.constant 0 : index
    %c0_23 = arith.constant 0 : index
    %34 = vector.load %arg4[%c2, %c0_22, %c0_23] : memref<9x4x4xbf16, #tpu.memory_space<vmem>>, vector<1x4x4xbf16>
    %35 = vector.shape_cast %34 : vector<1x4x4xbf16> to vector<4x4xbf16>
    %cst_24 = arith.constant dense<0.000000e+00> : vector<336x4xf32>
    %36 = tpu.matmul %7, %35, %cst_24 {dimension_numbers = #tpu.dot_dimension_numbers<[1], [0], [0], [1], [0, 0, 1, 1], [], []>} : vector<336x4xbf16>, vector<4x4xbf16>, vector<336x4xf32> -> vector<336x4xf32>
    %c5 = arith.constant 5 : index
    %c0_25 = arith.constant 0 : index
    %c0_26 = arith.constant 0 : index
    %37 = vector.load %arg4[%c5, %c0_25, %c0_26] : memref<9x4x4xbf16, #tpu.memory_space<vmem>>, vector<1x4x4xbf16>
    %38 = vector.shape_cast %37 : vector<1x4x4xbf16> to vector<4x4xbf16>
    %cst_27 = arith.constant dense<0.000000e+00> : vector<336x4xf32>
    %39 = tpu.matmul %4, %38, %cst_27 {dimension_numbers = #tpu.dot_dimension_numbers<[1], [0], [0], [1], [0, 0, 1, 1], [], []>} : vector<336x4xbf16>, vector<4x4xbf16>, vector<336x4xf32> -> vector<336x4xf32>
    %40 = arith.addf %36, %39 : vector<336x4xf32>
    %c8 = arith.constant 8 : index
    %c0_28 = arith.constant 0 : index
    %c0_29 = arith.constant 0 : index
    %41 = vector.load %arg4[%c8, %c0_28, %c0_29] : memref<9x4x4xbf16, #tpu.memory_space<vmem>>, vector<1x4x4xbf16>
    %42 = vector.shape_cast %41 : vector<1x4x4xbf16> to vector<4x4xbf16>
    %cst_30 = arith.constant dense<0.000000e+00> : vector<336x4xf32>
    %43 = tpu.matmul %9, %42, %cst_30 {dimension_numbers = #tpu.dot_dimension_numbers<[1], [0], [0], [1], [0, 0, 1, 1], [], []>} : vector<336x4xbf16>, vector<4x4xbf16>, vector<336x4xf32> -> vector<336x4xf32>
    %44 = arith.addf %40, %43 : vector<336x4xf32>
    %c335_i32 = arith.constant 335 : i32
    %45 = tpu.dynamic_rotate %44 by %c335_i32 dim 0 : vector<336x4xf32>, i32 -> vector<336x4xf32>
    %46 = arith.addf %33, %45 : vector<336x4xf32>
    %c0_31 = arith.constant 0 : index
    %c0_32 = arith.constant 0 : index
    %47 = vector.load %arg5[%c0_31, %c0_32] : memref<1x4xf32, #tpu.memory_space<vmem>>, vector<1x4xf32>
    %48 = vector.broadcast %47 : vector<1x4xf32> to vector<336x4xf32>
    %49 = arith.addf %46, %48 : vector<336x4xf32>
    %cst_33 = arith.constant 0.000000e+00 : f32
    %50 = vector.broadcast %cst_33 : f32 to vector<336x4xf32>
    %51 = arith.subf %50, %49 : vector<336x4xf32>
    %52 = math.exp %51 : vector<336x4xf32>
    %cst_34 = arith.constant 1.000000e+00 : f32
    %53 = vector.broadcast %cst_34 : f32 to vector<336x4xf32>
    %54 = arith.addf %53, %52 : vector<336x4xf32>
    %55 = tpu.reciprocal %54 {approx = true} : vector<336x4xf32> -> vector<336x4xf32>
    %56 = arith.mulf %49, %55 : vector<336x4xf32>
    %c0_35 = arith.constant 0 : index
    %c0_36 = arith.constant 0 : index
    %c0_37 = arith.constant 0 : index
    %57 = vector.load %arg3[%c0_35, %c0_36, %c0_37] : memref<1x336x4xbf16, #tpu.memory_space<vmem>>, vector<1x336x4xbf16>
    %58 = vector.shape_cast %57 : vector<1x336x4xbf16> to vector<336x4xbf16>
    %59 = arith.extf %58 : vector<336x4xbf16> to vector<336x4xf32>
    %60 = arith.addf %56, %59 : vector<336x4xf32>
    %61 = arith.truncf %60 : vector<336x4xf32> to vector<336x4xbf16>
    %c0_38 = arith.constant 0 : index
    %c0_39 = arith.constant 0 : index
    %c0_40 = arith.constant 0 : index
    %62 = vector.load %arg7[%c0_38, %c0_39, %c0_40] : memref<1x336x4xbf16, #tpu.memory_space<vmem>>, vector<1x336x4xbf16>
    %63 = vector.shape_cast %62 : vector<1x336x4xbf16> to vector<336x4xbf16>
    %64 = vector.shape_cast %61 : vector<336x4xbf16> to vector<1x336x4xbf16>
    tpu.vector_store %arg7[%c0_38, %c0_39, %c0_40], %64 {strides = array<i32>} : memref<1x336x4xbf16, #tpu.memory_space<vmem>>, vector<1x336x4xbf16>,
    return
  }
  func.func @transform_0(%arg0: i32, %arg1: i32) -> (i32, i32, i32) {
    %c0_i32 = arith.constant 0 : i32
    %c0_i32_0 = arith.constant 0 : i32
    %c0_i32_1 = arith.constant 0 : i32
    return %arg0, %c0_i32, %c0_i32_0 : i32, i32, i32
  }
  func.func @transform_1(%arg0: i32, %arg1: i32) -> (i32, i32, i32) {
    %c0_i32 = arith.constant 0 : i32
    %c0_i32_0 = arith.constant 0 : i32
    return %arg0, %c0_i32, %arg1 : i32, i32, i32
  }
  func.func @transform_2(%arg0: i32, %arg1: i32) -> (i32, i32, i32) {
    %c0_i32 = arith.constant 0 : i32
    %c0_i32_0 = arith.constant 0 : i32
    %c0_i32_1 = arith.constant 0 : i32
    return %c0_i32, %c0_i32_0, %arg1 : i32, i32, i32
  }
  func.func @transform_3(%arg0: i32, %arg1: i32) -> (i32, i32) {
    %c0_i32 = arith.constant 0 : i32
    %c0_i32_0 = arith.constant 0 : i32
    return %c0_i32, %arg1 : i32, i32
  }
  func.func @transform_4(%arg0: i32, %arg1: i32) -> (i32, i32) {
    %c0_i32 = arith.constant 0 : i32
    %c0_i32_0 = arith.constant 0 : i32
    %c0_i32_1 = arith.constant 0 : i32
    return %c0_i32, %c0_i32_0 : i32, i32
  }
  func.func @transform_5(%arg0: i32, %arg1: i32) -> (i32, i32, i32) {
    %c0_i32 = arith.constant 0 : i32
    %c0_i32_0 = arith.constant 0 : i32
    return %arg0, %c0_i32, %arg1 : i32, i32, i32
  }
}

module attributes {stable_mosaic.version = 11 : i64} {
  func.func @_conv3x3_kernel(%arg0: i32, %arg1: i32, %arg2: memref<1x336x4xbf16, #tpu.memory_space<vmem>>, %arg3: memref<9x4x4xbf16, #tpu.memory_space<vmem>>, %arg4: memref<1x4xf32, #tpu.memory_space<vmem>>, %arg5: memref<336x1xbf16, #tpu.memory_space<vmem>>, %arg6: memref<1x336x4xbf16, #tpu.memory_space<vmem>>) attributes {dimension_semantics = [#tpu.dimension_semantics<parallel>, #tpu.dimension_semantics<parallel>], iteration_bounds = array<i64: 2, 1>, scalar_prefetch = 0 : i64, scratch_operands = 0 : i64, tpu.core_type = #tpu.core_type<tc>, window_params = [{transform_indices = @transform_0, window_bounds = array<i64: 1, 336, 4>}, {transform_indices = @transform_1, window_bounds = array<i64: 9, 4, 4>}, {transform_indices = @transform_2, window_bounds = array<i64: 1, 4>}, {pipeline_mode = #tpu.pipeline_mode<synchronous>, transform_indices = @transform_3, window_bounds = array<i64: 336, 1>}, {transform_indices = @transform_4, window_bounds = array<i64: 1, 336, 4>}]} {
    %c0 = arith.constant 0 : index
    %c0_0 = arith.constant 0 : index
    %c0_1 = arith.constant 0 : index
    %0 = vector.load %arg2[%c0, %c0_0, %c0_1] : memref<1x336x4xbf16, #tpu.memory_space<vmem>>, vector<1x336x4xbf16>
    %1 = vector.shape_cast %0 : vector<1x336x4xbf16> to vector<336x4xbf16>
    %c0_2 = arith.constant 0 : index
    %c0_3 = arith.constant 0 : index
    %2 = vector.load %arg5[%c0_2, %c0_3] : memref<336x1xbf16, #tpu.memory_space<vmem>>, vector<336x1xbf16>
    %3 = vector.broadcast %2 : vector<336x1xbf16> to vector<336x4xbf16>
    %4 = arith.mulf %1, %3 : vector<336x4xbf16>
    %5 = arith.extf %4 : vector<336x4xbf16> to vector<336x4xf32>
    %c18_i32 = arith.constant 18 : i32
    %6 = tpu.dynamic_rotate %5 by %c18_i32 dim 0 : vector<336x4xf32>, i32 -> vector<336x4xf32>
    %7 = arith.truncf %6 : vector<336x4xf32> to vector<336x4xbf16>
    %c318_i32 = arith.constant 318 : i32
    %8 = tpu.dynamic_rotate %5 by %c318_i32 dim 0 : vector<336x4xf32>, i32 -> vector<336x4xf32>
    %9 = arith.truncf %8 : vector<336x4xf32> to vector<336x4xbf16>
    %c0_4 = arith.constant 0 : index
    %c0_5 = arith.constant 0 : index
    %c0_6 = arith.constant 0 : index
    %10 = vector.load %arg3[%c0_4, %c0_5, %c0_6] : memref<9x4x4xbf16, #tpu.memory_space<vmem>>, vector<1x4x4xbf16>
    %11 = vector.shape_cast %10 : vector<1x4x4xbf16> to vector<4x4xbf16>
    %cst = arith.constant dense<0.000000e+00> : vector<336x4xf32>
    %12 = tpu.matmul %7, %11, %cst {dimension_numbers = #tpu.dot_dimension_numbers<[1], [0], [0], [1], [0, 0, 1, 1], [], []>} : vector<336x4xbf16>, vector<4x4xbf16>, vector<336x4xf32> -> vector<336x4xf32>
    %c3 = arith.constant 3 : index
    %c0_7 = arith.constant 0 : index
    %c0_8 = arith.constant 0 : index
    %13 = vector.load %arg3[%c3, %c0_7, %c0_8] : memref<9x4x4xbf16, #tpu.memory_space<vmem>>, vector<1x4x4xbf16>
    %14 = vector.shape_cast %13 : vector<1x4x4xbf16> to vector<4x4xbf16>
    %cst_9 = arith.constant dense<0.000000e+00> : vector<336x4xf32>
    %15 = tpu.matmul %4, %14, %cst_9 {dimension_numbers = #tpu.dot_dimension_numbers<[1], [0], [0], [1], [0, 0, 1, 1], [], []>} : vector<336x4xbf16>, vector<4x4xbf16>, vector<336x4xf32> -> vector<336x4xf32>
    %16 = arith.addf %12, %15 : vector<336x4xf32>
    %c6 = arith.constant 6 : index
    %c0_10 = arith.constant 0 : index
    %c0_11 = arith.constant 0 : index
    %17 = vector.load %arg3[%c6, %c0_10, %c0_11] : memref<9x4x4xbf16, #tpu.memory_space<vmem>>, vector<1x4x4xbf16>
    %18 = vector.shape_cast %17 : vector<1x4x4xbf16> to vector<4x4xbf16>
    %cst_12 = arith.constant dense<0.000000e+00> : vector<336x4xf32>
    %19 = tpu.matmul %9, %18, %cst_12 {dimension_numbers = #tpu.dot_dimension_numbers<[1], [0], [0], [1], [0, 0, 1, 1], [], []>} : vector<336x4xbf16>, vector<4x4xbf16>, vector<336x4xf32> -> vector<336x4xf32>
    %20 = arith.addf %16, %19 : vector<336x4xf32>
    %c1_i32 = arith.constant 1 : i32
    %21 = tpu.dynamic_rotate %20 by %c1_i32 dim 0 : vector<336x4xf32>, i32 -> vector<336x4xf32>
    %c1 = arith.constant 1 : index
    %c0_13 = arith.constant 0 : index
    %c0_14 = arith.constant 0 : index
    %22 = vector.load %arg3[%c1, %c0_13, %c0_14] : memref<9x4x4xbf16, #tpu.memory_space<vmem>>, vector<1x4x4xbf16>
    %23 = vector.shape_cast %22 : vector<1x4x4xbf16> to vector<4x4xbf16>
    %cst_15 = arith.constant dense<0.000000e+00> : vector<336x4xf32>
    %24 = tpu.matmul %7, %23, %cst_15 {dimension_numbers = #tpu.dot_dimension_numbers<[1], [0], [0], [1], [0, 0, 1, 1], [], []>} : vector<336x4xbf16>, vector<4x4xbf16>, vector<336x4xf32> -> vector<336x4xf32>
    %c4 = arith.constant 4 : index
    %c0_16 = arith.constant 0 : index
    %c0_17 = arith.constant 0 : index
    %25 = vector.load %arg3[%c4, %c0_16, %c0_17] : memref<9x4x4xbf16, #tpu.memory_space<vmem>>, vector<1x4x4xbf16>
    %26 = vector.shape_cast %25 : vector<1x4x4xbf16> to vector<4x4xbf16>
    %cst_18 = arith.constant dense<0.000000e+00> : vector<336x4xf32>
    %27 = tpu.matmul %4, %26, %cst_18 {dimension_numbers = #tpu.dot_dimension_numbers<[1], [0], [0], [1], [0, 0, 1, 1], [], []>} : vector<336x4xbf16>, vector<4x4xbf16>, vector<336x4xf32> -> vector<336x4xf32>
    %28 = arith.addf %24, %27 : vector<336x4xf32>
    %c7 = arith.constant 7 : index
    %c0_19 = arith.constant 0 : index
    %c0_20 = arith.constant 0 : index
    %29 = vector.load %arg3[%c7, %c0_19, %c0_20] : memref<9x4x4xbf16, #tpu.memory_space<vmem>>, vector<1x4x4xbf16>
    %30 = vector.shape_cast %29 : vector<1x4x4xbf16> to vector<4x4xbf16>
    %cst_21 = arith.constant dense<0.000000e+00> : vector<336x4xf32>
    %31 = tpu.matmul %9, %30, %cst_21 {dimension_numbers = #tpu.dot_dimension_numbers<[1], [0], [0], [1], [0, 0, 1, 1], [], []>} : vector<336x4xbf16>, vector<4x4xbf16>, vector<336x4xf32> -> vector<336x4xf32>
    %32 = arith.addf %28, %31 : vector<336x4xf32>
    %33 = arith.addf %21, %32 : vector<336x4xf32>
    %c2 = arith.constant 2 : index
    %c0_22 = arith.constant 0 : index
    %c0_23 = arith.constant 0 : index
    %34 = vector.load %arg3[%c2, %c0_22, %c0_23] : memref<9x4x4xbf16, #tpu.memory_space<vmem>>, vector<1x4x4xbf16>
    %35 = vector.shape_cast %34 : vector<1x4x4xbf16> to vector<4x4xbf16>
    %cst_24 = arith.constant dense<0.000000e+00> : vector<336x4xf32>
    %36 = tpu.matmul %7, %35, %cst_24 {dimension_numbers = #tpu.dot_dimension_numbers<[1], [0], [0], [1], [0, 0, 1, 1], [], []>} : vector<336x4xbf16>, vector<4x4xbf16>, vector<336x4xf32> -> vector<336x4xf32>
    %c5 = arith.constant 5 : index
    %c0_25 = arith.constant 0 : index
    %c0_26 = arith.constant 0 : index
    %37 = vector.load %arg3[%c5, %c0_25, %c0_26] : memref<9x4x4xbf16, #tpu.memory_space<vmem>>, vector<1x4x4xbf16>
    %38 = vector.shape_cast %37 : vector<1x4x4xbf16> to vector<4x4xbf16>
    %cst_27 = arith.constant dense<0.000000e+00> : vector<336x4xf32>
    %39 = tpu.matmul %4, %38, %cst_27 {dimension_numbers = #tpu.dot_dimension_numbers<[1], [0], [0], [1], [0, 0, 1, 1], [], []>} : vector<336x4xbf16>, vector<4x4xbf16>, vector<336x4xf32> -> vector<336x4xf32>
    %40 = arith.addf %36, %39 : vector<336x4xf32>
    %c8 = arith.constant 8 : index
    %c0_28 = arith.constant 0 : index
    %c0_29 = arith.constant 0 : index
    %41 = vector.load %arg3[%c8, %c0_28, %c0_29] : memref<9x4x4xbf16, #tpu.memory_space<vmem>>, vector<1x4x4xbf16>
    %42 = vector.shape_cast %41 : vector<1x4x4xbf16> to vector<4x4xbf16>
    %cst_30 = arith.constant dense<0.000000e+00> : vector<336x4xf32>
    %43 = tpu.matmul %9, %42, %cst_30 {dimension_numbers = #tpu.dot_dimension_numbers<[1], [0], [0], [1], [0, 0, 1, 1], [], []>} : vector<336x4xbf16>, vector<4x4xbf16>, vector<336x4xf32> -> vector<336x4xf32>
    %44 = arith.addf %40, %43 : vector<336x4xf32>
    %c335_i32 = arith.constant 335 : i32
    %45 = tpu.dynamic_rotate %44 by %c335_i32 dim 0 : vector<336x4xf32>, i32 -> vector<336x4xf32>
    %46 = arith.addf %33, %45 : vector<336x4xf32>
    %c0_31 = arith.constant 0 : index
    %c0_32 = arith.constant 0 : index
    %47 = vector.load %arg4[%c0_31, %c0_32] : memref<1x4xf32, #tpu.memory_space<vmem>>, vector<1x4xf32>
    %48 = vector.broadcast %47 : vector<1x4xf32> to vector<336x4xf32>
    %49 = arith.addf %46, %48 : vector<336x4xf32>
    %cst_33 = arith.constant 0.000000e+00 : f32
    %50 = vector.broadcast %cst_33 : f32 to vector<336x4xf32>
    %51 = arith.subf %50, %49 : vector<336x4xf32>
    %52 = math.exp %51 : vector<336x4xf32>
    %cst_34 = arith.constant 1.000000e+00 : f32
    %53 = vector.broadcast %cst_34 : f32 to vector<336x4xf32>
    %54 = arith.addf %53, %52 : vector<336x4xf32>
    %55 = tpu.reciprocal %54 {approx = true} : vector<336x4xf32> -> vector<336x4xf32>
    %56 = arith.mulf %49, %55 : vector<336x4xf32>
    %57 = arith.truncf %56 : vector<336x4xf32> to vector<336x4xbf16>
    %c0_35 = arith.constant 0 : index
    %c0_36 = arith.constant 0 : index
    %c0_37 = arith.constant 0 : index
    %58 = vector.load %arg6[%c0_35, %c0_36, %c0_37] : memref<1x336x4xbf16, #tpu.memory_space<vmem>>, vector<1x336x4xbf16>
    %59 = vector.shape_cast %58 : vector<1x336x4xbf16> to vector<336x4xbf16>
    %60 = vector.shape_cast %57 : vector<336x4xbf16> to vector<1x336x4xbf16>
    tpu.vector_store %arg6[%c0_35, %c0_36, %c0_37], %60 {strides = array<i32>} : memref<1x336x4xbf16, #tpu.memory_space<vmem>>, vector<1x336x4xbf16>,
    return
  }
  func.func @transform_0(%arg0: i32, %arg1: i32) -> (i32, i32, i32) {
    %c0_i32 = arith.constant 0 : i32
    %c0_i32_0 = arith.constant 0 : i32
    %c0_i32_1 = arith.constant 0 : i32
    return %arg0, %c0_i32, %c0_i32_0 : i32, i32, i32
  }
  func.func @transform_1(%arg0: i32, %arg1: i32) -> (i32, i32, i32) {
    %c0_i32 = arith.constant 0 : i32
    %c0_i32_0 = arith.constant 0 : i32
    %c0_i32_1 = arith.constant 0 : i32
    return %c0_i32, %c0_i32_0, %arg1 : i32, i32, i32
  }
  func.func @transform_2(%arg0: i32, %arg1: i32) -> (i32, i32) {
    %c0_i32 = arith.constant 0 : i32
    %c0_i32_0 = arith.constant 0 : i32
    return %c0_i32, %arg1 : i32, i32
  }
  func.func @transform_3(%arg0: i32, %arg1: i32) -> (i32, i32) {
    %c0_i32 = arith.constant 0 : i32
    %c0_i32_0 = arith.constant 0 : i32
    %c0_i32_1 = arith.constant 0 : i32
    return %c0_i32, %c0_i32_0 : i32, i32
  }
  func.func @transform_4(%arg0: i32, %arg1: i32) -> (i32, i32, i32) {
    %c0_i32 = arith.constant 0 : i32
    %c0_i32_0 = arith.constant 0 : i32
    return %arg0, %c0_i32, %arg1 : i32, i32, i32
  }
}

module attributes {stable_mosaic.version = 11 : i64} {
  func.func @_pw_concat_kernel(%arg0: i32, %arg1: memref<336x4xbf16, #tpu.memory_space<vmem>>, %arg2: memref<336x4xbf16, #tpu.memory_space<vmem>>, %arg3: memref<336x4xbf16, #tpu.memory_space<vmem>>, %arg4: memref<336x4xbf16, #tpu.memory_space<vmem>>, %arg5: memref<4x4x8xbf16, #tpu.memory_space<vmem>>, %arg6: memref<1x8xf32, #tpu.memory_space<vmem>>, %arg7: memref<336x8xbf16, #tpu.memory_space<vmem>>) attributes {dimension_semantics = [#tpu.dimension_semantics<parallel>], iteration_bounds = array<i64: 2>, scalar_prefetch = 0 : i64, scratch_operands = 0 : i64, tpu.core_type = #tpu.core_type<tc>, window_params = [{transform_indices = @transform_0, window_bounds = array<i64: 336, 4>}, {transform_indices = @transform_1, window_bounds = array<i64: 336, 4>}, {transform_indices = @transform_2, window_bounds = array<i64: 336, 4>}, {transform_indices = @transform_3, window_bounds = array<i64: 336, 4>}, {pipeline_mode = #tpu.pipeline_mode<synchronous>, transform_indices = @transform_4, window_bounds = array<i64: 4, 4, 8>}, {pipeline_mode = #tpu.pipeline_mode<synchronous>, transform_indices = @transform_5, window_bounds = array<i64: 1, 8>}, {transform_indices = @transform_6, window_bounds = array<i64: 336, 8>}]} {
    %c0 = arith.constant 0 : index
    %c0_0 = arith.constant 0 : index
    %0 = vector.load %arg1[%c0, %c0_0] : memref<336x4xbf16, #tpu.memory_space<vmem>>, vector<336x4xbf16>
    %c0_1 = arith.constant 0 : index
    %c0_2 = arith.constant 0 : index
    %c0_3 = arith.constant 0 : index
    %1 = vector.load %arg5[%c0_1, %c0_2, %c0_3] : memref<4x4x8xbf16, #tpu.memory_space<vmem>>, vector<1x4x8xbf16>
    %2 = vector.shape_cast %1 : vector<1x4x8xbf16> to vector<4x8xbf16>
    %cst = arith.constant dense<0.000000e+00> : vector<336x8xf32>
    %3 = tpu.matmul %0, %2, %cst {dimension_numbers = #tpu.dot_dimension_numbers<[1], [0], [0], [1], [0, 0, 1, 1], [], []>} : vector<336x4xbf16>, vector<4x8xbf16>, vector<336x8xf32> -> vector<336x8xf32>
    %c0_4 = arith.constant 0 : index
    %c0_5 = arith.constant 0 : index
    %4 = vector.load %arg2[%c0_4, %c0_5] : memref<336x4xbf16, #tpu.memory_space<vmem>>, vector<336x4xbf16>
    %c1 = arith.constant 1 : index
    %c0_6 = arith.constant 0 : index
    %c0_7 = arith.constant 0 : index
    %5 = vector.load %arg5[%c1, %c0_6, %c0_7] : memref<4x4x8xbf16, #tpu.memory_space<vmem>>, vector<1x4x8xbf16>
    %6 = vector.shape_cast %5 : vector<1x4x8xbf16> to vector<4x8xbf16>
    %cst_8 = arith.constant dense<0.000000e+00> : vector<336x8xf32>
    %7 = tpu.matmul %4, %6, %cst_8 {dimension_numbers = #tpu.dot_dimension_numbers<[1], [0], [0], [1], [0, 0, 1, 1], [], []>} : vector<336x4xbf16>, vector<4x8xbf16>, vector<336x8xf32> -> vector<336x8xf32>
    %8 = arith.addf %3, %7 : vector<336x8xf32>
    %c0_9 = arith.constant 0 : index
    %c0_10 = arith.constant 0 : index
    %9 = vector.load %arg3[%c0_9, %c0_10] : memref<336x4xbf16, #tpu.memory_space<vmem>>, vector<336x4xbf16>
    %c2 = arith.constant 2 : index
    %c0_11 = arith.constant 0 : index
    %c0_12 = arith.constant 0 : index
    %10 = vector.load %arg5[%c2, %c0_11, %c0_12] : memref<4x4x8xbf16, #tpu.memory_space<vmem>>, vector<1x4x8xbf16>
    %11 = vector.shape_cast %10 : vector<1x4x8xbf16> to vector<4x8xbf16>
    %cst_13 = arith.constant dense<0.000000e+00> : vector<336x8xf32>
    %12 = tpu.matmul %9, %11, %cst_13 {dimension_numbers = #tpu.dot_dimension_numbers<[1], [0], [0], [1], [0, 0, 1, 1], [], []>} : vector<336x4xbf16>, vector<4x8xbf16>, vector<336x8xf32> -> vector<336x8xf32>
    %13 = arith.addf %8, %12 : vector<336x8xf32>
    %c0_14 = arith.constant 0 : index
    %c0_15 = arith.constant 0 : index
    %14 = vector.load %arg4[%c0_14, %c0_15] : memref<336x4xbf16, #tpu.memory_space<vmem>>, vector<336x4xbf16>
    %c3 = arith.constant 3 : index
    %c0_16 = arith.constant 0 : index
    %c0_17 = arith.constant 0 : index
    %15 = vector.load %arg5[%c3, %c0_16, %c0_17] : memref<4x4x8xbf16, #tpu.memory_space<vmem>>, vector<1x4x8xbf16>
    %16 = vector.shape_cast %15 : vector<1x4x8xbf16> to vector<4x8xbf16>
    %cst_18 = arith.constant dense<0.000000e+00> : vector<336x8xf32>
    %17 = tpu.matmul %14, %16, %cst_18 {dimension_numbers = #tpu.dot_dimension_numbers<[1], [0], [0], [1], [0, 0, 1, 1], [], []>} : vector<336x4xbf16>, vector<4x8xbf16>, vector<336x8xf32> -> vector<336x8xf32>
    %18 = arith.addf %13, %17 : vector<336x8xf32>
    %c0_19 = arith.constant 0 : index
    %c0_20 = arith.constant 0 : index
    %19 = vector.load %arg6[%c0_19, %c0_20] : memref<1x8xf32, #tpu.memory_space<vmem>>, vector<1x8xf32>
    %20 = vector.broadcast %19 : vector<1x8xf32> to vector<336x8xf32>
    %21 = arith.addf %18, %20 : vector<336x8xf32>
    %cst_21 = arith.constant 0.000000e+00 : f32
    %22 = vector.broadcast %cst_21 : f32 to vector<336x8xf32>
    %23 = arith.subf %22, %21 : vector<336x8xf32>
    %24 = math.exp %23 : vector<336x8xf32>
    %cst_22 = arith.constant 1.000000e+00 : f32
    %25 = vector.broadcast %cst_22 : f32 to vector<336x8xf32>
    %26 = arith.addf %25, %24 : vector<336x8xf32>
    %27 = tpu.reciprocal %26 {approx = true} : vector<336x8xf32> -> vector<336x8xf32>
    %28 = arith.mulf %21, %27 : vector<336x8xf32>
    %29 = arith.truncf %28 : vector<336x8xf32> to vector<336x8xbf16>
    %c0_23 = arith.constant 0 : index
    %c0_24 = arith.constant 0 : index
    %30 = vector.load %arg7[%c0_23, %c0_24] : memref<336x8xbf16, #tpu.memory_space<vmem>>, vector<336x8xbf16>
    tpu.vector_store %arg7[%c0_23, %c0_24], %29 {strides = array<i32>} : memref<336x8xbf16, #tpu.memory_space<vmem>>, vector<336x8xbf16>,
    return
  }
  func.func @transform_0(%arg0: i32) -> (i32, i32) {
    %c0_i32 = arith.constant 0 : i32
    %c0_i32_0 = arith.constant 0 : i32
    return %arg0, %c0_i32 : i32, i32
  }
  func.func @transform_1(%arg0: i32) -> (i32, i32) {
    %c0_i32 = arith.constant 0 : i32
    %c0_i32_0 = arith.constant 0 : i32
    return %arg0, %c0_i32 : i32, i32
  }
  func.func @transform_2(%arg0: i32) -> (i32, i32) {
    %c0_i32 = arith.constant 0 : i32
    %c0_i32_0 = arith.constant 0 : i32
    return %arg0, %c0_i32 : i32, i32
  }
  func.func @transform_3(%arg0: i32) -> (i32, i32) {
    %c0_i32 = arith.constant 0 : i32
    %c0_i32_0 = arith.constant 0 : i32
    return %arg0, %c0_i32 : i32, i32
  }
  func.func @transform_4(%arg0: i32) -> (i32, i32, i32) {
    %c0_i32 = arith.constant 0 : i32
    %c0_i32_0 = arith.constant 0 : i32
    %c0_i32_1 = arith.constant 0 : i32
    %c0_i32_2 = arith.constant 0 : i32
    return %c0_i32, %c0_i32_0, %c0_i32_1 : i32, i32, i32
  }
  func.func @transform_5(%arg0: i32) -> (i32, i32) {
    %c0_i32 = arith.constant 0 : i32
    %c0_i32_0 = arith.constant 0 : i32
    %c0_i32_1 = arith.constant 0 : i32
    return %c0_i32, %c0_i32_0 : i32, i32
  }
  func.func @transform_6(%arg0: i32) -> (i32, i32) {
    %c0_i32 = arith.constant 0 : i32
    %c0_i32_0 = arith.constant 0 : i32
    return %arg0, %c0_i32 : i32, i32
  }
}

</mosaic_0001>

<llo_original>
// kernel: _lambda_.6
$region0: #{_lambda_.6}
  #allocation0 [shape = 'u32[]', space=smem, size = 0x4, offset = 0x4, fixed_abs, tag = 'smem constant byte address 0x4 - core index']
  #allocation1 [shape = 'u32[144,128]{1,0:T(1,128)}', space=vmem, size = 0x12000, scoped, tag = 'internal scratch']
  %s0 = inlined_call_operand.vmem [shape: bf16[672,8], index: 0, kind: input, shape index: {}]
  %s1 = inlined_call_operand.vmem [shape: bf16[8,8], index: 1, kind: input, shape index: {}]
  %s2 = inlined_call_operand.vmem [shape: f32[1,8], index: 2, kind: input, shape index: {}]
  %s3 = inlined_call_operand.vmem [shape: bf16[672,4], index: 3, kind: output, shape index: {0}]
  %s4 = inlined_call_operand.vmem [shape: bf16[672,4], index: 4, kind: output, shape index: {1}]
  %5 = xla_tuple %s3, %s4
  %s6 = sld [smem:[#allocation0]]
  $region53: #{_lambda_.6} parent=0
    _
  %s8 = ssub.s32 1, %s6
  %s9 = scalar_select 0, %s8, %s6
  loop: start=0, step=1, limit=4
  $region2: #{_lambda_.6} parent=0 // loop_pre_header
    _
  $region3: #{_lambda_.6} parent=0 // loop_header
    %s11 = sphi 0, %s15
    %p12 = scmp.ge.s32.totalorder %s11, 4
    %s21 = sphi 0, %s23
    %s24 = sphi 0, %s21
    %s25 = sphi 0, %s24
    %s41 = sphi 0, %s25
    %s45 = sphi 0, %s45
    %s47 = sphi 0, %s45
    %s48 = sphi 0, %s47
    %s62 = sphi 0, %s48
    %s66 = sphi 0, %s66
    %s68 = sphi 0, %s66
    %s69 = sphi 0, %s68
    %s83 = sphi 0, %s69
    %s89 = sphi 0, %s91
    %s92 = sphi 0, %s89
    %s93 = sphi 0, %s92
    %s109 = sphi 0, %s93
    %s115 = sphi 0, %s117
    %s118 = sphi 0, %s115
    %s119 = sphi 0, %s118
    %s135 = sphi 0, %s119
  $region4: #{_lambda_.6} parent=0 // loop_header_branch
    %14 = sbr.rel (%p12) target = $region8
  $region5: #{_lambda_.6} parent=0 // loop_body
    %s16 = ssub.s32 %s11, 1
    %s17 = ssub.s32 %s11, 2
    %s18 = sadd.s32 %s11, 1
    %s19 = ssub.s32 %s11, %s18
    %p20 = scmp.eq.s32.totalorder %s19, 0
    %s22 = sadd.s32 %s21, 1
    %s23 = scalar_select %p20, %s21, %s22
    %p26 = pneg %p20
    %p27 = scmp.eq.s32.totalorder %s11, 1
    %p28 = por %p26, %p27
    %p29 = scmp.ne.s32.totalorder %s21, %s24
    %p30 = scmp.eq.s32.totalorder %s11, 0
    %p31 = por %p29, %p30
    %p32 = scmp.ne.s32.totalorder %s21, %s24
    %p33 = scmp.eq.s32.totalorder %s16, 1
    %p34 = por %p32, %p33
    %p35 = scmp.ne.s32.totalorder %s24, %s25
    %p36 = scmp.eq.s32.totalorder %s16, 0
    %p37 = por %p35, %p36
    %p38 = scmp.ne.s32.totalorder %s24, %s25
    %p39 = scmp.eq.s32.totalorder %s17, 1
    %p40 = por %p38, %p39
    %p42 = scmp.ne.s32.totalorder %s25, %s41
    %p43 = scmp.eq.s32.totalorder %s17, 0
    %p44 = por %p42, %p43
    %s46 = sadd.s32 %s45, 1
    %p49 = scmp.eq.s32.totalorder %s11, 1
    %p50 = scmp.ne.s32.totalorder %s45, %s47
    %p51 = scmp.eq.s32.totalorder %s11, 0
    %p52 = por %p50, %p51
    %p53 = scmp.ne.s32.totalorder %s45, %s47
    %p54 = scmp.eq.s32.totalorder %s16, 1
    %p55 = por %p53, %p54
    %p56 = scmp.ne.s32.totalorder %s47, %s48
    %p57 = scmp.eq.s32.totalorder %s16, 0
    %p58 = por %p56, %p57
    %p59 = scmp.ne.s32.totalorder %s47, %s48
    %p60 = scmp.eq.s32.totalorder %s17, 1
    %p61 = por %p59, %p60
    %p63 = scmp.ne.s32.totalorder %s48, %s62
    %p64 = scmp.eq.s32.totalorder %s17, 0
    %p65 = por %p63, %p64
    %s67 = sadd.s32 %s66, 1
    %p70 = scmp.eq.s32.totalorder %s11, 1
    %p71 = scmp.ne.s32.totalorder %s66, %s68
    %p72 = scmp.eq.s32.totalorder %s11, 0
    %p73 = por %p71, %p72
    %p74 = scmp.ne.s32.totalorder %s66, %s68
    %p75 = scmp.eq.s32.totalorder %s16, 1
    %p76 = por %p74, %p75
    %p77 = scmp.ne.s32.totalorder %s68, %s69
    %p78 = scmp.eq.s32.totalorder %s16, 0
    %p79 = por %p77, %p78
    %p80 = scmp.ne.s32.totalorder %s68, %s69
    %p81 = scmp.eq.s32.totalorder %s17, 1
    %p82 = por %p80, %p81
    %p84 = scmp.ne.s32.totalorder %s69, %s83
    %p85 = scmp.eq.s32.totalorder %s17, 0
    %p86 = por %p84, %p85
    %s87 = ssub.s32 %s11, %s18
    %p88 = scmp.eq.s32.totalorder %s87, 0
    %s90 = sadd.s32 %s89, 1
    %s91 = scalar_select %p88, %s89, %s90
    %p94 = pneg %p88
    %p95 = scmp.eq.s32.totalorder %s11, 1
    %p96 = por %p94, %p95
    %p97 = scmp.ne.s32.totalorder %s89, %s92
    %p98 = scmp.eq.s32.totalorder %s11, 0
    %p99 = por %p97, %p98
    %p100 = scmp.ne.s32.totalorder %s89, %s92
    %p101 = scmp.eq.s32.totalorder %s16, 1
    %p102 = por %p100, %p101
    %p103 = scmp.ne.s32.totalorder %s92, %s93
    %p104 = scmp.eq.s32.totalorder %s16, 0
    %p105 = por %p103, %p104
    %p106 = scmp.ne.s32.totalorder %s92, %s93
    %p107 = scmp.eq.s32.totalorder %s17, 1
    %p108 = por %p106, %p107
    %p110 = scmp.ne.s32.totalorder %s93, %s109
    %p111 = scmp.eq.s32.totalorder %s17, 0
    %p112 = por %p110, %p111
    %s113 = ssub.s32 %s11, %s18
    %p114 = scmp.eq.s32.totalorder %s113, 0
    %s116 = sadd.s32 %s115, 1
    %s117 = scalar_select %p114, %s115, %s116
    %p120 = pneg %p114
    %p121 = scmp.eq.s32.totalorder %s11, 1
    %p122 = por %p120, %p121
    %p123 = scmp.ne.s32.totalorder %s115, %s118
    %p124 = scmp.eq.s32.totalorder %s11, 0
    %p125 = por %p123, %p124
    %p126 = scmp.ne.s32.totalorder %s115, %s118
    %p127 = scmp.eq.s32.totalorder %s16, 1
    %p128 = por %p126, %p127
    %p129 = scmp.ne.s32.totalorder %s118, %s119
    %p130 = scmp.eq.s32.totalorder %s16, 0
    %p131 = por %p129, %p130
    %p132 = scmp.ne.s32.totalorder %s118, %s119
    %p133 = scmp.eq.s32.totalorder %s17, 1
    %p134 = por %p132, %p133
    %p136 = scmp.ne.s32.totalorder %s119, %s135
    %p137 = scmp.eq.s32.totalorder %s17, 0
    %p138 = por %p136, %p137
    %p139 = scmp.le.s32.totalorder 1, %s11
    %p140 = scmp.lt.s32.totalorder %s11, 3
    %p141 = pnand %p139, %p140
    %p142 = pneg %p141
    // Predicated region
    $region9: #{_lambda_.6} parent=5 // pred_check
      _
    $region10: #{_lambda_.6} parent=5 // pred_check_branch
      %144 = sbr.rel (%p141) target = $region12
    $region11: #{_lambda_.6} parent=5 // pred_region
      %s145 = ssub.s32 %s11, 1
      // Predicated region
      $region13: #{_lambda_.6} parent=11 // pred_check
        %p146 = pneg %p58
      $region14: #{_lambda_.6} parent=11 // pred_check_branch
        %148 = sbr.rel (%p146) target = $region16
      $region15: #{_lambda_.6} parent=11 // pred_region
        _
      $region16: #{_lambda_.6} parent=11 // pred_fallthru
        _
      // Predicated region
      $region17: #{_lambda_.6} parent=11 // pred_check
        %p149 = pneg %p79
      $region18: #{_lambda_.6} parent=11 // pred_check_branch
        %151 = sbr.rel (%p149) target = $region20
      $region19: #{_lambda_.6} parent=11 // pred_region
        _
      $region20: #{_lambda_.6} parent=11 // pred_fallthru
        _
    $region12: #{_lambda_.6} parent=5 // pred_fallthru
      _
    %p152 = scmp.lt.s32.totalorder %s11, 2
    // Predicated region
    $region21: #{_lambda_.6} parent=5 // pred_check
      %p153 = pneg %p152
    $region22: #{_lambda_.6} parent=5 // pred_check_branch
      %155 = sbr.rel (%p153) target = $region24
    $region23: #{_lambda_.6} parent=5 // pred_region
      // Predicated region
      $region25: #{_lambda_.6} parent=23 // pred_check
        %p156 = pneg %p31
      $region26: #{_lambda_.6} parent=23 // pred_check_branch
        %158 = sbr.rel (%p156) target = $region28
      $region27: #{_lambda_.6} parent=23 // pred_region
        %s159 = smul.u32 42, %s11
        %p160 = scmp.lt.s32.totalorder %s159, 83
        %s161 = scalar_select %p160, %s159, 83
        %s162 = smul.addr %s161, 4
        %s163 = scalar_lea.vmem %s0, %s162
        %s164 = smul.u32 42, %s11
      $region28: #{_lambda_.6} parent=23 // pred_fallthru
        _
    $region24: #{_lambda_.6} parent=5 // pred_fallthru
      _
    %p165 = scmp.le.s32.totalorder 1, %s11
    %p166 = scmp.lt.s32.totalorder %s11, 3
    %p167 = pnand %p165, %p166
    %p168 = pneg %p167
    // Predicated region
    $region29: #{_lambda_.6} parent=5 // pred_check
      _
    $region30: #{_lambda_.6} parent=5 // pred_check_branch
      %170 = sbr.rel (%p167) target = $region32
    $region31: #{_lambda_.6} parent=5 // pred_region
      %s171 = ssub.s32 %s11, 1
      %s172 = smul.u32 42, %s16
      %p173 = scmp.lt.s32.totalorder %s172, 83
      %s174 = scalar_select %p173, %s172, 83
      %s175 = smul.addr %s174, 4
      %s176 = scalar_lea.vmem %s0, %s175
      %p177 = pneg %p37
      %p178 = pneg %p34
      %p179 = pneg %p58
      %p180 = pneg %p55
      %p181 = pneg %p79
      %p182 = pneg %p76
      %p183 = pneg %p105
      %p184 = pneg %p102
      %s185 = smul.u32 42, %s16
      %p186 = scmp.lt.s32.totalorder %s185, 83
      %s187 = scalar_select %p186, %s185, 83
      %s188 = smul.addr %s187, 4
      %s189 = scalar_lea.vmem %s3, %s188
      %p190 = pneg %p131
      %p191 = pneg %p128
      %s192 = smul.u32 42, %s16
      %p193 = scmp.lt.s32.totalorder %s192, 83
      %s194 = scalar_select %p193, %s192, 83
      %s195 = smul.addr %s194, 4
      %s196 = scalar_lea.vmem %s4, %s195
      %s197 = smul.u32 42, %s16
      %p198 = scmp.lt.s32.totalorder %s197, 83
      %s199 = scalar_select %p198, %s197, 83
      %s200 = smul.addr %s199, 4
      %s201 = scalar_lea.vmem %s0, %s200
      %s202 = smul.u32 42, %s16
      %s203 = smul.u32 42, %s16
      %p204 = scmp.lt.s32.totalorder %s203, 83
      %s205 = scalar_select %p204, %s203, 83
      %s206 = smul.addr %s205, 4
      %s207 = scalar_lea.vmem %s3, %s206
      %s208 = smul.u32 42, %s16
      %s209 = smul.u32 42, %s16
      %p210 = scmp.lt.s32.totalorder %s209, 83
      %s211 = scalar_select %p210, %s209, 83
      %s212 = smul.addr %s211, 4
      %s213 = scalar_lea.vmem %s4, %s212
      %s214 = smul.u32 42, %s16
      %v216 = vld [vmem:[%s201] sm:$0xf]
      %v217 = vld [vmem:[%s201 + $0x4] sm:$0xf]
      %v218 = vld [vmem:[%s201 + $0x8] sm:$0xf]
      %v219 = vld [vmem:[%s201 + $0xc] sm:$0xf]
      %v220 = vld [vmem:[%s201 + $0x10] sm:$0xf]
      %v221 = vld [vmem:[%s201 + $0x14] sm:$0xf]
      %v222 = vld [vmem:[%s201 + $0x18] sm:$0xf]
      %v223 = vld [vmem:[%s201 + $0x1c] sm:$0xf]
      %v224 = vld [vmem:[%s201 + $0x20] sm:$0xf]
      %v225 = vld [vmem:[%s201 + $0x24] sm:$0xf]
      %v226 = vld [vmem:[%s201 + $0x28] sm:$0xf]
      %v227 = vld [vmem:[%s201 + $0x2c] sm:$0xf]
      %v228 = vld [vmem:[%s201 + $0x30] sm:$0xf]
      %v229 = vld [vmem:[%s201 + $0x34] sm:$0xf]
      %v230 = vld [vmem:[%s201 + $0x38] sm:$0xf]
      %v231 = vld [vmem:[%s201 + $0x3c] sm:$0xf]
      %v232 = vld [vmem:[%s201 + $0x40] sm:$0xf]
      %v233 = vld [vmem:[%s201 + $0x44] sm:$0xf]
      %v234 = vld [vmem:[%s201 + $0x48] sm:$0xf]
      %v235 = vld [vmem:[%s201 + $0x4c] sm:$0xf]
      %v236 = vld [vmem:[%s201 + $0x50] sm:$0xf]
      %v237 = vld [vmem:[%s201 + $0x54] sm:$0xf]
      %v238 = vld [vmem:[%s201 + $0x58] sm:$0xf]
      %v239 = vld [vmem:[%s201 + $0x5c] sm:$0xf]
      %v240 = vld [vmem:[%s201 + $0x60] sm:$0xf]
      %v241 = vld [vmem:[%s201 + $0x64] sm:$0xf]
      %v242 = vld [vmem:[%s201 + $0x68] sm:$0xf]
      %v243 = vld [vmem:[%s201 + $0x6c] sm:$0xf]
      %v244 = vld [vmem:[%s201 + $0x70] sm:$0xf]
      %v245 = vld [vmem:[%s201 + $0x74] sm:$0xf]
      %v246 = vld [vmem:[%s201 + $0x78] sm:$0xf]
      %v247 = vld [vmem:[%s201 + $0x7c] sm:$0xf]
      %v248 = vld [vmem:[%s201 + $0x80] sm:$0xf]
      %v249 = vld [vmem:[%s201 + $0x84] sm:$0xf]
      %v250 = vld [vmem:[%s201 + $0x88] sm:$0xf]
      %v251 = vld [vmem:[%s201 + $0x8c] sm:$0xf]
      %v252 = vld [vmem:[%s201 + $0x90] sm:$0xf]
      %v253 = vld [vmem:[%s201 + $0x94] sm:$0xf]
      %v254 = vld [vmem:[%s201 + $0x98] sm:$0xf]
      %v255 = vld [vmem:[%s201 + $0x9c] sm:$0xf]
      %v256 = vld [vmem:[%s201 + $0xa0] sm:$0xf]
      %v257 = vld [vmem:[%s201 + $0xa4] sm:$0xf]
      %v258 = vld [vmem:[%s1] sm:$0xf]
      %v259 = vld [vmem:[%s2] sm:$0x1]
      %v261 = vlaneseq
      %v262 = vshrl.u32 %v261, 7
      %v263 = vsub.s32 0, %v262
      %v264 = vrot.slane %v259, %v263
      %v308 = vunpack.c.l.b16 %v216
      %v309 = vunpack.c.l.b16 %v217
      %v310 = vunpack.c.l.b16 %v218
      %v311 = vunpack.c.l.b16 %v219
      %v312 = vunpack.c.l.b16 %v220
      %v313 = vunpack.c.l.b16 %v221
      %v314 = vunpack.c.l.b16 %v222
      %v315 = vunpack.c.l.b16 %v223
      %v316 = vunpack.c.l.b16 %v224
      %v317 = vunpack.c.l.b16 %v225
      %v318 = vunpack.c.l.b16 %v226
      %v319 = vunpack.c.l.b16 %v227
      %v320 = vunpack.c.l.b16 %v228
      %v321 = vunpack.c.l.b16 %v229
      %v322 = vunpack.c.l.b16 %v230
      %v323 = vunpack.c.l.b16 %v231
      %v324 = vunpack.c.l.b16 %v232
      %v325 = vunpack.c.l.b16 %v233
      %v326 = vunpack.c.l.b16 %v234
      %v327 = vunpack.c.l.b16 %v235
      %v328 = vunpack.c.l.b16 %v236
      %v329 = vunpack.c.l.b16 %v237
      %v330 = vunpack.c.l.b16 %v238
      %v331 = vunpack.c.l.b16 %v239
      %v332 = vunpack.c.l.b16 %v240
      %v333 = vunpack.c.l.b16 %v241
      %v334 = vunpack.c.l.b16 %v242
      %v335 = vunpack.c.l.b16 %v243
      %v336 = vunpack.c.l.b16 %v244
      %v337 = vunpack.c.l.b16 %v245
      %v338 = vunpack.c.l.b16 %v246
      %v339 = vunpack.c.l.b16 %v247
      %v340 = vunpack.c.l.b16 %v248
      %v341 = vunpack.c.l.b16 %v249
      %v342 = vunpack.c.l.b16 %v250
      %v343 = vunpack.c.l.b16 %v251
      %v344 = vunpack.c.l.b16 %v252
      %v345 = vunpack.c.l.b16 %v253
      %v346 = vunpack.c.l.b16 %v254
      %v347 = vunpack.c.l.b16 %v255
      %v348 = vunpack.c.l.b16 %v256
      %v349 = vunpack.c.l.b16 %v257
      %v350 = vpack.c.b16 %v309, %v308
      %v351 = vpack.c.b16 %v311, %v310
      %v352 = vpack.c.b16 %v313, %v312
      %v353 = vpack.c.b16 %v315, %v314
      %v354 = vpack.c.b16 %v317, %v316
      %v355 = vpack.c.b16 %v319, %v318
      %v356 = vpack.c.b16 %v321, %v320
      %v357 = vpack.c.b16 %v323, %v322
      %v358 = vpack.c.b16 %v325, %v324
      %v359 = vpack.c.b16 %v327, %v326
      %v360 = vpack.c.b16 %v329, %v328
      %v361 = vpack.c.b16 %v331, %v330
      %v362 = vpack.c.b16 %v333, %v332
      %v363 = vpack.c.b16 %v335, %v334
      %v364 = vpack.c.b16 %v337, %v336
      %v365 = vpack.c.b16 %v339, %v338
      %v366 = vpack.c.b16 %v341, %v340
      %v367 = vpack.c.b16 %v343, %v342
      %v368 = vpack.c.b16 %v345, %v344
      %v369 = vpack.c.b16 %v347, %v346
      %v370 = vpack.c.b16 %v349, %v348
      %vm371 = vcmask 64512
      %v373 = vsel %vm371, %v350, 0
      %v376 = vsel %vm371, %v351, 0
      %v379 = vsel %vm371, %v352, 0
      %v382 = vsel %vm371, %v353, 0
      %v385 = vsel %vm371, %v354, 0
      %v388 = vsel %vm371, %v355, 0
      %v391 = vsel %vm371, %v356, 0
      %v394 = vsel %vm371, %v357, 0
      %v397 = vsel %vm371, %v358, 0
      %v400 = vsel %vm371, %v359, 0
      %v403 = vsel %vm371, %v360, 0
      %v406 = vsel %vm371, %v361, 0
      %v409 = vsel %vm371, %v362, 0
      %v412 = vsel %vm371, %v363, 0
      %v415 = vsel %vm371, %v364, 0
      %v418 = vsel %vm371, %v365, 0
      %v421 = vsel %vm371, %v366, 0
      %v424 = vsel %vm371, %v367, 0
      %v427 = vsel %vm371, %v368, 0
      %v430 = vsel %vm371, %v369, 0
      %v433 = vsel %vm371, %v370, 0
      %vm435 = vcmask 1043456
      %v437 = vsel %vm435, %v258, 0
      %439 = vmatprep.subr.bf16.mxu0 0
      %440 = vmatpush1.bf16.msra.mxu0 0
      %441 = vmatprep.subr.bf16.mxu0 0
      %442 = vmatpush1.bf16.msra.mxu0 0
      %443 = vmatprep.subr.bf16.mxu0 0
      %444 = vmatpush1.bf16.msra.mxu0 0
      %445 = vmatprep.subr.bf16.mxu0 0
      %446 = vmatpush1.bf16.msra.mxu0 0
      %447 = vmatprep.subr.bf16.mxu0 0
      %448 = vmatpush1.bf16.msra.mxu0 0
      %449 = vmatprep.subr.bf16.mxu0 0
      %450 = vmatpush1.bf16.msra.mxu0 0
      %451 = vmatprep.subr.bf16.mxu0 0
      %452 = vmatpush1.bf16.msra.mxu0 0
      %453 = vmatprep.subr.bf16.mxu0 0
      %454 = vmatpush1.bf16.msra.mxu0 %v437
      %455 = vmatprep.subr.bf16.mxu0 0
      %456 = vmatpush2.bf16.msra.mxu0 0
      %457 = vmatprep.subr.bf16.mxu0 0
      %458 = vmatpush2.bf16.msra.mxu0 0
      %459 = vmatprep.subr.bf16.mxu0 0
      %460 = vmatpush2.bf16.msra.mxu0 0
      %461 = vmatprep.subr.bf16.mxu0 0
      %462 = vmatpush2.bf16.msra.mxu0 0
      %463 = vmatprep.subr.bf16.mxu0 0
      %464 = vmatpush2.bf16.msra.mxu0 0
      %465 = vmatprep.subr.bf16.mxu0 0
      %466 = vmatpush2.bf16.msra.mxu0 0
      %467 = vmatprep.subr.bf16.mxu0 0
      %468 = vmatpush2.bf16.msra.mxu0 0
      %469 = vmatprep.subr.bf16.mxu0 0
      %470 = vmatpush2.bf16.msra.mxu0 0
      %471 = vmatprep.mubr.bf16.mxu0 0
      %472 = vmatmul.mubr.bf16.gmra.mxu0 %v373
      %v473 = vpop.f32.mrf.mxu0
      %v474 = vadd.f32 %v264, %v473
      %v475 = vpop.f32.mrf.mxu0
      %v476 = vpop.f32.mrf.mxu0
      %v477 = vadd.f32 %v264, %v476
      %v478 = vpop.f32.mrf.mxu0
      %479 = vmatprep.mubr.bf16.mxu0 0
      %480 = vmatmul.mubr.bf16.gmra.mxu0 %v376
      %v481 = vpop.f32.mrf.mxu0
      %v482 = vadd.f32 %v264, %v481
      %v483 = vpop.f32.mrf.mxu0
      %v484 = vpop.f32.mrf.mxu0
      %v485 = vadd.f32 %v264, %v484
      %v486 = vpop.f32.mrf.mxu0
      %487 = vmatprep.mubr.bf16.mxu0 0
      %488 = vmatmul.mubr.bf16.gmra.mxu0 %v379
      %v489 = vpop.f32.mrf.mxu0
      %v490 = vadd.f32 %v264, %v489
      %v491 = vpop.f32.mrf.mxu0
      %v492 = vpop.f32.mrf.mxu0
      %v493 = vadd.f32 %v264, %v492
      %v494 = vpop.f32.mrf.mxu0
      %495 = vmatprep.mubr.bf16.mxu0 0
      %496 = vmatmul.mubr.bf16.gmra.mxu0 %v382
      %v497 = vpop.f32.mrf.mxu0
      %v498 = vadd.f32 %v264, %v497
      %v499 = vpop.f32.mrf.mxu0
      %v500 = vpop.f32.mrf.mxu0
      %v501 = vadd.f32 %v264, %v500
      %v502 = vpop.f32.mrf.mxu0
      %503 = vmatprep.mubr.bf16.mxu0 0
      %504 = vmatmul.mubr.bf16.gmra.mxu0 %v385
      %v505 = vpop.f32.mrf.mxu0
      %v506 = vadd.f32 %v264, %v505
      %v507 = vpop.f32.mrf.mxu0
      %v508 = vpop.f32.mrf.mxu0
      %v509 = vadd.f32 %v264, %v508
      %v510 = vpop.f32.mrf.mxu0
      %511 = vmatprep.mubr.bf16.mxu0 0
      %512 = vmatmul.mubr.bf16.gmra.mxu0 %v388
      %v513 = vpop.f32.mrf.mxu0
      %v514 = vadd.f32 %v264, %v513
      %v515 = vpop.f32.mrf.mxu0
      %v516 = vpop.f32.mrf.mxu0
      %v517 = vadd.f32 %v264, %v516
      %v518 = vpop.f32.mrf.mxu0
      %519 = vmatprep.mubr.bf16.mxu0 0
      %520 = vmatmul.mubr.bf16.gmra.mxu0 %v391
      %v521 = vpop.f32.mrf.mxu0
      %v522 = vadd.f32 %v264, %v521
      %v523 = vpop.f32.mrf.mxu0
      %v524 = vpop.f32.mrf.mxu0
      %v525 = vadd.f32 %v264, %v524
      %v526 = vpop.f32.mrf.mxu0
      %527 = vmatprep.mubr.bf16.mxu0 0
      %528 = vmatmul.mubr.bf16.gmra.mxu0 %v394
      %v529 = vpop.f32.mrf.mxu0
      %v530 = vadd.f32 %v264, %v529
      %v531 = vpop.f32.mrf.mxu0
      %v532 = vpop.f32.mrf.mxu0
      %v533 = vadd.f32 %v264, %v532
      %v534 = vpop.f32.mrf.mxu0
      %535 = vmatprep.mubr.bf16.mxu0 0
      %536 = vmatmul.mubr.bf16.gmra.mxu0 %v397
      %v537 = vpop.f32.mrf.mxu0
      %v538 = vadd.f32 %v264, %v537
      %v539 = vpop.f32.mrf.mxu0
      %v540 = vpop.f32.mrf.mxu0
      %v541 = vadd.f32 %v264, %v540
      %v542 = vpop.f32.mrf.mxu0
      %543 = vmatprep.mubr.bf16.mxu0 0
      %544 = vmatmul.mubr.bf16.gmra.mxu0 %v400
      %v545 = vpop.f32.mrf.mxu0
      %v546 = vadd.f32 %v264, %v545
      %v547 = vpop.f32.mrf.mxu0
      %v548 = vpop.f32.mrf.mxu0
      %v549 = vadd.f32 %v264, %v548
      %v550 = vpop.f32.mrf.mxu0
      %551 = vmatprep.mubr.bf16.mxu0 0
      %552 = vmatmul.mubr.bf16.gmra.mxu0 %v403
      %v553 = vpop.f32.mrf.mxu0
      %v554 = vadd.f32 %v264, %v553
      %v555 = vpop.f32.mrf.mxu0
      %v556 = vpop.f32.mrf.mxu0
      %v557 = vadd.f32 %v264, %v556
      %v558 = vpop.f32.mrf.mxu0
      %559 = vmatprep.mubr.bf16.mxu0 0
      %560 = vmatmul.mubr.bf16.gmra.mxu0 %v406
      %v561 = vpop.f32.mrf.mxu0
      %v562 = vadd.f32 %v264, %v561
      %v563 = vpop.f32.mrf.mxu0
      %v564 = vpop.f32.mrf.mxu0
      %v565 = vadd.f32 %v264, %v564
      %v566 = vpop.f32.mrf.mxu0
      %567 = vmatprep.mubr.bf16.mxu0 0
      %568 = vmatmul.mubr.bf16.gmra.mxu0 %v409
      %v569 = vpop.f32.mrf.mxu0
      %v570 = vadd.f32 %v264, %v569
      %v571 = vpop.f32.mrf.mxu0
      %v572 = vpop.f32.mrf.mxu0
      %v573 = vadd.f32 %v264, %v572
      %v574 = vpop.f32.mrf.mxu0
      %575 = vmatprep.mubr.bf16.mxu0 0
      %576 = vmatmul.mubr.bf16.gmra.mxu0 %v412
      %v577 = vpop.f32.mrf.mxu0
      %v578 = vadd.f32 %v264, %v577
      %v579 = vpop.f32.mrf.mxu0
      %v580 = vpop.f32.mrf.mxu0
      %v581 = vadd.f32 %v264, %v580
      %v582 = vpop.f32.mrf.mxu0
      %583 = vmatprep.mubr.bf16.mxu0 0
      %584 = vmatmul.mubr.bf16.gmra.mxu0 %v415
      %v585 = vpop.f32.mrf.mxu0
      %v586 = vadd.f32 %v264, %v585
      %v587 = vpop.f32.mrf.mxu0
      %v588 = vpop.f32.mrf.mxu0
      %v589 = vadd.f32 %v264, %v588
      %v590 = vpop.f32.mrf.mxu0
      %591 = vmatprep.mubr.bf16.mxu0 0
      %592 = vmatmul.mubr.bf16.gmra.mxu0 %v418
      %v593 = vpop.f32.mrf.mxu0
      %v594 = vadd.f32 %v264, %v593
      %v595 = vpop.f32.mrf.mxu0
      %v596 = vpop.f32.mrf.mxu0
      %v597 = vadd.f32 %v264, %v596
      %v598 = vpop.f32.mrf.mxu0
      %599 = vmatprep.mubr.bf16.mxu0 0
      %600 = vmatmul.mubr.bf16.gmra.mxu0 %v421
      %v601 = vpop.f32.mrf.mxu0
      %v602 = vadd.f32 %v264, %v601
      %v603 = vpop.f32.mrf.mxu0
      %v604 = vpop.f32.mrf.mxu0
      %v605 = vadd.f32 %v264, %v604
      %v606 = vpop.f32.mrf.mxu0
      %607 = vmatprep.mubr.bf16.mxu0 0
      %608 = vmatmul.mubr.bf16.gmra.mxu0 %v424
      %v609 = vpop.f32.mrf.mxu0
      %v610 = vadd.f32 %v264, %v609
      %v611 = vpop.f32.mrf.mxu0
      %v612 = vpop.f32.mrf.mxu0
      %v613 = vadd.f32 %v264, %v612
      %v614 = vpop.f32.mrf.mxu0
      %615 = vmatprep.mubr.bf16.mxu0 0
      %616 = vmatmul.mubr.bf16.gmra.mxu0 %v427
      %v617 = vpop.f32.mrf.mxu0
      %v618 = vadd.f32 %v264, %v617
      %v619 = vpop.f32.mrf.mxu0
      %v620 = vpop.f32.mrf.mxu0
      %v621 = vadd.f32 %v264, %v620
      %v622 = vpop.f32.mrf.mxu0
      %623 = vmatprep.mubr.bf16.mxu0 0
      %624 = vmatmul.mubr.bf16.gmra.mxu0 %v430
      %v625 = vpop.f32.mrf.mxu0
      %v626 = vadd.f32 %v264, %v625
      %v627 = vpop.f32.mrf.mxu0
      %v628 = vpop.f32.mrf.mxu0
      %v629 = vadd.f32 %v264, %v628
      %v630 = vpop.f32.mrf.mxu0
      %631 = vmatprep.mubr.bf16.mxu0 0
      %632 = vmatmul.mubr.bf16.gmra.mxu0 %v433
      %v633 = vpop.f32.mrf.mxu0
      %v634 = vadd.f32 %v264, %v633
      %v635 = vpop.f32.mrf.mxu0
      %v636 = vpop.f32.mrf.mxu0
      %v637 = vadd.f32 %v264, %v636
      %v638 = vpop.f32.mrf.mxu0
      %639 = vdwg.mxu0
      %v640 = vsub.f32 0.0, %v474
      %v641 = vsub.f32 0.0, %v477
      %v642 = vsub.f32 0.0, %v482
      %v643 = vsub.f32 0.0, %v485
      %v644 = vsub.f32 0.0, %v490
      %v645 = vsub.f32 0.0, %v493
      %v646 = vsub.f32 0.0, %v498
      %v647 = vsub.f32 0.0, %v501
      %v648 = vsub.f32 0.0, %v506
      %v649 = vsub.f32 0.0, %v509
      %v650 = vsub.f32 0.0, %v514
      %v651 = vsub.f32 0.0, %v517
      %v652 = vsub.f32 0.0, %v522
      %v653 = vsub.f32 0.0, %v525
      %v654 = vsub.f32 0.0, %v530
      %v655 = vsub.f32 0.0, %v533
      %v656 = vsub.f32 0.0, %v538
      %v657 = vsub.f32 0.0, %v541
      %v658 = vsub.f32 0.0, %v546
      %v659 = vsub.f32 0.0, %v549
      %v660 = vsub.f32 0.0, %v554
      %v661 = vsub.f32 0.0, %v557
      %v662 = vsub.f32 0.0, %v562
      %v663 = vsub.f32 0.0, %v565
      %v664 = vsub.f32 0.0, %v570
      %v665 = vsub.f32 0.0, %v573
      %v666 = vsub.f32 0.0, %v578
      %v667 = vsub.f32 0.0, %v581
      %v668 = vsub.f32 0.0, %v586
      %v669 = vsub.f32 0.0, %v589
      %v670 = vsub.f32 0.0, %v594
      %v671 = vsub.f32 0.0, %v597
      %v672 = vsub.f32 0.0, %v602
      %v673 = vsub.f32 0.0, %v605
      %v674 = vsub.f32 0.0, %v610
      %v675 = vsub.f32 0.0, %v613
      %v676 = vsub.f32 0.0, %v618
      %v677 = vsub.f32 0.0, %v621
      %v678 = vsub.f32 0.0, %v626
      %v679 = vsub.f32 0.0, %v629
      %v680 = vsub.f32 0.0, %v634
      %v681 = vsub.f32 0.0, %v637
      %v682 = vmul.f32 %v640, 1.442695
      %v683 = vpow.pop %v682
      %v684 = vmul.f32 %v641, 1.442695
      %v685 = vpow.pop %v684
      %v686 = vmul.f32 %v642, 1.442695
      %v687 = vpow.pop %v686
      %v688 = vmul.f32 %v643, 1.442695
      %v689 = vpow.pop %v688
      %v690 = vmul.f32 %v644, 1.442695
      %v691 = vpow.pop %v690
      %v692 = vmul.f32 %v645, 1.442695
      %v693 = vpow.pop %v692
      %v694 = vmul.f32 %v646, 1.442695
      %v695 = vpow.pop %v694
      %v696 = vmul.f32 %v647, 1.442695
      %v697 = vpow.pop %v696
      %v698 = vmul.f32 %v648, 1.442695
      %v699 = vpow.pop %v698
      %v700 = vmul.f32 %v649, 1.442695
      %v701 = vpow.pop %v700
      %v702 = vmul.f32 %v650, 1.442695
      %v703 = vpow.pop %v702
      %v704 = vmul.f32 %v651, 1.442695
      %v705 = vpow.pop %v704
      %v706 = vmul.f32 %v652, 1.442695
      %v707 = vpow.pop %v706
      %v708 = vmul.f32 %v653, 1.442695
      %v709 = vpow.pop %v708
      %v710 = vmul.f32 %v654, 1.442695
      %v711 = vpow.pop %v710
      %v712 = vmul.f32 %v655, 1.442695
      %v713 = vpow.pop %v712
      %v714 = vmul.f32 %v656, 1.442695
      %v715 = vpow.pop %v714
      %v716 = vmul.f32 %v657, 1.442695
      %v717 = vpow.pop %v716
      %v718 = vmul.f32 %v658, 1.442695
      %v719 = vpow.pop %v718
      %v720 = vmul.f32 %v659, 1.442695
      %v721 = vpow.pop %v720
      %v722 = vmul.f32 %v660, 1.442695
      %v723 = vpow.pop %v722
      %v724 = vmul.f32 %v661, 1.442695
      %v725 = vpow.pop %v724
      %v726 = vmul.f32 %v662, 1.442695
      %v727 = vpow.pop %v726
      %v728 = vmul.f32 %v663, 1.442695
      %v729 = vpow.pop %v728
      %v730 = vmul.f32 %v664, 1.442695
      %v731 = vpow.pop %v730
      %v732 = vmul.f32 %v665, 1.442695
      %v733 = vpow.pop %v732
      %v734 = vmul.f32 %v666, 1.442695
      %v735 = vpow.pop %v734
      %v736 = vmul.f32 %v667, 1.442695
      %v737 = vpow.pop %v736
      %v738 = vmul.f32 %v668, 1.442695
      %v739 = vpow.pop %v738
      %v740 = vmul.f32 %v669, 1.442695
      %v741 = vpow.pop %v740
      %v742 = vmul.f32 %v670, 1.442695
      %v743 = vpow.pop %v742
      %v744 = vmul.f32 %v671, 1.442695
      %v745 = vpow.pop %v744
      %v746 = vmul.f32 %v672, 1.442695
      %v747 = vpow.pop %v746
      %v748 = vmul.f32 %v673, 1.442695
      %v749 = vpow.pop %v748
      %v750 = vmul.f32 %v674, 1.442695
      %v751 = vpow.pop %v750
      %v752 = vmul.f32 %v675, 1.442695
      %v753 = vpow.pop %v752
      %v754 = vmul.f32 %v676, 1.442695
      %v755 = vpow.pop %v754
      %v756 = vmul.f32 %v677, 1.442695
      %v757 = vpow.pop %v756
      %v758 = vmul.f32 %v678, 1.442695
      %v759 = vpow.pop %v758
      %v760 = vmul.f32 %v679, 1.442695
      %v761 = vpow.pop %v760
      %v762 = vmul.f32 %v680, 1.442695
      %v763 = vpow.pop %v762
      %v764 = vmul.f32 %v681, 1.442695
      %v765 = vpow.pop %v764
      %v766 = vadd.f32 %v683, 1.0
      %v767 = vadd.f32 %v685, 1.0
      %v768 = vadd.f32 %v687, 1.0
      %v769 = vadd.f32 %v689, 1.0
      %v770 = vadd.f32 %v691, 1.0
      %v771 = vadd.f32 %v693, 1.0
      %v772 = vadd.f32 %v695, 1.0
      %v773 = vadd.f32 %v697, 1.0
      %v774 = vadd.f32 %v699, 1.0
      %v775 = vadd.f32 %v701, 1.0
      %v776 = vadd.f32 %v703, 1.0
      %v777 = vadd.f32 %v705, 1.0
      %v778 = vadd.f32 %v707, 1.0
      %v779 = vadd.f32 %v709, 1.0
      %v780 = vadd.f32 %v711, 1.0
      %v781 = vadd.f32 %v713, 1.0
      %v782 = vadd.f32 %v715, 1.0
      %v783 = vadd.f32 %v717, 1.0
      %v784 = vadd.f32 %v719, 1.0
      %v785 = vadd.f32 %v721, 1.0
      %v786 = vadd.f32 %v723, 1.0
      %v787 = vadd.f32 %v725, 1.0
      %v788 = vadd.f32 %v727, 1.0
      %v789 = vadd.f32 %v729, 1.0
      %v790 = vadd.f32 %v731, 1.0
      %v791 = vadd.f32 %v733, 1.0
      %v792 = vadd.f32 %v735, 1.0
      %v793 = vadd.f32 %v737, 1.0
      %v794 = vadd.f32 %v739, 1.0
      %v795 = vadd.f32 %v741, 1.0
      %v796 = vadd.f32 %v743, 1.0
      %v797 = vadd.f32 %v745, 1.0
      %v798 = vadd.f32 %v747, 1.0
      %v799 = vadd.f32 %v749, 1.0
      %v800 = vadd.f32 %v751, 1.0
      %v801 = vadd.f32 %v753, 1.0
      %v802 = vadd.f32 %v755, 1.0
      %v803 = vadd.f32 %v757, 1.0
      %v804 = vadd.f32 %v759, 1.0
      %v805 = vadd.f32 %v761, 1.0
      %v806 = vadd.f32 %v763, 1.0
      %v807 = vadd.f32 %v765, 1.0
      %v808 = vrcp.pop %v766
      %v809 = vrcp.pop %v767
      %v810 = vrcp.pop %v768
      %v811 = vrcp.pop %v769
      %v812 = vrcp.pop %v770
      %v813 = vrcp.pop %v771
      %v814 = vrcp.pop %v772
      %v815 = vrcp.pop %v773
      %v816 = vrcp.pop %v774
      %v817 = vrcp.pop %v775
      %v818 = vrcp.pop %v776
      %v819 = vrcp.pop %v777
      %v820 = vrcp.pop %v778
      %v821 = vrcp.pop %v779
      %v822 = vrcp.pop %v780
      %v823 = vrcp.pop %v781
      %v824 = vrcp.pop %v782
      %v825 = vrcp.pop %v783
      %v826 = vrcp.pop %v784
      %v827 = vrcp.pop %v785
      %v828 = vrcp.pop %v786
      %v829 = vrcp.pop %v787
      %v830 = vrcp.pop %v788
      %v831 = vrcp.pop %v789
      %v832 = vrcp.pop %v790
      %v833 = vrcp.pop %v791
      %v834 = vrcp.pop %v792
      %v835 = vrcp.pop %v793
      %v836 = vrcp.pop %v794
      %v837 = vrcp.pop %v795
      %v838 = vrcp.pop %v796
      %v839 = vrcp.pop %v797
      %v840 = vrcp.pop %v798
      %v841 = vrcp.pop %v799
      %v842 = vrcp.pop %v800
      %v843 = vrcp.pop %v801
      %v844 = vrcp.pop %v802
      %v845 = vrcp.pop %v803
      %v846 = vrcp.pop %v804
      %v847 = vrcp.pop %v805
      %v848 = vrcp.pop %v806
      %v849 = vrcp.pop %v807
      %v850 = vmul.f32 %v474, %v808
      %v851 = vmul.f32 %v477, %v809
      %v852 = vmul.f32 %v482, %v810
      %v853 = vmul.f32 %v485, %v811
      %v854 = vmul.f32 %v490, %v812
      %v855 = vmul.f32 %v493, %v813
      %v856 = vmul.f32 %v498, %v814
      %v857 = vmul.f32 %v501, %v815
      %v858 = vmul.f32 %v506, %v816
      %v859 = vmul.f32 %v509, %v817
      %v860 = vmul.f32 %v514, %v818
      %v861 = vmul.f32 %v517, %v819
      %v862 = vmul.f32 %v522, %v820
      %v863 = vmul.f32 %v525, %v821
      %v864 = vmul.f32 %v530, %v822
      %v865 = vmul.f32 %v533, %v823
      %v866 = vmul.f32 %v538, %v824
      %v867 = vmul.f32 %v541, %v825
      %v868 = vmul.f32 %v546, %v826
      %v869 = vmul.f32 %v549, %v827
      %v870 = vmul.f32 %v554, %v828
      %v871 = vmul.f32 %v557, %v829
      %v872 = vmul.f32 %v562, %v830
      %v873 = vmul.f32 %v565, %v831
      %v874 = vmul.f32 %v570, %v832
      %v875 = vmul.f32 %v573, %v833
      %v876 = vmul.f32 %v578, %v834
      %v877 = vmul.f32 %v581, %v835
      %v878 = vmul.f32 %v586, %v836
      %v879 = vmul.f32 %v589, %v837
      %v880 = vmul.f32 %v594, %v838
      %v881 = vmul.f32 %v597, %v839
      %v882 = vmul.f32 %v602, %v840
      %v883 = vmul.f32 %v605, %v841
      %v884 = vmul.f32 %v610, %v842
      %v885 = vmul.f32 %v613, %v843
      %v886 = vmul.f32 %v618, %v844
      %v887 = vmul.f32 %v621, %v845
      %v888 = vmul.f32 %v626, %v846
      %v889 = vmul.f32 %v629, %v847
      %v890 = vmul.f32 %v634, %v848
      %v891 = vmul.f32 %v637, %v849
      %v892 = vpack.c.bf16 %v851, %v850
      %v893 = vpack.c.bf16 %v853, %v852
      %v894 = vpack.c.bf16 %v855, %v854
      %v895 = vpack.c.bf16 %v857, %v856
      %v896 = vpack.c.bf16 %v859, %v858
      %v897 = vpack.c.bf16 %v861, %v860
      %v898 = vpack.c.bf16 %v863, %v862
      %v899 = vpack.c.bf16 %v865, %v864
      %v900 = vpack.c.bf16 %v867, %v866
      %v901 = vpack.c.bf16 %v869, %v868
      %v902 = vpack.c.bf16 %v871, %v870
      %v903 = vpack.c.bf16 %v873, %v872
      %v904 = vpack.c.bf16 %v875, %v874
      %v905 = vpack.c.bf16 %v877, %v876
      %v906 = vpack.c.bf16 %v879, %v878
      %v907 = vpack.c.bf16 %v881, %v880
      %v908 = vpack.c.bf16 %v883, %v882
      %v909 = vpack.c.bf16 %v885, %v884
      %v910 = vpack.c.bf16 %v887, %v886
      %v911 = vpack.c.bf16 %v889, %v888
      %v912 = vpack.c.bf16 %v891, %v890
      %v934 = vunpack.c.l.b16 %v892
      %v935 = vunpack.c.h.b16 %v892
      %v936 = vunpack.c.l.b16 %v893
      %v937 = vunpack.c.h.b16 %v893
      %v938 = vunpack.c.l.b16 %v894
      %v939 = vunpack.c.h.b16 %v894
      %v940 = vunpack.c.l.b16 %v895
      %v941 = vunpack.c.h.b16 %v895
      %v942 = vunpack.c.l.b16 %v896
      %v943 = vunpack.c.h.b16 %v896
      %v944 = vunpack.c.l.b16 %v897
      %v945 = vunpack.c.h.b16 %v897
      %v946 = vunpack.c.l.b16 %v898
      %v947 = vunpack.c.h.b16 %v898
      %v948 = vunpack.c.l.b16 %v899
      %v949 = vunpack.c.h.b16 %v899
      %v950 = vunpack.c.l.b16 %v900
      %v951 = vunpack.c.h.b16 %v900
      %v952 = vunpack.c.l.b16 %v901
      %v953 = vunpack.c.h.b16 %v901
      %v954 = vunpack.c.l.b16 %v902
      %v955 = vunpack.c.h.b16 %v902
      %v956 = vunpack.c.l.b16 %v903
      %v957 = vunpack.c.h.b16 %v903
      %v958 = vunpack.c.l.b16 %v904
      %v959 = vunpack.c.h.b16 %v904
      %v960 = vunpack.c.l.b16 %v905
      %v961 = vunpack.c.h.b16 %v905
      %v962 = vunpack.c.l.b16 %v906
      %v963 = vunpack.c.h.b16 %v906
      %v964 = vunpack.c.l.b16 %v907
      %v965 = vunpack.c.h.b16 %v907
      %v966 = vunpack.c.l.b16 %v908
      %v967 = vunpack.c.h.b16 %v908
      %v968 = vunpack.c.l.b16 %v909
      %v969 = vunpack.c.h.b16 %v909
      %v970 = vunpack.c.l.b16 %v910
      %v971 = vunpack.c.h.b16 %v910
      %v972 = vunpack.c.l.b16 %v911
      %v973 = vunpack.c.h.b16 %v911
      %v974 = vunpack.c.l.b16 %v912
      %v975 = vunpack.c.h.b16 %v912
      %v976 = vpack.c.b16 %v934, %v934
      %v977 = vpack.c.b16 %v935, %v935
      %v978 = vpack.c.b16 %v936, %v936
      %v979 = vpack.c.b16 %v937, %v937
      %v980 = vpack.c.b16 %v938, %v938
      %v981 = vpack.c.b16 %v939, %v939
      %v982 = vpack.c.b16 %v940, %v940
      %v983 = vpack.c.b16 %v941, %v941
      %v984 = vpack.c.b16 %v942, %v942
      %v985 = vpack.c.b16 %v943, %v943
      %v986 = vpack.c.b16 %v944, %v944
      %v987 = vpack.c.b16 %v945, %v945
      %v988 = vpack.c.b16 %v946, %v946
      %v989 = vpack.c.b16 %v947, %v947
      %v990 = vpack.c.b16 %v948, %v948
      %v991 = vpack.c.b16 %v949, %v949
      %v992 = vpack.c.b16 %v950, %v950
      %v993 = vpack.c.b16 %v951, %v951
      %v994 = vpack.c.b16 %v952, %v952
      %v995 = vpack.c.b16 %v953, %v953
      %v996 = vpack.c.b16 %v954, %v954
      %v997 = vpack.c.b16 %v955, %v955
      %v998 = vpack.c.b16 %v956, %v956
      %v999 = vpack.c.b16 %v957, %v957
      %v1000 = vpack.c.b16 %v958, %v958
      %v1001 = vpack.c.b16 %v959, %v959
      %v1002 = vpack.c.b16 %v960, %v960
      %v1003 = vpack.c.b16 %v961, %v961
      %v1004 = vpack.c.b16 %v962, %v962
      %v1005 = vpack.c.b16 %v963, %v963
      %v1006 = vpack.c.b16 %v964, %v964
      %v1007 = vpack.c.b16 %v965, %v965
      %v1008 = vpack.c.b16 %v966, %v966
      %v1009 = vpack.c.b16 %v967, %v967
      %v1010 = vpack.c.b16 %v968, %v968
      %v1011 = vpack.c.b16 %v969, %v969
      %v1012 = vpack.c.b16 %v970, %v970
      %v1013 = vpack.c.b16 %v971, %v971
      %v1014 = vpack.c.b16 %v972, %v972
      %v1015 = vpack.c.b16 %v973, %v973
      %v1016 = vpack.c.b16 %v974, %v974
      %v1017 = vpack.c.b16 %v975, %v975
      %vm1060 = vcmask 27648
      %1061 = vst.msk [vmem:[%s207] sm:$0xf] %vm1060, %v976
      %1062 = vst.msk [vmem:[%s207 + $0x4] sm:$0xf] %vm1060, %v977
      %1063 = vst.msk [vmem:[%s207 + $0x8] sm:$0xf] %vm1060, %v978
      %1064 = vst.msk [vmem:[%s207 + $0xc] sm:$0xf] %vm1060, %v979
      %1065 = vst.msk [vmem:[%s207 + $0x10] sm:$0xf] %vm1060, %v980
      %1066 = vst.msk [vmem:[%s207 + $0x14] sm:$0xf] %vm1060, %v981
      %1067 = vst.msk [vmem:[%s207 + $0x18] sm:$0xf] %vm1060, %v982
      %1068 = vst.msk [vmem:[%s207 + $0x1c] sm:$0xf] %vm1060, %v983
      %1069 = vst.msk [vmem:[%s207 + $0x20] sm:$0xf] %vm1060, %v984
      %1070 = vst.msk [vmem:[%s207 + $0x24] sm:$0xf] %vm1060, %v985
      %1071 = vst.msk [vmem:[%s207 + $0x28] sm:$0xf] %vm1060, %v986
      %1072 = vst.msk [vmem:[%s207 + $0x2c] sm:$0xf] %vm1060, %v987
      %1073 = vst.msk [vmem:[%s207 + $0x30] sm:$0xf] %vm1060, %v988
      %1074 = vst.msk [vmem:[%s207 + $0x34] sm:$0xf] %vm1060, %v989
      %1075 = vst.msk [vmem:[%s207 + $0x38] sm:$0xf] %vm1060, %v990
      %1076 = vst.msk [vmem:[%s207 + $0x3c] sm:$0xf] %vm1060, %v991
      %1077 = vst.msk [vmem:[%s207 + $0x40] sm:$0xf] %vm1060, %v992
      %1078 = vst.msk [vmem:[%s207 + $0x44] sm:$0xf] %vm1060, %v993
      %1079 = vst.msk [vmem:[%s207 + $0x48] sm:$0xf] %vm1060, %v994
      %1080 = vst.msk [vmem:[%s207 + $0x4c] sm:$0xf] %vm1060, %v995
      %1081 = vst.msk [vmem:[%s207 + $0x50] sm:$0xf] %vm1060, %v996
      %1082 = vst.msk [vmem:[%s207 + $0x54] sm:$0xf] %vm1060, %v997
      %1083 = vst.msk [vmem:[%s207 + $0x58] sm:$0xf] %vm1060, %v998
      %1084 = vst.msk [vmem:[%s207 + $0x5c] sm:$0xf] %vm1060, %v999
      %1085 = vst.msk [vmem:[%s207 + $0x60] sm:$0xf] %vm1060, %v1000
      %1086 = vst.msk [vmem:[%s207 + $0x64] sm:$0xf] %vm1060, %v1001
      %1087 = vst.msk [vmem:[%s207 + $0x68] sm:$0xf] %vm1060, %v1002
      %1088 = vst.msk [vmem:[%s207 + $0x6c] sm:$0xf] %vm1060, %v1003
      %1089 = vst.msk [vmem:[%s207 + $0x70] sm:$0xf] %vm1060, %v1004
      %1090 = vst.msk [vmem:[%s207 + $0x74] sm:$0xf] %vm1060, %v1005
      %1091 = vst.msk [vmem:[%s207 + $0x78] sm:$0xf] %vm1060, %v1006
      %1092 = vst.msk [vmem:[%s207 + $0x7c] sm:$0xf] %vm1060, %v1007
      %1093 = vst.msk [vmem:[%s207 + $0x80] sm:$0xf] %vm1060, %v1008
      %1094 = vst.msk [vmem:[%s207 + $0x84] sm:$0xf] %vm1060, %v1009
      %1095 = vst.msk [vmem:[%s207 + $0x88] sm:$0xf] %vm1060, %v1010
      %1096 = vst.msk [vmem:[%s207 + $0x8c] sm:$0xf] %vm1060, %v1011
      %1097 = vst.msk [vmem:[%s207 + $0x90] sm:$0xf] %vm1060, %v1012
      %1098 = vst.msk [vmem:[%s207 + $0x94] sm:$0xf] %vm1060, %v1013
      %1099 = vst.msk [vmem:[%s207 + $0x98] sm:$0xf] %vm1060, %v1014
      %1100 = vst.msk [vmem:[%s207 + $0x9c] sm:$0xf] %vm1060, %v1015
      %1101 = vst.msk [vmem:[%s207 + $0xa0] sm:$0xf] %vm1060, %v1016
      %1102 = vst.msk [vmem:[%s207 + $0xa4] sm:$0xf] %vm1060, %v1017
      %1103 = vrot.lane.b32.xlu0 %v976, 124
      %v1104 = vpop.permute.xlu0 %1103
      %1105 = vrot.lane.b32.xlu0 %v977, 124
      %v1106 = vpop.permute.xlu0 %1105
      %1107 = vrot.lane.b32.xlu0 %v978, 124
      %v1108 = vpop.permute.xlu0 %1107
      %1109 = vrot.lane.b32.xlu0 %v979, 124
      %v1110 = vpop.permute.xlu0 %1109
      %1111 = vrot.lane.b32.xlu0 %v980, 124
      %v1112 = vpop.permute.xlu0 %1111
      %1113 = vrot.lane.b32.xlu0 %v981, 124
      %v1114 = vpop.permute.xlu0 %1113
      %1115 = vrot.lane.b32.xlu0 %v982, 124
      %v1116 = vpop.permute.xlu0 %1115
      %1117 = vrot.lane.b32.xlu0 %v983, 124
      %v1118 = vpop.permute.xlu0 %1117
      %1119 = vrot.lane.b32.xlu0 %v984, 124
      %v1120 = vpop.permute.xlu0 %1119
      %1121 = vrot.lane.b32.xlu0 %v985, 124
      %v1122 = vpop.permute.xlu0 %1121
      %1123 = vrot.lane.b32.xlu0 %v986, 124
      %v1124 = vpop.permute.xlu0 %1123
      %1125 = vrot.lane.b32.xlu0 %v987, 124
      %v1126 = vpop.permute.xlu0 %1125
      %1127 = vrot.lane.b32.xlu0 %v988, 124
      %v1128 = vpop.permute.xlu0 %1127
      %1129 = vrot.lane.b32.xlu0 %v989, 124
      %v1130 = vpop.permute.xlu0 %1129
      %1131 = vrot.lane.b32.xlu0 %v990, 124
      %v1132 = vpop.permute.xlu0 %1131
      %1133 = vrot.lane.b32.xlu0 %v991, 124
      %v1134 = vpop.permute.xlu0 %1133
      %1135 = vrot.lane.b32.xlu0 %v992, 124
      %v1136 = vpop.permute.xlu0 %1135
      %1137 = vrot.lane.b32.xlu0 %v993, 124
      %v1138 = vpop.permute.xlu0 %1137
      %1139 = vrot.lane.b32.xlu0 %v994, 124
      %v1140 = vpop.permute.xlu0 %1139
      %1141 = vrot.lane.b32.xlu0 %v995, 124
      %v1142 = vpop.permute.xlu0 %1141
      %1143 = vrot.lane.b32.xlu0 %v996, 124
      %v1144 = vpop.permute.xlu0 %1143
      %1145 = vrot.lane.b32.xlu0 %v997, 124
      %v1146 = vpop.permute.xlu0 %1145
      %1147 = vrot.lane.b32.xlu0 %v998, 124
      %v1148 = vpop.permute.xlu0 %1147
      %1149 = vrot.lane.b32.xlu0 %v999, 124
      %v1150 = vpop.permute.xlu0 %1149
      %1151 = vrot.lane.b32.xlu0 %v1000, 124
      %v1152 = vpop.permute.xlu0 %1151
      %1153 = vrot.lane.b32.xlu0 %v1001, 124
      %v1154 = vpop.permute.xlu0 %1153
      %1155 = vrot.lane.b32.xlu0 %v1002, 124
      %v1156 = vpop.permute.xlu0 %1155
      %1157 = vrot.lane.b32.xlu0 %v1003, 124
      %v1158 = vpop.permute.xlu0 %1157
      %1159 = vrot.lane.b32.xlu0 %v1004, 124
      %v1160 = vpop.permute.xlu0 %1159
      %1161 = vrot.lane.b32.xlu0 %v1005, 124
      %v1162 = vpop.permute.xlu0 %1161
      %1163 = vrot.lane.b32.xlu0 %v1006, 124
      %v1164 = vpop.permute.xlu0 %1163
      %1165 = vrot.lane.b32.xlu0 %v1007, 124
      %v1166 = vpop.permute.xlu0 %1165
      %1167 = vrot.lane.b32.xlu0 %v1008, 124
      %v1168 = vpop.permute.xlu0 %1167
      %1169 = vrot.lane.b32.xlu0 %v1009, 124
      %v1170 = vpop.permute.xlu0 %1169
      %1171 = vrot.lane.b32.xlu0 %v1010, 124
      %v1172 = vpop.permute.xlu0 %1171
      %1173 = vrot.lane.b32.xlu0 %v1011, 124
      %v1174 = vpop.permute.xlu0 %1173
      %1175 = vrot.lane.b32.xlu0 %v1012, 124
      %v1176 = vpop.permute.xlu0 %1175
      %1177 = vrot.lane.b32.xlu0 %v1013, 124
      %v1178 = vpop.permute.xlu0 %1177
      %1179 = vrot.lane.b32.xlu0 %v1014, 124
      %v1180 = vpop.permute.xlu0 %1179
      %1181 = vrot.lane.b32.xlu0 %v1015, 124
      %v1182 = vpop.permute.xlu0 %1181
      %1183 = vrot.lane.b32.xlu0 %v1016, 124
      %v1184 = vpop.permute.xlu0 %1183
      %1185 = vrot.lane.b32.xlu0 %v1017, 124
      %v1186 = vpop.permute.xlu0 %1185
      %1229 = vst.msk [vmem:[%s213] sm:$0xf] %vm1060, %v1104
      %1230 = vst.msk [vmem:[%s213 + $0x4] sm:$0xf] %vm1060, %v1106
      %1231 = vst.msk [vmem:[%s213 + $0x8] sm:$0xf] %vm1060, %v1108
      %1232 = vst.msk [vmem:[%s213 + $0xc] sm:$0xf] %vm1060, %v1110
      %1233 = vst.msk [vmem:[%s213 + $0x10] sm:$0xf] %vm1060, %v1112
      %1234 = vst.msk [vmem:[%s213 + $0x14] sm:$0xf] %vm1060, %v1114
      %1235 = vst.msk [vmem:[%s213 + $0x18] sm:$0xf] %vm1060, %v1116
      %1236 = vst.msk [vmem:[%s213 + $0x1c] sm:$0xf] %vm1060, %v1118
      %1237 = vst.msk [vmem:[%s213 + $0x20] sm:$0xf] %vm1060, %v1120
      %1238 = vst.msk [vmem:[%s213 + $0x24] sm:$0xf] %vm1060, %v1122
      %1239 = vst.msk [vmem:[%s213 + $0x28] sm:$0xf] %vm1060, %v1124
      %1240 = vst.msk [vmem:[%s213 + $0x2c] sm:$0xf] %vm1060, %v1126
      %1241 = vst.msk [vmem:[%s213 + $0x30] sm:$0xf] %vm1060, %v1128
      %1242 = vst.msk [vmem:[%s213 + $0x34] sm:$0xf] %vm1060, %v1130
      %1243 = vst.msk [vmem:[%s213 + $0x38] sm:$0xf] %vm1060, %v1132
      %1244 = vst.msk [vmem:[%s213 + $0x3c] sm:$0xf] %vm1060, %v1134
      %1245 = vst.msk [vmem:[%s213 + $0x40] sm:$0xf] %vm1060, %v1136
      %1246 = vst.msk [vmem:[%s213 + $0x44] sm:$0xf] %vm1060, %v1138
      %1247 = vst.msk [vmem:[%s213 + $0x48] sm:$0xf] %vm1060, %v1140
      %1248 = vst.msk [vmem:[%s213 + $0x4c] sm:$0xf] %vm1060, %v1142
      %1249 = vst.msk [vmem:[%s213 + $0x50] sm:$0xf] %vm1060, %v1144
      %1250 = vst.msk [vmem:[%s213 + $0x54] sm:$0xf] %vm1060, %v1146
      %1251 = vst.msk [vmem:[%s213 + $0x58] sm:$0xf] %vm1060, %v1148
      %1252 = vst.msk [vmem:[%s213 + $0x5c] sm:$0xf] %vm1060, %v1150
      %1253 = vst.msk [vmem:[%s213 + $0x60] sm:$0xf] %vm1060, %v1152
      %1254 = vst.msk [vmem:[%s213 + $0x64] sm:$0xf] %vm1060, %v1154
      %1255 = vst.msk [vmem:[%s213 + $0x68] sm:$0xf] %vm1060, %v1156
      %1256 = vst.msk [vmem:[%s213 + $0x6c] sm:$0xf] %vm1060, %v1158
      %1257 = vst.msk [vmem:[%s213 + $0x70] sm:$0xf] %vm1060, %v1160
      %1258 = vst.msk [vmem:[%s213 + $0x74] sm:$0xf] %vm1060, %v1162
      %1259 = vst.msk [vmem:[%s213 + $0x78] sm:$0xf] %vm1060, %v1164
      %1260 = vst.msk [vmem:[%s213 + $0x7c] sm:$0xf] %vm1060, %v1166
      %1261 = vst.msk [vmem:[%s213 + $0x80] sm:$0xf] %vm1060, %v1168
      %1262 = vst.msk [vmem:[%s213 + $0x84] sm:$0xf] %vm1060, %v1170
      %1263 = vst.msk [vmem:[%s213 + $0x88] sm:$0xf] %vm1060, %v1172
      %1264 = vst.msk [vmem:[%s213 + $0x8c] sm:$0xf] %vm1060, %v1174
      %1265 = vst.msk [vmem:[%s213 + $0x90] sm:$0xf] %vm1060, %v1176
      %1266 = vst.msk [vmem:[%s213 + $0x94] sm:$0xf] %vm1060, %v1178
      %1267 = vst.msk [vmem:[%s213 + $0x98] sm:$0xf] %vm1060, %v1180
      %1268 = vst.msk [vmem:[%s213 + $0x9c] sm:$0xf] %vm1060, %v1182
      %1269 = vst.msk [vmem:[%s213 + $0xa0] sm:$0xf] %vm1060, %v1184
      %1270 = vst.msk [vmem:[%s213 + $0xa4] sm:$0xf] %vm1060, %v1186
      %s1271 = smul.u32 42, %s16
      %p1272 = scmp.lt.s32.totalorder %s1271, 83
      %s1273 = scalar_select %p1272, %s1271, 83
      %s1274 = smul.addr %s1273, 4
      %s1275 = scalar_lea.vmem %s3, %s1274
      %s1276 = smul.u32 42, %s16
      %p1277 = scmp.lt.s32.totalorder %s1276, 83
      %s1278 = scalar_select %p1277, %s1276, 83
      %s1279 = smul.addr %s1278, 4
      %s1280 = scalar_lea.vmem %s4, %s1279
      // Predicated region
      $region33: #{_lambda_.6} parent=31 // pred_check
        %p1281 = pneg %p102
      $region34: #{_lambda_.6} parent=31 // pred_check_branch
        %1283 = sbr.rel (%p1281) target = $region36
      $region35: #{_lambda_.6} parent=31 // pred_region
        %s1284 = smul.u32 42, %s16
      $region36: #{_lambda_.6} parent=31 // pred_fallthru
        _
      // Predicated region
      $region37: #{_lambda_.6} parent=31 // pred_check
        %p1285 = pneg %p128
      $region38: #{_lambda_.6} parent=31 // pred_check_branch
        %1287 = sbr.rel (%p1285) target = $region40
      $region39: #{_lambda_.6} parent=31 // pred_region
        %s1288 = smul.u32 42, %s16
      $region40: #{_lambda_.6} parent=31 // pred_fallthru
        _
    $region32: #{_lambda_.6} parent=5 // pred_fallthru
      _
    %p1289 = scmp.le.s32.totalorder 2, %s11
    // Predicated region
    $region41: #{_lambda_.6} parent=5 // pred_check
      %p1290 = pneg %p1289
    $region42: #{_lambda_.6} parent=5 // pred_check_branch
      %1292 = sbr.rel (%p1290) target = $region44
    $region43: #{_lambda_.6} parent=5 // pred_region
      %s1293 = ssub.s32 %s11, 2
      // Predicated region
      $region45: #{_lambda_.6} parent=43 // pred_check
        %p1294 = pneg %p108
      $region46: #{_lambda_.6} parent=43 // pred_check_branch
        %1296 = sbr.rel (%p1294) target = $region48
      $region47: #{_lambda_.6} parent=43 // pred_region
        %s1297 = smul.u32 42, %s17
        %p1298 = scmp.lt.s32.totalorder %s1297, 83
        %s1299 = scalar_select %p1298, %s1297, 83
        %s1300 = smul.addr %s1299, 4
        %s1301 = scalar_lea.vmem %s3, %s1300
      $region48: #{_lambda_.6} parent=43 // pred_fallthru
        _
      // Predicated region
      $region49: #{_lambda_.6} parent=43 // pred_check
        %p1302 = pneg %p134
      $region50: #{_lambda_.6} parent=43 // pred_check_branch
        %1304 = sbr.rel (%p1302) target = $region52
      $region51: #{_lambda_.6} parent=43 // pred_region
        %s1305 = smul.u32 42, %s17
        %p1306 = scmp.lt.s32.totalorder %s1305, 83
        %s1307 = scalar_select %p1306, %s1305, 83
        %s1308 = smul.addr %s1307, 4
        %s1309 = scalar_lea.vmem %s4, %s1308
      $region52: #{_lambda_.6} parent=43 // pred_fallthru
        _
    $region44: #{_lambda_.6} parent=5 // pred_fallthru
      _
  $region6: #{_lambda_.6} parent=0 // loop_footer
    %s15 = sadd.s32 1, %s11
  $region7: #{_lambda_.6} parent=0 // loop_footer_branch
    %10 = sbr.rel target = $region3
  $region8: #{_lambda_.6} parent=0 // loop_exit
    _

// kernel: _lambda_.11
$region0: #{_lambda_.11}
  #allocation0 [shape = 'u32[]', space=smem, size = 0x4, offset = 0x4, fixed_abs, tag = 'smem constant byte address 0x4 - core index']
  #allocation1 [shape = 'u32[144,128]{1,0:T(1,128)}', space=vmem, size = 0x12000, scoped, tag = 'internal scratch']
  %s0 = inlined_call_operand.vmem [shape: bf16[672,4], index: 0, kind: input, shape index: {}]
  %s1 = inlined_call_operand.vmem [shape: bf16[672,4], index: 1, kind: input, shape index: {}]
  %s2 = inlined_call_operand.vmem [shape: bf16[672,4], index: 2, kind: input, shape index: {}]
  %s3 = inlined_call_operand.vmem [shape: bf16[672,4], index: 3, kind: input, shape index: {}]
  %s4 = inlined_call_operand.vmem [shape: bf16[4,4,8], index: 4, kind: input, shape index: {}]
  %s5 = inlined_call_operand.vmem [shape: f32[1,8], index: 5, kind: input, shape index: {}]
  %s6 = inlined_call_operand.vmem [shape: bf16[672,8], index: 6, kind: output, shape index: {}]
  %s7 = sld [smem:[#allocation0]]
  $region57: #{_lambda_.11} parent=0
    _
  %s9 = ssub.s32 1, %s7
  %s10 = scalar_select 0, %s9, %s7
  loop: start=0, step=1, limit=4
  $region2: #{_lambda_.11} parent=0 // loop_pre_header
    _
  $region3: #{_lambda_.11} parent=0 // loop_header
    %s12 = sphi 0, %s16
    %p13 = scmp.ge.s32.totalorder %s12, 4
    %s22 = sphi 0, %s24
    %s25 = sphi 0, %s22
    %s26 = sphi 0, %s25
    %s42 = sphi 0, %s26
    %s48 = sphi 0, %s50
    %s51 = sphi 0, %s48
    %s52 = sphi 0, %s51
    %s68 = sphi 0, %s52
    %s74 = sphi 0, %s76
    %s77 = sphi 0, %s74
    %s78 = sphi 0, %s77
    %s94 = sphi 0, %s78
    %s100 = sphi 0, %s102
    %s103 = sphi 0, %s100
    %s104 = sphi 0, %s103
    %s120 = sphi 0, %s104
    %s124 = sphi 0, %s124
    %s126 = sphi 0, %s124
    %s127 = sphi 0, %s126
    %s141 = sphi 0, %s127
    %s145 = sphi 0, %s145
    %s147 = sphi 0, %s145
    %s148 = sphi 0, %s147
    %s162 = sphi 0, %s148
    %s168 = sphi 0, %s170
    %s171 = sphi 0, %s168
    %s172 = sphi 0, %s171
    %s188 = sphi 0, %s172
  $region4: #{_lambda_.11} parent=0 // loop_header_branch
    %15 = sbr.rel (%p13) target = $region8
  $region5: #{_lambda_.11} parent=0 // loop_body
    %s17 = ssub.s32 %s12, 1
    %s18 = ssub.s32 %s12, 2
    %s19 = sadd.s32 %s12, 1
    %s20 = ssub.s32 %s12, %s19
    %p21 = scmp.eq.s32.totalorder %s20, 0
    %s23 = sadd.s32 %s22, 1
    %s24 = scalar_select %p21, %s22, %s23
    %p27 = pneg %p21
    %p28 = scmp.eq.s32.totalorder %s12, 1
    %p29 = por %p27, %p28
    %p30 = scmp.ne.s32.totalorder %s22, %s25
    %p31 = scmp.eq.s32.totalorder %s12, 0
    %p32 = por %p30, %p31
    %p33 = scmp.ne.s32.totalorder %s22, %s25
    %p34 = scmp.eq.s32.totalorder %s17, 1
    %p35 = por %p33, %p34
    %p36 = scmp.ne.s32.totalorder %s25, %s26
    %p37 = scmp.eq.s32.totalorder %s17, 0
    %p38 = por %p36, %p37
    %p39 = scmp.ne.s32.totalorder %s25, %s26
    %p40 = scmp.eq.s32.totalorder %s18, 1
    %p41 = por %p39, %p40
    %p43 = scmp.ne.s32.totalorder %s26, %s42
    %p44 = scmp.eq.s32.totalorder %s18, 0
    %p45 = por %p43, %p44
    %s46 = ssub.s32 %s12, %s19
    %p47 = scmp.eq.s32.totalorder %s46, 0
    %s49 = sadd.s32 %s48, 1
    %s50 = scalar_select %p47, %s48, %s49
    %p53 = pneg %p47
    %p54 = scmp.eq.s32.totalorder %s12, 1
    %p55 = por %p53, %p54
    %p56 = scmp.ne.s32.totalorder %s48, %s51
    %p57 = scmp.eq.s32.totalorder %s12, 0
    %p58 = por %p56, %p57
    %p59 = scmp.ne.s32.totalorder %s48, %s51
    %p60 = scmp.eq.s32.totalorder %s17, 1
    %p61 = por %p59, %p60
    %p62 = scmp.ne.s32.totalorder %s51, %s52
    %p63 = scmp.eq.s32.totalorder %s17, 0
    %p64 = por %p62, %p63
    %p65 = scmp.ne.s32.totalorder %s51, %s52
    %p66 = scmp.eq.s32.totalorder %s18, 1
    %p67 = por %p65, %p66
    %p69 = scmp.ne.s32.totalorder %s52, %s68
    %p70 = scmp.eq.s32.totalorder %s18, 0
    %p71 = por %p69, %p70
    %s72 = ssub.s32 %s12, %s19
    %p73 = scmp.eq.s32.totalorder %s72, 0
    %s75 = sadd.s32 %s74, 1
    %s76 = scalar_select %p73, %s74, %s75
    %p79 = pneg %p73
    %p80 = scmp.eq.s32.totalorder %s12, 1
    %p81 = por %p79, %p80
    %p82 = scmp.ne.s32.totalorder %s74, %s77
    %p83 = scmp.eq.s32.totalorder %s12, 0
    %p84 = por %p82, %p83
    %p85 = scmp.ne.s32.totalorder %s74, %s77
    %p86 = scmp.eq.s32.totalorder %s17, 1
    %p87 = por %p85, %p86
    %p88 = scmp.ne.s32.totalorder %s77, %s78
    %p89 = scmp.eq.s32.totalorder %s17, 0
    %p90 = por %p88, %p89
    %p91 = scmp.ne.s32.totalorder %s77, %s78
    %p92 = scmp.eq.s32.totalorder %s18, 1
    %p93 = por %p91, %p92
    %p95 = scmp.ne.s32.totalorder %s78, %s94
    %p96 = scmp.eq.s32.totalorder %s18, 0
    %p97 = por %p95, %p96
    %s98 = ssub.s32 %s12, %s19
    %p99 = scmp.eq.s32.totalorder %s98, 0
    %s101 = sadd.s32 %s100, 1
    %s102 = scalar_select %p99, %s100, %s101
    %p105 = pneg %p99
    %p106 = scmp.eq.s32.totalorder %s12, 1
    %p107 = por %p105, %p106
    %p108 = scmp.ne.s32.totalorder %s100, %s103
    %p109 = scmp.eq.s32.totalorder %s12, 0
    %p110 = por %p108, %p109
    %p111 = scmp.ne.s32.totalorder %s100, %s103
    %p112 = scmp.eq.s32.totalorder %s17, 1
    %p113 = por %p111, %p112
    %p114 = scmp.ne.s32.totalorder %s103, %s104
    %p115 = scmp.eq.s32.totalorder %s17, 0
    %p116 = por %p114, %p115
    %p117 = scmp.ne.s32.totalorder %s103, %s104
    %p118 = scmp.eq.s32.totalorder %s18, 1
    %p119 = por %p117, %p118
    %p121 = scmp.ne.s32.totalorder %s104, %s120
    %p122 = scmp.eq.s32.totalorder %s18, 0
    %p123 = por %p121, %p122
    %s125 = sadd.s32 %s124, 1
    %p128 = scmp.eq.s32.totalorder %s12, 1
    %p129 = scmp.ne.s32.totalorder %s124, %s126
    %p130 = scmp.eq.s32.totalorder %s12, 0
    %p131 = por %p129, %p130
    %p132 = scmp.ne.s32.totalorder %s124, %s126
    %p133 = scmp.eq.s32.totalorder %s17, 1
    %p134 = por %p132, %p133
    %p135 = scmp.ne.s32.totalorder %s126, %s127
    %p136 = scmp.eq.s32.totalorder %s17, 0
    %p137 = por %p135, %p136
    %p138 = scmp.ne.s32.totalorder %s126, %s127
    %p139 = scmp.eq.s32.totalorder %s18, 1
    %p140 = por %p138, %p139
    %p142 = scmp.ne.s32.totalorder %s127, %s141
    %p143 = scmp.eq.s32.totalorder %s18, 0
    %p144 = por %p142, %p143
    %s146 = sadd.s32 %s145, 1
    %p149 = scmp.eq.s32.totalorder %s12, 1
    %p150 = scmp.ne.s32.totalorder %s145, %s147
    %p151 = scmp.eq.s32.totalorder %s12, 0
    %p152 = por %p150, %p151
    %p153 = scmp.ne.s32.totalorder %s145, %s147
    %p154 = scmp.eq.s32.totalorder %s17, 1
    %p155 = por %p153, %p154
    %p156 = scmp.ne.s32.totalorder %s147, %s148
    %p157 = scmp.eq.s32.totalorder %s17, 0
    %p158 = por %p156, %p157
    %p159 = scmp.ne.s32.totalorder %s147, %s148
    %p160 = scmp.eq.s32.totalorder %s18, 1
    %p161 = por %p159, %p160
    %p163 = scmp.ne.s32.totalorder %s148, %s162
    %p164 = scmp.eq.s32.totalorder %s18, 0
    %p165 = por %p163, %p164
    %s166 = ssub.s32 %s12, %s19
    %p167 = scmp.eq.s32.totalorder %s166, 0
    %s169 = sadd.s32 %s168, 1
    %s170 = scalar_select %p167, %s168, %s169
    %p173 = pneg %p167
    %p174 = scmp.eq.s32.totalorder %s12, 1
    %p175 = por %p173, %p174
    %p176 = scmp.ne.s32.totalorder %s168, %s171
    %p177 = scmp.eq.s32.totalorder %s12, 0
    %p178 = por %p176, %p177
    %p179 = scmp.ne.s32.totalorder %s168, %s171
    %p180 = scmp.eq.s32.totalorder %s17, 1
    %p181 = por %p179, %p180
    %p182 = scmp.ne.s32.totalorder %s171, %s172
    %p183 = scmp.eq.s32.totalorder %s17, 0
    %p184 = por %p182, %p183
    %p185 = scmp.ne.s32.totalorder %s171, %s172
    %p186 = scmp.eq.s32.totalorder %s18, 1
    %p187 = por %p185, %p186
    %p189 = scmp.ne.s32.totalorder %s172, %s188
    %p190 = scmp.eq.s32.totalorder %s18, 0
    %p191 = por %p189, %p190
    %p192 = scmp.le.s32.totalorder 1, %s12
    %p193 = scmp.lt.s32.totalorder %s12, 3
    %p194 = pnand %p192, %p193
    %p195 = pneg %p194
    // Predicated region
    $region9: #{_lambda_.11} parent=5 // pred_check
      _
    $region10: #{_lambda_.11} parent=5 // pred_check_branch
      %197 = sbr.rel (%p194) target = $region12
    $region11: #{_lambda_.11} parent=5 // pred_region
      %s198 = ssub.s32 %s12, 1
      // Predicated region
      $region13: #{_lambda_.11} parent=11 // pred_check
        %p199 = pneg %p137
      $region14: #{_lambda_.11} parent=11 // pred_check_branch
        %201 = sbr.rel (%p199) target = $region16
      $region15: #{_lambda_.11} parent=11 // pred_region
        _
      $region16: #{_lambda_.11} parent=11 // pred_fallthru
        _
      // Predicated region
      $region17: #{_lambda_.11} parent=11 // pred_check
        %p202 = pneg %p158
      $region18: #{_lambda_.11} parent=11 // pred_check_branch
        %204 = sbr.rel (%p202) target = $region20
      $region19: #{_lambda_.11} parent=11 // pred_region
        _
      $region20: #{_lambda_.11} parent=11 // pred_fallthru
        _
    $region12: #{_lambda_.11} parent=5 // pred_fallthru
      _
    %p205 = scmp.lt.s32.totalorder %s12, 2
    // Predicated region
    $region21: #{_lambda_.11} parent=5 // pred_check
      %p206 = pneg %p205
    $region22: #{_lambda_.11} parent=5 // pred_check_branch
      %208 = sbr.rel (%p206) target = $region24
    $region23: #{_lambda_.11} parent=5 // pred_region
      // Predicated region
      $region25: #{_lambda_.11} parent=23 // pred_check
        %p209 = pneg %p32
      $region26: #{_lambda_.11} parent=23 // pred_check_branch
        %211 = sbr.rel (%p209) target = $region28
      $region27: #{_lambda_.11} parent=23 // pred_region
        %s212 = smul.u32 42, %s12
        %p213 = scmp.lt.s32.totalorder %s212, 83
        %s214 = scalar_select %p213, %s212, 83
        %s215 = smul.addr %s214, 4
        %s216 = scalar_lea.vmem %s0, %s215
        %s217 = smul.u32 42, %s12
      $region28: #{_lambda_.11} parent=23 // pred_fallthru
        _
      // Predicated region
      $region29: #{_lambda_.11} parent=23 // pred_check
        %p218 = pneg %p58
      $region30: #{_lambda_.11} parent=23 // pred_check_branch
        %220 = sbr.rel (%p218) target = $region32
      $region31: #{_lambda_.11} parent=23 // pred_region
        %s221 = smul.u32 42, %s12
        %p222 = scmp.lt.s32.totalorder %s221, 83
        %s223 = scalar_select %p222, %s221, 83
        %s224 = smul.addr %s223, 4
        %s225 = scalar_lea.vmem %s1, %s224
        %s226 = smul.u32 42, %s12
      $region32: #{_lambda_.11} parent=23 // pred_fallthru
        _
      // Predicated region
      $region33: #{_lambda_.11} parent=23 // pred_check
        %p227 = pneg %p84
      $region34: #{_lambda_.11} parent=23 // pred_check_branch
        %229 = sbr.rel (%p227) target = $region36
      $region35: #{_lambda_.11} parent=23 // pred_region
        %s230 = smul.u32 42, %s12
        %p231 = scmp.lt.s32.totalorder %s230, 83
        %s232 = scalar_select %p231, %s230, 83
        %s233 = smul.addr %s232, 4
        %s234 = scalar_lea.vmem %s2, %s233
        %s235 = smul.u32 42, %s12
      $region36: #{_lambda_.11} parent=23 // pred_fallthru
        _
      // Predicated region
      $region37: #{_lambda_.11} parent=23 // pred_check
        %p236 = pneg %p110
      $region38: #{_lambda_.11} parent=23 // pred_check_branch
        %238 = sbr.rel (%p236) target = $region40
      $region39: #{_lambda_.11} parent=23 // pred_region
        %s239 = smul.u32 42, %s12
        %p240 = scmp.lt.s32.totalorder %s239, 83
        %s241 = scalar_select %p240, %s239, 83
        %s242 = smul.addr %s241, 4
        %s243 = scalar_lea.vmem %s3, %s242
        %s244 = smul.u32 42, %s12
      $region40: #{_lambda_.11} parent=23 // pred_fallthru
        _
    $region24: #{_lambda_.11} parent=5 // pred_fallthru
      _
    %p245 = scmp.le.s32.totalorder 1, %s12
    %p246 = scmp.lt.s32.totalorder %s12, 3
    %p247 = pnand %p245, %p246
    %p248 = pneg %p247
    // Predicated region
    $region41: #{_lambda_.11} parent=5 // pred_check
      _
    $region42: #{_lambda_.11} parent=5 // pred_check_branch
      %250 = sbr.rel (%p247) target = $region44
    $region43: #{_lambda_.11} parent=5 // pred_region
      %s251 = ssub.s32 %s12, 1
      %s252 = smul.u32 42, %s17
      %p253 = scmp.lt.s32.totalorder %s252, 83
      %s254 = scalar_select %p253, %s252, 83
      %s255 = smul.addr %s254, 4
      %s256 = scalar_lea.vmem %s0, %s255
      %p257 = pneg %p38
      %p258 = pneg %p35
      %s259 = smul.u32 42, %s17
      %p260 = scmp.lt.s32.totalorder %s259, 83
      %s261 = scalar_select %p260, %s259, 83
      %s262 = smul.addr %s261, 4
      %s263 = scalar_lea.vmem %s1, %s262
      %p264 = pneg %p64
      %p265 = pneg %p61
      %s266 = smul.u32 42, %s17
      %p267 = scmp.lt.s32.totalorder %s266, 83
      %s268 = scalar_select %p267, %s266, 83
      %s269 = smul.addr %s268, 4
      %s270 = scalar_lea.vmem %s2, %s269
      %p271 = pneg %p90
      %p272 = pneg %p87
      %s273 = smul.u32 42, %s17
      %p274 = scmp.lt.s32.totalorder %s273, 83
      %s275 = scalar_select %p274, %s273, 83
      %s276 = smul.addr %s275, 4
      %s277 = scalar_lea.vmem %s3, %s276
      %p278 = pneg %p116
      %p279 = pneg %p113
      %p280 = pneg %p137
      %p281 = pneg %p134
      %p282 = pneg %p158
      %p283 = pneg %p155
      %p284 = pneg %p184
      %p285 = pneg %p181
      %s286 = smul.u32 42, %s17
      %p287 = scmp.lt.s32.totalorder %s286, 83
      %s288 = scalar_select %p287, %s286, 83
      %s289 = smul.addr %s288, 4
      %s290 = scalar_lea.vmem %s6, %s289
      %s291 = smul.u32 42, %s17
      %p292 = scmp.lt.s32.totalorder %s291, 83
      %s293 = scalar_select %p292, %s291, 83
      %s294 = smul.addr %s293, 4
      %s295 = scalar_lea.vmem %s0, %s294
      %s296 = smul.u32 42, %s17
      %s297 = smul.u32 42, %s17
      %p298 = scmp.lt.s32.totalorder %s297, 83
      %s299 = scalar_select %p298, %s297, 83
      %s300 = smul.addr %s299, 4
      %s301 = scalar_lea.vmem %s1, %s300
      %s302 = smul.u32 42, %s17
      %s303 = smul.u32 42, %s17
      %p304 = scmp.lt.s32.totalorder %s303, 83
      %s305 = scalar_select %p304, %s303, 83
      %s306 = smul.addr %s305, 4
      %s307 = scalar_lea.vmem %s2, %s306
      %s308 = smul.u32 42, %s17
      %s309 = smul.u32 42, %s17
      %p310 = scmp.lt.s32.totalorder %s309, 83
      %s311 = scalar_select %p310, %s309, 83
      %s312 = smul.addr %s311, 4
      %s313 = scalar_lea.vmem %s3, %s312
      %s314 = smul.u32 42, %s17
      %s315 = smul.u32 42, %s17
      %p316 = scmp.lt.s32.totalorder %s315, 83
      %s317 = scalar_select %p316, %s315, 83
      %s318 = smul.addr %s317, 4
      %s319 = scalar_lea.vmem %s6, %s318
      %s320 = smul.u32 42, %s17
      %v322 = vld [vmem:[%s295] sm:$0xf]
      %v323 = vld [vmem:[%s295 + $0x4] sm:$0xf]
      %v324 = vld [vmem:[%s295 + $0x8] sm:$0xf]
      %v325 = vld [vmem:[%s295 + $0xc] sm:$0xf]
      %v326 = vld [vmem:[%s295 + $0x10] sm:$0xf]
      %v327 = vld [vmem:[%s295 + $0x14] sm:$0xf]
      %v328 = vld [vmem:[%s295 + $0x18] sm:$0xf]
      %v329 = vld [vmem:[%s295 + $0x1c] sm:$0xf]
      %v330 = vld [vmem:[%s295 + $0x20] sm:$0xf]
      %v331 = vld [vmem:[%s295 + $0x24] sm:$0xf]
      %v332 = vld [vmem:[%s295 + $0x28] sm:$0xf]
      %v333 = vld [vmem:[%s295 + $0x2c] sm:$0xf]
      %v334 = vld [vmem:[%s295 + $0x30] sm:$0xf]
      %v335 = vld [vmem:[%s295 + $0x34] sm:$0xf]
      %v336 = vld [vmem:[%s295 + $0x38] sm:$0xf]
      %v337 = vld [vmem:[%s295 + $0x3c] sm:$0xf]
      %v338 = vld [vmem:[%s295 + $0x40] sm:$0xf]
      %v339 = vld [vmem:[%s295 + $0x44] sm:$0xf]
      %v340 = vld [vmem:[%s295 + $0x48] sm:$0xf]
      %v341 = vld [vmem:[%s295 + $0x4c] sm:$0xf]
      %v342 = vld [vmem:[%s295 + $0x50] sm:$0xf]
      %v343 = vld [vmem:[%s295 + $0x54] sm:$0xf]
      %v344 = vld [vmem:[%s295 + $0x58] sm:$0xf]
      %v345 = vld [vmem:[%s295 + $0x5c] sm:$0xf]
      %v346 = vld [vmem:[%s295 + $0x60] sm:$0xf]
      %v347 = vld [vmem:[%s295 + $0x64] sm:$0xf]
      %v348 = vld [vmem:[%s295 + $0x68] sm:$0xf]
      %v349 = vld [vmem:[%s295 + $0x6c] sm:$0xf]
      %v350 = vld [vmem:[%s295 + $0x70] sm:$0xf]
      %v351 = vld [vmem:[%s295 + $0x74] sm:$0xf]
      %v352 = vld [vmem:[%s295 + $0x78] sm:$0xf]
      %v353 = vld [vmem:[%s295 + $0x7c] sm:$0xf]
      %v354 = vld [vmem:[%s295 + $0x80] sm:$0xf]
      %v355 = vld [vmem:[%s295 + $0x84] sm:$0xf]
      %v356 = vld [vmem:[%s295 + $0x88] sm:$0xf]
      %v357 = vld [vmem:[%s295 + $0x8c] sm:$0xf]
      %v358 = vld [vmem:[%s295 + $0x90] sm:$0xf]
      %v359 = vld [vmem:[%s295 + $0x94] sm:$0xf]
      %v360 = vld [vmem:[%s295 + $0x98] sm:$0xf]
      %v361 = vld [vmem:[%s295 + $0x9c] sm:$0xf]
      %v362 = vld [vmem:[%s295 + $0xa0] sm:$0xf]
      %v363 = vld [vmem:[%s295 + $0xa4] sm:$0xf]
      %v364 = vld [vmem:[%s4] sm:$0x3]
      %v365 = vld [vmem:[%s301] sm:$0xf]
      %v366 = vld [vmem:[%s301 + $0x4] sm:$0xf]
      %v367 = vld [vmem:[%s301 + $0x8] sm:$0xf]
      %v368 = vld [vmem:[%s301 + $0xc] sm:$0xf]
      %v369 = vld [vmem:[%s301 + $0x10] sm:$0xf]
      %v370 = vld [vmem:[%s301 + $0x14] sm:$0xf]
      %v371 = vld [vmem:[%s301 + $0x18] sm:$0xf]
      %v372 = vld [vmem:[%s301 + $0x1c] sm:$0xf]
      %v373 = vld [vmem:[%s301 + $0x20] sm:$0xf]
      %v374 = vld [vmem:[%s301 + $0x24] sm:$0xf]
      %v375 = vld [vmem:[%s301 + $0x28] sm:$0xf]
      %v376 = vld [vmem:[%s301 + $0x2c] sm:$0xf]
      %v377 = vld [vmem:[%s301 + $0x30] sm:$0xf]
      %v378 = vld [vmem:[%s301 + $0x34] sm:$0xf]
      %v379 = vld [vmem:[%s301 + $0x38] sm:$0xf]
      %v380 = vld [vmem:[%s301 + $0x3c] sm:$0xf]
      %v381 = vld [vmem:[%s301 + $0x40] sm:$0xf]
      %v382 = vld [vmem:[%s301 + $0x44] sm:$0xf]
      %v383 = vld [vmem:[%s301 + $0x48] sm:$0xf]
      %v384 = vld [vmem:[%s301 + $0x4c] sm:$0xf]
      %v385 = vld [vmem:[%s301 + $0x50] sm:$0xf]
      %v386 = vld [vmem:[%s301 + $0x54] sm:$0xf]
      %v387 = vld [vmem:[%s301 + $0x58] sm:$0xf]
      %v388 = vld [vmem:[%s301 + $0x5c] sm:$0xf]
      %v389 = vld [vmem:[%s301 + $0x60] sm:$0xf]
      %v390 = vld [vmem:[%s301 + $0x64] sm:$0xf]
      %v391 = vld [vmem:[%s301 + $0x68] sm:$0xf]
      %v392 = vld [vmem:[%s301 + $0x6c] sm:$0xf]
      %v393 = vld [vmem:[%s301 + $0x70] sm:$0xf]
      %v394 = vld [vmem:[%s301 + $0x74] sm:$0xf]
      %v395 = vld [vmem:[%s301 + $0x78] sm:$0xf]
      %v396 = vld [vmem:[%s301 + $0x7c] sm:$0xf]
      %v397 = vld [vmem:[%s301 + $0x80] sm:$0xf]
      %v398 = vld [vmem:[%s301 + $0x84] sm:$0xf]
      %v399 = vld [vmem:[%s301 + $0x88] sm:$0xf]
      %v400 = vld [vmem:[%s301 + $0x8c] sm:$0xf]
      %v401 = vld [vmem:[%s301 + $0x90] sm:$0xf]
      %v402 = vld [vmem:[%s301 + $0x94] sm:$0xf]
      %v403 = vld [vmem:[%s301 + $0x98] sm:$0xf]
      %v404 = vld [vmem:[%s301 + $0x9c] sm:$0xf]
      %v405 = vld [vmem:[%s301 + $0xa0] sm:$0xf]
      %v406 = vld [vmem:[%s301 + $0xa4] sm:$0xf]
      %s407 = scalar_lea.vmem %s4, 2
      %v408 = vld [vmem:[%s407] sm:$0x3]
      %v451 = vunpack.c.l.b16 %v365
      %v452 = vunpack.c.l.b16 %v366
      %v453 = vunpack.c.l.b16 %v367
      %v454 = vunpack.c.l.b16 %v368
      %v455 = vunpack.c.l.b16 %v369
      %v456 = vunpack.c.l.b16 %v370
      %v457 = vunpack.c.l.b16 %v371
      %v458 = vunpack.c.l.b16 %v372
      %v459 = vunpack.c.l.b16 %v373
      %v460 = vunpack.c.l.b16 %v374
      %v461 = vunpack.c.l.b16 %v375
      %v462 = vunpack.c.l.b16 %v376
      %v463 = vunpack.c.l.b16 %v377
      %v464 = vunpack.c.l.b16 %v378
      %v465 = vunpack.c.l.b16 %v379
      %v466 = vunpack.c.l.b16 %v380
      %v467 = vunpack.c.l.b16 %v381
      %v468 = vunpack.c.l.b16 %v382
      %v469 = vunpack.c.l.b16 %v383
      %v470 = vunpack.c.l.b16 %v384
      %v471 = vunpack.c.l.b16 %v385
      %v472 = vunpack.c.l.b16 %v386
      %v473 = vunpack.c.l.b16 %v387
      %v474 = vunpack.c.l.b16 %v388
      %v475 = vunpack.c.l.b16 %v389
      %v476 = vunpack.c.l.b16 %v390
      %v477 = vunpack.c.l.b16 %v391
      %v478 = vunpack.c.l.b16 %v392
      %v479 = vunpack.c.l.b16 %v393
      %v480 = vunpack.c.l.b16 %v394
      %v481 = vunpack.c.l.b16 %v395
      %v482 = vunpack.c.l.b16 %v396
      %v483 = vunpack.c.l.b16 %v397
      %v484 = vunpack.c.l.b16 %v398
      %v485 = vunpack.c.l.b16 %v399
      %v486 = vunpack.c.l.b16 %v400
      %v487 = vunpack.c.l.b16 %v401
      %v488 = vunpack.c.l.b16 %v402
      %v489 = vunpack.c.l.b16 %v403
      %v490 = vunpack.c.l.b16 %v404
      %v491 = vunpack.c.l.b16 %v405
      %v492 = vunpack.c.l.b16 %v406
      %v493 = vpack.c.b16 %v452, %v451
      %v494 = vpack.c.b16 %v454, %v453
      %v495 = vpack.c.b16 %v456, %v455
      %v496 = vpack.c.b16 %v458, %v457
      %v497 = vpack.c.b16 %v460, %v459
      %v498 = vpack.c.b16 %v462, %v461
      %v499 = vpack.c.b16 %v464, %v463
      %v500 = vpack.c.b16 %v466, %v465
      %v501 = vpack.c.b16 %v468, %v467
      %v502 = vpack.c.b16 %v470, %v469
      %v503 = vpack.c.b16 %v472, %v471
      %v504 = vpack.c.b16 %v474, %v473
      %v505 = vpack.c.b16 %v476, %v475
      %v506 = vpack.c.b16 %v478, %v477
      %v507 = vpack.c.b16 %v480, %v479
      %v508 = vpack.c.b16 %v482, %v481
      %v509 = vpack.c.b16 %v484, %v483
      %v510 = vpack.c.b16 %v486, %v485
      %v511 = vpack.c.b16 %v488, %v487
      %v512 = vpack.c.b16 %v490, %v489
      %v513 = vpack.c.b16 %v492, %v491
      %vm514 = vcmask 31744
      %v516 = vsel %vm514, %v493, 0
      %v519 = vsel %vm514, %v494, 0
      %v522 = vsel %vm514, %v495, 0
      %v525 = vsel %vm514, %v496, 0
      %v528 = vsel %vm514, %v497, 0
      %v531 = vsel %vm514, %v498, 0
      %v534 = vsel %vm514, %v499, 0
      %v537 = vsel %vm514, %v500, 0
      %v540 = vsel %vm514, %v501, 0
      %v543 = vsel %vm514, %v502, 0
      %v546 = vsel %vm514, %v503, 0
      %v549 = vsel %vm514, %v504, 0
      %v552 = vsel %vm514, %v505, 0
      %v555 = vsel %vm514, %v506, 0
      %v558 = vsel %vm514, %v507, 0
      %v561 = vsel %vm514, %v508, 0
      %v564 = vsel %vm514, %v509, 0
      %v567 = vsel %vm514, %v510, 0
      %v570 = vsel %vm514, %v511, 0
      %v573 = vsel %vm514, %v512, 0
      %v576 = vsel %vm514, %v513, 0
      %vm578 = vcmask 1041408
      %v580 = vsel %vm578, %v408, 0
      %582 = vmatprep.subr.bf16.mxu0 0
      %583 = vmatpush1.bf16.msra.mxu0 0
      %584 = vmatprep.subr.bf16.mxu0 0
      %585 = vmatpush1.bf16.msra.mxu0 0
      %586 = vmatprep.subr.bf16.mxu0 0
      %587 = vmatpush1.bf16.msra.mxu0 0
      %588 = vmatprep.subr.bf16.mxu0 0
      %589 = vmatpush1.bf16.msra.mxu0 0
      %590 = vmatprep.subr.bf16.mxu0 0
      %591 = vmatpush1.bf16.msra.mxu0 0
      %592 = vmatprep.subr.bf16.mxu0 0
      %593 = vmatpush1.bf16.msra.mxu0 0
      %594 = vmatprep.subr.bf16.mxu0 0
      %595 = vmatpush1.bf16.msra.mxu0 0
      %596 = vmatprep.subr.bf16.mxu0 0
      %597 = vmatpush1.bf16.msra.mxu0 %v580
      %598 = vmatprep.subr.bf16.mxu0 0
      %599 = vmatpush2.bf16.msra.mxu0 0
      %600 = vmatprep.subr.bf16.mxu0 0
      %601 = vmatpush2.bf16.msra.mxu0 0
      %602 = vmatprep.subr.bf16.mxu0 0
      %603 = vmatpush2.bf16.msra.mxu0 0
      %604 = vmatprep.subr.bf16.mxu0 0
      %605 = vmatpush2.bf16.msra.mxu0 0
      %606 = vmatprep.subr.bf16.mxu0 0
      %607 = vmatpush2.bf16.msra.mxu0 0
      %608 = vmatprep.subr.bf16.mxu0 0
      %609 = vmatpush2.bf16.msra.mxu0 0
      %610 = vmatprep.subr.bf16.mxu0 0
      %611 = vmatpush2.bf16.msra.mxu0 0
      %612 = vmatprep.subr.bf16.mxu0 0
      %613 = vmatpush2.bf16.msra.mxu0 0
      %614 = vmatprep.mubr.bf16.mxu0 0
      %615 = vmatmul.mubr.bf16.gmra.mxu0 %v516
      %v616 = vpop.f32.mrf.mxu0
      %v617 = vadd.f32 0.0, %v616
      %v618 = vpop.f32.mrf.mxu0
      %v619 = vpop.f32.mrf.mxu0
      %v620 = vadd.f32 0.0, %v619
      %v621 = vpop.f32.mrf.mxu0
      %622 = vmatprep.mubr.bf16.mxu0 0
      %623 = vmatmul.mubr.bf16.gmra.mxu0 %v519
      %v624 = vpop.f32.mrf.mxu0
      %v625 = vadd.f32 0.0, %v624
      %v626 = vpop.f32.mrf.mxu0
      %v627 = vpop.f32.mrf.mxu0
      %v628 = vadd.f32 0.0, %v627
      %v629 = vpop.f32.mrf.mxu0
      %630 = vmatprep.mubr.bf16.mxu0 0
      %631 = vmatmul.mubr.bf16.gmra.mxu0 %v522
      %v632 = vpop.f32.mrf.mxu0
      %v633 = vadd.f32 0.0, %v632
      %v634 = vpop.f32.mrf.mxu0
      %v635 = vpop.f32.mrf.mxu0
      %v636 = vadd.f32 0.0, %v635
      %v637 = vpop.f32.mrf.mxu0
      %638 = vmatprep.mubr.bf16.mxu0 0
      %639 = vmatmul.mubr.bf16.gmra.mxu0 %v525
      %v640 = vpop.f32.mrf.mxu0
      %v641 = vadd.f32 0.0, %v640
      %v642 = vpop.f32.mrf.mxu0
      %v643 = vpop.f32.mrf.mxu0
      %v644 = vadd.f32 0.0, %v643
      %v645 = vpop.f32.mrf.mxu0
      %646 = vmatprep.mubr.bf16.mxu0 0
      %647 = vmatmul.mubr.bf16.gmra.mxu0 %v528
      %v648 = vpop.f32.mrf.mxu0
      %v649 = vadd.f32 0.0, %v648
      %v650 = vpop.f32.mrf.mxu0
      %v651 = vpop.f32.mrf.mxu0
      %v652 = vadd.f32 0.0, %v651
      %v653 = vpop.f32.mrf.mxu0
      %654 = vmatprep.mubr.bf16.mxu0 0
      %655 = vmatmul.mubr.bf16.gmra.mxu0 %v531
      %v656 = vpop.f32.mrf.mxu0
      %v657 = vadd.f32 0.0, %v656
      %v658 = vpop.f32.mrf.mxu0
      %v659 = vpop.f32.mrf.mxu0
      %v660 = vadd.f32 0.0, %v659
      %v661 = vpop.f32.mrf.mxu0
      %662 = vmatprep.mubr.bf16.mxu0 0
      %663 = vmatmul.mubr.bf16.gmra.mxu0 %v534
      %v664 = vpop.f32.mrf.mxu0
      %v665 = vadd.f32 0.0, %v664
      %v666 = vpop.f32.mrf.mxu0
      %v667 = vpop.f32.mrf.mxu0
      %v668 = vadd.f32 0.0, %v667
      %v669 = vpop.f32.mrf.mxu0
      %670 = vmatprep.mubr.bf16.mxu0 0
      %671 = vmatmul.mubr.bf16.gmra.mxu0 %v537
      %v672 = vpop.f32.mrf.mxu0
      %v673 = vadd.f32 0.0, %v672
      %v674 = vpop.f32.mrf.mxu0
      %v675 = vpop.f32.mrf.mxu0
      %v676 = vadd.f32 0.0, %v675
      %v677 = vpop.f32.mrf.mxu0
      %678 = vmatprep.mubr.bf16.mxu0 0
      %679 = vmatmul.mubr.bf16.gmra.mxu0 %v540
      %v680 = vpop.f32.mrf.mxu0
      %v681 = vadd.f32 0.0, %v680
      %v682 = vpop.f32.mrf.mxu0
      %v683 = vpop.f32.mrf.mxu0
      %v684 = vadd.f32 0.0, %v683
      %v685 = vpop.f32.mrf.mxu0
      %686 = vmatprep.mubr.bf16.mxu0 0
      %687 = vmatmul.mubr.bf16.gmra.mxu0 %v543
      %v688 = vpop.f32.mrf.mxu0
      %v689 = vadd.f32 0.0, %v688
      %v690 = vpop.f32.mrf.mxu0
      %v691 = vpop.f32.mrf.mxu0
      %v692 = vadd.f32 0.0, %v691
      %v693 = vpop.f32.mrf.mxu0
      %694 = vmatprep.mubr.bf16.mxu0 0
      %695 = vmatmul.mubr.bf16.gmra.mxu0 %v546
      %v696 = vpop.f32.mrf.mxu0
      %v697 = vadd.f32 0.0, %v696
      %v698 = vpop.f32.mrf.mxu0
      %v699 = vpop.f32.mrf.mxu0
      %v700 = vadd.f32 0.0, %v699
      %v701 = vpop.f32.mrf.mxu0
      %702 = vmatprep.mubr.bf16.mxu0 0
      %703 = vmatmul.mubr.bf16.gmra.mxu0 %v549
      %v704 = vpop.f32.mrf.mxu0
      %v705 = vadd.f32 0.0, %v704
      %v706 = vpop.f32.mrf.mxu0
      %v707 = vpop.f32.mrf.mxu0
      %v708 = vadd.f32 0.0, %v707
      %v709 = vpop.f32.mrf.mxu0
      %710 = vmatprep.mubr.bf16.mxu0 0
      %711 = vmatmul.mubr.bf16.gmra.mxu0 %v552
      %v712 = vpop.f32.mrf.mxu0
      %v713 = vadd.f32 0.0, %v712
      %v714 = vpop.f32.mrf.mxu0
      %v715 = vpop.f32.mrf.mxu0
      %v716 = vadd.f32 0.0, %v715
      %v717 = vpop.f32.mrf.mxu0
      %718 = vmatprep.mubr.bf16.mxu0 0
      %719 = vmatmul.mubr.bf16.gmra.mxu0 %v555
      %v720 = vpop.f32.mrf.mxu0
      %v721 = vadd.f32 0.0, %v720
      %v722 = vpop.f32.mrf.mxu0
      %v723 = vpop.f32.mrf.mxu0
      %v724 = vadd.f32 0.0, %v723
      %v725 = vpop.f32.mrf.mxu0
      %726 = vmatprep.mubr.bf16.mxu0 0
      %727 = vmatmul.mubr.bf16.gmra.mxu0 %v558
      %v728 = vpop.f32.mrf.mxu0
      %v729 = vadd.f32 0.0, %v728
      %v730 = vpop.f32.mrf.mxu0
      %v731 = vpop.f32.mrf.mxu0
      %v732 = vadd.f32 0.0, %v731
      %v733 = vpop.f32.mrf.mxu0
      %734 = vmatprep.mubr.bf16.mxu0 0
      %735 = vmatmul.mubr.bf16.gmra.mxu0 %v561
      %v736 = vpop.f32.mrf.mxu0
      %v737 = vadd.f32 0.0, %v736
      %v738 = vpop.f32.mrf.mxu0
      %v739 = vpop.f32.mrf.mxu0
      %v740 = vadd.f32 0.0, %v739
      %v741 = vpop.f32.mrf.mxu0
      %742 = vmatprep.mubr.bf16.mxu0 0
      %743 = vmatmul.mubr.bf16.gmra.mxu0 %v564
      %v744 = vpop.f32.mrf.mxu0
      %v745 = vadd.f32 0.0, %v744
      %v746 = vpop.f32.mrf.mxu0
      %v747 = vpop.f32.mrf.mxu0
      %v748 = vadd.f32 0.0, %v747
      %v749 = vpop.f32.mrf.mxu0
      %750 = vmatprep.mubr.bf16.mxu0 0
      %751 = vmatmul.mubr.bf16.gmra.mxu0 %v567
      %v752 = vpop.f32.mrf.mxu0
      %v753 = vadd.f32 0.0, %v752
      %v754 = vpop.f32.mrf.mxu0
      %v755 = vpop.f32.mrf.mxu0
      %v756 = vadd.f32 0.0, %v755
      %v757 = vpop.f32.mrf.mxu0
      %758 = vmatprep.mubr.bf16.mxu0 0
      %759 = vmatmul.mubr.bf16.gmra.mxu0 %v570
      %v760 = vpop.f32.mrf.mxu0
      %v761 = vadd.f32 0.0, %v760
      %v762 = vpop.f32.mrf.mxu0
      %v763 = vpop.f32.mrf.mxu0
      %v764 = vadd.f32 0.0, %v763
      %v765 = vpop.f32.mrf.mxu0
      %766 = vmatprep.mubr.bf16.mxu0 0
      %767 = vmatmul.mubr.bf16.gmra.mxu0 %v573
      %v768 = vpop.f32.mrf.mxu0
      %v769 = vadd.f32 0.0, %v768
      %v770 = vpop.f32.mrf.mxu0
      %v771 = vpop.f32.mrf.mxu0
      %v772 = vadd.f32 0.0, %v771
      %v773 = vpop.f32.mrf.mxu0
      %774 = vmatprep.mubr.bf16.mxu0 0
      %775 = vmatmul.mubr.bf16.gmra.mxu0 %v576
      %v776 = vpop.f32.mrf.mxu0
      %v777 = vadd.f32 0.0, %v776
      %v778 = vpop.f32.mrf.mxu0
      %v779 = vpop.f32.mrf.mxu0
      %v780 = vadd.f32 0.0, %v779
      %v781 = vpop.f32.mrf.mxu0
      %782 = vdwg.mxu0
      %v825 = vunpack.c.l.b16 %v322
      %v826 = vunpack.c.l.b16 %v323
      %v827 = vunpack.c.l.b16 %v324
      %v828 = vunpack.c.l.b16 %v325
      %v829 = vunpack.c.l.b16 %v326
      %v830 = vunpack.c.l.b16 %v327
      %v831 = vunpack.c.l.b16 %v328
      %v832 = vunpack.c.l.b16 %v329
      %v833 = vunpack.c.l.b16 %v330
      %v834 = vunpack.c.l.b16 %v331
      %v835 = vunpack.c.l.b16 %v332
      %v836 = vunpack.c.l.b16 %v333
      %v837 = vunpack.c.l.b16 %v334
      %v838 = vunpack.c.l.b16 %v335
      %v839 = vunpack.c.l.b16 %v336
      %v840 = vunpack.c.l.b16 %v337
      %v841 = vunpack.c.l.b16 %v338
      %v842 = vunpack.c.l.b16 %v339
      %v843 = vunpack.c.l.b16 %v340
      %v844 = vunpack.c.l.b16 %v341
      %v845 = vunpack.c.l.b16 %v342
      %v846 = vunpack.c.l.b16 %v343
      %v847 = vunpack.c.l.b16 %v344
      %v848 = vunpack.c.l.b16 %v345
      %v849 = vunpack.c.l.b16 %v346
      %v850 = vunpack.c.l.b16 %v347
      %v851 = vunpack.c.l.b16 %v348
      %v852 = vunpack.c.l.b16 %v349
      %v853 = vunpack.c.l.b16 %v350
      %v854 = vunpack.c.l.b16 %v351
      %v855 = vunpack.c.l.b16 %v352
      %v856 = vunpack.c.l.b16 %v353
      %v857 = vunpack.c.l.b16 %v354
      %v858 = vunpack.c.l.b16 %v355
      %v859 = vunpack.c.l.b16 %v356
      %v860 = vunpack.c.l.b16 %v357
      %v861 = vunpack.c.l.b16 %v358
      %v862 = vunpack.c.l.b16 %v359
      %v863 = vunpack.c.l.b16 %v360
      %v864 = vunpack.c.l.b16 %v361
      %v865 = vunpack.c.l.b16 %v362
      %v866 = vunpack.c.l.b16 %v363
      %v867 = vpack.c.b16 %v826, %v825
      %v868 = vpack.c.b16 %v828, %v827
      %v869 = vpack.c.b16 %v830, %v829
      %v870 = vpack.c.b16 %v832, %v831
      %v871 = vpack.c.b16 %v834, %v833
      %v872 = vpack.c.b16 %v836, %v835
      %v873 = vpack.c.b16 %v838, %v837
      %v874 = vpack.c.b16 %v840, %v839
      %v875 = vpack.c.b16 %v842, %v841
      %v876 = vpack.c.b16 %v844, %v843
      %v877 = vpack.c.b16 %v846, %v845
      %v878 = vpack.c.b16 %v848, %v847
      %v879 = vpack.c.b16 %v850, %v849
      %v880 = vpack.c.b16 %v852, %v851
      %v881 = vpack.c.b16 %v854, %v853
      %v882 = vpack.c.b16 %v856, %v855
      %v883 = vpack.c.b16 %v858, %v857
      %v884 = vpack.c.b16 %v860, %v859
      %v885 = vpack.c.b16 %v862, %v861
      %v886 = vpack.c.b16 %v864, %v863
      %v887 = vpack.c.b16 %v866, %v865
      %v889 = vsel %vm514, %v867, 0
      %v892 = vsel %vm514, %v868, 0
      %v895 = vsel %vm514, %v869, 0
      %v898 = vsel %vm514, %v870, 0
      %v901 = vsel %vm514, %v871, 0
      %v904 = vsel %vm514, %v872, 0
      %v907 = vsel %vm514, %v873, 0
      %v910 = vsel %vm514, %v874, 0
      %v913 = vsel %vm514, %v875, 0
      %v916 = vsel %vm514, %v876, 0
      %v919 = vsel %vm514, %v877, 0
      %v922 = vsel %vm514, %v878, 0
      %v925 = vsel %vm514, %v879, 0
      %v928 = vsel %vm514, %v880, 0
      %v931 = vsel %vm514, %v881, 0
      %v934 = vsel %vm514, %v882, 0
      %v937 = vsel %vm514, %v883, 0
      %v940 = vsel %vm514, %v884, 0
      %v943 = vsel %vm514, %v885, 0
      %v946 = vsel %vm514, %v886, 0
      %v949 = vsel %vm514, %v887, 0
      %v952 = vsel %vm578, %v364, 0
      %954 = vmatprep.subr.bf16.mxu0 0
      %955 = vmatpush1.bf16.msra.mxu0 0
      %956 = vmatprep.subr.bf16.mxu0 0
      %957 = vmatpush1.bf16.msra.mxu0 0
      %958 = vmatprep.subr.bf16.mxu0 0
      %959 = vmatpush1.bf16.msra.mxu0 0
      %960 = vmatprep.subr.bf16.mxu0 0
      %961 = vmatpush1.bf16.msra.mxu0 0
      %962 = vmatprep.subr.bf16.mxu0 0
      %963 = vmatpush1.bf16.msra.mxu0 0
      %964 = vmatprep.subr.bf16.mxu0 0
      %965 = vmatpush1.bf16.msra.mxu0 0
      %966 = vmatprep.subr.bf16.mxu0 0
      %967 = vmatpush1.bf16.msra.mxu0 0
      %968 = vmatprep.subr.bf16.mxu0 0
      %969 = vmatpush1.bf16.msra.mxu0 %v952
      %970 = vmatprep.subr.bf16.mxu0 0
      %971 = vmatpush2.bf16.msra.mxu0 0
      %972 = vmatprep.subr.bf16.mxu0 0
      %973 = vmatpush2.bf16.msra.mxu0 0
      %974 = vmatprep.subr.bf16.mxu0 0
      %975 = vmatpush2.bf16.msra.mxu0 0
      %976 = vmatprep.subr.bf16.mxu0 0
      %977 = vmatpush2.bf16.msra.mxu0 0
      %978 = vmatprep.subr.bf16.mxu0 0
      %979 = vmatpush2.bf16.msra.mxu0 0
      %980 = vmatprep.subr.bf16.mxu0 0
      %981 = vmatpush2.bf16.msra.mxu0 0
      %982 = vmatprep.subr.bf16.mxu0 0
      %983 = vmatpush2.bf16.msra.mxu0 0
      %984 = vmatprep.subr.bf16.mxu0 0
      %985 = vmatpush2.bf16.msra.mxu0 0
      %986 = vmatprep.mubr.bf16.mxu0 0
      %987 = vmatmul.mubr.bf16.gmra.mxu0 %v889
      %v988 = vpop.f32.mrf.mxu0
      %v989 = vadd.f32 %v617, %v988
      %v990 = vpop.f32.mrf.mxu0
      %v991 = vpop.f32.mrf.mxu0
      %v992 = vadd.f32 %v620, %v991
      %v993 = vpop.f32.mrf.mxu0
      %994 = vmatprep.mubr.bf16.mxu0 0
      %995 = vmatmul.mubr.bf16.gmra.mxu0 %v892
      %v996 = vpop.f32.mrf.mxu0
      %v997 = vadd.f32 %v625, %v996
      %v998 = vpop.f32.mrf.mxu0
      %v999 = vpop.f32.mrf.mxu0
      %v1000 = vadd.f32 %v628, %v999
      %v1001 = vpop.f32.mrf.mxu0
      %1002 = vmatprep.mubr.bf16.mxu0 0
      %1003 = vmatmul.mubr.bf16.gmra.mxu0 %v895
      %v1004 = vpop.f32.mrf.mxu0
      %v1005 = vadd.f32 %v633, %v1004
      %v1006 = vpop.f32.mrf.mxu0
      %v1007 = vpop.f32.mrf.mxu0
      %v1008 = vadd.f32 %v636, %v1007
      %v1009 = vpop.f32.mrf.mxu0
      %1010 = vmatprep.mubr.bf16.mxu0 0
      %1011 = vmatmul.mubr.bf16.gmra.mxu0 %v898
      %v1012 = vpop.f32.mrf.mxu0
      %v1013 = vadd.f32 %v641, %v1012
      %v1014 = vpop.f32.mrf.mxu0
      %v1015 = vpop.f32.mrf.mxu0
      %v1016 = vadd.f32 %v644, %v1015
      %v1017 = vpop.f32.mrf.mxu0
      %1018 = vmatprep.mubr.bf16.mxu0 0
      %1019 = vmatmul.mubr.bf16.gmra.mxu0 %v901
      %v1020 = vpop.f32.mrf.mxu0
      %v1021 = vadd.f32 %v649, %v1020
      %v1022 = vpop.f32.mrf.mxu0
      %v1023 = vpop.f32.mrf.mxu0
      %v1024 = vadd.f32 %v652, %v1023
      %v1025 = vpop.f32.mrf.mxu0
      %1026 = vmatprep.mubr.bf16.mxu0 0
      %1027 = vmatmul.mubr.bf16.gmra.mxu0 %v904
      %v1028 = vpop.f32.mrf.mxu0
      %v1029 = vadd.f32 %v657, %v1028
      %v1030 = vpop.f32.mrf.mxu0
      %v1031 = vpop.f32.mrf.mxu0
      %v1032 = vadd.f32 %v660, %v1031
      %v1033 = vpop.f32.mrf.mxu0
      %1034 = vmatprep.mubr.bf16.mxu0 0
      %1035 = vmatmul.mubr.bf16.gmra.mxu0 %v907
      %v1036 = vpop.f32.mrf.mxu0
      %v1037 = vadd.f32 %v665, %v1036
      %v1038 = vpop.f32.mrf.mxu0
      %v1039 = vpop.f32.mrf.mxu0
      %v1040 = vadd.f32 %v668, %v1039
      %v1041 = vpop.f32.mrf.mxu0
      %1042 = vmatprep.mubr.bf16.mxu0 0
      %1043 = vmatmul.mubr.bf16.gmra.mxu0 %v910
      %v1044 = vpop.f32.mrf.mxu0
      %v1045 = vadd.f32 %v673, %v1044
      %v1046 = vpop.f32.mrf.mxu0
      %v1047 = vpop.f32.mrf.mxu0
      %v1048 = vadd.f32 %v676, %v1047
      %v1049 = vpop.f32.mrf.mxu0
      %1050 = vmatprep.mubr.bf16.mxu0 0
      %1051 = vmatmul.mubr.bf16.gmra.mxu0 %v913
      %v1052 = vpop.f32.mrf.mxu0
      %v1053 = vadd.f32 %v681, %v1052
      %v1054 = vpop.f32.mrf.mxu0
      %v1055 = vpop.f32.mrf.mxu0
      %v1056 = vadd.f32 %v684, %v1055
      %v1057 = vpop.f32.mrf.mxu0
      %1058 = vmatprep.mubr.bf16.mxu0 0
      %1059 = vmatmul.mubr.bf16.gmra.mxu0 %v916
      %v1060 = vpop.f32.mrf.mxu0
      %v1061 = vadd.f32 %v689, %v1060
      %v1062 = vpop.f32.mrf.mxu0
      %v1063 = vpop.f32.mrf.mxu0
      %v1064 = vadd.f32 %v692, %v1063
      %v1065 = vpop.f32.mrf.mxu0
      %1066 = vmatprep.mubr.bf16.mxu0 0
      %1067 = vmatmul.mubr.bf16.gmra.mxu0 %v919
      %v1068 = vpop.f32.mrf.mxu0
      %v1069 = vadd.f32 %v697, %v1068
      %v1070 = vpop.f32.mrf.mxu0
      %v1071 = vpop.f32.mrf.mxu0
      %v1072 = vadd.f32 %v700, %v1071
      %v1073 = vpop.f32.mrf.mxu0
      %1074 = vmatprep.mubr.bf16.mxu0 0
      %1075 = vmatmul.mubr.bf16.gmra.mxu0 %v922
      %v1076 = vpop.f32.mrf.mxu0
      %v1077 = vadd.f32 %v705, %v1076
      %v1078 = vpop.f32.mrf.mxu0
      %v1079 = vpop.f32.mrf.mxu0
      %v1080 = vadd.f32 %v708, %v1079
      %v1081 = vpop.f32.mrf.mxu0
      %1082 = vmatprep.mubr.bf16.mxu0 0
      %1083 = vmatmul.mubr.bf16.gmra.mxu0 %v925
      %v1084 = vpop.f32.mrf.mxu0
      %v1085 = vadd.f32 %v713, %v1084
      %v1086 = vpop.f32.mrf.mxu0
      %v1087 = vpop.f32.mrf.mxu0
      %v1088 = vadd.f32 %v716, %v1087
      %v1089 = vpop.f32.mrf.mxu0
      %1090 = vmatprep.mubr.bf16.mxu0 0
      %1091 = vmatmul.mubr.bf16.gmra.mxu0 %v928
      %v1092 = vpop.f32.mrf.mxu0
      %v1093 = vadd.f32 %v721, %v1092
      %v1094 = vpop.f32.mrf.mxu0
      %v1095 = vpop.f32.mrf.mxu0
      %v1096 = vadd.f32 %v724, %v1095
      %v1097 = vpop.f32.mrf.mxu0
      %1098 = vmatprep.mubr.bf16.mxu0 0
      %1099 = vmatmul.mubr.bf16.gmra.mxu0 %v931
      %v1100 = vpop.f32.mrf.mxu0
      %v1101 = vadd.f32 %v729, %v1100
      %v1102 = vpop.f32.mrf.mxu0
      %v1103 = vpop.f32.mrf.mxu0
      %v1104 = vadd.f32 %v732, %v1103
      %v1105 = vpop.f32.mrf.mxu0
      %1106 = vmatprep.mubr.bf16.mxu0 0
      %1107 = vmatmul.mubr.bf16.gmra.mxu0 %v934
      %v1108 = vpop.f32.mrf.mxu0
      %v1109 = vadd.f32 %v737, %v1108
      %v1110 = vpop.f32.mrf.mxu0
      %v1111 = vpop.f32.mrf.mxu0
      %v1112 = vadd.f32 %v740, %v1111
      %v1113 = vpop.f32.mrf.mxu0
      %1114 = vmatprep.mubr.bf16.mxu0 0
      %1115 = vmatmul.mubr.bf16.gmra.mxu0 %v937
      %v1116 = vpop.f32.mrf.mxu0
      %v1117 = vadd.f32 %v745, %v1116
      %v1118 = vpop.f32.mrf.mxu0
      %v1119 = vpop.f32.mrf.mxu0
      %v1120 = vadd.f32 %v748, %v1119
      %v1121 = vpop.f32.mrf.mxu0
      %1122 = vmatprep.mubr.bf16.mxu0 0
      %1123 = vmatmul.mubr.bf16.gmra.mxu0 %v940
      %v1124 = vpop.f32.mrf.mxu0
      %v1125 = vadd.f32 %v753, %v1124
      %v1126 = vpop.f32.mrf.mxu0
      %v1127 = vpop.f32.mrf.mxu0
      %v1128 = vadd.f32 %v756, %v1127
      %v1129 = vpop.f32.mrf.mxu0
      %1130 = vmatprep.mubr.bf16.mxu0 0
      %1131 = vmatmul.mubr.bf16.gmra.mxu0 %v943
      %v1132 = vpop.f32.mrf.mxu0
      %v1133 = vadd.f32 %v761, %v1132
      %v1134 = vpop.f32.mrf.mxu0
      %v1135 = vpop.f32.mrf.mxu0
      %v1136 = vadd.f32 %v764, %v1135
      %v1137 = vpop.f32.mrf.mxu0
      %1138 = vmatprep.mubr.bf16.mxu0 0
      %1139 = vmatmul.mubr.bf16.gmra.mxu0 %v946
      %v1140 = vpop.f32.mrf.mxu0
      %v1141 = vadd.f32 %v769, %v1140
      %v1142 = vpop.f32.mrf.mxu0
      %v1143 = vpop.f32.mrf.mxu0
      %v1144 = vadd.f32 %v772, %v1143
      %v1145 = vpop.f32.mrf.mxu0
      %1146 = vmatprep.mubr.bf16.mxu0 0
      %1147 = vmatmul.mubr.bf16.gmra.mxu0 %v949
      %v1148 = vpop.f32.mrf.mxu0
      %v1149 = vadd.f32 %v777, %v1148
      %v1150 = vpop.f32.mrf.mxu0
      %v1151 = vpop.f32.mrf.mxu0
      %v1152 = vadd.f32 %v780, %v1151
      %v1153 = vpop.f32.mrf.mxu0
      %1154 = vdwg.mxu0
      %v1155 = vld [vmem:[%s307] sm:$0xf]
      %v1156 = vld [vmem:[%s307 + $0x4] sm:$0xf]
      %v1157 = vld [vmem:[%s307 + $0x8] sm:$0xf]
      %v1158 = vld [vmem:[%s307 + $0xc] sm:$0xf]
      %v1159 = vld [vmem:[%s307 + $0x10] sm:$0xf]
      %v1160 = vld [vmem:[%s307 + $0x14] sm:$0xf]
      %v1161 = vld [vmem:[%s307 + $0x18] sm:$0xf]
      %v1162 = vld [vmem:[%s307 + $0x1c] sm:$0xf]
      %v1163 = vld [vmem:[%s307 + $0x20] sm:$0xf]
      %v1164 = vld [vmem:[%s307 + $0x24] sm:$0xf]
      %v1165 = vld [vmem:[%s307 + $0x28] sm:$0xf]
      %v1166 = vld [vmem:[%s307 + $0x2c] sm:$0xf]
      %v1167 = vld [vmem:[%s307 + $0x30] sm:$0xf]
      %v1168 = vld [vmem:[%s307 + $0x34] sm:$0xf]
      %v1169 = vld [vmem:[%s307 + $0x38] sm:$0xf]
      %v1170 = vld [vmem:[%s307 + $0x3c] sm:$0xf]
      %v1171 = vld [vmem:[%s307 + $0x40] sm:$0xf]
      %v1172 = vld [vmem:[%s307 + $0x44] sm:$0xf]
      %v1173 = vld [vmem:[%s307 + $0x48] sm:$0xf]
      %v1174 = vld [vmem:[%s307 + $0x4c] sm:$0xf]
      %v1175 = vld [vmem:[%s307 + $0x50] sm:$0xf]
      %v1176 = vld [vmem:[%s307 + $0x54] sm:$0xf]
      %v1177 = vld [vmem:[%s307 + $0x58] sm:$0xf]
      %v1178 = vld [vmem:[%s307 + $0x5c] sm:$0xf]
      %v1179 = vld [vmem:[%s307 + $0x60] sm:$0xf]
      %v1180 = vld [vmem:[%s307 + $0x64] sm:$0xf]
      %v1181 = vld [vmem:[%s307 + $0x68] sm:$0xf]
      %v1182 = vld [vmem:[%s307 + $0x6c] sm:$0xf]
      %v1183 = vld [vmem:[%s307 + $0x70] sm:$0xf]
      %v1184 = vld [vmem:[%s307 + $0x74] sm:$0xf]
      %v1185 = vld [vmem:[%s307 + $0x78] sm:$0xf]
      %v1186 = vld [vmem:[%s307 + $0x7c] sm:$0xf]
      %v1187 = vld [vmem:[%s307 + $0x80] sm:$0xf]
      %v1188 = vld [vmem:[%s307 + $0x84] sm:$0xf]
      %v1189 = vld [vmem:[%s307 + $0x88] sm:$0xf]
      %v1190 = vld [vmem:[%s307 + $0x8c] sm:$0xf]
      %v1191 = vld [vmem:[%s307 + $0x90] sm:$0xf]
      %v1192 = vld [vmem:[%s307 + $0x94] sm:$0xf]
      %v1193 = vld [vmem:[%s307 + $0x98] sm:$0xf]
      %v1194 = vld [vmem:[%s307 + $0x9c] sm:$0xf]
      %v1195 = vld [vmem:[%s307 + $0xa0] sm:$0xf]
      %v1196 = vld [vmem:[%s307 + $0xa4] sm:$0xf]
      %s1197 = scalar_lea.vmem %s4, 4
      %v1198 = vld [vmem:[%s1197] sm:$0x3]
      %v1241 = vunpack.c.l.b16 %v1155
      %v1242 = vunpack.c.l.b16 %v1156
      %v1243 = vunpack.c.l.b16 %v1157
      %v1244 = vunpack.c.l.b16 %v1158
      %v1245 = vunpack.c.l.b16 %v1159
      %v1246 = vunpack.c.l.b16 %v1160
      %v1247 = vunpack.c.l.b16 %v1161
      %v1248 = vunpack.c.l.b16 %v1162
      %v1249 = vunpack.c.l.b16 %v1163
      %v1250 = vunpack.c.l.b16 %v1164
      %v1251 = vunpack.c.l.b16 %v1165
      %v1252 = vunpack.c.l.b16 %v1166
      %v1253 = vunpack.c.l.b16 %v1167
      %v1254 = vunpack.c.l.b16 %v1168
      %v1255 = vunpack.c.l.b16 %v1169
      %v1256 = vunpack.c.l.b16 %v1170
      %v1257 = vunpack.c.l.b16 %v1171
      %v1258 = vunpack.c.l.b16 %v1172
      %v1259 = vunpack.c.l.b16 %v1173
      %v1260 = vunpack.c.l.b16 %v1174
      %v1261 = vunpack.c.l.b16 %v1175
      %v1262 = vunpack.c.l.b16 %v1176
      %v1263 = vunpack.c.l.b16 %v1177
      %v1264 = vunpack.c.l.b16 %v1178
      %v1265 = vunpack.c.l.b16 %v1179
      %v1266 = vunpack.c.l.b16 %v1180
      %v1267 = vunpack.c.l.b16 %v1181
      %v1268 = vunpack.c.l.b16 %v1182
      %v1269 = vunpack.c.l.b16 %v1183
      %v1270 = vunpack.c.l.b16 %v1184
      %v1271 = vunpack.c.l.b16 %v1185
      %v1272 = vunpack.c.l.b16 %v1186
      %v1273 = vunpack.c.l.b16 %v1187
      %v1274 = vunpack.c.l.b16 %v1188
      %v1275 = vunpack.c.l.b16 %v1189
      %v1276 = vunpack.c.l.b16 %v1190
      %v1277 = vunpack.c.l.b16 %v1191
      %v1278 = vunpack.c.l.b16 %v1192
      %v1279 = vunpack.c.l.b16 %v1193
      %v1280 = vunpack.c.l.b16 %v1194
      %v1281 = vunpack.c.l.b16 %v1195
      %v1282 = vunpack.c.l.b16 %v1196
      %v1283 = vpack.c.b16 %v1242, %v1241
      %v1284 = vpack.c.b16 %v1244, %v1243
      %v1285 = vpack.c.b16 %v1246, %v1245
      %v1286 = vpack.c.b16 %v1248, %v1247
      %v1287 = vpack.c.b16 %v1250, %v1249
      %v1288 = vpack.c.b16 %v1252, %v1251
      %v1289 = vpack.c.b16 %v1254, %v1253
      %v1290 = vpack.c.b16 %v1256, %v1255
      %v1291 = vpack.c.b16 %v1258, %v1257
      %v1292 = vpack.c.b16 %v1260, %v1259
      %v1293 = vpack.c.b16 %v1262, %v1261
      %v1294 = vpack.c.b16 %v1264, %v1263
      %v1295 = vpack.c.b16 %v1266, %v1265
      %v1296 = vpack.c.b16 %v1268, %v1267
      %v1297 = vpack.c.b16 %v1270, %v1269
      %v1298 = vpack.c.b16 %v1272, %v1271
      %v1299 = vpack.c.b16 %v1274, %v1273
      %v1300 = vpack.c.b16 %v1276, %v1275
      %v1301 = vpack.c.b16 %v1278, %v1277
      %v1302 = vpack.c.b16 %v1280, %v1279
      %v1303 = vpack.c.b16 %v1282, %v1281
      %v1305 = vsel %vm514, %v1283, 0
      %v1308 = vsel %vm514, %v1284, 0
      %v1311 = vsel %vm514, %v1285, 0
      %v1314 = vsel %vm514, %v1286, 0
      %v1317 = vsel %vm514, %v1287, 0
      %v1320 = vsel %vm514, %v1288, 0
      %v1323 = vsel %vm514, %v1289, 0
      %v1326 = vsel %vm514, %v1290, 0
      %v1329 = vsel %vm514, %v1291, 0
      %v1332 = vsel %vm514, %v1292, 0
      %v1335 = vsel %vm514, %v1293, 0
      %v1338 = vsel %vm514, %v1294, 0
      %v1341 = vsel %vm514, %v1295, 0
      %v1344 = vsel %vm514, %v1296, 0
      %v1347 = vsel %vm514, %v1297, 0
      %v1350 = vsel %vm514, %v1298, 0
      %v1353 = vsel %vm514, %v1299, 0
      %v1356 = vsel %vm514, %v1300, 0
      %v1359 = vsel %vm514, %v1301, 0
      %v1362 = vsel %vm514, %v1302, 0
      %v1365 = vsel %vm514, %v1303, 0
      %v1368 = vsel %vm578, %v1198, 0
      %1370 = vmatprep.subr.bf16.mxu0 0
      %1371 = vmatpush1.bf16.msra.mxu0 0
      %1372 = vmatprep.subr.bf16.mxu0 0
      %1373 = vmatpush1.bf16.msra.mxu0 0
      %1374 = vmatprep.subr.bf16.mxu0 0
      %1375 = vmatpush1.bf16.msra.mxu0 0
      %1376 = vmatprep.subr.bf16.mxu0 0
      %1377 = vmatpush1.bf16.msra.mxu0 0
      %1378 = vmatprep.subr.bf16.mxu0 0
      %1379 = vmatpush1.bf16.msra.mxu0 0
      %1380 = vmatprep.subr.bf16.mxu0 0
      %1381 = vmatpush1.bf16.msra.mxu0 0
      %1382 = vmatprep.subr.bf16.mxu0 0
      %1383 = vmatpush1.bf16.msra.mxu0 0
      %1384 = vmatprep.subr.bf16.mxu0 0
      %1385 = vmatpush1.bf16.msra.mxu0 %v1368
      %1386 = vmatprep.subr.bf16.mxu0 0
      %1387 = vmatpush2.bf16.msra.mxu0 0
      %1388 = vmatprep.subr.bf16.mxu0 0
      %1389 = vmatpush2.bf16.msra.mxu0 0
      %1390 = vmatprep.subr.bf16.mxu0 0
      %1391 = vmatpush2.bf16.msra.mxu0 0
      %1392 = vmatprep.subr.bf16.mxu0 0
      %1393 = vmatpush2.bf16.msra.mxu0 0
      %1394 = vmatprep.subr.bf16.mxu0 0
      %1395 = vmatpush2.bf16.msra.mxu0 0
      %1396 = vmatprep.subr.bf16.mxu0 0
      %1397 = vmatpush2.bf16.msra.mxu0 0
      %1398 = vmatprep.subr.bf16.mxu0 0
      %1399 = vmatpush2.bf16.msra.mxu0 0
      %1400 = vmatprep.subr.bf16.mxu0 0
      %1401 = vmatpush2.bf16.msra.mxu0 0
      %1402 = vmatprep.mubr.bf16.mxu0 0
      %1403 = vmatmul.mubr.bf16.gmra.mxu0 %v1305
      %v1404 = vpop.f32.mrf.mxu0
      %v1405 = vadd.f32 0.0, %v1404
      %v1406 = vpop.f32.mrf.mxu0
      %v1407 = vpop.f32.mrf.mxu0
      %v1408 = vadd.f32 0.0, %v1407
      %v1409 = vpop.f32.mrf.mxu0
      %1410 = vmatprep.mubr.bf16.mxu0 0
      %1411 = vmatmul.mubr.bf16.gmra.mxu0 %v1308
      %v1412 = vpop.f32.mrf.mxu0
      %v1413 = vadd.f32 0.0, %v1412
      %v1414 = vpop.f32.mrf.mxu0
      %v1415 = vpop.f32.mrf.mxu0
      %v1416 = vadd.f32 0.0, %v1415
      %v1417 = vpop.f32.mrf.mxu0
      %1418 = vmatprep.mubr.bf16.mxu0 0
      %1419 = vmatmul.mubr.bf16.gmra.mxu0 %v1311
      %v1420 = vpop.f32.mrf.mxu0
      %v1421 = vadd.f32 0.0, %v1420
      %v1422 = vpop.f32.mrf.mxu0
      %v1423 = vpop.f32.mrf.mxu0
      %v1424 = vadd.f32 0.0, %v1423
      %v1425 = vpop.f32.mrf.mxu0
      %1426 = vmatprep.mubr.bf16.mxu0 0
      %1427 = vmatmul.mubr.bf16.gmra.mxu0 %v1314
      %v1428 = vpop.f32.mrf.mxu0
      %v1429 = vadd.f32 0.0, %v1428
      %v1430 = vpop.f32.mrf.mxu0
      %v1431 = vpop.f32.mrf.mxu0
      %v1432 = vadd.f32 0.0, %v1431
      %v1433 = vpop.f32.mrf.mxu0
      %1434 = vmatprep.mubr.bf16.mxu0 0
      %1435 = vmatmul.mubr.bf16.gmra.mxu0 %v1317
      %v1436 = vpop.f32.mrf.mxu0
      %v1437 = vadd.f32 0.0, %v1436
      %v1438 = vpop.f32.mrf.mxu0
      %v1439 = vpop.f32.mrf.mxu0
      %v1440 = vadd.f32 0.0, %v1439
      %v1441 = vpop.f32.mrf.mxu0
      %1442 = vmatprep.mubr.bf16.mxu0 0
      %1443 = vmatmul.mubr.bf16.gmra.mxu0 %v1320
      %v1444 = vpop.f32.mrf.mxu0
      %v1445 = vadd.f32 0.0, %v1444
      %v1446 = vpop.f32.mrf.mxu0
      %v1447 = vpop.f32.mrf.mxu0
      %v1448 = vadd.f32 0.0, %v1447
      %v1449 = vpop.f32.mrf.mxu0
      %1450 = vmatprep.mubr.bf16.mxu0 0
      %1451 = vmatmul.mubr.bf16.gmra.mxu0 %v1323
      %v1452 = vpop.f32.mrf.mxu0
      %v1453 = vadd.f32 0.0, %v1452
      %v1454 = vpop.f32.mrf.mxu0
      %v1455 = vpop.f32.mrf.mxu0
      %v1456 = vadd.f32 0.0, %v1455
      %v1457 = vpop.f32.mrf.mxu0
      %1458 = vmatprep.mubr.bf16.mxu0 0
      %1459 = vmatmul.mubr.bf16.gmra.mxu0 %v1326
      %v1460 = vpop.f32.mrf.mxu0
      %v1461 = vadd.f32 0.0, %v1460
      %v1462 = vpop.f32.mrf.mxu0
      %v1463 = vpop.f32.mrf.mxu0
      %v1464 = vadd.f32 0.0, %v1463
      %v1465 = vpop.f32.mrf.mxu0
      %1466 = vmatprep.mubr.bf16.mxu0 0
      %1467 = vmatmul.mubr.bf16.gmra.mxu0 %v1329
      %v1468 = vpop.f32.mrf.mxu0
      %v1469 = vadd.f32 0.0, %v1468
      %v1470 = vpop.f32.mrf.mxu0
      %v1471 = vpop.f32.mrf.mxu0
      %v1472 = vadd.f32 0.0, %v1471
      %v1473 = vpop.f32.mrf.mxu0
      %1474 = vmatprep.mubr.bf16.mxu0 0
      %1475 = vmatmul.mubr.bf16.gmra.mxu0 %v1332
      %v1476 = vpop.f32.mrf.mxu0
      %v1477 = vadd.f32 0.0, %v1476
      %v1478 = vpop.f32.mrf.mxu0
      %v1479 = vpop.f32.mrf.mxu0
      %v1480 = vadd.f32 0.0, %v1479
      %v1481 = vpop.f32.mrf.mxu0
      %1482 = vmatprep.mubr.bf16.mxu0 0
      %1483 = vmatmul.mubr.bf16.gmra.mxu0 %v1335
      %v1484 = vpop.f32.mrf.mxu0
      %v1485 = vadd.f32 0.0, %v1484
      %v1486 = vpop.f32.mrf.mxu0
      %v1487 = vpop.f32.mrf.mxu0
      %v1488 = vadd.f32 0.0, %v1487
      %v1489 = vpop.f32.mrf.mxu0
      %1490 = vmatprep.mubr.bf16.mxu0 0
      %1491 = vmatmul.mubr.bf16.gmra.mxu0 %v1338
      %v1492 = vpop.f32.mrf.mxu0
      %v1493 = vadd.f32 0.0, %v1492
      %v1494 = vpop.f32.mrf.mxu0
      %v1495 = vpop.f32.mrf.mxu0
      %v1496 = vadd.f32 0.0, %v1495
      %v1497 = vpop.f32.mrf.mxu0
      %1498 = vmatprep.mubr.bf16.mxu0 0
      %1499 = vmatmul.mubr.bf16.gmra.mxu0 %v1341
      %v1500 = vpop.f32.mrf.mxu0
      %v1501 = vadd.f32 0.0, %v1500
      %v1502 = vpop.f32.mrf.mxu0
      %v1503 = vpop.f32.mrf.mxu0
      %v1504 = vadd.f32 0.0, %v1503
      %v1505 = vpop.f32.mrf.mxu0
      %1506 = vmatprep.mubr.bf16.mxu0 0
      %1507 = vmatmul.mubr.bf16.gmra.mxu0 %v1344
      %v1508 = vpop.f32.mrf.mxu0
      %v1509 = vadd.f32 0.0, %v1508
      %v1510 = vpop.f32.mrf.mxu0
      %v1511 = vpop.f32.mrf.mxu0
      %v1512 = vadd.f32 0.0, %v1511
      %v1513 = vpop.f32.mrf.mxu0
      %1514 = vmatprep.mubr.bf16.mxu0 0
      %1515 = vmatmul.mubr.bf16.gmra.mxu0 %v1347
      %v1516 = vpop.f32.mrf.mxu0
      %v1517 = vadd.f32 0.0, %v1516
      %v1518 = vpop.f32.mrf.mxu0
      %v1519 = vpop.f32.mrf.mxu0
      %v1520 = vadd.f32 0.0, %v1519
      %v1521 = vpop.f32.mrf.mxu0
      %1522 = vmatprep.mubr.bf16.mxu0 0
      %1523 = vmatmul.mubr.bf16.gmra.mxu0 %v1350
      %v1524 = vpop.f32.mrf.mxu0
      %v1525 = vadd.f32 0.0, %v1524
      %v1526 = vpop.f32.mrf.mxu0
      %v1527 = vpop.f32.mrf.mxu0
      %v1528 = vadd.f32 0.0, %v1527
      %v1529 = vpop.f32.mrf.mxu0
      %1530 = vmatprep.mubr.bf16.mxu0 0
      %1531 = vmatmul.mubr.bf16.gmra.mxu0 %v1353
      %v1532 = vpop.f32.mrf.mxu0
      %v1533 = vadd.f32 0.0, %v1532
      %v1534 = vpop.f32.mrf.mxu0
      %v1535 = vpop.f32.mrf.mxu0
      %v1536 = vadd.f32 0.0, %v1535
      %v1537 = vpop.f32.mrf.mxu0
      %1538 = vmatprep.mubr.bf16.mxu0 0
      %1539 = vmatmul.mubr.bf16.gmra.mxu0 %v1356
      %v1540 = vpop.f32.mrf.mxu0
      %v1541 = vadd.f32 0.0, %v1540
      %v1542 = vpop.f32.mrf.mxu0
      %v1543 = vpop.f32.mrf.mxu0
      %v1544 = vadd.f32 0.0, %v1543
      %v1545 = vpop.f32.mrf.mxu0
      %1546 = vmatprep.mubr.bf16.mxu0 0
      %1547 = vmatmul.mubr.bf16.gmra.mxu0 %v1359
      %v1548 = vpop.f32.mrf.mxu0
      %v1549 = vadd.f32 0.0, %v1548
      %v1550 = vpop.f32.mrf.mxu0
      %v1551 = vpop.f32.mrf.mxu0
      %v1552 = vadd.f32 0.0, %v1551
      %v1553 = vpop.f32.mrf.mxu0
      %1554 = vmatprep.mubr.bf16.mxu0 0
      %1555 = vmatmul.mubr.bf16.gmra.mxu0 %v1362
      %v1556 = vpop.f32.mrf.mxu0
      %v1557 = vadd.f32 0.0, %v1556
      %v1558 = vpop.f32.mrf.mxu0
      %v1559 = vpop.f32.mrf.mxu0
      %v1560 = vadd.f32 0.0, %v1559
      %v1561 = vpop.f32.mrf.mxu0
      %1562 = vmatprep.mubr.bf16.mxu0 0
      %1563 = vmatmul.mubr.bf16.gmra.mxu0 %v1365
      %v1564 = vpop.f32.mrf.mxu0
      %v1565 = vadd.f32 0.0, %v1564
      %v1566 = vpop.f32.mrf.mxu0
      %v1567 = vpop.f32.mrf.mxu0
      %v1568 = vadd.f32 0.0, %v1567
      %v1569 = vpop.f32.mrf.mxu0
      %1570 = vdwg.mxu0
      %v1571 = vadd.f32 %v989, %v1405
      %v1572 = vadd.f32 %v992, %v1408
      %v1573 = vadd.f32 %v997, %v1413
      %v1574 = vadd.f32 %v1000, %v1416
      %v1575 = vadd.f32 %v1005, %v1421
      %v1576 = vadd.f32 %v1008, %v1424
      %v1577 = vadd.f32 %v1013, %v1429
      %v1578 = vadd.f32 %v1016, %v1432
      %v1579 = vadd.f32 %v1021, %v1437
      %v1580 = vadd.f32 %v1024, %v1440
      %v1581 = vadd.f32 %v1029, %v1445
      %v1582 = vadd.f32 %v1032, %v1448
      %v1583 = vadd.f32 %v1037, %v1453
      %v1584 = vadd.f32 %v1040, %v1456
      %v1585 = vadd.f32 %v1045, %v1461
      %v1586 = vadd.f32 %v1048, %v1464
      %v1587 = vadd.f32 %v1053, %v1469
      %v1588 = vadd.f32 %v1056, %v1472
      %v1589 = vadd.f32 %v1061, %v1477
      %v1590 = vadd.f32 %v1064, %v1480
      %v1591 = vadd.f32 %v1069, %v1485
      %v1592 = vadd.f32 %v1072, %v1488
      %v1593 = vadd.f32 %v1077, %v1493
      %v1594 = vadd.f32 %v1080, %v1496
      %v1595 = vadd.f32 %v1085, %v1501
      %v1596 = vadd.f32 %v1088, %v1504
      %v1597 = vadd.f32 %v1093, %v1509
      %v1598 = vadd.f32 %v1096, %v1512
      %v1599 = vadd.f32 %v1101, %v1517
      %v1600 = vadd.f32 %v1104, %v1520
      %v1601 = vadd.f32 %v1109, %v1525
      %v1602 = vadd.f32 %v1112, %v1528
      %v1603 = vadd.f32 %v1117, %v1533
      %v1604 = vadd.f32 %v1120, %v1536
      %v1605 = vadd.f32 %v1125, %v1541
      %v1606 = vadd.f32 %v1128, %v1544
      %v1607 = vadd.f32 %v1133, %v1549
      %v1608 = vadd.f32 %v1136, %v1552
      %v1609 = vadd.f32 %v1141, %v1557
      %v1610 = vadd.f32 %v1144, %v1560
      %v1611 = vadd.f32 %v1149, %v1565
      %v1612 = vadd.f32 %v1152, %v1568
      %v1613 = vld [vmem:[%s313] sm:$0xf]
      %v1614 = vld [vmem:[%s313 + $0x4] sm:$0xf]
      %v1615 = vld [vmem:[%s313 + $0x8] sm:$0xf]
      %v1616 = vld [vmem:[%s313 + $0xc] sm:$0xf]
      %v1617 = vld [vmem:[%s313 + $0x10] sm:$0xf]
      %v1618 = vld [vmem:[%s313 + $0x14] sm:$0xf]
      %v1619 = vld [vmem:[%s313 + $0x18] sm:$0xf]
      %v1620 = vld [vmem:[%s313 + $0x1c] sm:$0xf]
      %v1621 = vld [vmem:[%s313 + $0x20] sm:$0xf]
      %v1622 = vld [vmem:[%s313 + $0x24] sm:$0xf]
      %v1623 = vld [vmem:[%s313 + $0x28] sm:$0xf]
      %v1624 = vld [vmem:[%s313 + $0x2c] sm:$0xf]
      %v1625 = vld [vmem:[%s313 + $0x30] sm:$0xf]
      %v1626 = vld [vmem:[%s313 + $0x34] sm:$0xf]
      %v1627 = vld [vmem:[%s313 + $0x38] sm:$0xf]
      %v1628 = vld [vmem:[%s313 + $0x3c] sm:$0xf]
      %v1629 = vld [vmem:[%s313 + $0x40] sm:$0xf]
      %v1630 = vld [vmem:[%s313 + $0x44] sm:$0xf]
      %v1631 = vld [vmem:[%s313 + $0x48] sm:$0xf]
      %v1632 = vld [vmem:[%s313 + $0x4c] sm:$0xf]
      %v1633 = vld [vmem:[%s313 + $0x50] sm:$0xf]
      %v1634 = vld [vmem:[%s313 + $0x54] sm:$0xf]
      %v1635 = vld [vmem:[%s313 + $0x58] sm:$0xf]
      %v1636 = vld [vmem:[%s313 + $0x5c] sm:$0xf]
      %v1637 = vld [vmem:[%s313 + $0x60] sm:$0xf]
      %v1638 = vld [vmem:[%s313 + $0x64] sm:$0xf]
      %v1639 = vld [vmem:[%s313 + $0x68] sm:$0xf]
      %v1640 = vld [vmem:[%s313 + $0x6c] sm:$0xf]
      %v1641 = vld [vmem:[%s313 + $0x70] sm:$0xf]
      %v1642 = vld [vmem:[%s313 + $0x74] sm:$0xf]
      %v1643 = vld [vmem:[%s313 + $0x78] sm:$0xf]
      %v1644 = vld [vmem:[%s313 + $0x7c] sm:$0xf]
      %v1645 = vld [vmem:[%s313 + $0x80] sm:$0xf]
      %v1646 = vld [vmem:[%s313 + $0x84] sm:$0xf]
      %v1647 = vld [vmem:[%s313 + $0x88] sm:$0xf]
      %v1648 = vld [vmem:[%s313 + $0x8c] sm:$0xf]
      %v1649 = vld [vmem:[%s313 + $0x90] sm:$0xf]
      %v1650 = vld [vmem:[%s313 + $0x94] sm:$0xf]
      %v1651 = vld [vmem:[%s313 + $0x98] sm:$0xf]
      %v1652 = vld [vmem:[%s313 + $0x9c] sm:$0xf]
      %v1653 = vld [vmem:[%s313 + $0xa0] sm:$0xf]
      %v1654 = vld [vmem:[%s313 + $0xa4] sm:$0xf]
      %s1655 = scalar_lea.vmem %s4, 6
      %v1656 = vld [vmem:[%s1655] sm:$0x3]
      %v1699 = vunpack.c.l.b16 %v1613
      %v1700 = vunpack.c.l.b16 %v1614
      %v1701 = vunpack.c.l.b16 %v1615
      %v1702 = vunpack.c.l.b16 %v1616
      %v1703 = vunpack.c.l.b16 %v1617
      %v1704 = vunpack.c.l.b16 %v1618
      %v1705 = vunpack.c.l.b16 %v1619
      %v1706 = vunpack.c.l.b16 %v1620
      %v1707 = vunpack.c.l.b16 %v1621
      %v1708 = vunpack.c.l.b16 %v1622
      %v1709 = vunpack.c.l.b16 %v1623
      %v1710 = vunpack.c.l.b16 %v1624
      %v1711 = vunpack.c.l.b16 %v1625
      %v1712 = vunpack.c.l.b16 %v1626
      %v1713 = vunpack.c.l.b16 %v1627
      %v1714 = vunpack.c.l.b16 %v1628
      %v1715 = vunpack.c.l.b16 %v1629
      %v1716 = vunpack.c.l.b16 %v1630
      %v1717 = vunpack.c.l.b16 %v1631
      %v1718 = vunpack.c.l.b16 %v1632
      %v1719 = vunpack.c.l.b16 %v1633
      %v1720 = vunpack.c.l.b16 %v1634
      %v1721 = vunpack.c.l.b16 %v1635
      %v1722 = vunpack.c.l.b16 %v1636
      %v1723 = vunpack.c.l.b16 %v1637
      %v1724 = vunpack.c.l.b16 %v1638
      %v1725 = vunpack.c.l.b16 %v1639
      %v1726 = vunpack.c.l.b16 %v1640
      %v1727 = vunpack.c.l.b16 %v1641
      %v1728 = vunpack.c.l.b16 %v1642
      %v1729 = vunpack.c.l.b16 %v1643
      %v1730 = vunpack.c.l.b16 %v1644
      %v1731 = vunpack.c.l.b16 %v1645
      %v1732 = vunpack.c.l.b16 %v1646
      %v1733 = vunpack.c.l.b16 %v1647
      %v1734 = vunpack.c.l.b16 %v1648
      %v1735 = vunpack.c.l.b16 %v1649
      %v1736 = vunpack.c.l.b16 %v1650
      %v1737 = vunpack.c.l.b16 %v1651
      %v1738 = vunpack.c.l.b16 %v1652
      %v1739 = vunpack.c.l.b16 %v1653
      %v1740 = vunpack.c.l.b16 %v1654
      %v1741 = vpack.c.b16 %v1700, %v1699
      %v1742 = vpack.c.b16 %v1702, %v1701
      %v1743 = vpack.c.b16 %v1704, %v1703
      %v1744 = vpack.c.b16 %v1706, %v1705
      %v1745 = vpack.c.b16 %v1708, %v1707
      %v1746 = vpack.c.b16 %v1710, %v1709
      %v1747 = vpack.c.b16 %v1712, %v1711
      %v1748 = vpack.c.b16 %v1714, %v1713
      %v1749 = vpack.c.b16 %v1716, %v1715
      %v1750 = vpack.c.b16 %v1718, %v1717
      %v1751 = vpack.c.b16 %v1720, %v1719
      %v1752 = vpack.c.b16 %v1722, %v1721
      %v1753 = vpack.c.b16 %v1724, %v1723
      %v1754 = vpack.c.b16 %v1726, %v1725
      %v1755 = vpack.c.b16 %v1728, %v1727
      %v1756 = vpack.c.b16 %v1730, %v1729
      %v1757 = vpack.c.b16 %v1732, %v1731
      %v1758 = vpack.c.b16 %v1734, %v1733
      %v1759 = vpack.c.b16 %v1736, %v1735
      %v1760 = vpack.c.b16 %v1738, %v1737
      %v1761 = vpack.c.b16 %v1740, %v1739
      %v1763 = vsel %vm514, %v1741, 0
      %v1766 = vsel %vm514, %v1742, 0
      %v1769 = vsel %vm514, %v1743, 0
      %v1772 = vsel %vm514, %v1744, 0
      %v1775 = vsel %vm514, %v1745, 0
      %v1778 = vsel %vm514, %v1746, 0
      %v1781 = vsel %vm514, %v1747, 0
      %v1784 = vsel %vm514, %v1748, 0
      %v1787 = vsel %vm514, %v1749, 0
      %v1790 = vsel %vm514, %v1750, 0
      %v1793 = vsel %vm514, %v1751, 0
      %v1796 = vsel %vm514, %v1752, 0
      %v1799 = vsel %vm514, %v1753, 0
      %v1802 = vsel %vm514, %v1754, 0
      %v1805 = vsel %vm514, %v1755, 0
      %v1808 = vsel %vm514, %v1756, 0
      %v1811 = vsel %vm514, %v1757, 0
      %v1814 = vsel %vm514, %v1758, 0
      %v1817 = vsel %vm514, %v1759, 0
      %v1820 = vsel %vm514, %v1760, 0
      %v1823 = vsel %vm514, %v1761, 0
      %v1826 = vsel %vm578, %v1656, 0
      %1828 = vmatprep.subr.bf16.mxu0 0
      %1829 = vmatpush1.bf16.msra.mxu0 0
      %1830 = vmatprep.subr.bf16.mxu0 0
      %1831 = vmatpush1.bf16.msra.mxu0 0
      %1832 = vmatprep.subr.bf16.mxu0 0
      %1833 = vmatpush1.bf16.msra.mxu0 0
      %1834 = vmatprep.subr.bf16.mxu0 0
      %1835 = vmatpush1.bf16.msra.mxu0 0
      %1836 = vmatprep.subr.bf16.mxu0 0
      %1837 = vmatpush1.bf16.msra.mxu0 0
      %1838 = vmatprep.subr.bf16.mxu0 0
      %1839 = vmatpush1.bf16.msra.mxu0 0
      %1840 = vmatprep.subr.bf16.mxu0 0
      %1841 = vmatpush1.bf16.msra.mxu0 0
      %1842 = vmatprep.subr.bf16.mxu0 0
      %1843 = vmatpush1.bf16.msra.mxu0 %v1826
      %1844 = vmatprep.subr.bf16.mxu0 0
      %1845 = vmatpush2.bf16.msra.mxu0 0
      %1846 = vmatprep.subr.bf16.mxu0 0
      %1847 = vmatpush2.bf16.msra.mxu0 0
      %1848 = vmatprep.subr.bf16.mxu0 0
      %1849 = vmatpush2.bf16.msra.mxu0 0
      %1850 = vmatprep.subr.bf16.mxu0 0
      %1851 = vmatpush2.bf16.msra.mxu0 0
      %1852 = vmatprep.subr.bf16.mxu0 0
      %1853 = vmatpush2.bf16.msra.mxu0 0
      %1854 = vmatprep.subr.bf16.mxu0 0
      %1855 = vmatpush2.bf16.msra.mxu0 0
      %1856 = vmatprep.subr.bf16.mxu0 0
      %1857 = vmatpush2.bf16.msra.mxu0 0
      %1858 = vmatprep.subr.bf16.mxu0 0
      %1859 = vmatpush2.bf16.msra.mxu0 0
      %1860 = vmatprep.mubr.bf16.mxu0 0
      %1861 = vmatmul.mubr.bf16.gmra.mxu0 %v1763
      %v1862 = vpop.f32.mrf.mxu0
      %v1863 = vadd.f32 0.0, %v1862
      %v1864 = vpop.f32.mrf.mxu0
      %v1865 = vpop.f32.mrf.mxu0
      %v1866 = vadd.f32 0.0, %v1865
      %v1867 = vpop.f32.mrf.mxu0
      %1868 = vmatprep.mubr.bf16.mxu0 0
      %1869 = vmatmul.mubr.bf16.gmra.mxu0 %v1766
      %v1870 = vpop.f32.mrf.mxu0
      %v1871 = vadd.f32 0.0, %v1870
      %v1872 = vpop.f32.mrf.mxu0
      %v1873 = vpop.f32.mrf.mxu0
      %v1874 = vadd.f32 0.0, %v1873
      %v1875 = vpop.f32.mrf.mxu0
      %1876 = vmatprep.mubr.bf16.mxu0 0
      %1877 = vmatmul.mubr.bf16.gmra.mxu0 %v1769
      %v1878 = vpop.f32.mrf.mxu0
      %v1879 = vadd.f32 0.0, %v1878
      %v1880 = vpop.f32.mrf.mxu0
      %v1881 = vpop.f32.mrf.mxu0
      %v1882 = vadd.f32 0.0, %v1881
      %v1883 = vpop.f32.mrf.mxu0
      %1884 = vmatprep.mubr.bf16.mxu0 0
      %1885 = vmatmul.mubr.bf16.gmra.mxu0 %v1772
      %v1886 = vpop.f32.mrf.mxu0
      %v1887 = vadd.f32 0.0, %v1886
      %v1888 = vpop.f32.mrf.mxu0
      %v1889 = vpop.f32.mrf.mxu0
      %v1890 = vadd.f32 0.0, %v1889
      %v1891 = vpop.f32.mrf.mxu0
      %1892 = vmatprep.mubr.bf16.mxu0 0
      %1893 = vmatmul.mubr.bf16.gmra.mxu0 %v1775
      %v1894 = vpop.f32.mrf.mxu0
      %v1895 = vadd.f32 0.0, %v1894
      %v1896 = vpop.f32.mrf.mxu0
      %v1897 = vpop.f32.mrf.mxu0
      %v1898 = vadd.f32 0.0, %v1897
      %v1899 = vpop.f32.mrf.mxu0
      %1900 = vmatprep.mubr.bf16.mxu0 0
      %1901 = vmatmul.mubr.bf16.gmra.mxu0 %v1778
      %v1902 = vpop.f32.mrf.mxu0
      %v1903 = vadd.f32 0.0, %v1902
      %v1904 = vpop.f32.mrf.mxu0
      %v1905 = vpop.f32.mrf.mxu0
      %v1906 = vadd.f32 0.0, %v1905
      %v1907 = vpop.f32.mrf.mxu0
      %1908 = vmatprep.mubr.bf16.mxu0 0
      %1909 = vmatmul.mubr.bf16.gmra.mxu0 %v1781
      %v1910 = vpop.f32.mrf.mxu0
      %v1911 = vadd.f32 0.0, %v1910
      %v1912 = vpop.f32.mrf.mxu0
      %v1913 = vpop.f32.mrf.mxu0
      %v1914 = vadd.f32 0.0, %v1913
      %v1915 = vpop.f32.mrf.mxu0
      %1916 = vmatprep.mubr.bf16.mxu0 0
      %1917 = vmatmul.mubr.bf16.gmra.mxu0 %v1784
      %v1918 = vpop.f32.mrf.mxu0
      %v1919 = vadd.f32 0.0, %v1918
      %v1920 = vpop.f32.mrf.mxu0
      %v1921 = vpop.f32.mrf.mxu0
      %v1922 = vadd.f32 0.0, %v1921
      %v1923 = vpop.f32.mrf.mxu0
      %1924 = vmatprep.mubr.bf16.mxu0 0
      %1925 = vmatmul.mubr.bf16.gmra.mxu0 %v1787
      %v1926 = vpop.f32.mrf.mxu0
      %v1927 = vadd.f32 0.0, %v1926
      %v1928 = vpop.f32.mrf.mxu0
      %v1929 = vpop.f32.mrf.mxu0
      %v1930 = vadd.f32 0.0, %v1929
      %v1931 = vpop.f32.mrf.mxu0
      %1932 = vmatprep.mubr.bf16.mxu0 0
      %1933 = vmatmul.mubr.bf16.gmra.mxu0 %v1790
      %v1934 = vpop.f32.mrf.mxu0
      %v1935 = vadd.f32 0.0, %v1934
      %v1936 = vpop.f32.mrf.mxu0
      %v1937 = vpop.f32.mrf.mxu0
      %v1938 = vadd.f32 0.0, %v1937
      %v1939 = vpop.f32.mrf.mxu0
      %1940 = vmatprep.mubr.bf16.mxu0 0
      %1941 = vmatmul.mubr.bf16.gmra.mxu0 %v1793
      %v1942 = vpop.f32.mrf.mxu0
      %v1943 = vadd.f32 0.0, %v1942
      %v1944 = vpop.f32.mrf.mxu0
      %v1945 = vpop.f32.mrf.mxu0
      %v1946 = vadd.f32 0.0, %v1945
      %v1947 = vpop.f32.mrf.mxu0
      %1948 = vmatprep.mubr.bf16.mxu0 0
      %1949 = vmatmul.mubr.bf16.gmra.mxu0 %v1796
      %v1950 = vpop.f32.mrf.mxu0
      %v1951 = vadd.f32 0.0, %v1950
      %v1952 = vpop.f32.mrf.mxu0
      %v1953 = vpop.f32.mrf.mxu0
      %v1954 = vadd.f32 0.0, %v1953
      %v1955 = vpop.f32.mrf.mxu0
      %1956 = vmatprep.mubr.bf16.mxu0 0
      %1957 = vmatmul.mubr.bf16.gmra.mxu0 %v1799
      %v1958 = vpop.f32.mrf.mxu0
      %v1959 = vadd.f32 0.0, %v1958
      %v1960 = vpop.f32.mrf.mxu0
      %v1961 = vpop.f32.mrf.mxu0
      %v1962 = vadd.f32 0.0, %v1961
      %v1963 = vpop.f32.mrf.mxu0
      %1964 = vmatprep.mubr.bf16.mxu0 0
      %1965 = vmatmul.mubr.bf16.gmra.mxu0 %v1802
      %v1966 = vpop.f32.mrf.mxu0
      %v1967 = vadd.f32 0.0, %v1966
      %v1968 = vpop.f32.mrf.mxu0
      %v1969 = vpop.f32.mrf.mxu0
      %v1970 = vadd.f32 0.0, %v1969
      %v1971 = vpop.f32.mrf.mxu0
      %1972 = vmatprep.mubr.bf16.mxu0 0
      %1973 = vmatmul.mubr.bf16.gmra.mxu0 %v1805
      %v1974 = vpop.f32.mrf.mxu0
      %v1975 = vadd.f32 0.0, %v1974
      %v1976 = vpop.f32.mrf.mxu0
      %v1977 = vpop.f32.mrf.mxu0
      %v1978 = vadd.f32 0.0, %v1977
      %v1979 = vpop.f32.mrf.mxu0
      %1980 = vmatprep.mubr.bf16.mxu0 0
      %1981 = vmatmul.mubr.bf16.gmra.mxu0 %v1808
      %v1982 = vpop.f32.mrf.mxu0
      %v1983 = vadd.f32 0.0, %v1982
      %v1984 = vpop.f32.mrf.mxu0
      %v1985 = vpop.f32.mrf.mxu0
      %v1986 = vadd.f32 0.0, %v1985
      %v1987 = vpop.f32.mrf.mxu0
      %1988 = vmatprep.mubr.bf16.mxu0 0
      %1989 = vmatmul.mubr.bf16.gmra.mxu0 %v1811
      %v1990 = vpop.f32.mrf.mxu0
      %v1991 = vadd.f32 0.0, %v1990
      %v1992 = vpop.f32.mrf.mxu0
      %v1993 = vpop.f32.mrf.mxu0
      %v1994 = vadd.f32 0.0, %v1993
      %v1995 = vpop.f32.mrf.mxu0
      %1996 = vmatprep.mubr.bf16.mxu0 0
      %1997 = vmatmul.mubr.bf16.gmra.mxu0 %v1814
      %v1998 = vpop.f32.mrf.mxu0
      %v1999 = vadd.f32 0.0, %v1998
      %v2000 = vpop.f32.mrf.mxu0
      %v2001 = vpop.f32.mrf.mxu0
      %v2002 = vadd.f32 0.0, %v2001
      %v2003 = vpop.f32.mrf.mxu0
      %2004 = vmatprep.mubr.bf16.mxu0 0
      %2005 = vmatmul.mubr.bf16.gmra.mxu0 %v1817
      %v2006 = vpop.f32.mrf.mxu0
      %v2007 = vadd.f32 0.0, %v2006
      %v2008 = vpop.f32.mrf.mxu0
      %v2009 = vpop.f32.mrf.mxu0
      %v2010 = vadd.f32 0.0, %v2009
      %v2011 = vpop.f32.mrf.mxu0
      %2012 = vmatprep.mubr.bf16.mxu0 0
      %2013 = vmatmul.mubr.bf16.gmra.mxu0 %v1820
      %v2014 = vpop.f32.mrf.mxu0
      %v2015 = vadd.f32 0.0, %v2014
      %v2016 = vpop.f32.mrf.mxu0
      %v2017 = vpop.f32.mrf.mxu0
      %v2018 = vadd.f32 0.0, %v2017
      %v2019 = vpop.f32.mrf.mxu0
      %2020 = vmatprep.mubr.bf16.mxu0 0
      %2021 = vmatmul.mubr.bf16.gmra.mxu0 %v1823
      %v2022 = vpop.f32.mrf.mxu0
      %v2023 = vadd.f32 0.0, %v2022
      %v2024 = vpop.f32.mrf.mxu0
      %v2025 = vpop.f32.mrf.mxu0
      %v2026 = vadd.f32 0.0, %v2025
      %v2027 = vpop.f32.mrf.mxu0
      %2028 = vdwg.mxu0
      %v2029 = vadd.f32 %v1571, %v1863
      %v2030 = vadd.f32 %v1572, %v1866
      %v2031 = vadd.f32 %v1573, %v1871
      %v2032 = vadd.f32 %v1574, %v1874
      %v2033 = vadd.f32 %v1575, %v1879
      %v2034 = vadd.f32 %v1576, %v1882
      %v2035 = vadd.f32 %v1577, %v1887
      %v2036 = vadd.f32 %v1578, %v1890
      %v2037 = vadd.f32 %v1579, %v1895
      %v2038 = vadd.f32 %v1580, %v1898
      %v2039 = vadd.f32 %v1581, %v1903
      %v2040 = vadd.f32 %v1582, %v1906
      %v2041 = vadd.f32 %v1583, %v1911
      %v2042 = vadd.f32 %v1584, %v1914
      %v2043 = vadd.f32 %v1585, %v1919
      %v2044 = vadd.f32 %v1586, %v1922
      %v2045 = vadd.f32 %v1587, %v1927
      %v2046 = vadd.f32 %v1588, %v1930
      %v2047 = vadd.f32 %v1589, %v1935
      %v2048 = vadd.f32 %v1590, %v1938
      %v2049 = vadd.f32 %v1591, %v1943
      %v2050 = vadd.f32 %v1592, %v1946
      %v2051 = vadd.f32 %v1593, %v1951
      %v2052 = vadd.f32 %v1594, %v1954
      %v2053 = vadd.f32 %v1595, %v1959
      %v2054 = vadd.f32 %v1596, %v1962
      %v2055 = vadd.f32 %v1597, %v1967
      %v2056 = vadd.f32 %v1598, %v1970
      %v2057 = vadd.f32 %v1599, %v1975
      %v2058 = vadd.f32 %v1600, %v1978
      %v2059 = vadd.f32 %v1601, %v1983
      %v2060 = vadd.f32 %v1602, %v1986
      %v2061 = vadd.f32 %v1603, %v1991
      %v2062 = vadd.f32 %v1604, %v1994
      %v2063 = vadd.f32 %v1605, %v1999
      %v2064 = vadd.f32 %v1606, %v2002
      %v2065 = vadd.f32 %v1607, %v2007
      %v2066 = vadd.f32 %v1608, %v2010
      %v2067 = vadd.f32 %v1609, %v2015
      %v2068 = vadd.f32 %v1610, %v2018
      %v2069 = vadd.f32 %v1611, %v2023
      %v2070 = vadd.f32 %v1612, %v2026
      %v2071 = vld [vmem:[%s5] sm:$0x1]
      %v2073 = vlaneseq
      %v2074 = vshrl.u32 %v2073, 7
      %v2075 = vsub.s32 0, %v2074
      %v2076 = vrot.slane %v2071, %v2075
      %v2078 = vadd.f32 %v2029, %v2076
      %v2079 = vadd.f32 %v2030, %v2076
      %v2080 = vadd.f32 %v2031, %v2076
      %v2081 = vadd.f32 %v2032, %v2076
      %v2082 = vadd.f32 %v2033, %v2076
      %v2083 = vadd.f32 %v2034, %v2076
      %v2084 = vadd.f32 %v2035, %v2076
      %v2085 = vadd.f32 %v2036, %v2076
      %v2086 = vadd.f32 %v2037, %v2076
      %v2087 = vadd.f32 %v2038, %v2076
      %v2088 = vadd.f32 %v2039, %v2076
      %v2089 = vadd.f32 %v2040, %v2076
      %v2090 = vadd.f32 %v2041, %v2076
      %v2091 = vadd.f32 %v2042, %v2076
      %v2092 = vadd.f32 %v2043, %v2076
      %v2093 = vadd.f32 %v2044, %v2076
      %v2094 = vadd.f32 %v2045, %v2076
      %v2095 = vadd.f32 %v2046, %v2076
      %v2096 = vadd.f32 %v2047, %v2076
      %v2097 = vadd.f32 %v2048, %v2076
      %v2098 = vadd.f32 %v2049, %v2076
      %v2099 = vadd.f32 %v2050, %v2076
      %v2100 = vadd.f32 %v2051, %v2076
      %v2101 = vadd.f32 %v2052, %v2076
      %v2102 = vadd.f32 %v2053, %v2076
      %v2103 = vadd.f32 %v2054, %v2076
      %v2104 = vadd.f32 %v2055, %v2076
      %v2105 = vadd.f32 %v2056, %v2076
      %v2106 = vadd.f32 %v2057, %v2076
      %v2107 = vadd.f32 %v2058, %v2076
      %v2108 = vadd.f32 %v2059, %v2076
      %v2109 = vadd.f32 %v2060, %v2076
      %v2110 = vadd.f32 %v2061, %v2076
      %v2111 = vadd.f32 %v2062, %v2076
      %v2112 = vadd.f32 %v2063, %v2076
      %v2113 = vadd.f32 %v2064, %v2076
      %v2114 = vadd.f32 %v2065, %v2076
      %v2115 = vadd.f32 %v2066, %v2076
      %v2116 = vadd.f32 %v2067, %v2076
      %v2117 = vadd.f32 %v2068, %v2076
      %v2118 = vadd.f32 %v2069, %v2076
      %v2119 = vadd.f32 %v2070, %v2076
      %v2120 = vsub.f32 0.0, %v2078
      %v2121 = vsub.f32 0.0, %v2079
      %v2122 = vsub.f32 0.0, %v2080
      %v2123 = vsub.f32 0.0, %v2081
      %v2124 = vsub.f32 0.0, %v2082
      %v2125 = vsub.f32 0.0, %v2083
      %v2126 = vsub.f32 0.0, %v2084
      %v2127 = vsub.f32 0.0, %v2085
      %v2128 = vsub.f32 0.0, %v2086
      %v2129 = vsub.f32 0.0, %v2087
      %v2130 = vsub.f32 0.0, %v2088
      %v2131 = vsub.f32 0.0, %v2089
      %v2132 = vsub.f32 0.0, %v2090
      %v2133 = vsub.f32 0.0, %v2091
      %v2134 = vsub.f32 0.0, %v2092
      %v2135 = vsub.f32 0.0, %v2093
      %v2136 = vsub.f32 0.0, %v2094
      %v2137 = vsub.f32 0.0, %v2095
      %v2138 = vsub.f32 0.0, %v2096
      %v2139 = vsub.f32 0.0, %v2097
      %v2140 = vsub.f32 0.0, %v2098
      %v2141 = vsub.f32 0.0, %v2099
      %v2142 = vsub.f32 0.0, %v2100
      %v2143 = vsub.f32 0.0, %v2101
      %v2144 = vsub.f32 0.0, %v2102
      %v2145 = vsub.f32 0.0, %v2103
      %v2146 = vsub.f32 0.0, %v2104
      %v2147 = vsub.f32 0.0, %v2105
      %v2148 = vsub.f32 0.0, %v2106
      %v2149 = vsub.f32 0.0, %v2107
      %v2150 = vsub.f32 0.0, %v2108
      %v2151 = vsub.f32 0.0, %v2109
      %v2152 = vsub.f32 0.0, %v2110
      %v2153 = vsub.f32 0.0, %v2111
      %v2154 = vsub.f32 0.0, %v2112
      %v2155 = vsub.f32 0.0, %v2113
      %v2156 = vsub.f32 0.0, %v2114
      %v2157 = vsub.f32 0.0, %v2115
      %v2158 = vsub.f32 0.0, %v2116
      %v2159 = vsub.f32 0.0, %v2117
      %v2160 = vsub.f32 0.0, %v2118
      %v2161 = vsub.f32 0.0, %v2119
      %v2162 = vmul.f32 %v2120, 1.442695
      %v2163 = vpow.pop %v2162
      %v2164 = vmul.f32 %v2121, 1.442695
      %v2165 = vpow.pop %v2164
      %v2166 = vmul.f32 %v2122, 1.442695
      %v2167 = vpow.pop %v2166
      %v2168 = vmul.f32 %v2123, 1.442695
      %v2169 = vpow.pop %v2168
      %v2170 = vmul.f32 %v2124, 1.442695
      %v2171 = vpow.pop %v2170
      %v2172 = vmul.f32 %v2125, 1.442695
      %v2173 = vpow.pop %v2172
      %v2174 = vmul.f32 %v2126, 1.442695
      %v2175 = vpow.pop %v2174
      %v2176 = vmul.f32 %v2127, 1.442695
      %v2177 = vpow.pop %v2176
      %v2178 = vmul.f32 %v2128, 1.442695
      %v2179 = vpow.pop %v2178
      %v2180 = vmul.f32 %v2129, 1.442695
      %v2181 = vpow.pop %v2180
      %v2182 = vmul.f32 %v2130, 1.442695
      %v2183 = vpow.pop %v2182
      %v2184 = vmul.f32 %v2131, 1.442695
      %v2185 = vpow.pop %v2184
      %v2186 = vmul.f32 %v2132, 1.442695
      %v2187 = vpow.pop %v2186
      %v2188 = vmul.f32 %v2133, 1.442695
      %v2189 = vpow.pop %v2188
      %v2190 = vmul.f32 %v2134, 1.442695
      %v2191 = vpow.pop %v2190
      %v2192 = vmul.f32 %v2135, 1.442695
      %v2193 = vpow.pop %v2192
      %v2194 = vmul.f32 %v2136, 1.442695
      %v2195 = vpow.pop %v2194
      %v2196 = vmul.f32 %v2137, 1.442695
      %v2197 = vpow.pop %v2196
      %v2198 = vmul.f32 %v2138, 1.442695
      %v2199 = vpow.pop %v2198
      %v2200 = vmul.f32 %v2139, 1.442695
      %v2201 = vpow.pop %v2200
      %v2202 = vmul.f32 %v2140, 1.442695
      %v2203 = vpow.pop %v2202
      %v2204 = vmul.f32 %v2141, 1.442695
      %v2205 = vpow.pop %v2204
      %v2206 = vmul.f32 %v2142, 1.442695
      %v2207 = vpow.pop %v2206
      %v2208 = vmul.f32 %v2143, 1.442695
      %v2209 = vpow.pop %v2208
      %v2210 = vmul.f32 %v2144, 1.442695
      %v2211 = vpow.pop %v2210
      %v2212 = vmul.f32 %v2145, 1.442695
      %v2213 = vpow.pop %v2212
      %v2214 = vmul.f32 %v2146, 1.442695
      %v2215 = vpow.pop %v2214
      %v2216 = vmul.f32 %v2147, 1.442695
      %v2217 = vpow.pop %v2216
      %v2218 = vmul.f32 %v2148, 1.442695
      %v2219 = vpow.pop %v2218
      %v2220 = vmul.f32 %v2149, 1.442695
      %v2221 = vpow.pop %v2220
      %v2222 = vmul.f32 %v2150, 1.442695
      %v2223 = vpow.pop %v2222
      %v2224 = vmul.f32 %v2151, 1.442695
      %v2225 = vpow.pop %v2224
      %v2226 = vmul.f32 %v2152, 1.442695
      %v2227 = vpow.pop %v2226
      %v2228 = vmul.f32 %v2153, 1.442695
      %v2229 = vpow.pop %v2228
      %v2230 = vmul.f32 %v2154, 1.442695
      %v2231 = vpow.pop %v2230
      %v2232 = vmul.f32 %v2155, 1.442695
      %v2233 = vpow.pop %v2232
      %v2234 = vmul.f32 %v2156, 1.442695
      %v2235 = vpow.pop %v2234
      %v2236 = vmul.f32 %v2157, 1.442695
      %v2237 = vpow.pop %v2236
      %v2238 = vmul.f32 %v2158, 1.442695
      %v2239 = vpow.pop %v2238
      %v2240 = vmul.f32 %v2159, 1.442695
      %v2241 = vpow.pop %v2240
      %v2242 = vmul.f32 %v2160, 1.442695
      %v2243 = vpow.pop %v2242
      %v2244 = vmul.f32 %v2161, 1.442695
      %v2245 = vpow.pop %v2244
      %v2246 = vadd.f32 %v2163, 1.0
      %v2247 = vadd.f32 %v2165, 1.0
      %v2248 = vadd.f32 %v2167, 1.0
      %v2249 = vadd.f32 %v2169, 1.0
      %v2250 = vadd.f32 %v2171, 1.0
      %v2251 = vadd.f32 %v2173, 1.0
      %v2252 = vadd.f32 %v2175, 1.0
      %v2253 = vadd.f32 %v2177, 1.0
      %v2254 = vadd.f32 %v2179, 1.0
      %v2255 = vadd.f32 %v2181, 1.0
      %v2256 = vadd.f32 %v2183, 1.0
      %v2257 = vadd.f32 %v2185, 1.0
      %v2258 = vadd.f32 %v2187, 1.0
      %v2259 = vadd.f32 %v2189, 1.0
      %v2260 = vadd.f32 %v2191, 1.0
      %v2261 = vadd.f32 %v2193, 1.0
      %v2262 = vadd.f32 %v2195, 1.0
      %v2263 = vadd.f32 %v2197, 1.0
      %v2264 = vadd.f32 %v2199, 1.0
      %v2265 = vadd.f32 %v2201, 1.0
      %v2266 = vadd.f32 %v2203, 1.0
      %v2267 = vadd.f32 %v2205, 1.0
      %v2268 = vadd.f32 %v2207, 1.0
      %v2269 = vadd.f32 %v2209, 1.0
      %v2270 = vadd.f32 %v2211, 1.0
      %v2271 = vadd.f32 %v2213, 1.0
      %v2272 = vadd.f32 %v2215, 1.0
      %v2273 = vadd.f32 %v2217, 1.0
      %v2274 = vadd.f32 %v2219, 1.0
      %v2275 = vadd.f32 %v2221, 1.0
      %v2276 = vadd.f32 %v2223, 1.0
      %v2277 = vadd.f32 %v2225, 1.0
      %v2278 = vadd.f32 %v2227, 1.0
      %v2279 = vadd.f32 %v2229, 1.0
      %v2280 = vadd.f32 %v2231, 1.0
      %v2281 = vadd.f32 %v2233, 1.0
      %v2282 = vadd.f32 %v2235, 1.0
      %v2283 = vadd.f32 %v2237, 1.0
      %v2284 = vadd.f32 %v2239, 1.0
      %v2285 = vadd.f32 %v2241, 1.0
      %v2286 = vadd.f32 %v2243, 1.0
      %v2287 = vadd.f32 %v2245, 1.0
      %v2288 = vrcp.pop %v2246
      %v2289 = vrcp.pop %v2247
      %v2290 = vrcp.pop %v2248
      %v2291 = vrcp.pop %v2249
      %v2292 = vrcp.pop %v2250
      %v2293 = vrcp.pop %v2251
      %v2294 = vrcp.pop %v2252
      %v2295 = vrcp.pop %v2253
      %v2296 = vrcp.pop %v2254
      %v2297 = vrcp.pop %v2255
      %v2298 = vrcp.pop %v2256
      %v2299 = vrcp.pop %v2257
      %v2300 = vrcp.pop %v2258
      %v2301 = vrcp.pop %v2259
      %v2302 = vrcp.pop %v2260
      %v2303 = vrcp.pop %v2261
      %v2304 = vrcp.pop %v2262
      %v2305 = vrcp.pop %v2263
      %v2306 = vrcp.pop %v2264
      %v2307 = vrcp.pop %v2265
      %v2308 = vrcp.pop %v2266
      %v2309 = vrcp.pop %v2267
      %v2310 = vrcp.pop %v2268
      %v2311 = vrcp.pop %v2269
      %v2312 = vrcp.pop %v2270
      %v2313 = vrcp.pop %v2271
      %v2314 = vrcp.pop %v2272
      %v2315 = vrcp.pop %v2273
      %v2316 = vrcp.pop %v2274
      %v2317 = vrcp.pop %v2275
      %v2318 = vrcp.pop %v2276
      %v2319 = vrcp.pop %v2277
      %v2320 = vrcp.pop %v2278
      %v2321 = vrcp.pop %v2279
      %v2322 = vrcp.pop %v2280
      %v2323 = vrcp.pop %v2281
      %v2324 = vrcp.pop %v2282
      %v2325 = vrcp.pop %v2283
      %v2326 = vrcp.pop %v2284
      %v2327 = vrcp.pop %v2285
      %v2328 = vrcp.pop %v2286
      %v2329 = vrcp.pop %v2287
      %v2330 = vmul.f32 %v2078, %v2288
      %v2331 = vmul.f32 %v2079, %v2289
      %v2332 = vmul.f32 %v2080, %v2290
      %v2333 = vmul.f32 %v2081, %v2291
      %v2334 = vmul.f32 %v2082, %v2292
      %v2335 = vmul.f32 %v2083, %v2293
      %v2336 = vmul.f32 %v2084, %v2294
      %v2337 = vmul.f32 %v2085, %v2295
      %v2338 = vmul.f32 %v2086, %v2296
      %v2339 = vmul.f32 %v2087, %v2297
      %v2340 = vmul.f32 %v2088, %v2298
      %v2341 = vmul.f32 %v2089, %v2299
      %v2342 = vmul.f32 %v2090, %v2300
      %v2343 = vmul.f32 %v2091, %v2301
      %v2344 = vmul.f32 %v2092, %v2302
      %v2345 = vmul.f32 %v2093, %v2303
      %v2346 = vmul.f32 %v2094, %v2304
      %v2347 = vmul.f32 %v2095, %v2305
      %v2348 = vmul.f32 %v2096, %v2306
      %v2349 = vmul.f32 %v2097, %v2307
      %v2350 = vmul.f32 %v2098, %v2308
      %v2351 = vmul.f32 %v2099, %v2309
      %v2352 = vmul.f32 %v2100, %v2310
      %v2353 = vmul.f32 %v2101, %v2311
      %v2354 = vmul.f32 %v2102, %v2312
      %v2355 = vmul.f32 %v2103, %v2313
      %v2356 = vmul.f32 %v2104, %v2314
      %v2357 = vmul.f32 %v2105, %v2315
      %v2358 = vmul.f32 %v2106, %v2316
      %v2359 = vmul.f32 %v2107, %v2317
      %v2360 = vmul.f32 %v2108, %v2318
      %v2361 = vmul.f32 %v2109, %v2319
      %v2362 = vmul.f32 %v2110, %v2320
      %v2363 = vmul.f32 %v2111, %v2321
      %v2364 = vmul.f32 %v2112, %v2322
      %v2365 = vmul.f32 %v2113, %v2323
      %v2366 = vmul.f32 %v2114, %v2324
      %v2367 = vmul.f32 %v2115, %v2325
      %v2368 = vmul.f32 %v2116, %v2326
      %v2369 = vmul.f32 %v2117, %v2327
      %v2370 = vmul.f32 %v2118, %v2328
      %v2371 = vmul.f32 %v2119, %v2329
      %v2372 = vpack.c.bf16 %v2331, %v2330
      %v2373 = vpack.c.bf16 %v2333, %v2332
      %v2374 = vpack.c.bf16 %v2335, %v2334
      %v2375 = vpack.c.bf16 %v2337, %v2336
      %v2376 = vpack.c.bf16 %v2339, %v2338
      %v2377 = vpack.c.bf16 %v2341, %v2340
      %v2378 = vpack.c.bf16 %v2343, %v2342
      %v2379 = vpack.c.bf16 %v2345, %v2344
      %v2380 = vpack.c.bf16 %v2347, %v2346
      %v2381 = vpack.c.bf16 %v2349, %v2348
      %v2382 = vpack.c.bf16 %v2351, %v2350
      %v2383 = vpack.c.bf16 %v2353, %v2352
      %v2384 = vpack.c.bf16 %v2355, %v2354
      %v2385 = vpack.c.bf16 %v2357, %v2356
      %v2386 = vpack.c.bf16 %v2359, %v2358
      %v2387 = vpack.c.bf16 %v2361, %v2360
      %v2388 = vpack.c.bf16 %v2363, %v2362
      %v2389 = vpack.c.bf16 %v2365, %v2364
      %v2390 = vpack.c.bf16 %v2367, %v2366
      %v2391 = vpack.c.bf16 %v2369, %v2368
      %v2392 = vpack.c.bf16 %v2371, %v2370
      %v2414 = vunpack.c.l.b16 %v2372
      %v2415 = vunpack.c.h.b16 %v2372
      %v2416 = vunpack.c.l.b16 %v2373
      %v2417 = vunpack.c.h.b16 %v2373
      %v2418 = vunpack.c.l.b16 %v2374
      %v2419 = vunpack.c.h.b16 %v2374
      %v2420 = vunpack.c.l.b16 %v2375
      %v2421 = vunpack.c.h.b16 %v2375
      %v2422 = vunpack.c.l.b16 %v2376
      %v2423 = vunpack.c.h.b16 %v2376
      %v2424 = vunpack.c.l.b16 %v2377
      %v2425 = vunpack.c.h.b16 %v2377
      %v2426 = vunpack.c.l.b16 %v2378
      %v2427 = vunpack.c.h.b16 %v2378
      %v2428 = vunpack.c.l.b16 %v2379
      %v2429 = vunpack.c.h.b16 %v2379
      %v2430 = vunpack.c.l.b16 %v2380
      %v2431 = vunpack.c.h.b16 %v2380
      %v2432 = vunpack.c.l.b16 %v2381
      %v2433 = vunpack.c.h.b16 %v2381
      %v2434 = vunpack.c.l.b16 %v2382
      %v2435 = vunpack.c.h.b16 %v2382
      %v2436 = vunpack.c.l.b16 %v2383
      %v2437 = vunpack.c.h.b16 %v2383
      %v2438 = vunpack.c.l.b16 %v2384
      %v2439 = vunpack.c.h.b16 %v2384
      %v2440 = vunpack.c.l.b16 %v2385
      %v2441 = vunpack.c.h.b16 %v2385
      %v2442 = vunpack.c.l.b16 %v2386
      %v2443 = vunpack.c.h.b16 %v2386
      %v2444 = vunpack.c.l.b16 %v2387
      %v2445 = vunpack.c.h.b16 %v2387
      %v2446 = vunpack.c.l.b16 %v2388
      %v2447 = vunpack.c.h.b16 %v2388
      %v2448 = vunpack.c.l.b16 %v2389
      %v2449 = vunpack.c.h.b16 %v2389
      %v2450 = vunpack.c.l.b16 %v2390
      %v2451 = vunpack.c.h.b16 %v2390
      %v2452 = vunpack.c.l.b16 %v2391
      %v2453 = vunpack.c.h.b16 %v2391
      %v2454 = vunpack.c.l.b16 %v2392
      %v2455 = vunpack.c.h.b16 %v2392
      %v2456 = vpack.c.b16 %v2414, %v2414
      %v2457 = vpack.c.b16 %v2415, %v2415
      %v2458 = vpack.c.b16 %v2416, %v2416
      %v2459 = vpack.c.b16 %v2417, %v2417
      %v2460 = vpack.c.b16 %v2418, %v2418
      %v2461 = vpack.c.b16 %v2419, %v2419
      %v2462 = vpack.c.b16 %v2420, %v2420
      %v2463 = vpack.c.b16 %v2421, %v2421
      %v2464 = vpack.c.b16 %v2422, %v2422
      %v2465 = vpack.c.b16 %v2423, %v2423
      %v2466 = vpack.c.b16 %v2424, %v2424
      %v2467 = vpack.c.b16 %v2425, %v2425
      %v2468 = vpack.c.b16 %v2426, %v2426
      %v2469 = vpack.c.b16 %v2427, %v2427
      %v2470 = vpack.c.b16 %v2428, %v2428
      %v2471 = vpack.c.b16 %v2429, %v2429
      %v2472 = vpack.c.b16 %v2430, %v2430
      %v2473 = vpack.c.b16 %v2431, %v2431
      %v2474 = vpack.c.b16 %v2432, %v2432
      %v2475 = vpack.c.b16 %v2433, %v2433
      %v2476 = vpack.c.b16 %v2434, %v2434
      %v2477 = vpack.c.b16 %v2435, %v2435
      %v2478 = vpack.c.b16 %v2436, %v2436
      %v2479 = vpack.c.b16 %v2437, %v2437
      %v2480 = vpack.c.b16 %v2438, %v2438
      %v2481 = vpack.c.b16 %v2439, %v2439
      %v2482 = vpack.c.b16 %v2440, %v2440
      %v2483 = vpack.c.b16 %v2441, %v2441
      %v2484 = vpack.c.b16 %v2442, %v2442
      %v2485 = vpack.c.b16 %v2443, %v2443
      %v2486 = vpack.c.b16 %v2444, %v2444
      %v2487 = vpack.c.b16 %v2445, %v2445
      %v2488 = vpack.c.b16 %v2446, %v2446
      %v2489 = vpack.c.b16 %v2447, %v2447
      %v2490 = vpack.c.b16 %v2448, %v2448
      %v2491 = vpack.c.b16 %v2449, %v2449
      %v2492 = vpack.c.b16 %v2450, %v2450
      %v2493 = vpack.c.b16 %v2451, %v2451
      %v2494 = vpack.c.b16 %v2452, %v2452
      %v2495 = vpack.c.b16 %v2453, %v2453
      %v2496 = vpack.c.b16 %v2454, %v2454
      %v2497 = vpack.c.b16 %v2455, %v2455
      %vm2540 = vcmask 60416
      %2541 = vst.msk [vmem:[%s319] sm:$0xf] %vm2540, %v2456
      %2542 = vst.msk [vmem:[%s319 + $0x4] sm:$0xf] %vm2540, %v2457
      %2543 = vst.msk [vmem:[%s319 + $0x8] sm:$0xf] %vm2540, %v2458
      %2544 = vst.msk [vmem:[%s319 + $0xc] sm:$0xf] %vm2540, %v2459
      %2545 = vst.msk [vmem:[%s319 + $0x10] sm:$0xf] %vm2540, %v2460
      %2546 = vst.msk [vmem:[%s319 + $0x14] sm:$0xf] %vm2540, %v2461
      %2547 = vst.msk [vmem:[%s319 + $0x18] sm:$0xf] %vm2540, %v2462
      %2548 = vst.msk [vmem:[%s319 + $0x1c] sm:$0xf] %vm2540, %v2463
      %2549 = vst.msk [vmem:[%s319 + $0x20] sm:$0xf] %vm2540, %v2464
      %2550 = vst.msk [vmem:[%s319 + $0x24] sm:$0xf] %vm2540, %v2465
      %2551 = vst.msk [vmem:[%s319 + $0x28] sm:$0xf] %vm2540, %v2466
      %2552 = vst.msk [vmem:[%s319 + $0x2c] sm:$0xf] %vm2540, %v2467
      %2553 = vst.msk [vmem:[%s319 + $0x30] sm:$0xf] %vm2540, %v2468
      %2554 = vst.msk [vmem:[%s319 + $0x34] sm:$0xf] %vm2540, %v2469
      %2555 = vst.msk [vmem:[%s319 + $0x38] sm:$0xf] %vm2540, %v2470
      %2556 = vst.msk [vmem:[%s319 + $0x3c] sm:$0xf] %vm2540, %v2471
      %2557 = vst.msk [vmem:[%s319 + $0x40] sm:$0xf] %vm2540, %v2472
      %2558 = vst.msk [vmem:[%s319 + $0x44] sm:$0xf] %vm2540, %v2473
      %2559 = vst.msk [vmem:[%s319 + $0x48] sm:$0xf] %vm2540, %v2474
      %2560 = vst.msk [vmem:[%s319 + $0x4c] sm:$0xf] %vm2540, %v2475
      %2561 = vst.msk [vmem:[%s319 + $0x50] sm:$0xf] %vm2540, %v2476
      %2562 = vst.msk [vmem:[%s319 + $0x54] sm:$0xf] %vm2540, %v2477
      %2563 = vst.msk [vmem:[%s319 + $0x58] sm:$0xf] %vm2540, %v2478
      %2564 = vst.msk [vmem:[%s319 + $0x5c] sm:$0xf] %vm2540, %v2479
      %2565 = vst.msk [vmem:[%s319 + $0x60] sm:$0xf] %vm2540, %v2480
      %2566 = vst.msk [vmem:[%s319 + $0x64] sm:$0xf] %vm2540, %v2481
      %2567 = vst.msk [vmem:[%s319 + $0x68] sm:$0xf] %vm2540, %v2482
      %2568 = vst.msk [vmem:[%s319 + $0x6c] sm:$0xf] %vm2540, %v2483
      %2569 = vst.msk [vmem:[%s319 + $0x70] sm:$0xf] %vm2540, %v2484
      %2570 = vst.msk [vmem:[%s319 + $0x74] sm:$0xf] %vm2540, %v2485
      %2571 = vst.msk [vmem:[%s319 + $0x78] sm:$0xf] %vm2540, %v2486
      %2572 = vst.msk [vmem:[%s319 + $0x7c] sm:$0xf] %vm2540, %v2487
      %2573 = vst.msk [vmem:[%s319 + $0x80] sm:$0xf] %vm2540, %v2488
      %2574 = vst.msk [vmem:[%s319 + $0x84] sm:$0xf] %vm2540, %v2489
      %2575 = vst.msk [vmem:[%s319 + $0x88] sm:$0xf] %vm2540, %v2490
      %2576 = vst.msk [vmem:[%s319 + $0x8c] sm:$0xf] %vm2540, %v2491
      %2577 = vst.msk [vmem:[%s319 + $0x90] sm:$0xf] %vm2540, %v2492
      %2578 = vst.msk [vmem:[%s319 + $0x94] sm:$0xf] %vm2540, %v2493
      %2579 = vst.msk [vmem:[%s319 + $0x98] sm:$0xf] %vm2540, %v2494
      %2580 = vst.msk [vmem:[%s319 + $0x9c] sm:$0xf] %vm2540, %v2495
      %2581 = vst.msk [vmem:[%s319 + $0xa0] sm:$0xf] %vm2540, %v2496
      %2582 = vst.msk [vmem:[%s319 + $0xa4] sm:$0xf] %vm2540, %v2497
      %s2583 = smul.u32 42, %s17
      %p2584 = scmp.lt.s32.totalorder %s2583, 83
      %s2585 = scalar_select %p2584, %s2583, 83
      %s2586 = smul.addr %s2585, 4
      %s2587 = scalar_lea.vmem %s6, %s2586
      // Predicated region
      $region45: #{_lambda_.11} parent=43 // pred_check
        %p2588 = pneg %p181
      $region46: #{_lambda_.11} parent=43 // pred_check_branch
        %2590 = sbr.rel (%p2588) target = $region48
      $region47: #{_lambda_.11} parent=43 // pred_region
        %s2591 = smul.u32 42, %s17
      $region48: #{_lambda_.11} parent=43 // pred_fallthru
        _
    $region44: #{_lambda_.11} parent=5 // pred_fallthru
      _
    %p2592 = scmp.le.s32.totalorder 2, %s12
    // Predicated region
    $region49: #{_lambda_.11} parent=5 // pred_check
      %p2593 = pneg %p2592
    $region50: #{_lambda_.11} parent=5 // pred_check_branch
      %2595 = sbr.rel (%p2593) target = $region52
    $region51: #{_lambda_.11} parent=5 // pred_region
      %s2596 = ssub.s32 %s12, 2
      // Predicated region
      $region53: #{_lambda_.11} parent=51 // pred_check
        %p2597 = pneg %p187
      $region54: #{_lambda_.11} parent=51 // pred_check_branch
        %2599 = sbr.rel (%p2597) target = $region56
      $region55: #{_lambda_.11} parent=51 // pred_region
        %s2600 = smul.u32 42, %s18
        %p2601 = scmp.lt.s32.totalorder %s2600, 83
        %s2602 = scalar_select %p2601, %s2600, 83
        %s2603 = smul.addr %s2602, 4
        %s2604 = scalar_lea.vmem %s6, %s2603
      $region56: #{_lambda_.11} parent=51 // pred_fallthru
        _
    $region52: #{_lambda_.11} parent=5 // pred_fallthru
      _
  $region6: #{_lambda_.11} parent=0 // loop_footer
    %s16 = sadd.s32 1, %s12
  $region7: #{_lambda_.11} parent=0 // loop_footer_branch
    %11 = sbr.rel target = $region3
  $region8: #{_lambda_.11} parent=0 // loop_exit
    _

// kernel: _lambda_.7
$region0: #{_lambda_.7}
  #allocation0 [shape = 'u32[]', space=smem, size = 0x4, offset = 0x4, fixed_abs, tag = 'smem constant byte address 0x4 - core index']
  #allocation1 [shape = 'u32[144,128]{1,0:T(1,128)}', space=vmem, size = 0x12000, scoped, tag = 'internal scratch']
  %s0 = inlined_call_operand.vmem [shape: bf16[2,336,4], index: 0, kind: input, shape index: {}]
  %s1 = inlined_call_operand.vmem [shape: bf16[9,4,4], index: 1, kind: input, shape index: {}]
  %s2 = inlined_call_operand.vmem [shape: f32[1,4], index: 2, kind: input, shape index: {}]
  %s3 = inlined_call_operand.vmem [shape: bf16[336,1], index: 3, kind: input, shape index: {}]
  %s4 = inlined_call_operand.vmem [shape: bf16[2,336,4], index: 4, kind: output, shape index: {}]
  %s5 = sld [smem:[#allocation0]]
  $region49: #{_lambda_.7} parent=0
    _
  %s7 = ssub.s32 1, %s5
  %s8 = scalar_select 0, %s7, %s5
  loop: start=0, step=1, limit=4
  $region2: #{_lambda_.7} parent=0 // loop_pre_header
    _
  $region3: #{_lambda_.7} parent=0 // loop_header
    %s10 = sphi 0, %s14
    %p11 = scmp.ge.s32.totalorder %s10, 4
    %s17 = sphi 0, %s29
    %s18 = sphi 0, %s25
    %s19 = sphi 0, %s17
    %s20 = sphi 0, %s18
    %s21 = sphi 0, %s19
    %s22 = sphi 0, %s20
    %s32 = sphi 0, %s34
    %s35 = sphi 0, %s32
    %s36 = sphi 0, %s35
    %s52 = sphi 0, %s36
    %s58 = sphi 0, %s60
    %s61 = sphi 0, %s58
    %s62 = sphi 0, %s61
    %s78 = sphi 0, %s62
    %s84 = sphi 0, %s86
    %s87 = sphi 0, %s84
    %s88 = sphi 0, %s87
    %s104 = sphi 0, %s88
    %s108 = sphi 0, %s108
    %s110 = sphi 0, %s108
    %s111 = sphi 0, %s110
    %s125 = sphi 0, %s111
    %s133 = sphi 0, %s135
    %s136 = sphi 0, %s133
    %s137 = sphi 0, %s136
    %s153 = sphi 0, %s137
  $region4: #{_lambda_.7} parent=0 // loop_header_branch
    %13 = sbr.rel (%p11) target = $region8
  $region5: #{_lambda_.7} parent=0 // loop_body
    %s15 = ssub.s32 %s10, 1
    %s16 = ssub.s32 %s10, 2
    %s23 = sadd.s32 1, %s18
    %p24 = scmp.ge.s32.totalorder %s23, 1
    %s25 = scalar_select %p24, 0, %s23
    %s26 = sadd.s32 1, %s17
    %s27 = scalar_select %p24, %s26, %s17
    %p28 = scmp.ge.s32.totalorder %s27, 2
    %s29 = scalar_select %p28, 0, %s27
    %s30 = ssub.s32 %s17, %s29
    %p31 = scmp.eq.s32.totalorder %s30, 0
    %s33 = sadd.s32 %s32, 1
    %s34 = scalar_select %p31, %s32, %s33
    %p37 = pneg %p31
    %p38 = scmp.eq.s32.totalorder %s10, 1
    %p39 = por %p37, %p38
    %p40 = scmp.ne.s32.totalorder %s32, %s35
    %p41 = scmp.eq.s32.totalorder %s10, 0
    %p42 = por %p40, %p41
    %p43 = scmp.ne.s32.totalorder %s32, %s35
    %p44 = scmp.eq.s32.totalorder %s15, 1
    %p45 = por %p43, %p44
    %p46 = scmp.ne.s32.totalorder %s35, %s36
    %p47 = scmp.eq.s32.totalorder %s15, 0
    %p48 = por %p46, %p47
    %p49 = scmp.ne.s32.totalorder %s35, %s36
    %p50 = scmp.eq.s32.totalorder %s16, 1
    %p51 = por %p49, %p50
    %p53 = scmp.ne.s32.totalorder %s36, %s52
    %p54 = scmp.eq.s32.totalorder %s16, 0
    %p55 = por %p53, %p54
    %s56 = ssub.s32 %s18, %s25
    %p57 = scmp.eq.s32.totalorder %s56, 0
    %s59 = sadd.s32 %s58, 1
    %s60 = scalar_select %p57, %s58, %s59
    %p63 = pneg %p57
    %p64 = scmp.eq.s32.totalorder %s10, 1
    %p65 = por %p63, %p64
    %p66 = scmp.ne.s32.totalorder %s58, %s61
    %p67 = scmp.eq.s32.totalorder %s10, 0
    %p68 = por %p66, %p67
    %p69 = scmp.ne.s32.totalorder %s58, %s61
    %p70 = scmp.eq.s32.totalorder %s15, 1
    %p71 = por %p69, %p70
    %p72 = scmp.ne.s32.totalorder %s61, %s62
    %p73 = scmp.eq.s32.totalorder %s15, 0
    %p74 = por %p72, %p73
    %p75 = scmp.ne.s32.totalorder %s61, %s62
    %p76 = scmp.eq.s32.totalorder %s16, 1
    %p77 = por %p75, %p76
    %p79 = scmp.ne.s32.totalorder %s62, %s78
    %p80 = scmp.eq.s32.totalorder %s16, 0
    %p81 = por %p79, %p80
    %s82 = ssub.s32 %s18, %s25
    %p83 = scmp.eq.s32.totalorder %s82, 0
    %s85 = sadd.s32 %s84, 1
    %s86 = scalar_select %p83, %s84, %s85
    %p89 = pneg %p83
    %p90 = scmp.eq.s32.totalorder %s10, 1
    %p91 = por %p89, %p90
    %p92 = scmp.ne.s32.totalorder %s84, %s87
    %p93 = scmp.eq.s32.totalorder %s10, 0
    %p94 = por %p92, %p93
    %p95 = scmp.ne.s32.totalorder %s84, %s87
    %p96 = scmp.eq.s32.totalorder %s15, 1
    %p97 = por %p95, %p96
    %p98 = scmp.ne.s32.totalorder %s87, %s88
    %p99 = scmp.eq.s32.totalorder %s15, 0
    %p100 = por %p98, %p99
    %p101 = scmp.ne.s32.totalorder %s87, %s88
    %p102 = scmp.eq.s32.totalorder %s16, 1
    %p103 = por %p101, %p102
    %p105 = scmp.ne.s32.totalorder %s88, %s104
    %p106 = scmp.eq.s32.totalorder %s16, 0
    %p107 = por %p105, %p106
    %s109 = sadd.s32 %s108, 1
    %p112 = scmp.eq.s32.totalorder %s10, 1
    %p113 = scmp.ne.s32.totalorder %s108, %s110
    %p114 = scmp.eq.s32.totalorder %s10, 0
    %p115 = por %p113, %p114
    %p116 = scmp.ne.s32.totalorder %s108, %s110
    %p117 = scmp.eq.s32.totalorder %s15, 1
    %p118 = por %p116, %p117
    %p119 = scmp.ne.s32.totalorder %s110, %s111
    %p120 = scmp.eq.s32.totalorder %s15, 0
    %p121 = por %p119, %p120
    %p122 = scmp.ne.s32.totalorder %s110, %s111
    %p123 = scmp.eq.s32.totalorder %s16, 1
    %p124 = por %p122, %p123
    %p126 = scmp.ne.s32.totalorder %s111, %s125
    %p127 = scmp.eq.s32.totalorder %s16, 0
    %p128 = por %p126, %p127
    %s129 = ssub.s32 %s17, %s29
    %s130 = ssub.s32 %s18, %s25
    %s131 = sor.u32 %s129, %s130
    %p132 = scmp.eq.s32.totalorder %s131, 0
    %s134 = sadd.s32 %s133, 1
    %s135 = scalar_select %p132, %s133, %s134
    %p138 = pneg %p132
    %p139 = scmp.eq.s32.totalorder %s10, 1
    %p140 = por %p138, %p139
    %p141 = scmp.ne.s32.totalorder %s133, %s136
    %p142 = scmp.eq.s32.totalorder %s10, 0
    %p143 = por %p141, %p142
    %p144 = scmp.ne.s32.totalorder %s133, %s136
    %p145 = scmp.eq.s32.totalorder %s15, 1
    %p146 = por %p144, %p145
    %p147 = scmp.ne.s32.totalorder %s136, %s137
    %p148 = scmp.eq.s32.totalorder %s15, 0
    %p149 = por %p147, %p148
    %p150 = scmp.ne.s32.totalorder %s136, %s137
    %p151 = scmp.eq.s32.totalorder %s16, 1
    %p152 = por %p150, %p151
    %p154 = scmp.ne.s32.totalorder %s137, %s153
    %p155 = scmp.eq.s32.totalorder %s16, 0
    %p156 = por %p154, %p155
    %p157 = scmp.le.s32.totalorder 1, %s10
    %p158 = scmp.lt.s32.totalorder %s10, 3
    %p159 = pnand %p157, %p158
    %p160 = pneg %p159
    // Predicated region
    $region9: #{_lambda_.7} parent=5 // pred_check
      _
    $region10: #{_lambda_.7} parent=5 // pred_check_branch
      %162 = sbr.rel (%p159) target = $region12
    $region11: #{_lambda_.7} parent=5 // pred_region
      %s163 = ssub.s32 %s10, 1
      // Predicated region
      $region13: #{_lambda_.7} parent=11 // pred_check
        %p164 = pneg %p74
      $region14: #{_lambda_.7} parent=11 // pred_check_branch
        %166 = sbr.rel (%p164) target = $region16
      $region15: #{_lambda_.7} parent=11 // pred_region
        %p167 = scmp.lt.s32.totalorder %s20, 0
        %s168 = scalar_select %p167, %s20, 0
        %s169 = smul.addr %s168, 2
        %s170 = scalar_lea.vmem %s1, %s169
      $region16: #{_lambda_.7} parent=11 // pred_fallthru
        _
      // Predicated region
      $region17: #{_lambda_.7} parent=11 // pred_check
        %p171 = pneg %p100
      $region18: #{_lambda_.7} parent=11 // pred_check_branch
        %173 = sbr.rel (%p171) target = $region20
      $region19: #{_lambda_.7} parent=11 // pred_region
        %p174 = scmp.lt.s32.totalorder %s20, 0
        %s175 = scalar_select %p174, %s20, 0
        %s176 = scalar_lea.vmem %s2, %s175
      $region20: #{_lambda_.7} parent=11 // pred_fallthru
        _
      // Predicated region
      $region21: #{_lambda_.7} parent=11 // pred_check
        %p177 = pneg %p121
      $region22: #{_lambda_.7} parent=11 // pred_check_branch
        %179 = sbr.rel (%p177) target = $region24
      $region23: #{_lambda_.7} parent=11 // pred_region
        _
      $region24: #{_lambda_.7} parent=11 // pred_fallthru
        _
    $region12: #{_lambda_.7} parent=5 // pred_fallthru
      _
    %p180 = scmp.lt.s32.totalorder %s10, 2
    // Predicated region
    $region25: #{_lambda_.7} parent=5 // pred_check
      %p181 = pneg %p180
    $region26: #{_lambda_.7} parent=5 // pred_check_branch
      %183 = sbr.rel (%p181) target = $region28
    $region27: #{_lambda_.7} parent=5 // pred_region
      // Predicated region
      $region29: #{_lambda_.7} parent=27 // pred_check
        %p184 = pneg %p42
      $region30: #{_lambda_.7} parent=27 // pred_check_branch
        %186 = sbr.rel (%p184) target = $region32
      $region31: #{_lambda_.7} parent=27 // pred_region
        %p187 = scmp.lt.s32.totalorder %s17, 1
        %s188 = scalar_select %p187, %s17, 1
        %s189 = smul.addr %s188, 42
        %s190 = smul.addr %s189, 4
        %s191 = scalar_lea.vmem %s0, %s190
      $region32: #{_lambda_.7} parent=27 // pred_fallthru
        _
    $region28: #{_lambda_.7} parent=5 // pred_fallthru
      _
    %p192 = scmp.le.s32.totalorder 1, %s10
    %p193 = scmp.lt.s32.totalorder %s10, 3
    %p194 = pnand %p192, %p193
    %p195 = pneg %p194
    // Predicated region
    $region33: #{_lambda_.7} parent=5 // pred_check
      _
    $region34: #{_lambda_.7} parent=5 // pred_check_branch
      %197 = sbr.rel (%p194) target = $region36
    $region35: #{_lambda_.7} parent=5 // pred_region
      %s198 = ssub.s32 %s10, 1
      %p199 = scmp.lt.s32.totalorder %s19, 1
      %s200 = scalar_select %p199, %s19, 1
      %s201 = smul.addr %s200, 42
      %s202 = smul.addr %s201, 4
      %s203 = scalar_lea.vmem %s0, %s202
      %p204 = pneg %p48
      %p205 = pneg %p45
      %p206 = scmp.lt.s32.totalorder %s20, 0
      %s207 = scalar_select %p206, %s20, 0
      %s208 = smul.addr %s207, 2
      %s209 = scalar_lea.vmem %s1, %s208
      %p210 = pneg %p74
      %p211 = pneg %p71
      %p212 = scmp.lt.s32.totalorder %s20, 0
      %s213 = scalar_select %p212, %s20, 0
      %s214 = scalar_lea.vmem %s2, %s213
      %p215 = pneg %p100
      %p216 = pneg %p97
      %p217 = pneg %p121
      %p218 = pneg %p118
      %p219 = pneg %p149
      %p220 = pneg %p146
      %p221 = scmp.lt.s32.totalorder %s19, 1
      %s222 = scalar_select %p221, %s19, 1
      %p223 = scmp.lt.s32.totalorder %s20, 0
      %s224 = scalar_select %p223, %s20, 0
      %s225 = smul.addr %s222, 42
      %s226 = sadd.s32 %s224, %s225
      %s227 = smul.addr %s226, 4
      %s228 = scalar_lea.vmem %s4, %s227
      %p229 = scmp.lt.s32.totalorder %s19, 1
      %s230 = scalar_select %p229, %s19, 1
      %s231 = smul.addr %s230, 42
      %s232 = smul.addr %s231, 4
      %s233 = scalar_lea.vmem %s0, %s232
      %p234 = scmp.lt.s32.totalorder %s20, 0
      %s235 = scalar_select %p234, %s20, 0
      %s236 = smul.addr %s235, 2
      %s237 = scalar_lea.vmem %s1, %s236
      %p238 = scmp.lt.s32.totalorder %s20, 0
      %s239 = scalar_select %p238, %s20, 0
      %s240 = scalar_lea.vmem %s2, %s239
      %p241 = scmp.lt.s32.totalorder %s19, 1
      %s242 = scalar_select %p241, %s19, 1
      %p243 = scmp.lt.s32.totalorder %s20, 0
      %s244 = scalar_select %p243, %s20, 0
      %s245 = smul.addr %s242, 42
      %s246 = sadd.s32 %s244, %s245
      %s247 = smul.addr %s246, 4
      %s248 = scalar_lea.vmem %s4, %s247
      %v250 = vld [vmem:[%s233] sm:$0xf]
      %v251 = vld [vmem:[%s233 + $0x4] sm:$0xf]
      %v252 = vld [vmem:[%s233 + $0x8] sm:$0xf]
      %v253 = vld [vmem:[%s233 + $0xc] sm:$0xf]
      %v254 = vld [vmem:[%s233 + $0x10] sm:$0xf]
      %v255 = vld [vmem:[%s233 + $0x14] sm:$0xf]
      %v256 = vld [vmem:[%s233 + $0x18] sm:$0xf]
      %v257 = vld [vmem:[%s233 + $0x1c] sm:$0xf]
      %v258 = vld [vmem:[%s233 + $0x20] sm:$0xf]
      %v259 = vld [vmem:[%s233 + $0x24] sm:$0xf]
      %v260 = vld [vmem:[%s233 + $0x28] sm:$0xf]
      %v261 = vld [vmem:[%s233 + $0x2c] sm:$0xf]
      %v262 = vld [vmem:[%s233 + $0x30] sm:$0xf]
      %v263 = vld [vmem:[%s233 + $0x34] sm:$0xf]
      %v264 = vld [vmem:[%s233 + $0x38] sm:$0xf]
      %v265 = vld [vmem:[%s233 + $0x3c] sm:$0xf]
      %v266 = vld [vmem:[%s233 + $0x40] sm:$0xf]
      %v267 = vld [vmem:[%s233 + $0x44] sm:$0xf]
      %v268 = vld [vmem:[%s233 + $0x48] sm:$0xf]
      %v269 = vld [vmem:[%s233 + $0x4c] sm:$0xf]
      %v270 = vld [vmem:[%s233 + $0x50] sm:$0xf]
      %v271 = vld [vmem:[%s233 + $0x54] sm:$0xf]
      %v272 = vld [vmem:[%s233 + $0x58] sm:$0xf]
      %v273 = vld [vmem:[%s233 + $0x5c] sm:$0xf]
      %v274 = vld [vmem:[%s233 + $0x60] sm:$0xf]
      %v275 = vld [vmem:[%s233 + $0x64] sm:$0xf]
      %v276 = vld [vmem:[%s233 + $0x68] sm:$0xf]
      %v277 = vld [vmem:[%s233 + $0x6c] sm:$0xf]
      %v278 = vld [vmem:[%s233 + $0x70] sm:$0xf]
      %v279 = vld [vmem:[%s233 + $0x74] sm:$0xf]
      %v280 = vld [vmem:[%s233 + $0x78] sm:$0xf]
      %v281 = vld [vmem:[%s233 + $0x7c] sm:$0xf]
      %v282 = vld [vmem:[%s233 + $0x80] sm:$0xf]
      %v283 = vld [vmem:[%s233 + $0x84] sm:$0xf]
      %v284 = vld [vmem:[%s233 + $0x88] sm:$0xf]
      %v285 = vld [vmem:[%s233 + $0x8c] sm:$0xf]
      %v286 = vld [vmem:[%s233 + $0x90] sm:$0xf]
      %v287 = vld [vmem:[%s233 + $0x94] sm:$0xf]
      %v288 = vld [vmem:[%s233 + $0x98] sm:$0xf]
      %v289 = vld [vmem:[%s233 + $0x9c] sm:$0xf]
      %v290 = vld [vmem:[%s233 + $0xa0] sm:$0xf]
      %v291 = vld [vmem:[%s233 + $0xa4] sm:$0xf]
      %v292 = vld [vmem:[%s3] sm:$0xf]
      %v293 = vld [vmem:[%s3 + $0x4] sm:$0xf]
      %v294 = vld [vmem:[%s3 + $0x8] sm:$0xf]
      %v295 = vld [vmem:[%s3 + $0xc] sm:$0xf]
      %v296 = vld [vmem:[%s3 + $0x10] sm:$0xf]
      %v297 = vld [vmem:[%s3 + $0x14] sm:$0xf]
      %v298 = vld [vmem:[%s3 + $0x18] sm:$0xf]
      %v299 = vld [vmem:[%s3 + $0x1c] sm:$0xf]
      %v300 = vld [vmem:[%s3 + $0x20] sm:$0xf]
      %v301 = vld [vmem:[%s3 + $0x24] sm:$0xf]
      %v302 = vld [vmem:[%s3 + $0x28] sm:$0xf]
      %v303 = vld [vmem:[%s3 + $0x2c] sm:$0xf]
      %v304 = vld [vmem:[%s3 + $0x30] sm:$0xf]
      %v305 = vld [vmem:[%s3 + $0x34] sm:$0xf]
      %v306 = vld [vmem:[%s3 + $0x38] sm:$0xf]
      %v307 = vld [vmem:[%s3 + $0x3c] sm:$0xf]
      %v308 = vld [vmem:[%s3 + $0x40] sm:$0xf]
      %v309 = vld [vmem:[%s3 + $0x44] sm:$0xf]
      %v310 = vld [vmem:[%s3 + $0x48] sm:$0xf]
      %v311 = vld [vmem:[%s3 + $0x4c] sm:$0xf]
      %v312 = vld [vmem:[%s3 + $0x50] sm:$0xf]
      %v313 = vld [vmem:[%s3 + $0x54] sm:$0xf]
      %v314 = vld [vmem:[%s3 + $0x58] sm:$0xf]
      %v315 = vld [vmem:[%s3 + $0x5c] sm:$0xf]
      %v316 = vld [vmem:[%s3 + $0x60] sm:$0xf]
      %v317 = vld [vmem:[%s3 + $0x64] sm:$0xf]
      %v318 = vld [vmem:[%s3 + $0x68] sm:$0xf]
      %v319 = vld [vmem:[%s3 + $0x6c] sm:$0xf]
      %v320 = vld [vmem:[%s3 + $0x70] sm:$0xf]
      %v321 = vld [vmem:[%s3 + $0x74] sm:$0xf]
      %v322 = vld [vmem:[%s3 + $0x78] sm:$0xf]
      %v323 = vld [vmem:[%s3 + $0x7c] sm:$0xf]
      %v324 = vld [vmem:[%s3 + $0x80] sm:$0xf]
      %v325 = vld [vmem:[%s3 + $0x84] sm:$0xf]
      %v326 = vld [vmem:[%s3 + $0x88] sm:$0xf]
      %v327 = vld [vmem:[%s3 + $0x8c] sm:$0xf]
      %v328 = vld [vmem:[%s3 + $0x90] sm:$0xf]
      %v329 = vld [vmem:[%s3 + $0x94] sm:$0xf]
      %v330 = vld [vmem:[%s3 + $0x98] sm:$0xf]
      %v331 = vld [vmem:[%s3 + $0x9c] sm:$0xf]
      %v332 = vld [vmem:[%s3 + $0xa0] sm:$0xf]
      %v333 = vld [vmem:[%s3 + $0xa4] sm:$0xf]
      %335 = vset.pattern.permute.xlu0 0
      %336 = vperm.xlu0 %335, %v292
      %v337 = vpop.permute.xlu0 %336
      %v340 = vunpack.c.l.s4 839922192
      %v341 = vunpack.c.0.s8 %v340
      %v342 = vlaneseq
      %v343 = vshrl.u32 %v342, 7
      %v344 = vsub.s32 %v341, %v343
      %v345 = vrot.slane %v337, %v344
      %347 = vset.pattern.permute.xlu0 0
      %348 = vperm.xlu0 %347, %v293
      %v349 = vpop.permute.xlu0 %348
      %v352 = vunpack.c.l.s4 839922192
      %v353 = vunpack.c.0.s8 %v352
      %v354 = vlaneseq
      %v355 = vshrl.u32 %v354, 7
      %v356 = vsub.s32 %v353, %v355
      %v357 = vrot.slane %v349, %v356
      %359 = vset.pattern.permute.xlu0 0
      %360 = vperm.xlu0 %359, %v294
      %v361 = vpop.permute.xlu0 %360
      %v364 = vunpack.c.l.s4 839922192
      %v365 = vunpack.c.0.s8 %v364
      %v366 = vlaneseq
      %v367 = vshrl.u32 %v366, 7
      %v368 = vsub.s32 %v365, %v367
      %v369 = vrot.slane %v361, %v368
      %371 = vset.pattern.permute.xlu0 0
      %372 = vperm.xlu0 %371, %v295
      %v373 = vpop.permute.xlu0 %372
      %v376 = vunpack.c.l.s4 839922192
      %v377 = vunpack.c.0.s8 %v376
      %v378 = vlaneseq
      %v379 = vshrl.u32 %v378, 7
      %v380 = vsub.s32 %v377, %v379
      %v381 = vrot.slane %v373, %v380
      %383 = vset.pattern.permute.xlu0 0
      %384 = vperm.xlu0 %383, %v296
      %v385 = vpop.permute.xlu0 %384
      %v388 = vunpack.c.l.s4 839922192
      %v389 = vunpack.c.0.s8 %v388
      %v390 = vlaneseq
      %v391 = vshrl.u32 %v390, 7
      %v392 = vsub.s32 %v389, %v391
      %v393 = vrot.slane %v385, %v392
      %395 = vset.pattern.permute.xlu0 0
      %396 = vperm.xlu0 %395, %v297
      %v397 = vpop.permute.xlu0 %396
      %v400 = vunpack.c.l.s4 839922192
      %v401 = vunpack.c.0.s8 %v400
      %v402 = vlaneseq
      %v403 = vshrl.u32 %v402, 7
      %v404 = vsub.s32 %v401, %v403
      %v405 = vrot.slane %v397, %v404
      %407 = vset.pattern.permute.xlu0 0
      %408 = vperm.xlu0 %407, %v298
      %v409 = vpop.permute.xlu0 %408
      %v412 = vunpack.c.l.s4 839922192
      %v413 = vunpack.c.0.s8 %v412
      %v414 = vlaneseq
      %v415 = vshrl.u32 %v414, 7
      %v416 = vsub.s32 %v413, %v415
      %v417 = vrot.slane %v409, %v416
      %419 = vset.pattern.permute.xlu0 0
      %420 = vperm.xlu0 %419, %v299
      %v421 = vpop.permute.xlu0 %420
      %v424 = vunpack.c.l.s4 839922192
      %v425 = vunpack.c.0.s8 %v424
      %v426 = vlaneseq
      %v427 = vshrl.u32 %v426, 7
      %v428 = vsub.s32 %v425, %v427
      %v429 = vrot.slane %v421, %v428
      %431 = vset.pattern.permute.xlu0 0
      %432 = vperm.xlu0 %431, %v300
      %v433 = vpop.permute.xlu0 %432
      %v436 = vunpack.c.l.s4 839922192
      %v437 = vunpack.c.0.s8 %v436
      %v438 = vlaneseq
      %v439 = vshrl.u32 %v438, 7
      %v440 = vsub.s32 %v437, %v439
      %v441 = vrot.slane %v433, %v440
      %443 = vset.pattern.permute.xlu0 0
      %444 = vperm.xlu0 %443, %v301
      %v445 = vpop.permute.xlu0 %444
      %v448 = vunpack.c.l.s4 839922192
      %v449 = vunpack.c.0.s8 %v448
      %v450 = vlaneseq
      %v451 = vshrl.u32 %v450, 7
      %v452 = vsub.s32 %v449, %v451
      %v453 = vrot.slane %v445, %v452
      %455 = vset.pattern.permute.xlu0 0
      %456 = vperm.xlu0 %455, %v302
      %v457 = vpop.permute.xlu0 %456
      %v460 = vunpack.c.l.s4 839922192
      %v461 = vunpack.c.0.s8 %v460
      %v462 = vlaneseq
      %v463 = vshrl.u32 %v462, 7
      %v464 = vsub.s32 %v461, %v463
      %v465 = vrot.slane %v457, %v464
      %467 = vset.pattern.permute.xlu0 0
      %468 = vperm.xlu0 %467, %v303
      %v469 = vpop.permute.xlu0 %468
      %v472 = vunpack.c.l.s4 839922192
      %v473 = vunpack.c.0.s8 %v472
      %v474 = vlaneseq
      %v475 = vshrl.u32 %v474, 7
      %v476 = vsub.s32 %v473, %v475
      %v477 = vrot.slane %v469, %v476
      %479 = vset.pattern.permute.xlu0 0
      %480 = vperm.xlu0 %479, %v304
      %v481 = vpop.permute.xlu0 %480
      %v484 = vunpack.c.l.s4 839922192
      %v485 = vunpack.c.0.s8 %v484
      %v486 = vlaneseq
      %v487 = vshrl.u32 %v486, 7
      %v488 = vsub.s32 %v485, %v487
      %v489 = vrot.slane %v481, %v488
      %491 = vset.pattern.permute.xlu0 0
      %492 = vperm.xlu0 %491, %v305
      %v493 = vpop.permute.xlu0 %492
      %v496 = vunpack.c.l.s4 839922192
      %v497 = vunpack.c.0.s8 %v496
      %v498 = vlaneseq
      %v499 = vshrl.u32 %v498, 7
      %v500 = vsub.s32 %v497, %v499
      %v501 = vrot.slane %v493, %v500
      %503 = vset.pattern.permute.xlu0 0
      %504 = vperm.xlu0 %503, %v306
      %v505 = vpop.permute.xlu0 %504
      %v508 = vunpack.c.l.s4 839922192
      %v509 = vunpack.c.0.s8 %v508
      %v510 = vlaneseq
      %v511 = vshrl.u32 %v510, 7
      %v512 = vsub.s32 %v509, %v511
      %v513 = vrot.slane %v505, %v512
      %515 = vset.pattern.permute.xlu0 0
      %516 = vperm.xlu0 %515, %v307
      %v517 = vpop.permute.xlu0 %516
      %v520 = vunpack.c.l.s4 839922192
      %v521 = vunpack.c.0.s8 %v520
      %v522 = vlaneseq
      %v523 = vshrl.u32 %v522, 7
      %v524 = vsub.s32 %v521, %v523
      %v525 = vrot.slane %v517, %v524
      %527 = vset.pattern.permute.xlu0 0
      %528 = vperm.xlu0 %527, %v308
      %v529 = vpop.permute.xlu0 %528
      %v532 = vunpack.c.l.s4 839922192
      %v533 = vunpack.c.0.s8 %v532
      %v534 = vlaneseq
      %v535 = vshrl.u32 %v534, 7
      %v536 = vsub.s32 %v533, %v535
      %v537 = vrot.slane %v529, %v536
      %539 = vset.pattern.permute.xlu0 0
      %540 = vperm.xlu0 %539, %v309
      %v541 = vpop.permute.xlu0 %540
      %v544 = vunpack.c.l.s4 839922192
      %v545 = vunpack.c.0.s8 %v544
      %v546 = vlaneseq
      %v547 = vshrl.u32 %v546, 7
      %v548 = vsub.s32 %v545, %v547
      %v549 = vrot.slane %v541, %v548
      %551 = vset.pattern.permute.xlu0 0
      %552 = vperm.xlu0 %551, %v310
      %v553 = vpop.permute.xlu0 %552
      %v556 = vunpack.c.l.s4 839922192
      %v557 = vunpack.c.0.s8 %v556
      %v558 = vlaneseq
      %v559 = vshrl.u32 %v558, 7
      %v560 = vsub.s32 %v557, %v559
      %v561 = vrot.slane %v553, %v560
      %563 = vset.pattern.permute.xlu0 0
      %564 = vperm.xlu0 %563, %v311
      %v565 = vpop.permute.xlu0 %564
      %v568 = vunpack.c.l.s4 839922192
      %v569 = vunpack.c.0.s8 %v568
      %v570 = vlaneseq
      %v571 = vshrl.u32 %v570, 7
      %v572 = vsub.s32 %v569, %v571
      %v573 = vrot.slane %v565, %v572
      %575 = vset.pattern.permute.xlu0 0
      %576 = vperm.xlu0 %575, %v312
      %v577 = vpop.permute.xlu0 %576
      %v580 = vunpack.c.l.s4 839922192
      %v581 = vunpack.c.0.s8 %v580
      %v582 = vlaneseq
      %v583 = vshrl.u32 %v582, 7
      %v584 = vsub.s32 %v581, %v583
      %v585 = vrot.slane %v577, %v584
      %587 = vset.pattern.permute.xlu0 0
      %588 = vperm.xlu0 %587, %v313
      %v589 = vpop.permute.xlu0 %588
      %v592 = vunpack.c.l.s4 839922192
      %v593 = vunpack.c.0.s8 %v592
      %v594 = vlaneseq
      %v595 = vshrl.u32 %v594, 7
      %v596 = vsub.s32 %v593, %v595
      %v597 = vrot.slane %v589, %v596
      %599 = vset.pattern.permute.xlu0 0
      %600 = vperm.xlu0 %599, %v314
      %v601 = vpop.permute.xlu0 %600
      %v604 = vunpack.c.l.s4 839922192
      %v605 = vunpack.c.0.s8 %v604
      %v606 = vlaneseq
      %v607 = vshrl.u32 %v606, 7
      %v608 = vsub.s32 %v605, %v607
      %v609 = vrot.slane %v601, %v608
      %611 = vset.pattern.permute.xlu0 0
      %612 = vperm.xlu0 %611, %v315
      %v613 = vpop.permute.xlu0 %612
      %v616 = vunpack.c.l.s4 839922192
      %v617 = vunpack.c.0.s8 %v616
      %v618 = vlaneseq
      %v619 = vshrl.u32 %v618, 7
      %v620 = vsub.s32 %v617, %v619
      %v621 = vrot.slane %v613, %v620
      %623 = vset.pattern.permute.xlu0 0
      %624 = vperm.xlu0 %623, %v316
      %v625 = vpop.permute.xlu0 %624
      %v628 = vunpack.c.l.s4 839922192
      %v629 = vunpack.c.0.s8 %v628
      %v630 = vlaneseq
      %v631 = vshrl.u32 %v630, 7
      %v632 = vsub.s32 %v629, %v631
      %v633 = vrot.slane %v625, %v632
      %635 = vset.pattern.permute.xlu0 0
      %636 = vperm.xlu0 %635, %v317
      %v637 = vpop.permute.xlu0 %636
      %v640 = vunpack.c.l.s4 839922192
      %v641 = vunpack.c.0.s8 %v640
      %v642 = vlaneseq
      %v643 = vshrl.u32 %v642, 7
      %v644 = vsub.s32 %v641, %v643
      %v645 = vrot.slane %v637, %v644
      %647 = vset.pattern.permute.xlu0 0
      %648 = vperm.xlu0 %647, %v318
      %v649 = vpop.permute.xlu0 %648
      %v652 = vunpack.c.l.s4 839922192
      %v653 = vunpack.c.0.s8 %v652
      %v654 = vlaneseq
      %v655 = vshrl.u32 %v654, 7
      %v656 = vsub.s32 %v653, %v655
      %v657 = vrot.slane %v649, %v656
      %659 = vset.pattern.permute.xlu0 0
      %660 = vperm.xlu0 %659, %v319
      %v661 = vpop.permute.xlu0 %660
      %v664 = vunpack.c.l.s4 839922192
      %v665 = vunpack.c.0.s8 %v664
      %v666 = vlaneseq
      %v667 = vshrl.u32 %v666, 7
      %v668 = vsub.s32 %v665, %v667
      %v669 = vrot.slane %v661, %v668
      %671 = vset.pattern.permute.xlu0 0
      %672 = vperm.xlu0 %671, %v320
      %v673 = vpop.permute.xlu0 %672
      %v676 = vunpack.c.l.s4 839922192
      %v677 = vunpack.c.0.s8 %v676
      %v678 = vlaneseq
      %v679 = vshrl.u32 %v678, 7
      %v680 = vsub.s32 %v677, %v679
      %v681 = vrot.slane %v673, %v680
      %683 = vset.pattern.permute.xlu0 0
      %684 = vperm.xlu0 %683, %v321
      %v685 = vpop.permute.xlu0 %684
      %v688 = vunpack.c.l.s4 839922192
      %v689 = vunpack.c.0.s8 %v688
      %v690 = vlaneseq
      %v691 = vshrl.u32 %v690, 7
      %v692 = vsub.s32 %v689, %v691
      %v693 = vrot.slane %v685, %v692
      %695 = vset.pattern.permute.xlu0 0
      %696 = vperm.xlu0 %695, %v322
      %v697 = vpop.permute.xlu0 %696
      %v700 = vunpack.c.l.s4 839922192
      %v701 = vunpack.c.0.s8 %v700
      %v702 = vlaneseq
      %v703 = vshrl.u32 %v702, 7
      %v704 = vsub.s32 %v701, %v703
      %v705 = vrot.slane %v697, %v704
      %707 = vset.pattern.permute.xlu0 0
      %708 = vperm.xlu0 %707, %v323
      %v709 = vpop.permute.xlu0 %708
      %v712 = vunpack.c.l.s4 839922192
      %v713 = vunpack.c.0.s8 %v712
      %v714 = vlaneseq
      %v715 = vshrl.u32 %v714, 7
      %v716 = vsub.s32 %v713, %v715
      %v717 = vrot.slane %v709, %v716
      %719 = vset.pattern.permute.xlu0 0
      %720 = vperm.xlu0 %719, %v324
      %v721 = vpop.permute.xlu0 %720
      %v724 = vunpack.c.l.s4 839922192
      %v725 = vunpack.c.0.s8 %v724
      %v726 = vlaneseq
      %v727 = vshrl.u32 %v726, 7
      %v728 = vsub.s32 %v725, %v727
      %v729 = vrot.slane %v721, %v728
      %731 = vset.pattern.permute.xlu0 0
      %732 = vperm.xlu0 %731, %v325
      %v733 = vpop.permute.xlu0 %732
      %v736 = vunpack.c.l.s4 839922192
      %v737 = vunpack.c.0.s8 %v736
      %v738 = vlaneseq
      %v739 = vshrl.u32 %v738, 7
      %v740 = vsub.s32 %v737, %v739
      %v741 = vrot.slane %v733, %v740
      %743 = vset.pattern.permute.xlu0 0
      %744 = vperm.xlu0 %743, %v326
      %v745 = vpop.permute.xlu0 %744
      %v748 = vunpack.c.l.s4 839922192
      %v749 = vunpack.c.0.s8 %v748
      %v750 = vlaneseq
      %v751 = vshrl.u32 %v750, 7
      %v752 = vsub.s32 %v749, %v751
      %v753 = vrot.slane %v745, %v752
      %755 = vset.pattern.permute.xlu0 0
      %756 = vperm.xlu0 %755, %v327
      %v757 = vpop.permute.xlu0 %756
      %v760 = vunpack.c.l.s4 839922192
      %v761 = vunpack.c.0.s8 %v760
      %v762 = vlaneseq
      %v763 = vshrl.u32 %v762, 7
      %v764 = vsub.s32 %v761, %v763
      %v765 = vrot.slane %v757, %v764
      %767 = vset.pattern.permute.xlu0 0
      %768 = vperm.xlu0 %767, %v328
      %v769 = vpop.permute.xlu0 %768
      %v772 = vunpack.c.l.s4 839922192
      %v773 = vunpack.c.0.s8 %v772
      %v774 = vlaneseq
      %v775 = vshrl.u32 %v774, 7
      %v776 = vsub.s32 %v773, %v775
      %v777 = vrot.slane %v769, %v776
      %779 = vset.pattern.permute.xlu0 0
      %780 = vperm.xlu0 %779, %v329
      %v781 = vpop.permute.xlu0 %780
      %v784 = vunpack.c.l.s4 839922192
      %v785 = vunpack.c.0.s8 %v784
      %v786 = vlaneseq
      %v787 = vshrl.u32 %v786, 7
      %v788 = vsub.s32 %v785, %v787
      %v789 = vrot.slane %v781, %v788
      %791 = vset.pattern.permute.xlu0 0
      %792 = vperm.xlu0 %791, %v330
      %v793 = vpop.permute.xlu0 %792
      %v796 = vunpack.c.l.s4 839922192
      %v797 = vunpack.c.0.s8 %v796
      %v798 = vlaneseq
      %v799 = vshrl.u32 %v798, 7
      %v800 = vsub.s32 %v797, %v799
      %v801 = vrot.slane %v793, %v800
      %803 = vset.pattern.permute.xlu0 0
      %804 = vperm.xlu0 %803, %v331
      %v805 = vpop.permute.xlu0 %804
      %v808 = vunpack.c.l.s4 839922192
      %v809 = vunpack.c.0.s8 %v808
      %v810 = vlaneseq
      %v811 = vshrl.u32 %v810, 7
      %v812 = vsub.s32 %v809, %v811
      %v813 = vrot.slane %v805, %v812
      %815 = vset.pattern.permute.xlu0 0
      %816 = vperm.xlu0 %815, %v332
      %v817 = vpop.permute.xlu0 %816
      %v820 = vunpack.c.l.s4 839922192
      %v821 = vunpack.c.0.s8 %v820
      %v822 = vlaneseq
      %v823 = vshrl.u32 %v822, 7
      %v824 = vsub.s32 %v821, %v823
      %v825 = vrot.slane %v817, %v824
      %827 = vset.pattern.permute.xlu0 0
      %828 = vperm.xlu0 %827, %v333
      %v829 = vpop.permute.xlu0 %828
      %v832 = vunpack.c.l.s4 839922192
      %v833 = vunpack.c.0.s8 %v832
      %v834 = vlaneseq
      %v835 = vshrl.u32 %v834, 7
      %v836 = vsub.s32 %v833, %v835
      %v837 = vrot.slane %v829, %v836
      %v838 = vmul.bf16 %v250, %v345
      %v839 = vmul.bf16 %v251, %v357
      %v840 = vmul.bf16 %v252, %v369
      %v841 = vmul.bf16 %v253, %v381
      %v842 = vmul.bf16 %v254, %v393
      %v843 = vmul.bf16 %v255, %v405
      %v844 = vmul.bf16 %v256, %v417
      %v845 = vmul.bf16 %v257, %v429
      %v846 = vmul.bf16 %v258, %v441
      %v847 = vmul.bf16 %v259, %v453
      %v848 = vmul.bf16 %v260, %v465
      %v849 = vmul.bf16 %v261, %v477
      %v850 = vmul.bf16 %v262, %v489
      %v851 = vmul.bf16 %v263, %v501
      %v852 = vmul.bf16 %v264, %v513
      %v853 = vmul.bf16 %v265, %v525
      %v854 = vmul.bf16 %v266, %v537
      %v855 = vmul.bf16 %v267, %v549
      %v856 = vmul.bf16 %v268, %v561
      %v857 = vmul.bf16 %v269, %v573
      %v858 = vmul.bf16 %v270, %v585
      %v859 = vmul.bf16 %v271, %v597
      %v860 = vmul.bf16 %v272, %v609
      %v861 = vmul.bf16 %v273, %v621
      %v862 = vmul.bf16 %v274, %v633
      %v863 = vmul.bf16 %v275, %v645
      %v864 = vmul.bf16 %v276, %v657
      %v865 = vmul.bf16 %v277, %v669
      %v866 = vmul.bf16 %v278, %v681
      %v867 = vmul.bf16 %v279, %v693
      %v868 = vmul.bf16 %v280, %v705
      %v869 = vmul.bf16 %v281, %v717
      %v870 = vmul.bf16 %v282, %v729
      %v871 = vmul.bf16 %v283, %v741
      %v872 = vmul.bf16 %v284, %v753
      %v873 = vmul.bf16 %v285, %v765
      %v874 = vmul.bf16 %v286, %v777
      %v875 = vmul.bf16 %v287, %v789
      %v876 = vmul.bf16 %v288, %v801
      %v877 = vmul.bf16 %v289, %v813
      %v878 = vmul.bf16 %v290, %v825
      %v879 = vmul.bf16 %v291, %v837
      %v880 = vunpack.c.l.bf16 %v838
      %v881 = vunpack.c.l.bf16 %v839
      %v882 = vunpack.c.l.bf16 %v840
      %v883 = vunpack.c.l.bf16 %v841
      %v884 = vunpack.c.l.bf16 %v842
      %v885 = vunpack.c.l.bf16 %v843
      %v886 = vunpack.c.l.bf16 %v844
      %v887 = vunpack.c.l.bf16 %v845
      %v888 = vunpack.c.l.bf16 %v846
      %v889 = vunpack.c.l.bf16 %v847
      %v890 = vunpack.c.l.bf16 %v848
      %v891 = vunpack.c.l.bf16 %v849
      %v892 = vunpack.c.l.bf16 %v850
      %v893 = vunpack.c.l.bf16 %v851
      %v894 = vunpack.c.l.bf16 %v852
      %v895 = vunpack.c.l.bf16 %v853
      %v896 = vunpack.c.l.bf16 %v854
      %v897 = vunpack.c.l.bf16 %v855
      %v898 = vunpack.c.l.bf16 %v856
      %v899 = vunpack.c.l.bf16 %v857
      %v900 = vunpack.c.l.bf16 %v858
      %v901 = vunpack.c.l.bf16 %v859
      %v902 = vunpack.c.l.bf16 %v860
      %v903 = vunpack.c.l.bf16 %v861
      %v904 = vunpack.c.l.bf16 %v862
      %v905 = vunpack.c.l.bf16 %v863
      %v906 = vunpack.c.l.bf16 %v864
      %v907 = vunpack.c.l.bf16 %v865
      %v908 = vunpack.c.l.bf16 %v866
      %v909 = vunpack.c.l.bf16 %v867
      %v910 = vunpack.c.l.bf16 %v868
      %v911 = vunpack.c.l.bf16 %v869
      %v912 = vunpack.c.l.bf16 %v870
      %v913 = vunpack.c.l.bf16 %v871
      %v914 = vunpack.c.l.bf16 %v872
      %v915 = vunpack.c.l.bf16 %v873
      %v916 = vunpack.c.l.bf16 %v874
      %v917 = vunpack.c.l.bf16 %v875
      %v918 = vunpack.c.l.bf16 %v876
      %v919 = vunpack.c.l.bf16 %v877
      %v920 = vunpack.c.l.bf16 %v878
      %v921 = vunpack.c.l.bf16 %v879
      %v922 = vrot.slane %v880, 6
      %v923 = vrot.slane %v881, 6
      %v924 = vrot.slane %v882, 6
      %v925 = vrot.slane %v883, 6
      %v926 = vrot.slane %v884, 6
      %v927 = vrot.slane %v885, 6
      %v928 = vrot.slane %v886, 6
      %v929 = vrot.slane %v887, 6
      %v930 = vrot.slane %v888, 6
      %v931 = vrot.slane %v889, 6
      %v932 = vrot.slane %v890, 6
      %v933 = vrot.slane %v891, 6
      %v934 = vrot.slane %v892, 6
      %v935 = vrot.slane %v893, 6
      %v936 = vrot.slane %v894, 6
      %v937 = vrot.slane %v895, 6
      %v938 = vrot.slane %v896, 6
      %v939 = vrot.slane %v897, 6
      %v940 = vrot.slane %v898, 6
      %v941 = vrot.slane %v899, 6
      %v942 = vrot.slane %v900, 6
      %v943 = vrot.slane %v901, 6
      %v944 = vrot.slane %v902, 6
      %v945 = vrot.slane %v903, 6
      %v946 = vrot.slane %v904, 6
      %v947 = vrot.slane %v905, 6
      %v948 = vrot.slane %v906, 6
      %v949 = vrot.slane %v907, 6
      %v950 = vrot.slane %v908, 6
      %v951 = vrot.slane %v909, 6
      %v952 = vrot.slane %v910, 6
      %v953 = vrot.slane %v911, 6
      %v954 = vrot.slane %v912, 6
      %v955 = vrot.slane %v913, 6
      %v956 = vrot.slane %v914, 6
      %v957 = vrot.slane %v915, 6
      %v958 = vrot.slane %v916, 6
      %v959 = vrot.slane %v917, 6
      %v960 = vrot.slane %v918, 6
      %v961 = vrot.slane %v919, 6
      %v962 = vrot.slane %v920, 6
      %v963 = vrot.slane %v921, 6
      %v964 = vlaneseq
      %v965 = vshrl.u32 %v964, 7
      %vm966 = vcmp.lt.s32.totalorder %v965, 2
      %v967 = vsel %vm966, %v962, %v963
      %v968 = vsel %vm966, %v961, %v962
      %v969 = vsel %vm966, %v960, %v961
      %v970 = vsel %vm966, %v959, %v960
      %v971 = vsel %vm966, %v958, %v959
      %v972 = vsel %vm966, %v957, %v958
      %v973 = vsel %vm966, %v956, %v957
      %v974 = vsel %vm966, %v955, %v956
      %v975 = vsel %vm966, %v954, %v955
      %v976 = vsel %vm966, %v953, %v954
      %v977 = vsel %vm966, %v952, %v953
      %v978 = vsel %vm966, %v951, %v952
      %v979 = vsel %vm966, %v950, %v951
      %v980 = vsel %vm966, %v949, %v950
      %v981 = vsel %vm966, %v948, %v949
      %v982 = vsel %vm966, %v947, %v948
      %v983 = vsel %vm966, %v946, %v947
      %v984 = vsel %vm966, %v945, %v946
      %v985 = vsel %vm966, %v944, %v945
      %v986 = vsel %vm966, %v943, %v944
      %v987 = vsel %vm966, %v942, %v943
      %v988 = vsel %vm966, %v941, %v942
      %v989 = vsel %vm966, %v940, %v941
      %v990 = vsel %vm966, %v939, %v940
      %v991 = vsel %vm966, %v938, %v939
      %v992 = vsel %vm966, %v937, %v938
      %v993 = vsel %vm966, %v936, %v937
      %v994 = vsel %vm966, %v935, %v936
      %v995 = vsel %vm966, %v934, %v935
      %v996 = vsel %vm966, %v933, %v934
      %v997 = vsel %vm966, %v932, %v933
      %v998 = vsel %vm966, %v931, %v932
      %v999 = vsel %vm966, %v930, %v931
      %v1000 = vsel %vm966, %v929, %v930
      %v1001 = vsel %vm966, %v928, %v929
      %v1002 = vsel %vm966, %v927, %v928
      %v1003 = vsel %vm966, %v926, %v927
      %v1004 = vsel %vm966, %v925, %v926
      %v1005 = vsel %vm966, %v924, %v925
      %v1006 = vsel %vm966, %v923, %v924
      %v1007 = vsel %vm966, %v922, %v923
      %v1008 = vsel %vm966, %v963, %v922
      %v1009 = vpack.c.bf16 %v967, %v968
      %v1010 = vpack.c.bf16 %v1007, %v1008
      %v1011 = vpack.c.bf16 %v1005, %v1006
      %v1012 = vpack.c.bf16 %v1003, %v1004
      %v1013 = vpack.c.bf16 %v1001, %v1002
      %v1014 = vpack.c.bf16 %v999, %v1000
      %v1015 = vpack.c.bf16 %v997, %v998
      %v1016 = vpack.c.bf16 %v995, %v996
      %v1017 = vpack.c.bf16 %v993, %v994
      %v1018 = vpack.c.bf16 %v991, %v992
      %v1019 = vpack.c.bf16 %v989, %v990
      %v1020 = vpack.c.bf16 %v987, %v988
      %v1021 = vpack.c.bf16 %v985, %v986
      %v1022 = vpack.c.bf16 %v983, %v984
      %v1023 = vpack.c.bf16 %v981, %v982
      %v1024 = vpack.c.bf16 %v979, %v980
      %v1025 = vpack.c.bf16 %v977, %v978
      %v1026 = vpack.c.bf16 %v975, %v976
      %v1027 = vpack.c.bf16 %v973, %v974
      %v1028 = vpack.c.bf16 %v971, %v972
      %v1029 = vpack.c.bf16 %v969, %v970
      %v1030 = vrot.slane %v880, 2
      %v1031 = vrot.slane %v881, 2
      %v1032 = vrot.slane %v882, 2
      %v1033 = vrot.slane %v883, 2
      %v1034 = vrot.slane %v884, 2
      %v1035 = vrot.slane %v885, 2
      %v1036 = vrot.slane %v886, 2
      %v1037 = vrot.slane %v887, 2
      %v1038 = vrot.slane %v888, 2
      %v1039 = vrot.slane %v889, 2
      %v1040 = vrot.slane %v890, 2
      %v1041 = vrot.slane %v891, 2
      %v1042 = vrot.slane %v892, 2
      %v1043 = vrot.slane %v893, 2
      %v1044 = vrot.slane %v894, 2
      %v1045 = vrot.slane %v895, 2
      %v1046 = vrot.slane %v896, 2
      %v1047 = vrot.slane %v897, 2
      %v1048 = vrot.slane %v898, 2
      %v1049 = vrot.slane %v899, 2
      %v1050 = vrot.slane %v900, 2
      %v1051 = vrot.slane %v901, 2
      %v1052 = vrot.slane %v902, 2
      %v1053 = vrot.slane %v903, 2
      %v1054 = vrot.slane %v904, 2
      %v1055 = vrot.slane %v905, 2
      %v1056 = vrot.slane %v906, 2
      %v1057 = vrot.slane %v907, 2
      %v1058 = vrot.slane %v908, 2
      %v1059 = vrot.slane %v909, 2
      %v1060 = vrot.slane %v910, 2
      %v1061 = vrot.slane %v911, 2
      %v1062 = vrot.slane %v912, 2
      %v1063 = vrot.slane %v913, 2
      %v1064 = vrot.slane %v914, 2
      %v1065 = vrot.slane %v915, 2
      %v1066 = vrot.slane %v916, 2
      %v1067 = vrot.slane %v917, 2
      %v1068 = vrot.slane %v918, 2
      %v1069 = vrot.slane %v919, 2
      %v1070 = vrot.slane %v920, 2
      %v1071 = vrot.slane %v921, 2
      %vm1072 = vcmp.lt.s32.totalorder %v965, 6
      %v1073 = vsel %vm1072, %v1070, %v1071
      %v1074 = vsel %vm1072, %v1069, %v1070
      %v1075 = vsel %vm1072, %v1068, %v1069
      %v1076 = vsel %vm1072, %v1067, %v1068
      %v1077 = vsel %vm1072, %v1066, %v1067
      %v1078 = vsel %vm1072, %v1065, %v1066
      %v1079 = vsel %vm1072, %v1064, %v1065
      %v1080 = vsel %vm1072, %v1063, %v1064
      %v1081 = vsel %vm1072, %v1062, %v1063
      %v1082 = vsel %vm1072, %v1061, %v1062
      %v1083 = vsel %vm1072, %v1060, %v1061
      %v1084 = vsel %vm1072, %v1059, %v1060
      %v1085 = vsel %vm1072, %v1058, %v1059
      %v1086 = vsel %vm1072, %v1057, %v1058
      %v1087 = vsel %vm1072, %v1056, %v1057
      %v1088 = vsel %vm1072, %v1055, %v1056
      %v1089 = vsel %vm1072, %v1054, %v1055
      %v1090 = vsel %vm1072, %v1053, %v1054
      %v1091 = vsel %vm1072, %v1052, %v1053
      %v1092 = vsel %vm1072, %v1051, %v1052
      %v1093 = vsel %vm1072, %v1050, %v1051
      %v1094 = vsel %vm1072, %v1049, %v1050
      %v1095 = vsel %vm1072, %v1048, %v1049
      %v1096 = vsel %vm1072, %v1047, %v1048
      %v1097 = vsel %vm1072, %v1046, %v1047
      %v1098 = vsel %vm1072, %v1045, %v1046
      %v1099 = vsel %vm1072, %v1044, %v1045
      %v1100 = vsel %vm1072, %v1043, %v1044
      %v1101 = vsel %vm1072, %v1042, %v1043
      %v1102 = vsel %vm1072, %v1041, %v1042
      %v1103 = vsel %vm1072, %v1040, %v1041
      %v1104 = vsel %vm1072, %v1039, %v1040
      %v1105 = vsel %vm1072, %v1038, %v1039
      %v1106 = vsel %vm1072, %v1037, %v1038
      %v1107 = vsel %vm1072, %v1036, %v1037
      %v1108 = vsel %vm1072, %v1035, %v1036
      %v1109 = vsel %vm1072, %v1034, %v1035
      %v1110 = vsel %vm1072, %v1033, %v1034
      %v1111 = vsel %vm1072, %v1032, %v1033
      %v1112 = vsel %vm1072, %v1031, %v1032
      %v1113 = vsel %vm1072, %v1030, %v1031
      %v1114 = vsel %vm1072, %v1071, %v1030
      %v1115 = vpack.c.bf16 %v1110, %v1111
      %v1116 = vpack.c.bf16 %v1108, %v1109
      %v1117 = vpack.c.bf16 %v1106, %v1107
      %v1118 = vpack.c.bf16 %v1104, %v1105
      %v1119 = vpack.c.bf16 %v1102, %v1103
      %v1120 = vpack.c.bf16 %v1100, %v1101
      %v1121 = vpack.c.bf16 %v1098, %v1099
      %v1122 = vpack.c.bf16 %v1096, %v1097
      %v1123 = vpack.c.bf16 %v1094, %v1095
      %v1124 = vpack.c.bf16 %v1092, %v1093
      %v1125 = vpack.c.bf16 %v1090, %v1091
      %v1126 = vpack.c.bf16 %v1088, %v1089
      %v1127 = vpack.c.bf16 %v1086, %v1087
      %v1128 = vpack.c.bf16 %v1084, %v1085
      %v1129 = vpack.c.bf16 %v1082, %v1083
      %v1130 = vpack.c.bf16 %v1080, %v1081
      %v1131 = vpack.c.bf16 %v1078, %v1079
      %v1132 = vpack.c.bf16 %v1076, %v1077
      %v1133 = vpack.c.bf16 %v1074, %v1075
      %v1134 = vpack.c.bf16 %v1114, %v1073
      %v1135 = vpack.c.bf16 %v1112, %v1113
      %v1136 = vld [vmem:[%s237] sm:$0x3]
      %s1137 = scalar_lea.vmem %s237, 6
      %v1138 = vld [vmem:[%s1137] sm:$0x3]
      %v1181 = vunpack.c.l.b16 %v838
      %v1182 = vunpack.c.l.b16 %v839
      %v1183 = vunpack.c.l.b16 %v840
      %v1184 = vunpack.c.l.b16 %v841
      %v1185 = vunpack.c.l.b16 %v842
      %v1186 = vunpack.c.l.b16 %v843
      %v1187 = vunpack.c.l.b16 %v844
      %v1188 = vunpack.c.l.b16 %v845
      %v1189 = vunpack.c.l.b16 %v846
      %v1190 = vunpack.c.l.b16 %v847
      %v1191 = vunpack.c.l.b16 %v848
      %v1192 = vunpack.c.l.b16 %v849
      %v1193 = vunpack.c.l.b16 %v850
      %v1194 = vunpack.c.l.b16 %v851
      %v1195 = vunpack.c.l.b16 %v852
      %v1196 = vunpack.c.l.b16 %v853
      %v1197 = vunpack.c.l.b16 %v854
      %v1198 = vunpack.c.l.b16 %v855
      %v1199 = vunpack.c.l.b16 %v856
      %v1200 = vunpack.c.l.b16 %v857
      %v1201 = vunpack.c.l.b16 %v858
      %v1202 = vunpack.c.l.b16 %v859
      %v1203 = vunpack.c.l.b16 %v860
      %v1204 = vunpack.c.l.b16 %v861
      %v1205 = vunpack.c.l.b16 %v862
      %v1206 = vunpack.c.l.b16 %v863
      %v1207 = vunpack.c.l.b16 %v864
      %v1208 = vunpack.c.l.b16 %v865
      %v1209 = vunpack.c.l.b16 %v866
      %v1210 = vunpack.c.l.b16 %v867
      %v1211 = vunpack.c.l.b16 %v868
      %v1212 = vunpack.c.l.b16 %v869
      %v1213 = vunpack.c.l.b16 %v870
      %v1214 = vunpack.c.l.b16 %v871
      %v1215 = vunpack.c.l.b16 %v872
      %v1216 = vunpack.c.l.b16 %v873
      %v1217 = vunpack.c.l.b16 %v874
      %v1218 = vunpack.c.l.b16 %v875
      %v1219 = vunpack.c.l.b16 %v876
      %v1220 = vunpack.c.l.b16 %v877
      %v1221 = vunpack.c.l.b16 %v878
      %v1222 = vunpack.c.l.b16 %v879
      %v1223 = vpack.c.b16 %v1182, %v1181
      %v1224 = vpack.c.b16 %v1184, %v1183
      %v1225 = vpack.c.b16 %v1186, %v1185
      %v1226 = vpack.c.b16 %v1188, %v1187
      %v1227 = vpack.c.b16 %v1190, %v1189
      %v1228 = vpack.c.b16 %v1192, %v1191
      %v1229 = vpack.c.b16 %v1194, %v1193
      %v1230 = vpack.c.b16 %v1196, %v1195
      %v1231 = vpack.c.b16 %v1198, %v1197
      %v1232 = vpack.c.b16 %v1200, %v1199
      %v1233 = vpack.c.b16 %v1202, %v1201
      %v1234 = vpack.c.b16 %v1204, %v1203
      %v1235 = vpack.c.b16 %v1206, %v1205
      %v1236 = vpack.c.b16 %v1208, %v1207
      %v1237 = vpack.c.b16 %v1210, %v1209
      %v1238 = vpack.c.b16 %v1212, %v1211
      %v1239 = vpack.c.b16 %v1214, %v1213
      %v1240 = vpack.c.b16 %v1216, %v1215
      %v1241 = vpack.c.b16 %v1218, %v1217
      %v1242 = vpack.c.b16 %v1220, %v1219
      %v1243 = vpack.c.b16 %v1222, %v1221
      %vm1244 = vcmask 31744
      %v1246 = vsel %vm1244, %v1223, 0
      %v1249 = vsel %vm1244, %v1224, 0
      %v1252 = vsel %vm1244, %v1225, 0
      %v1255 = vsel %vm1244, %v1226, 0
      %v1258 = vsel %vm1244, %v1227, 0
      %v1261 = vsel %vm1244, %v1228, 0
      %v1264 = vsel %vm1244, %v1229, 0
      %v1267 = vsel %vm1244, %v1230, 0
      %v1270 = vsel %vm1244, %v1231, 0
      %v1273 = vsel %vm1244, %v1232, 0
      %v1276 = vsel %vm1244, %v1233, 0
      %v1279 = vsel %vm1244, %v1234, 0
      %v1282 = vsel %vm1244, %v1235, 0
      %v1285 = vsel %vm1244, %v1236, 0
      %v1288 = vsel %vm1244, %v1237, 0
      %v1291 = vsel %vm1244, %v1238, 0
      %v1294 = vsel %vm1244, %v1239, 0
      %v1297 = vsel %vm1244, %v1240, 0
      %v1300 = vsel %vm1244, %v1241, 0
      %v1303 = vsel %vm1244, %v1242, 0
      %v1306 = vsel %vm1244, %v1243, 0
      %vm1308 = vcmask 1041408
      %v1310 = vsel %vm1308, %v1138, 0
      %1312 = vmatprep.subr.bf16.mxu0 0
      %1313 = vmatpush1.bf16.msra.mxu0 0
      %1314 = vmatprep.subr.bf16.mxu0 0
      %1315 = vmatpush1.bf16.msra.mxu0 0
      %1316 = vmatprep.subr.bf16.mxu0 0
      %1317 = vmatpush1.bf16.msra.mxu0 0
      %1318 = vmatprep.subr.bf16.mxu0 0
      %1319 = vmatpush1.bf16.msra.mxu0 0
      %1320 = vmatprep.subr.bf16.mxu0 0
      %1321 = vmatpush1.bf16.msra.mxu0 0
      %1322 = vmatprep.subr.bf16.mxu0 0
      %1323 = vmatpush1.bf16.msra.mxu0 0
      %1324 = vmatprep.subr.bf16.mxu0 0
      %1325 = vmatpush1.bf16.msra.mxu0 0
      %1326 = vmatprep.subr.bf16.mxu0 0
      %1327 = vmatpush1.bf16.msra.mxu0 %v1310
      %1328 = vmatprep.subr.bf16.mxu0 0
      %1329 = vmatpush2.bf16.msra.mxu0 0
      %1330 = vmatprep.subr.bf16.mxu0 0
      %1331 = vmatpush2.bf16.msra.mxu0 0
      %1332 = vmatprep.subr.bf16.mxu0 0
      %1333 = vmatpush2.bf16.msra.mxu0 0
      %1334 = vmatprep.subr.bf16.mxu0 0
      %1335 = vmatpush2.bf16.msra.mxu0 0
      %1336 = vmatprep.subr.bf16.mxu0 0
      %1337 = vmatpush2.bf16.msra.mxu0 0
      %1338 = vmatprep.subr.bf16.mxu0 0
      %1339 = vmatpush2.bf16.msra.mxu0 0
      %1340 = vmatprep.subr.bf16.mxu0 0
      %1341 = vmatpush2.bf16.msra.mxu0 0
      %1342 = vmatprep.subr.bf16.mxu0 0
      %1343 = vmatpush2.bf16.msra.mxu0 0
      %1344 = vmatprep.mubr.bf16.mxu0 0
      %1345 = vmatmul.mubr.bf16.gmra.mxu0 %v1246
      %v1346 = vpop.f32.mrf.mxu0
      %v1347 = vadd.f32 0.0, %v1346
      %v1348 = vpop.f32.mrf.mxu0
      %v1349 = vpop.f32.mrf.mxu0
      %v1350 = vadd.f32 0.0, %v1349
      %v1351 = vpop.f32.mrf.mxu0
      %1352 = vmatprep.mubr.bf16.mxu0 0
      %1353 = vmatmul.mubr.bf16.gmra.mxu0 %v1249
      %v1354 = vpop.f32.mrf.mxu0
      %v1355 = vadd.f32 0.0, %v1354
      %v1356 = vpop.f32.mrf.mxu0
      %v1357 = vpop.f32.mrf.mxu0
      %v1358 = vadd.f32 0.0, %v1357
      %v1359 = vpop.f32.mrf.mxu0
      %1360 = vmatprep.mubr.bf16.mxu0 0
      %1361 = vmatmul.mubr.bf16.gmra.mxu0 %v1252
      %v1362 = vpop.f32.mrf.mxu0
      %v1363 = vadd.f32 0.0, %v1362
      %v1364 = vpop.f32.mrf.mxu0
      %v1365 = vpop.f32.mrf.mxu0
      %v1366 = vadd.f32 0.0, %v1365
      %v1367 = vpop.f32.mrf.mxu0
      %1368 = vmatprep.mubr.bf16.mxu0 0
      %1369 = vmatmul.mubr.bf16.gmra.mxu0 %v1255
      %v1370 = vpop.f32.mrf.mxu0
      %v1371 = vadd.f32 0.0, %v1370
      %v1372 = vpop.f32.mrf.mxu0
      %v1373 = vpop.f32.mrf.mxu0
      %v1374 = vadd.f32 0.0, %v1373
      %v1375 = vpop.f32.mrf.mxu0
      %1376 = vmatprep.mubr.bf16.mxu0 0
      %1377 = vmatmul.mubr.bf16.gmra.mxu0 %v1258
      %v1378 = vpop.f32.mrf.mxu0
      %v1379 = vadd.f32 0.0, %v1378
      %v1380 = vpop.f32.mrf.mxu0
      %v1381 = vpop.f32.mrf.mxu0
      %v1382 = vadd.f32 0.0, %v1381
      %v1383 = vpop.f32.mrf.mxu0
      %1384 = vmatprep.mubr.bf16.mxu0 0
      %1385 = vmatmul.mubr.bf16.gmra.mxu0 %v1261
      %v1386 = vpop.f32.mrf.mxu0
      %v1387 = vadd.f32 0.0, %v1386
      %v1388 = vpop.f32.mrf.mxu0
      %v1389 = vpop.f32.mrf.mxu0
      %v1390 = vadd.f32 0.0, %v1389
      %v1391 = vpop.f32.mrf.mxu0
      %1392 = vmatprep.mubr.bf16.mxu0 0
      %1393 = vmatmul.mubr.bf16.gmra.mxu0 %v1264
      %v1394 = vpop.f32.mrf.mxu0
      %v1395 = vadd.f32 0.0, %v1394
      %v1396 = vpop.f32.mrf.mxu0
      %v1397 = vpop.f32.mrf.mxu0
      %v1398 = vadd.f32 0.0, %v1397
      %v1399 = vpop.f32.mrf.mxu0
      %1400 = vmatprep.mubr.bf16.mxu0 0
      %1401 = vmatmul.mubr.bf16.gmra.mxu0 %v1267
      %v1402 = vpop.f32.mrf.mxu0
      %v1403 = vadd.f32 0.0, %v1402
      %v1404 = vpop.f32.mrf.mxu0
      %v1405 = vpop.f32.mrf.mxu0
      %v1406 = vadd.f32 0.0, %v1405
      %v1407 = vpop.f32.mrf.mxu0
      %1408 = vmatprep.mubr.bf16.mxu0 0
      %1409 = vmatmul.mubr.bf16.gmra.mxu0 %v1270
      %v1410 = vpop.f32.mrf.mxu0
      %v1411 = vadd.f32 0.0, %v1410
      %v1412 = vpop.f32.mrf.mxu0
      %v1413 = vpop.f32.mrf.mxu0
      %v1414 = vadd.f32 0.0, %v1413
      %v1415 = vpop.f32.mrf.mxu0
      %1416 = vmatprep.mubr.bf16.mxu0 0
      %1417 = vmatmul.mubr.bf16.gmra.mxu0 %v1273
      %v1418 = vpop.f32.mrf.mxu0
      %v1419 = vadd.f32 0.0, %v1418
      %v1420 = vpop.f32.mrf.mxu0
      %v1421 = vpop.f32.mrf.mxu0
      %v1422 = vadd.f32 0.0, %v1421
      %v1423 = vpop.f32.mrf.mxu0
      %1424 = vmatprep.mubr.bf16.mxu0 0
      %1425 = vmatmul.mubr.bf16.gmra.mxu0 %v1276
      %v1426 = vpop.f32.mrf.mxu0
      %v1427 = vadd.f32 0.0, %v1426
      %v1428 = vpop.f32.mrf.mxu0
      %v1429 = vpop.f32.mrf.mxu0
      %v1430 = vadd.f32 0.0, %v1429
      %v1431 = vpop.f32.mrf.mxu0
      %1432 = vmatprep.mubr.bf16.mxu0 0
      %1433 = vmatmul.mubr.bf16.gmra.mxu0 %v1279
      %v1434 = vpop.f32.mrf.mxu0
      %v1435 = vadd.f32 0.0, %v1434
      %v1436 = vpop.f32.mrf.mxu0
      %v1437 = vpop.f32.mrf.mxu0
      %v1438 = vadd.f32 0.0, %v1437
      %v1439 = vpop.f32.mrf.mxu0
      %1440 = vmatprep.mubr.bf16.mxu0 0
      %1441 = vmatmul.mubr.bf16.gmra.mxu0 %v1282
      %v1442 = vpop.f32.mrf.mxu0
      %v1443 = vadd.f32 0.0, %v1442
      %v1444 = vpop.f32.mrf.mxu0
      %v1445 = vpop.f32.mrf.mxu0
      %v1446 = vadd.f32 0.0, %v1445
      %v1447 = vpop.f32.mrf.mxu0
      %1448 = vmatprep.mubr.bf16.mxu0 0
      %1449 = vmatmul.mubr.bf16.gmra.mxu0 %v1285
      %v1450 = vpop.f32.mrf.mxu0
      %v1451 = vadd.f32 0.0, %v1450
      %v1452 = vpop.f32.mrf.mxu0
      %v1453 = vpop.f32.mrf.mxu0
      %v1454 = vadd.f32 0.0, %v1453
      %v1455 = vpop.f32.mrf.mxu0
      %1456 = vmatprep.mubr.bf16.mxu0 0
      %1457 = vmatmul.mubr.bf16.gmra.mxu0 %v1288
      %v1458 = vpop.f32.mrf.mxu0
      %v1459 = vadd.f32 0.0, %v1458
      %v1460 = vpop.f32.mrf.mxu0
      %v1461 = vpop.f32.mrf.mxu0
      %v1462 = vadd.f32 0.0, %v1461
      %v1463 = vpop.f32.mrf.mxu0
      %1464 = vmatprep.mubr.bf16.mxu0 0
      %1465 = vmatmul.mubr.bf16.gmra.mxu0 %v1291
      %v1466 = vpop.f32.mrf.mxu0
      %v1467 = vadd.f32 0.0, %v1466
      %v1468 = vpop.f32.mrf.mxu0
      %v1469 = vpop.f32.mrf.mxu0
      %v1470 = vadd.f32 0.0, %v1469
      %v1471 = vpop.f32.mrf.mxu0
      %1472 = vmatprep.mubr.bf16.mxu0 0
      %1473 = vmatmul.mubr.bf16.gmra.mxu0 %v1294
      %v1474 = vpop.f32.mrf.mxu0
      %v1475 = vadd.f32 0.0, %v1474
      %v1476 = vpop.f32.mrf.mxu0
      %v1477 = vpop.f32.mrf.mxu0
      %v1478 = vadd.f32 0.0, %v1477
      %v1479 = vpop.f32.mrf.mxu0
      %1480 = vmatprep.mubr.bf16.mxu0 0
      %1481 = vmatmul.mubr.bf16.gmra.mxu0 %v1297
      %v1482 = vpop.f32.mrf.mxu0
      %v1483 = vadd.f32 0.0, %v1482
      %v1484 = vpop.f32.mrf.mxu0
      %v1485 = vpop.f32.mrf.mxu0
      %v1486 = vadd.f32 0.0, %v1485
      %v1487 = vpop.f32.mrf.mxu0
      %1488 = vmatprep.mubr.bf16.mxu0 0
      %1489 = vmatmul.mubr.bf16.gmra.mxu0 %v1300
      %v1490 = vpop.f32.mrf.mxu0
      %v1491 = vadd.f32 0.0, %v1490
      %v1492 = vpop.f32.mrf.mxu0
      %v1493 = vpop.f32.mrf.mxu0
      %v1494 = vadd.f32 0.0, %v1493
      %v1495 = vpop.f32.mrf.mxu0
      %1496 = vmatprep.mubr.bf16.mxu0 0
      %1497 = vmatmul.mubr.bf16.gmra.mxu0 %v1303
      %v1498 = vpop.f32.mrf.mxu0
      %v1499 = vadd.f32 0.0, %v1498
      %v1500 = vpop.f32.mrf.mxu0
      %v1501 = vpop.f32.mrf.mxu0
      %v1502 = vadd.f32 0.0, %v1501
      %v1503 = vpop.f32.mrf.mxu0
      %1504 = vmatprep.mubr.bf16.mxu0 0
      %1505 = vmatmul.mubr.bf16.gmra.mxu0 %v1306
      %v1506 = vpop.f32.mrf.mxu0
      %v1507 = vadd.f32 0.0, %v1506
      %v1508 = vpop.f32.mrf.mxu0
      %v1509 = vpop.f32.mrf.mxu0
      %v1510 = vadd.f32 0.0, %v1509
      %v1511 = vpop.f32.mrf.mxu0
      %1512 = vdwg.mxu0
      %v1514 = vsel %vm1244, %v1009, 0
      %v1517 = vsel %vm1244, %v1010, 0
      %v1520 = vsel %vm1244, %v1011, 0
      %v1523 = vsel %vm1244, %v1012, 0
      %v1526 = vsel %vm1244, %v1013, 0
      %v1529 = vsel %vm1244, %v1014, 0
      %v1532 = vsel %vm1244, %v1015, 0
      %v1535 = vsel %vm1244, %v1016, 0
      %v1538 = vsel %vm1244, %v1017, 0
      %v1541 = vsel %vm1244, %v1018, 0
      %v1544 = vsel %vm1244, %v1019, 0
      %v1547 = vsel %vm1244, %v1020, 0
      %v1550 = vsel %vm1244, %v1021, 0
      %v1553 = vsel %vm1244, %v1022, 0
      %v1556 = vsel %vm1244, %v1023, 0
      %v1559 = vsel %vm1244, %v1024, 0
      %v1562 = vsel %vm1244, %v1025, 0
      %v1565 = vsel %vm1244, %v1026, 0
      %v1568 = vsel %vm1244, %v1027, 0
      %v1571 = vsel %vm1244, %v1028, 0
      %v1574 = vsel %vm1244, %v1029, 0
      %v1577 = vsel %vm1308, %v1136, 0
      %1579 = vmatprep.subr.bf16.mxu0 0
      %1580 = vmatpush1.bf16.msra.mxu0 0
      %1581 = vmatprep.subr.bf16.mxu0 0
      %1582 = vmatpush1.bf16.msra.mxu0 0
      %1583 = vmatprep.subr.bf16.mxu0 0
      %1584 = vmatpush1.bf16.msra.mxu0 0
      %1585 = vmatprep.subr.bf16.mxu0 0
      %1586 = vmatpush1.bf16.msra.mxu0 0
      %1587 = vmatprep.subr.bf16.mxu0 0
      %1588 = vmatpush1.bf16.msra.mxu0 0
      %1589 = vmatprep.subr.bf16.mxu0 0
      %1590 = vmatpush1.bf16.msra.mxu0 0
      %1591 = vmatprep.subr.bf16.mxu0 0
      %1592 = vmatpush1.bf16.msra.mxu0 0
      %1593 = vmatprep.subr.bf16.mxu0 0
      %1594 = vmatpush1.bf16.msra.mxu0 %v1577
      %1595 = vmatprep.subr.bf16.mxu0 0
      %1596 = vmatpush2.bf16.msra.mxu0 0
      %1597 = vmatprep.subr.bf16.mxu0 0
      %1598 = vmatpush2.bf16.msra.mxu0 0
      %1599 = vmatprep.subr.bf16.mxu0 0
      %1600 = vmatpush2.bf16.msra.mxu0 0
      %1601 = vmatprep.subr.bf16.mxu0 0
      %1602 = vmatpush2.bf16.msra.mxu0 0
      %1603 = vmatprep.subr.bf16.mxu0 0
      %1604 = vmatpush2.bf16.msra.mxu0 0
      %1605 = vmatprep.subr.bf16.mxu0 0
      %1606 = vmatpush2.bf16.msra.mxu0 0
      %1607 = vmatprep.subr.bf16.mxu0 0
      %1608 = vmatpush2.bf16.msra.mxu0 0
      %1609 = vmatprep.subr.bf16.mxu0 0
      %1610 = vmatpush2.bf16.msra.mxu0 0
      %1611 = vmatprep.mubr.bf16.mxu0 0
      %1612 = vmatmul.mubr.bf16.gmra.mxu0 %v1514
      %v1613 = vpop.f32.mrf.mxu0
      %v1614 = vadd.f32 %v1347, %v1613
      %v1615 = vpop.f32.mrf.mxu0
      %v1616 = vpop.f32.mrf.mxu0
      %v1617 = vadd.f32 %v1350, %v1616
      %v1618 = vpop.f32.mrf.mxu0
      %1619 = vmatprep.mubr.bf16.mxu0 0
      %1620 = vmatmul.mubr.bf16.gmra.mxu0 %v1517
      %v1621 = vpop.f32.mrf.mxu0
      %v1622 = vadd.f32 %v1355, %v1621
      %v1623 = vpop.f32.mrf.mxu0
      %v1624 = vpop.f32.mrf.mxu0
      %v1625 = vadd.f32 %v1358, %v1624
      %v1626 = vpop.f32.mrf.mxu0
      %1627 = vmatprep.mubr.bf16.mxu0 0
      %1628 = vmatmul.mubr.bf16.gmra.mxu0 %v1520
      %v1629 = vpop.f32.mrf.mxu0
      %v1630 = vadd.f32 %v1363, %v1629
      %v1631 = vpop.f32.mrf.mxu0
      %v1632 = vpop.f32.mrf.mxu0
      %v1633 = vadd.f32 %v1366, %v1632
      %v1634 = vpop.f32.mrf.mxu0
      %1635 = vmatprep.mubr.bf16.mxu0 0
      %1636 = vmatmul.mubr.bf16.gmra.mxu0 %v1523
      %v1637 = vpop.f32.mrf.mxu0
      %v1638 = vadd.f32 %v1371, %v1637
      %v1639 = vpop.f32.mrf.mxu0
      %v1640 = vpop.f32.mrf.mxu0
      %v1641 = vadd.f32 %v1374, %v1640
      %v1642 = vpop.f32.mrf.mxu0
      %1643 = vmatprep.mubr.bf16.mxu0 0
      %1644 = vmatmul.mubr.bf16.gmra.mxu0 %v1526
      %v1645 = vpop.f32.mrf.mxu0
      %v1646 = vadd.f32 %v1379, %v1645
      %v1647 = vpop.f32.mrf.mxu0
      %v1648 = vpop.f32.mrf.mxu0
      %v1649 = vadd.f32 %v1382, %v1648
      %v1650 = vpop.f32.mrf.mxu0
      %1651 = vmatprep.mubr.bf16.mxu0 0
      %1652 = vmatmul.mubr.bf16.gmra.mxu0 %v1529
      %v1653 = vpop.f32.mrf.mxu0
      %v1654 = vadd.f32 %v1387, %v1653
      %v1655 = vpop.f32.mrf.mxu0
      %v1656 = vpop.f32.mrf.mxu0
      %v1657 = vadd.f32 %v1390, %v1656
      %v1658 = vpop.f32.mrf.mxu0
      %1659 = vmatprep.mubr.bf16.mxu0 0
      %1660 = vmatmul.mubr.bf16.gmra.mxu0 %v1532
      %v1661 = vpop.f32.mrf.mxu0
      %v1662 = vadd.f32 %v1395, %v1661
      %v1663 = vpop.f32.mrf.mxu0
      %v1664 = vpop.f32.mrf.mxu0
      %v1665 = vadd.f32 %v1398, %v1664
      %v1666 = vpop.f32.mrf.mxu0
      %1667 = vmatprep.mubr.bf16.mxu0 0
      %1668 = vmatmul.mubr.bf16.gmra.mxu0 %v1535
      %v1669 = vpop.f32.mrf.mxu0
      %v1670 = vadd.f32 %v1403, %v1669
      %v1671 = vpop.f32.mrf.mxu0
      %v1672 = vpop.f32.mrf.mxu0
      %v1673 = vadd.f32 %v1406, %v1672
      %v1674 = vpop.f32.mrf.mxu0
      %1675 = vmatprep.mubr.bf16.mxu0 0
      %1676 = vmatmul.mubr.bf16.gmra.mxu0 %v1538
      %v1677 = vpop.f32.mrf.mxu0
      %v1678 = vadd.f32 %v1411, %v1677
      %v1679 = vpop.f32.mrf.mxu0
      %v1680 = vpop.f32.mrf.mxu0
      %v1681 = vadd.f32 %v1414, %v1680
      %v1682 = vpop.f32.mrf.mxu0
      %1683 = vmatprep.mubr.bf16.mxu0 0
      %1684 = vmatmul.mubr.bf16.gmra.mxu0 %v1541
      %v1685 = vpop.f32.mrf.mxu0
      %v1686 = vadd.f32 %v1419, %v1685
      %v1687 = vpop.f32.mrf.mxu0
      %v1688 = vpop.f32.mrf.mxu0
      %v1689 = vadd.f32 %v1422, %v1688
      %v1690 = vpop.f32.mrf.mxu0
      %1691 = vmatprep.mubr.bf16.mxu0 0
      %1692 = vmatmul.mubr.bf16.gmra.mxu0 %v1544
      %v1693 = vpop.f32.mrf.mxu0
      %v1694 = vadd.f32 %v1427, %v1693
      %v1695 = vpop.f32.mrf.mxu0
      %v1696 = vpop.f32.mrf.mxu0
      %v1697 = vadd.f32 %v1430, %v1696
      %v1698 = vpop.f32.mrf.mxu0
      %1699 = vmatprep.mubr.bf16.mxu0 0
      %1700 = vmatmul.mubr.bf16.gmra.mxu0 %v1547
      %v1701 = vpop.f32.mrf.mxu0
      %v1702 = vadd.f32 %v1435, %v1701
      %v1703 = vpop.f32.mrf.mxu0
      %v1704 = vpop.f32.mrf.mxu0
      %v1705 = vadd.f32 %v1438, %v1704
      %v1706 = vpop.f32.mrf.mxu0
      %1707 = vmatprep.mubr.bf16.mxu0 0
      %1708 = vmatmul.mubr.bf16.gmra.mxu0 %v1550
      %v1709 = vpop.f32.mrf.mxu0
      %v1710 = vadd.f32 %v1443, %v1709
      %v1711 = vpop.f32.mrf.mxu0
      %v1712 = vpop.f32.mrf.mxu0
      %v1713 = vadd.f32 %v1446, %v1712
      %v1714 = vpop.f32.mrf.mxu0
      %1715 = vmatprep.mubr.bf16.mxu0 0
      %1716 = vmatmul.mubr.bf16.gmra.mxu0 %v1553
      %v1717 = vpop.f32.mrf.mxu0
      %v1718 = vadd.f32 %v1451, %v1717
      %v1719 = vpop.f32.mrf.mxu0
      %v1720 = vpop.f32.mrf.mxu0
      %v1721 = vadd.f32 %v1454, %v1720
      %v1722 = vpop.f32.mrf.mxu0
      %1723 = vmatprep.mubr.bf16.mxu0 0
      %1724 = vmatmul.mubr.bf16.gmra.mxu0 %v1556
      %v1725 = vpop.f32.mrf.mxu0
      %v1726 = vadd.f32 %v1459, %v1725
      %v1727 = vpop.f32.mrf.mxu0
      %v1728 = vpop.f32.mrf.mxu0
      %v1729 = vadd.f32 %v1462, %v1728
      %v1730 = vpop.f32.mrf.mxu0
      %1731 = vmatprep.mubr.bf16.mxu0 0
      %1732 = vmatmul.mubr.bf16.gmra.mxu0 %v1559
      %v1733 = vpop.f32.mrf.mxu0
      %v1734 = vadd.f32 %v1467, %v1733
      %v1735 = vpop.f32.mrf.mxu0
      %v1736 = vpop.f32.mrf.mxu0
      %v1737 = vadd.f32 %v1470, %v1736
      %v1738 = vpop.f32.mrf.mxu0
      %1739 = vmatprep.mubr.bf16.mxu0 0
      %1740 = vmatmul.mubr.bf16.gmra.mxu0 %v1562
      %v1741 = vpop.f32.mrf.mxu0
      %v1742 = vadd.f32 %v1475, %v1741
      %v1743 = vpop.f32.mrf.mxu0
      %v1744 = vpop.f32.mrf.mxu0
      %v1745 = vadd.f32 %v1478, %v1744
      %v1746 = vpop.f32.mrf.mxu0
      %1747 = vmatprep.mubr.bf16.mxu0 0
      %1748 = vmatmul.mubr.bf16.gmra.mxu0 %v1565
      %v1749 = vpop.f32.mrf.mxu0
      %v1750 = vadd.f32 %v1483, %v1749
      %v1751 = vpop.f32.mrf.mxu0
      %v1752 = vpop.f32.mrf.mxu0
      %v1753 = vadd.f32 %v1486, %v1752
      %v1754 = vpop.f32.mrf.mxu0
      %1755 = vmatprep.mubr.bf16.mxu0 0
      %1756 = vmatmul.mubr.bf16.gmra.mxu0 %v1568
      %v1757 = vpop.f32.mrf.mxu0
      %v1758 = vadd.f32 %v1491, %v1757
      %v1759 = vpop.f32.mrf.mxu0
      %v1760 = vpop.f32.mrf.mxu0
      %v1761 = vadd.f32 %v1494, %v1760
      %v1762 = vpop.f32.mrf.mxu0
      %1763 = vmatprep.mubr.bf16.mxu0 0
      %1764 = vmatmul.mubr.bf16.gmra.mxu0 %v1571
      %v1765 = vpop.f32.mrf.mxu0
      %v1766 = vadd.f32 %v1499, %v1765
      %v1767 = vpop.f32.mrf.mxu0
      %v1768 = vpop.f32.mrf.mxu0
      %v1769 = vadd.f32 %v1502, %v1768
      %v1770 = vpop.f32.mrf.mxu0
      %1771 = vmatprep.mubr.bf16.mxu0 0
      %1772 = vmatmul.mubr.bf16.gmra.mxu0 %v1574
      %v1773 = vpop.f32.mrf.mxu0
      %v1774 = vadd.f32 %v1507, %v1773
      %v1775 = vpop.f32.mrf.mxu0
      %v1776 = vpop.f32.mrf.mxu0
      %v1777 = vadd.f32 %v1510, %v1776
      %v1778 = vpop.f32.mrf.mxu0
      %1779 = vdwg.mxu0
      %s1780 = scalar_lea.vmem %s237, 12
      %v1781 = vld [vmem:[%s1780] sm:$0x3]
      %v1783 = vsel %vm1244, %v1115, 0
      %v1786 = vsel %vm1244, %v1116, 0
      %v1789 = vsel %vm1244, %v1117, 0
      %v1792 = vsel %vm1244, %v1118, 0
      %v1795 = vsel %vm1244, %v1119, 0
      %v1798 = vsel %vm1244, %v1120, 0
      %v1801 = vsel %vm1244, %v1121, 0
      %v1804 = vsel %vm1244, %v1122, 0
      %v1807 = vsel %vm1244, %v1123, 0
      %v1810 = vsel %vm1244, %v1124, 0
      %v1813 = vsel %vm1244, %v1125, 0
      %v1816 = vsel %vm1244, %v1126, 0
      %v1819 = vsel %vm1244, %v1127, 0
      %v1822 = vsel %vm1244, %v1128, 0
      %v1825 = vsel %vm1244, %v1129, 0
      %v1828 = vsel %vm1244, %v1130, 0
      %v1831 = vsel %vm1244, %v1131, 0
      %v1834 = vsel %vm1244, %v1132, 0
      %v1837 = vsel %vm1244, %v1133, 0
      %v1840 = vsel %vm1244, %v1134, 0
      %v1843 = vsel %vm1244, %v1135, 0
      %v1846 = vsel %vm1308, %v1781, 0
      %1848 = vmatprep.subr.bf16.mxu0 0
      %1849 = vmatpush1.bf16.msra.mxu0 0
      %1850 = vmatprep.subr.bf16.mxu0 0
      %1851 = vmatpush1.bf16.msra.mxu0 0
      %1852 = vmatprep.subr.bf16.mxu0 0
      %1853 = vmatpush1.bf16.msra.mxu0 0
      %1854 = vmatprep.subr.bf16.mxu0 0
      %1855 = vmatpush1.bf16.msra.mxu0 0
      %1856 = vmatprep.subr.bf16.mxu0 0
      %1857 = vmatpush1.bf16.msra.mxu0 0
      %1858 = vmatprep.subr.bf16.mxu0 0
      %1859 = vmatpush1.bf16.msra.mxu0 0
      %1860 = vmatprep.subr.bf16.mxu0 0
      %1861 = vmatpush1.bf16.msra.mxu0 0
      %1862 = vmatprep.subr.bf16.mxu0 0
      %1863 = vmatpush1.bf16.msra.mxu0 %v1846
      %1864 = vmatprep.subr.bf16.mxu0 0
      %1865 = vmatpush2.bf16.msra.mxu0 0
      %1866 = vmatprep.subr.bf16.mxu0 0
      %1867 = vmatpush2.bf16.msra.mxu0 0
      %1868 = vmatprep.subr.bf16.mxu0 0
      %1869 = vmatpush2.bf16.msra.mxu0 0
      %1870 = vmatprep.subr.bf16.mxu0 0
      %1871 = vmatpush2.bf16.msra.mxu0 0
      %1872 = vmatprep.subr.bf16.mxu0 0
      %1873 = vmatpush2.bf16.msra.mxu0 0
      %1874 = vmatprep.subr.bf16.mxu0 0
      %1875 = vmatpush2.bf16.msra.mxu0 0
      %1876 = vmatprep.subr.bf16.mxu0 0
      %1877 = vmatpush2.bf16.msra.mxu0 0
      %1878 = vmatprep.subr.bf16.mxu0 0
      %1879 = vmatpush2.bf16.msra.mxu0 0
      %1880 = vmatprep.mubr.bf16.mxu0 0
      %1881 = vmatmul.mubr.bf16.gmra.mxu0 %v1783
      %v1882 = vpop.f32.mrf.mxu0
      %v1883 = vadd.f32 0.0, %v1882
      %v1884 = vpop.f32.mrf.mxu0
      %v1885 = vpop.f32.mrf.mxu0
      %v1886 = vadd.f32 0.0, %v1885
      %v1887 = vpop.f32.mrf.mxu0
      %1888 = vmatprep.mubr.bf16.mxu0 0
      %1889 = vmatmul.mubr.bf16.gmra.mxu0 %v1786
      %v1890 = vpop.f32.mrf.mxu0
      %v1891 = vadd.f32 0.0, %v1890
      %v1892 = vpop.f32.mrf.mxu0
      %v1893 = vpop.f32.mrf.mxu0
      %v1894 = vadd.f32 0.0, %v1893
      %v1895 = vpop.f32.mrf.mxu0
      %1896 = vmatprep.mubr.bf16.mxu0 0
      %1897 = vmatmul.mubr.bf16.gmra.mxu0 %v1789
      %v1898 = vpop.f32.mrf.mxu0
      %v1899 = vadd.f32 0.0, %v1898
      %v1900 = vpop.f32.mrf.mxu0
      %v1901 = vpop.f32.mrf.mxu0
      %v1902 = vadd.f32 0.0, %v1901
      %v1903 = vpop.f32.mrf.mxu0
      %1904 = vmatprep.mubr.bf16.mxu0 0
      %1905 = vmatmul.mubr.bf16.gmra.mxu0 %v1792
      %v1906 = vpop.f32.mrf.mxu0
      %v1907 = vadd.f32 0.0, %v1906
      %v1908 = vpop.f32.mrf.mxu0
      %v1909 = vpop.f32.mrf.mxu0
      %v1910 = vadd.f32 0.0, %v1909
      %v1911 = vpop.f32.mrf.mxu0
      %1912 = vmatprep.mubr.bf16.mxu0 0
      %1913 = vmatmul.mubr.bf16.gmra.mxu0 %v1795
      %v1914 = vpop.f32.mrf.mxu0
      %v1915 = vadd.f32 0.0, %v1914
      %v1916 = vpop.f32.mrf.mxu0
      %v1917 = vpop.f32.mrf.mxu0
      %v1918 = vadd.f32 0.0, %v1917
      %v1919 = vpop.f32.mrf.mxu0
      %1920 = vmatprep.mubr.bf16.mxu0 0
      %1921 = vmatmul.mubr.bf16.gmra.mxu0 %v1798
      %v1922 = vpop.f32.mrf.mxu0
      %v1923 = vadd.f32 0.0, %v1922
      %v1924 = vpop.f32.mrf.mxu0
      %v1925 = vpop.f32.mrf.mxu0
      %v1926 = vadd.f32 0.0, %v1925
      %v1927 = vpop.f32.mrf.mxu0
      %1928 = vmatprep.mubr.bf16.mxu0 0
      %1929 = vmatmul.mubr.bf16.gmra.mxu0 %v1801
      %v1930 = vpop.f32.mrf.mxu0
      %v1931 = vadd.f32 0.0, %v1930
      %v1932 = vpop.f32.mrf.mxu0
      %v1933 = vpop.f32.mrf.mxu0
      %v1934 = vadd.f32 0.0, %v1933
      %v1935 = vpop.f32.mrf.mxu0
      %1936 = vmatprep.mubr.bf16.mxu0 0
      %1937 = vmatmul.mubr.bf16.gmra.mxu0 %v1804
      %v1938 = vpop.f32.mrf.mxu0
      %v1939 = vadd.f32 0.0, %v1938
      %v1940 = vpop.f32.mrf.mxu0
      %v1941 = vpop.f32.mrf.mxu0
      %v1942 = vadd.f32 0.0, %v1941
      %v1943 = vpop.f32.mrf.mxu0
      %1944 = vmatprep.mubr.bf16.mxu0 0
      %1945 = vmatmul.mubr.bf16.gmra.mxu0 %v1807
      %v1946 = vpop.f32.mrf.mxu0
      %v1947 = vadd.f32 0.0, %v1946
      %v1948 = vpop.f32.mrf.mxu0
      %v1949 = vpop.f32.mrf.mxu0
      %v1950 = vadd.f32 0.0, %v1949
      %v1951 = vpop.f32.mrf.mxu0
      %1952 = vmatprep.mubr.bf16.mxu0 0
      %1953 = vmatmul.mubr.bf16.gmra.mxu0 %v1810
      %v1954 = vpop.f32.mrf.mxu0
      %v1955 = vadd.f32 0.0, %v1954
      %v1956 = vpop.f32.mrf.mxu0
      %v1957 = vpop.f32.mrf.mxu0
      %v1958 = vadd.f32 0.0, %v1957
      %v1959 = vpop.f32.mrf.mxu0
      %1960 = vmatprep.mubr.bf16.mxu0 0
      %1961 = vmatmul.mubr.bf16.gmra.mxu0 %v1813
      %v1962 = vpop.f32.mrf.mxu0
      %v1963 = vadd.f32 0.0, %v1962
      %v1964 = vpop.f32.mrf.mxu0
      %v1965 = vpop.f32.mrf.mxu0
      %v1966 = vadd.f32 0.0, %v1965
      %v1967 = vpop.f32.mrf.mxu0
      %1968 = vmatprep.mubr.bf16.mxu0 0
      %1969 = vmatmul.mubr.bf16.gmra.mxu0 %v1816
      %v1970 = vpop.f32.mrf.mxu0
      %v1971 = vadd.f32 0.0, %v1970
      %v1972 = vpop.f32.mrf.mxu0
      %v1973 = vpop.f32.mrf.mxu0
      %v1974 = vadd.f32 0.0, %v1973
      %v1975 = vpop.f32.mrf.mxu0
      %1976 = vmatprep.mubr.bf16.mxu0 0
      %1977 = vmatmul.mubr.bf16.gmra.mxu0 %v1819
      %v1978 = vpop.f32.mrf.mxu0
      %v1979 = vadd.f32 0.0, %v1978
      %v1980 = vpop.f32.mrf.mxu0
      %v1981 = vpop.f32.mrf.mxu0
      %v1982 = vadd.f32 0.0, %v1981
      %v1983 = vpop.f32.mrf.mxu0
      %1984 = vmatprep.mubr.bf16.mxu0 0
      %1985 = vmatmul.mubr.bf16.gmra.mxu0 %v1822
      %v1986 = vpop.f32.mrf.mxu0
      %v1987 = vadd.f32 0.0, %v1986
      %v1988 = vpop.f32.mrf.mxu0
      %v1989 = vpop.f32.mrf.mxu0
      %v1990 = vadd.f32 0.0, %v1989
      %v1991 = vpop.f32.mrf.mxu0
      %1992 = vmatprep.mubr.bf16.mxu0 0
      %1993 = vmatmul.mubr.bf16.gmra.mxu0 %v1825
      %v1994 = vpop.f32.mrf.mxu0
      %v1995 = vadd.f32 0.0, %v1994
      %v1996 = vpop.f32.mrf.mxu0
      %v1997 = vpop.f32.mrf.mxu0
      %v1998 = vadd.f32 0.0, %v1997
      %v1999 = vpop.f32.mrf.mxu0
      %2000 = vmatprep.mubr.bf16.mxu0 0
      %2001 = vmatmul.mubr.bf16.gmra.mxu0 %v1828
      %v2002 = vpop.f32.mrf.mxu0
      %v2003 = vadd.f32 0.0, %v2002
      %v2004 = vpop.f32.mrf.mxu0
      %v2005 = vpop.f32.mrf.mxu0
      %v2006 = vadd.f32 0.0, %v2005
      %v2007 = vpop.f32.mrf.mxu0
      %2008 = vmatprep.mubr.bf16.mxu0 0
      %2009 = vmatmul.mubr.bf16.gmra.mxu0 %v1831
      %v2010 = vpop.f32.mrf.mxu0
      %v2011 = vadd.f32 0.0, %v2010
      %v2012 = vpop.f32.mrf.mxu0
      %v2013 = vpop.f32.mrf.mxu0
      %v2014 = vadd.f32 0.0, %v2013
      %v2015 = vpop.f32.mrf.mxu0
      %2016 = vmatprep.mubr.bf16.mxu0 0
      %2017 = vmatmul.mubr.bf16.gmra.mxu0 %v1834
      %v2018 = vpop.f32.mrf.mxu0
      %v2019 = vadd.f32 0.0, %v2018
      %v2020 = vpop.f32.mrf.mxu0
      %v2021 = vpop.f32.mrf.mxu0
      %v2022 = vadd.f32 0.0, %v2021
      %v2023 = vpop.f32.mrf.mxu0
      %2024 = vmatprep.mubr.bf16.mxu0 0
      %2025 = vmatmul.mubr.bf16.gmra.mxu0 %v1837
      %v2026 = vpop.f32.mrf.mxu0
      %v2027 = vadd.f32 0.0, %v2026
      %v2028 = vpop.f32.mrf.mxu0
      %v2029 = vpop.f32.mrf.mxu0
      %v2030 = vadd.f32 0.0, %v2029
      %v2031 = vpop.f32.mrf.mxu0
      %2032 = vmatprep.mubr.bf16.mxu0 0
      %2033 = vmatmul.mubr.bf16.gmra.mxu0 %v1840
      %v2034 = vpop.f32.mrf.mxu0
      %v2035 = vadd.f32 0.0, %v2034
      %v2036 = vpop.f32.mrf.mxu0
      %v2037 = vpop.f32.mrf.mxu0
      %v2038 = vadd.f32 0.0, %v2037
      %v2039 = vpop.f32.mrf.mxu0
      %2040 = vmatprep.mubr.bf16.mxu0 0
      %2041 = vmatmul.mubr.bf16.gmra.mxu0 %v1843
      %v2042 = vpop.f32.mrf.mxu0
      %v2043 = vadd.f32 0.0, %v2042
      %v2044 = vpop.f32.mrf.mxu0
      %v2045 = vpop.f32.mrf.mxu0
      %v2046 = vadd.f32 0.0, %v2045
      %v2047 = vpop.f32.mrf.mxu0
      %2048 = vdwg.mxu0
      %v2049 = vadd.f32 %v1614, %v1883
      %v2050 = vadd.f32 %v1617, %v1886
      %v2051 = vadd.f32 %v1622, %v1891
      %v2052 = vadd.f32 %v1625, %v1894
      %v2053 = vadd.f32 %v1630, %v1899
      %v2054 = vadd.f32 %v1633, %v1902
      %v2055 = vadd.f32 %v1638, %v1907
      %v2056 = vadd.f32 %v1641, %v1910
      %v2057 = vadd.f32 %v1646, %v1915
      %v2058 = vadd.f32 %v1649, %v1918
      %v2059 = vadd.f32 %v1654, %v1923
      %v2060 = vadd.f32 %v1657, %v1926
      %v2061 = vadd.f32 %v1662, %v1931
      %v2062 = vadd.f32 %v1665, %v1934
      %v2063 = vadd.f32 %v1670, %v1939
      %v2064 = vadd.f32 %v1673, %v1942
      %v2065 = vadd.f32 %v1678, %v1947
      %v2066 = vadd.f32 %v1681, %v1950
      %v2067 = vadd.f32 %v1686, %v1955
      %v2068 = vadd.f32 %v1689, %v1958
      %v2069 = vadd.f32 %v1694, %v1963
      %v2070 = vadd.f32 %v1697, %v1966
      %v2071 = vadd.f32 %v1702, %v1971
      %v2072 = vadd.f32 %v1705, %v1974
      %v2073 = vadd.f32 %v1710, %v1979
      %v2074 = vadd.f32 %v1713, %v1982
      %v2075 = vadd.f32 %v1718, %v1987
      %v2076 = vadd.f32 %v1721, %v1990
      %v2077 = vadd.f32 %v1726, %v1995
      %v2078 = vadd.f32 %v1729, %v1998
      %v2079 = vadd.f32 %v1734, %v2003
      %v2080 = vadd.f32 %v1737, %v2006
      %v2081 = vadd.f32 %v1742, %v2011
      %v2082 = vadd.f32 %v1745, %v2014
      %v2083 = vadd.f32 %v1750, %v2019
      %v2084 = vadd.f32 %v1753, %v2022
      %v2085 = vadd.f32 %v1758, %v2027
      %v2086 = vadd.f32 %v1761, %v2030
      %v2087 = vadd.f32 %v1766, %v2035
      %v2088 = vadd.f32 %v1769, %v2038
      %v2089 = vadd.f32 %v1774, %v2043
      %v2090 = vadd.f32 %v1777, %v2046
      %v2091 = vrot.slane %v2049, 7
      %v2092 = vrot.slane %v2050, 7
      %v2093 = vrot.slane %v2051, 7
      %v2094 = vrot.slane %v2052, 7
      %v2095 = vrot.slane %v2053, 7
      %v2096 = vrot.slane %v2054, 7
      %v2097 = vrot.slane %v2055, 7
      %v2098 = vrot.slane %v2056, 7
      %v2099 = vrot.slane %v2057, 7
      %v2100 = vrot.slane %v2058, 7
      %v2101 = vrot.slane %v2059, 7
      %v2102 = vrot.slane %v2060, 7
      %v2103 = vrot.slane %v2061, 7
      %v2104 = vrot.slane %v2062, 7
      %v2105 = vrot.slane %v2063, 7
      %v2106 = vrot.slane %v2064, 7
      %v2107 = vrot.slane %v2065, 7
      %v2108 = vrot.slane %v2066, 7
      %v2109 = vrot.slane %v2067, 7
      %v2110 = vrot.slane %v2068, 7
      %v2111 = vrot.slane %v2069, 7
      %v2112 = vrot.slane %v2070, 7
      %v2113 = vrot.slane %v2071, 7
      %v2114 = vrot.slane %v2072, 7
      %v2115 = vrot.slane %v2073, 7
      %v2116 = vrot.slane %v2074, 7
      %v2117 = vrot.slane %v2075, 7
      %v2118 = vrot.slane %v2076, 7
      %v2119 = vrot.slane %v2077, 7
      %v2120 = vrot.slane %v2078, 7
      %v2121 = vrot.slane %v2079, 7
      %v2122 = vrot.slane %v2080, 7
      %v2123 = vrot.slane %v2081, 7
      %v2124 = vrot.slane %v2082, 7
      %v2125 = vrot.slane %v2083, 7
      %v2126 = vrot.slane %v2084, 7
      %v2127 = vrot.slane %v2085, 7
      %v2128 = vrot.slane %v2086, 7
      %v2129 = vrot.slane %v2087, 7
      %v2130 = vrot.slane %v2088, 7
      %v2131 = vrot.slane %v2089, 7
      %v2132 = vrot.slane %v2090, 7
      %vm2133 = vcmp.lt.s32.totalorder %v965, 1
      %v2134 = vsel %vm2133, %v2131, %v2132
      %v2135 = vsel %vm2133, %v2130, %v2131
      %v2136 = vsel %vm2133, %v2129, %v2130
      %v2137 = vsel %vm2133, %v2128, %v2129
      %v2138 = vsel %vm2133, %v2127, %v2128
      %v2139 = vsel %vm2133, %v2126, %v2127
      %v2140 = vsel %vm2133, %v2125, %v2126
      %v2141 = vsel %vm2133, %v2124, %v2125
      %v2142 = vsel %vm2133, %v2123, %v2124
      %v2143 = vsel %vm2133, %v2122, %v2123
      %v2144 = vsel %vm2133, %v2121, %v2122
      %v2145 = vsel %vm2133, %v2120, %v2121
      %v2146 = vsel %vm2133, %v2119, %v2120
      %v2147 = vsel %vm2133, %v2118, %v2119
      %v2148 = vsel %vm2133, %v2117, %v2118
      %v2149 = vsel %vm2133, %v2116, %v2117
      %v2150 = vsel %vm2133, %v2115, %v2116
      %v2151 = vsel %vm2133, %v2114, %v2115
      %v2152 = vsel %vm2133, %v2113, %v2114
      %v2153 = vsel %vm2133, %v2112, %v2113
      %v2154 = vsel %vm2133, %v2111, %v2112
      %v2155 = vsel %vm2133, %v2110, %v2111
      %v2156 = vsel %vm2133, %v2109, %v2110
      %v2157 = vsel %vm2133, %v2108, %v2109
      %v2158 = vsel %vm2133, %v2107, %v2108
      %v2159 = vsel %vm2133, %v2106, %v2107
      %v2160 = vsel %vm2133, %v2105, %v2106
      %v2161 = vsel %vm2133, %v2104, %v2105
      %v2162 = vsel %vm2133, %v2103, %v2104
      %v2163 = vsel %vm2133, %v2102, %v2103
      %v2164 = vsel %vm2133, %v2101, %v2102
      %v2165 = vsel %vm2133, %v2100, %v2101
      %v2166 = vsel %vm2133, %v2099, %v2100
      %v2167 = vsel %vm2133, %v2098, %v2099
      %v2168 = vsel %vm2133, %v2097, %v2098
      %v2169 = vsel %vm2133, %v2096, %v2097
      %v2170 = vsel %vm2133, %v2095, %v2096
      %v2171 = vsel %vm2133, %v2094, %v2095
      %v2172 = vsel %vm2133, %v2093, %v2094
      %v2173 = vsel %vm2133, %v2092, %v2093
      %v2174 = vsel %vm2133, %v2091, %v2092
      %v2175 = vsel %vm2133, %v2132, %v2091
      %s2176 = scalar_lea.vmem %s237, 2
      %v2177 = vld [vmem:[%s2176] sm:$0x3]
      %s2178 = scalar_lea.vmem %s237, 8
      %v2179 = vld [vmem:[%s2178] sm:$0x3]
      %v2181 = vsel %vm1308, %v2179, 0
      %2183 = vmatprep.subr.bf16.mxu0 0
      %2184 = vmatpush1.bf16.msra.mxu0 0
      %2185 = vmatprep.subr.bf16.mxu0 0
      %2186 = vmatpush1.bf16.msra.mxu0 0
      %2187 = vmatprep.subr.bf16.mxu0 0
      %2188 = vmatpush1.bf16.msra.mxu0 0
      %2189 = vmatprep.subr.bf16.mxu0 0
      %2190 = vmatpush1.bf16.msra.mxu0 0
      %2191 = vmatprep.subr.bf16.mxu0 0
      %2192 = vmatpush1.bf16.msra.mxu0 0
      %2193 = vmatprep.subr.bf16.mxu0 0
      %2194 = vmatpush1.bf16.msra.mxu0 0
      %2195 = vmatprep.subr.bf16.mxu0 0
      %2196 = vmatpush1.bf16.msra.mxu0 0
      %2197 = vmatprep.subr.bf16.mxu0 0
      %2198 = vmatpush1.bf16.msra.mxu0 %v2181
      %2199 = vmatprep.subr.bf16.mxu0 0
      %2200 = vmatpush2.bf16.msra.mxu0 0
      %2201 = vmatprep.subr.bf16.mxu0 0
      %2202 = vmatpush2.bf16.msra.mxu0 0
      %2203 = vmatprep.subr.bf16.mxu0 0
      %2204 = vmatpush2.bf16.msra.mxu0 0
      %2205 = vmatprep.subr.bf16.mxu0 0
      %2206 = vmatpush2.bf16.msra.mxu0 0
      %2207 = vmatprep.subr.bf16.mxu0 0
      %2208 = vmatpush2.bf16.msra.mxu0 0
      %2209 = vmatprep.subr.bf16.mxu0 0
      %2210 = vmatpush2.bf16.msra.mxu0 0
      %2211 = vmatprep.subr.bf16.mxu0 0
      %2212 = vmatpush2.bf16.msra.mxu0 0
      %2213 = vmatprep.subr.bf16.mxu0 0
      %2214 = vmatpush2.bf16.msra.mxu0 0
      %2215 = vmatprep.mubr.bf16.mxu0 0
      %2216 = vmatmul.mubr.bf16.gmra.mxu0 %v1246
      %v2217 = vpop.f32.mrf.mxu0
      %v2218 = vadd.f32 0.0, %v2217
      %v2219 = vpop.f32.mrf.mxu0
      %v2220 = vpop.f32.mrf.mxu0
      %v2221 = vadd.f32 0.0, %v2220
      %v2222 = vpop.f32.mrf.mxu0
      %2223 = vmatprep.mubr.bf16.mxu0 0
      %2224 = vmatmul.mubr.bf16.gmra.mxu0 %v1249
      %v2225 = vpop.f32.mrf.mxu0
      %v2226 = vadd.f32 0.0, %v2225
      %v2227 = vpop.f32.mrf.mxu0
      %v2228 = vpop.f32.mrf.mxu0
      %v2229 = vadd.f32 0.0, %v2228
      %v2230 = vpop.f32.mrf.mxu0
      %2231 = vmatprep.mubr.bf16.mxu0 0
      %2232 = vmatmul.mubr.bf16.gmra.mxu0 %v1252
      %v2233 = vpop.f32.mrf.mxu0
      %v2234 = vadd.f32 0.0, %v2233
      %v2235 = vpop.f32.mrf.mxu0
      %v2236 = vpop.f32.mrf.mxu0
      %v2237 = vadd.f32 0.0, %v2236
      %v2238 = vpop.f32.mrf.mxu0
      %2239 = vmatprep.mubr.bf16.mxu0 0
      %2240 = vmatmul.mubr.bf16.gmra.mxu0 %v1255
      %v2241 = vpop.f32.mrf.mxu0
      %v2242 = vadd.f32 0.0, %v2241
      %v2243 = vpop.f32.mrf.mxu0
      %v2244 = vpop.f32.mrf.mxu0
      %v2245 = vadd.f32 0.0, %v2244
      %v2246 = vpop.f32.mrf.mxu0
      %2247 = vmatprep.mubr.bf16.mxu0 0
      %2248 = vmatmul.mubr.bf16.gmra.mxu0 %v1258
      %v2249 = vpop.f32.mrf.mxu0
      %v2250 = vadd.f32 0.0, %v2249
      %v2251 = vpop.f32.mrf.mxu0
      %v2252 = vpop.f32.mrf.mxu0
      %v2253 = vadd.f32 0.0, %v2252
      %v2254 = vpop.f32.mrf.mxu0
      %2255 = vmatprep.mubr.bf16.mxu0 0
      %2256 = vmatmul.mubr.bf16.gmra.mxu0 %v1261
      %v2257 = vpop.f32.mrf.mxu0
      %v2258 = vadd.f32 0.0, %v2257
      %v2259 = vpop.f32.mrf.mxu0
      %v2260 = vpop.f32.mrf.mxu0
      %v2261 = vadd.f32 0.0, %v2260
      %v2262 = vpop.f32.mrf.mxu0
      %2263 = vmatprep.mubr.bf16.mxu0 0
      %2264 = vmatmul.mubr.bf16.gmra.mxu0 %v1264
      %v2265 = vpop.f32.mrf.mxu0
      %v2266 = vadd.f32 0.0, %v2265
      %v2267 = vpop.f32.mrf.mxu0
      %v2268 = vpop.f32.mrf.mxu0
      %v2269 = vadd.f32 0.0, %v2268
      %v2270 = vpop.f32.mrf.mxu0
      %2271 = vmatprep.mubr.bf16.mxu0 0
      %2272 = vmatmul.mubr.bf16.gmra.mxu0 %v1267
      %v2273 = vpop.f32.mrf.mxu0
      %v2274 = vadd.f32 0.0, %v2273
      %v2275 = vpop.f32.mrf.mxu0
      %v2276 = vpop.f32.mrf.mxu0
      %v2277 = vadd.f32 0.0, %v2276
      %v2278 = vpop.f32.mrf.mxu0
      %2279 = vmatprep.mubr.bf16.mxu0 0
      %2280 = vmatmul.mubr.bf16.gmra.mxu0 %v1270
      %v2281 = vpop.f32.mrf.mxu0
      %v2282 = vadd.f32 0.0, %v2281
      %v2283 = vpop.f32.mrf.mxu0
      %v2284 = vpop.f32.mrf.mxu0
      %v2285 = vadd.f32 0.0, %v2284
      %v2286 = vpop.f32.mrf.mxu0
      %2287 = vmatprep.mubr.bf16.mxu0 0
      %2288 = vmatmul.mubr.bf16.gmra.mxu0 %v1273
      %v2289 = vpop.f32.mrf.mxu0
      %v2290 = vadd.f32 0.0, %v2289
      %v2291 = vpop.f32.mrf.mxu0
      %v2292 = vpop.f32.mrf.mxu0
      %v2293 = vadd.f32 0.0, %v2292
      %v2294 = vpop.f32.mrf.mxu0
      %2295 = vmatprep.mubr.bf16.mxu0 0
      %2296 = vmatmul.mubr.bf16.gmra.mxu0 %v1276
      %v2297 = vpop.f32.mrf.mxu0
      %v2298 = vadd.f32 0.0, %v2297
      %v2299 = vpop.f32.mrf.mxu0
      %v2300 = vpop.f32.mrf.mxu0
      %v2301 = vadd.f32 0.0, %v2300
      %v2302 = vpop.f32.mrf.mxu0
      %2303 = vmatprep.mubr.bf16.mxu0 0
      %2304 = vmatmul.mubr.bf16.gmra.mxu0 %v1279
      %v2305 = vpop.f32.mrf.mxu0
      %v2306 = vadd.f32 0.0, %v2305
      %v2307 = vpop.f32.mrf.mxu0
      %v2308 = vpop.f32.mrf.mxu0
      %v2309 = vadd.f32 0.0, %v2308
      %v2310 = vpop.f32.mrf.mxu0
      %2311 = vmatprep.mubr.bf16.mxu0 0
      %2312 = vmatmul.mubr.bf16.gmra.mxu0 %v1282
      %v2313 = vpop.f32.mrf.mxu0
      %v2314 = vadd.f32 0.0, %v2313
      %v2315 = vpop.f32.mrf.mxu0
      %v2316 = vpop.f32.mrf.mxu0
      %v2317 = vadd.f32 0.0, %v2316
      %v2318 = vpop.f32.mrf.mxu0
      %2319 = vmatprep.mubr.bf16.mxu0 0
      %2320 = vmatmul.mubr.bf16.gmra.mxu0 %v1285
      %v2321 = vpop.f32.mrf.mxu0
      %v2322 = vadd.f32 0.0, %v2321
      %v2323 = vpop.f32.mrf.mxu0
      %v2324 = vpop.f32.mrf.mxu0
      %v2325 = vadd.f32 0.0, %v2324
      %v2326 = vpop.f32.mrf.mxu0
      %2327 = vmatprep.mubr.bf16.mxu0 0
      %2328 = vmatmul.mubr.bf16.gmra.mxu0 %v1288
      %v2329 = vpop.f32.mrf.mxu0
      %v2330 = vadd.f32 0.0, %v2329
      %v2331 = vpop.f32.mrf.mxu0
      %v2332 = vpop.f32.mrf.mxu0
      %v2333 = vadd.f32 0.0, %v2332
      %v2334 = vpop.f32.mrf.mxu0
      %2335 = vmatprep.mubr.bf16.mxu0 0
      %2336 = vmatmul.mubr.bf16.gmra.mxu0 %v1291
      %v2337 = vpop.f32.mrf.mxu0
      %v2338 = vadd.f32 0.0, %v2337
      %v2339 = vpop.f32.mrf.mxu0
      %v2340 = vpop.f32.mrf.mxu0
      %v2341 = vadd.f32 0.0, %v2340
      %v2342 = vpop.f32.mrf.mxu0
      %2343 = vmatprep.mubr.bf16.mxu0 0
      %2344 = vmatmul.mubr.bf16.gmra.mxu0 %v1294
      %v2345 = vpop.f32.mrf.mxu0
      %v2346 = vadd.f32 0.0, %v2345
      %v2347 = vpop.f32.mrf.mxu0
      %v2348 = vpop.f32.mrf.mxu0
      %v2349 = vadd.f32 0.0, %v2348
      %v2350 = vpop.f32.mrf.mxu0
      %2351 = vmatprep.mubr.bf16.mxu0 0
      %2352 = vmatmul.mubr.bf16.gmra.mxu0 %v1297
      %v2353 = vpop.f32.mrf.mxu0
      %v2354 = vadd.f32 0.0, %v2353
      %v2355 = vpop.f32.mrf.mxu0
      %v2356 = vpop.f32.mrf.mxu0
      %v2357 = vadd.f32 0.0, %v2356
      %v2358 = vpop.f32.mrf.mxu0
      %2359 = vmatprep.mubr.bf16.mxu0 0
      %2360 = vmatmul.mubr.bf16.gmra.mxu0 %v1300
      %v2361 = vpop.f32.mrf.mxu0
      %v2362 = vadd.f32 0.0, %v2361
      %v2363 = vpop.f32.mrf.mxu0
      %v2364 = vpop.f32.mrf.mxu0
      %v2365 = vadd.f32 0.0, %v2364
      %v2366 = vpop.f32.mrf.mxu0
      %2367 = vmatprep.mubr.bf16.mxu0 0
      %2368 = vmatmul.mubr.bf16.gmra.mxu0 %v1303
      %v2369 = vpop.f32.mrf.mxu0
      %v2370 = vadd.f32 0.0, %v2369
      %v2371 = vpop.f32.mrf.mxu0
      %v2372 = vpop.f32.mrf.mxu0
      %v2373 = vadd.f32 0.0, %v2372
      %v2374 = vpop.f32.mrf.mxu0
      %2375 = vmatprep.mubr.bf16.mxu0 0
      %2376 = vmatmul.mubr.bf16.gmra.mxu0 %v1306
      %v2377 = vpop.f32.mrf.mxu0
      %v2378 = vadd.f32 0.0, %v2377
      %v2379 = vpop.f32.mrf.mxu0
      %v2380 = vpop.f32.mrf.mxu0
      %v2381 = vadd.f32 0.0, %v2380
      %v2382 = vpop.f32.mrf.mxu0
      %2383 = vdwg.mxu0
      %v2385 = vsel %vm1308, %v2177, 0
      %2387 = vmatprep.subr.bf16.mxu0 0
      %2388 = vmatpush1.bf16.msra.mxu0 0
      %2389 = vmatprep.subr.bf16.mxu0 0
      %2390 = vmatpush1.bf16.msra.mxu0 0
      %2391 = vmatprep.subr.bf16.mxu0 0
      %2392 = vmatpush1.bf16.msra.mxu0 0
      %2393 = vmatprep.subr.bf16.mxu0 0
      %2394 = vmatpush1.bf16.msra.mxu0 0
      %2395 = vmatprep.subr.bf16.mxu0 0
      %2396 = vmatpush1.bf16.msra.mxu0 0
      %2397 = vmatprep.subr.bf16.mxu0 0
      %2398 = vmatpush1.bf16.msra.mxu0 0
      %2399 = vmatprep.subr.bf16.mxu0 0
      %2400 = vmatpush1.bf16.msra.mxu0 0
      %2401 = vmatprep.subr.bf16.mxu0 0
      %2402 = vmatpush1.bf16.msra.mxu0 %v2385
      %2403 = vmatprep.subr.bf16.mxu0 0
      %2404 = vmatpush2.bf16.msra.mxu0 0
      %2405 = vmatprep.subr.bf16.mxu0 0
      %2406 = vmatpush2.bf16.msra.mxu0 0
      %2407 = vmatprep.subr.bf16.mxu0 0
      %2408 = vmatpush2.bf16.msra.mxu0 0
      %2409 = vmatprep.subr.bf16.mxu0 0
      %2410 = vmatpush2.bf16.msra.mxu0 0
      %2411 = vmatprep.subr.bf16.mxu0 0
      %2412 = vmatpush2.bf16.msra.mxu0 0
      %2413 = vmatprep.subr.bf16.mxu0 0
      %2414 = vmatpush2.bf16.msra.mxu0 0
      %2415 = vmatprep.subr.bf16.mxu0 0
      %2416 = vmatpush2.bf16.msra.mxu0 0
      %2417 = vmatprep.subr.bf16.mxu0 0
      %2418 = vmatpush2.bf16.msra.mxu0 0
      %2419 = vmatprep.mubr.bf16.mxu0 0
      %2420 = vmatmul.mubr.bf16.gmra.mxu0 %v1514
      %v2421 = vpop.f32.mrf.mxu0
      %v2422 = vadd.f32 %v2218, %v2421
      %v2423 = vpop.f32.mrf.mxu0
      %v2424 = vpop.f32.mrf.mxu0
      %v2425 = vadd.f32 %v2221, %v2424
      %v2426 = vpop.f32.mrf.mxu0
      %2427 = vmatprep.mubr.bf16.mxu0 0
      %2428 = vmatmul.mubr.bf16.gmra.mxu0 %v1517
      %v2429 = vpop.f32.mrf.mxu0
      %v2430 = vadd.f32 %v2226, %v2429
      %v2431 = vpop.f32.mrf.mxu0
      %v2432 = vpop.f32.mrf.mxu0
      %v2433 = vadd.f32 %v2229, %v2432
      %v2434 = vpop.f32.mrf.mxu0
      %2435 = vmatprep.mubr.bf16.mxu0 0
      %2436 = vmatmul.mubr.bf16.gmra.mxu0 %v1520
      %v2437 = vpop.f32.mrf.mxu0
      %v2438 = vadd.f32 %v2234, %v2437
      %v2439 = vpop.f32.mrf.mxu0
      %v2440 = vpop.f32.mrf.mxu0
      %v2441 = vadd.f32 %v2237, %v2440
      %v2442 = vpop.f32.mrf.mxu0
      %2443 = vmatprep.mubr.bf16.mxu0 0
      %2444 = vmatmul.mubr.bf16.gmra.mxu0 %v1523
      %v2445 = vpop.f32.mrf.mxu0
      %v2446 = vadd.f32 %v2242, %v2445
      %v2447 = vpop.f32.mrf.mxu0
      %v2448 = vpop.f32.mrf.mxu0
      %v2449 = vadd.f32 %v2245, %v2448
      %v2450 = vpop.f32.mrf.mxu0
      %2451 = vmatprep.mubr.bf16.mxu0 0
      %2452 = vmatmul.mubr.bf16.gmra.mxu0 %v1526
      %v2453 = vpop.f32.mrf.mxu0
      %v2454 = vadd.f32 %v2250, %v2453
      %v2455 = vpop.f32.mrf.mxu0
      %v2456 = vpop.f32.mrf.mxu0
      %v2457 = vadd.f32 %v2253, %v2456
      %v2458 = vpop.f32.mrf.mxu0
      %2459 = vmatprep.mubr.bf16.mxu0 0
      %2460 = vmatmul.mubr.bf16.gmra.mxu0 %v1529
      %v2461 = vpop.f32.mrf.mxu0
      %v2462 = vadd.f32 %v2258, %v2461
      %v2463 = vpop.f32.mrf.mxu0
      %v2464 = vpop.f32.mrf.mxu0
      %v2465 = vadd.f32 %v2261, %v2464
      %v2466 = vpop.f32.mrf.mxu0
      %2467 = vmatprep.mubr.bf16.mxu0 0
      %2468 = vmatmul.mubr.bf16.gmra.mxu0 %v1532
      %v2469 = vpop.f32.mrf.mxu0
      %v2470 = vadd.f32 %v2266, %v2469
      %v2471 = vpop.f32.mrf.mxu0
      %v2472 = vpop.f32.mrf.mxu0
      %v2473 = vadd.f32 %v2269, %v2472
      %v2474 = vpop.f32.mrf.mxu0
      %2475 = vmatprep.mubr.bf16.mxu0 0
      %2476 = vmatmul.mubr.bf16.gmra.mxu0 %v1535
      %v2477 = vpop.f32.mrf.mxu0
      %v2478 = vadd.f32 %v2274, %v2477
      %v2479 = vpop.f32.mrf.mxu0
      %v2480 = vpop.f32.mrf.mxu0
      %v2481 = vadd.f32 %v2277, %v2480
      %v2482 = vpop.f32.mrf.mxu0
      %2483 = vmatprep.mubr.bf16.mxu0 0
      %2484 = vmatmul.mubr.bf16.gmra.mxu0 %v1538
      %v2485 = vpop.f32.mrf.mxu0
      %v2486 = vadd.f32 %v2282, %v2485
      %v2487 = vpop.f32.mrf.mxu0
      %v2488 = vpop.f32.mrf.mxu0
      %v2489 = vadd.f32 %v2285, %v2488
      %v2490 = vpop.f32.mrf.mxu0
      %2491 = vmatprep.mubr.bf16.mxu0 0
      %2492 = vmatmul.mubr.bf16.gmra.mxu0 %v1541
      %v2493 = vpop.f32.mrf.mxu0
      %v2494 = vadd.f32 %v2290, %v2493
      %v2495 = vpop.f32.mrf.mxu0
      %v2496 = vpop.f32.mrf.mxu0
      %v2497 = vadd.f32 %v2293, %v2496
      %v2498 = vpop.f32.mrf.mxu0
      %2499 = vmatprep.mubr.bf16.mxu0 0
      %2500 = vmatmul.mubr.bf16.gmra.mxu0 %v1544
      %v2501 = vpop.f32.mrf.mxu0
      %v2502 = vadd.f32 %v2298, %v2501
      %v2503 = vpop.f32.mrf.mxu0
      %v2504 = vpop.f32.mrf.mxu0
      %v2505 = vadd.f32 %v2301, %v2504
      %v2506 = vpop.f32.mrf.mxu0
      %2507 = vmatprep.mubr.bf16.mxu0 0
      %2508 = vmatmul.mubr.bf16.gmra.mxu0 %v1547
      %v2509 = vpop.f32.mrf.mxu0
      %v2510 = vadd.f32 %v2306, %v2509
      %v2511 = vpop.f32.mrf.mxu0
      %v2512 = vpop.f32.mrf.mxu0
      %v2513 = vadd.f32 %v2309, %v2512
      %v2514 = vpop.f32.mrf.mxu0
      %2515 = vmatprep.mubr.bf16.mxu0 0
      %2516 = vmatmul.mubr.bf16.gmra.mxu0 %v1550
      %v2517 = vpop.f32.mrf.mxu0
      %v2518 = vadd.f32 %v2314, %v2517
      %v2519 = vpop.f32.mrf.mxu0
      %v2520 = vpop.f32.mrf.mxu0
      %v2521 = vadd.f32 %v2317, %v2520
      %v2522 = vpop.f32.mrf.mxu0
      %2523 = vmatprep.mubr.bf16.mxu0 0
      %2524 = vmatmul.mubr.bf16.gmra.mxu0 %v1553
      %v2525 = vpop.f32.mrf.mxu0
      %v2526 = vadd.f32 %v2322, %v2525
      %v2527 = vpop.f32.mrf.mxu0
      %v2528 = vpop.f32.mrf.mxu0
      %v2529 = vadd.f32 %v2325, %v2528
      %v2530 = vpop.f32.mrf.mxu0
      %2531 = vmatprep.mubr.bf16.mxu0 0
      %2532 = vmatmul.mubr.bf16.gmra.mxu0 %v1556
      %v2533 = vpop.f32.mrf.mxu0
      %v2534 = vadd.f32 %v2330, %v2533
      %v2535 = vpop.f32.mrf.mxu0
      %v2536 = vpop.f32.mrf.mxu0
      %v2537 = vadd.f32 %v2333, %v2536
      %v2538 = vpop.f32.mrf.mxu0
      %2539 = vmatprep.mubr.bf16.mxu0 0
      %2540 = vmatmul.mubr.bf16.gmra.mxu0 %v1559
      %v2541 = vpop.f32.mrf.mxu0
      %v2542 = vadd.f32 %v2338, %v2541
      %v2543 = vpop.f32.mrf.mxu0
      %v2544 = vpop.f32.mrf.mxu0
      %v2545 = vadd.f32 %v2341, %v2544
      %v2546 = vpop.f32.mrf.mxu0
      %2547 = vmatprep.mubr.bf16.mxu0 0
      %2548 = vmatmul.mubr.bf16.gmra.mxu0 %v1562
      %v2549 = vpop.f32.mrf.mxu0
      %v2550 = vadd.f32 %v2346, %v2549
      %v2551 = vpop.f32.mrf.mxu0
      %v2552 = vpop.f32.mrf.mxu0
      %v2553 = vadd.f32 %v2349, %v2552
      %v2554 = vpop.f32.mrf.mxu0
      %2555 = vmatprep.mubr.bf16.mxu0 0
      %2556 = vmatmul.mubr.bf16.gmra.mxu0 %v1565
      %v2557 = vpop.f32.mrf.mxu0
      %v2558 = vadd.f32 %v2354, %v2557
      %v2559 = vpop.f32.mrf.mxu0
      %v2560 = vpop.f32.mrf.mxu0
      %v2561 = vadd.f32 %v2357, %v2560
      %v2562 = vpop.f32.mrf.mxu0
      %2563 = vmatprep.mubr.bf16.mxu0 0
      %2564 = vmatmul.mubr.bf16.gmra.mxu0 %v1568
      %v2565 = vpop.f32.mrf.mxu0
      %v2566 = vadd.f32 %v2362, %v2565
      %v2567 = vpop.f32.mrf.mxu0
      %v2568 = vpop.f32.mrf.mxu0
      %v2569 = vadd.f32 %v2365, %v2568
      %v2570 = vpop.f32.mrf.mxu0
      %2571 = vmatprep.mubr.bf16.mxu0 0
      %2572 = vmatmul.mubr.bf16.gmra.mxu0 %v1571
      %v2573 = vpop.f32.mrf.mxu0
      %v2574 = vadd.f32 %v2370, %v2573
      %v2575 = vpop.f32.mrf.mxu0
      %v2576 = vpop.f32.mrf.mxu0
      %v2577 = vadd.f32 %v2373, %v2576
      %v2578 = vpop.f32.mrf.mxu0
      %2579 = vmatprep.mubr.bf16.mxu0 0
      %2580 = vmatmul.mubr.bf16.gmra.mxu0 %v1574
      %v2581 = vpop.f32.mrf.mxu0
      %v2582 = vadd.f32 %v2378, %v2581
      %v2583 = vpop.f32.mrf.mxu0
      %v2584 = vpop.f32.mrf.mxu0
      %v2585 = vadd.f32 %v2381, %v2584
      %v2586 = vpop.f32.mrf.mxu0
      %2587 = vdwg.mxu0
      %s2588 = scalar_lea.vmem %s237, 14
      %v2589 = vld [vmem:[%s2588] sm:$0x3]
      %v2591 = vsel %vm1308, %v2589, 0
      %2593 = vmatprep.subr.bf16.mxu0 0
      %2594 = vmatpush1.bf16.msra.mxu0 0
      %2595 = vmatprep.subr.bf16.mxu0 0
      %2596 = vmatpush1.bf16.msra.mxu0 0
      %2597 = vmatprep.subr.bf16.mxu0 0
      %2598 = vmatpush1.bf16.msra.mxu0 0
      %2599 = vmatprep.subr.bf16.mxu0 0
      %2600 = vmatpush1.bf16.msra.mxu0 0
      %2601 = vmatprep.subr.bf16.mxu0 0
      %2602 = vmatpush1.bf16.msra.mxu0 0
      %2603 = vmatprep.subr.bf16.mxu0 0
      %2604 = vmatpush1.bf16.msra.mxu0 0
      %2605 = vmatprep.subr.bf16.mxu0 0
      %2606 = vmatpush1.bf16.msra.mxu0 0
      %2607 = vmatprep.subr.bf16.mxu0 0
      %2608 = vmatpush1.bf16.msra.mxu0 %v2591
      %2609 = vmatprep.subr.bf16.mxu0 0
      %2610 = vmatpush2.bf16.msra.mxu0 0
      %2611 = vmatprep.subr.bf16.mxu0 0
      %2612 = vmatpush2.bf16.msra.mxu0 0
      %2613 = vmatprep.subr.bf16.mxu0 0
      %2614 = vmatpush2.bf16.msra.mxu0 0
      %2615 = vmatprep.subr.bf16.mxu0 0
      %2616 = vmatpush2.bf16.msra.mxu0 0
      %2617 = vmatprep.subr.bf16.mxu0 0
      %2618 = vmatpush2.bf16.msra.mxu0 0
      %2619 = vmatprep.subr.bf16.mxu0 0
      %2620 = vmatpush2.bf16.msra.mxu0 0
      %2621 = vmatprep.subr.bf16.mxu0 0
      %2622 = vmatpush2.bf16.msra.mxu0 0
      %2623 = vmatprep.subr.bf16.mxu0 0
      %2624 = vmatpush2.bf16.msra.mxu0 0
      %2625 = vmatprep.mubr.bf16.mxu0 0
      %2626 = vmatmul.mubr.bf16.gmra.mxu0 %v1783
      %v2627 = vpop.f32.mrf.mxu0
      %v2628 = vadd.f32 0.0, %v2627
      %v2629 = vpop.f32.mrf.mxu0
      %v2630 = vpop.f32.mrf.mxu0
      %v2631 = vadd.f32 0.0, %v2630
      %v2632 = vpop.f32.mrf.mxu0
      %2633 = vmatprep.mubr.bf16.mxu0 0
      %2634 = vmatmul.mubr.bf16.gmra.mxu0 %v1786
      %v2635 = vpop.f32.mrf.mxu0
      %v2636 = vadd.f32 0.0, %v2635
      %v2637 = vpop.f32.mrf.mxu0
      %v2638 = vpop.f32.mrf.mxu0
      %v2639 = vadd.f32 0.0, %v2638
      %v2640 = vpop.f32.mrf.mxu0
      %2641 = vmatprep.mubr.bf16.mxu0 0
      %2642 = vmatmul.mubr.bf16.gmra.mxu0 %v1789
      %v2643 = vpop.f32.mrf.mxu0
      %v2644 = vadd.f32 0.0, %v2643
      %v2645 = vpop.f32.mrf.mxu0
      %v2646 = vpop.f32.mrf.mxu0
      %v2647 = vadd.f32 0.0, %v2646
      %v2648 = vpop.f32.mrf.mxu0
      %2649 = vmatprep.mubr.bf16.mxu0 0
      %2650 = vmatmul.mubr.bf16.gmra.mxu0 %v1792
      %v2651 = vpop.f32.mrf.mxu0
      %v2652 = vadd.f32 0.0, %v2651
      %v2653 = vpop.f32.mrf.mxu0
      %v2654 = vpop.f32.mrf.mxu0
      %v2655 = vadd.f32 0.0, %v2654
      %v2656 = vpop.f32.mrf.mxu0
      %2657 = vmatprep.mubr.bf16.mxu0 0
      %2658 = vmatmul.mubr.bf16.gmra.mxu0 %v1795
      %v2659 = vpop.f32.mrf.mxu0
      %v2660 = vadd.f32 0.0, %v2659
      %v2661 = vpop.f32.mrf.mxu0
      %v2662 = vpop.f32.mrf.mxu0
      %v2663 = vadd.f32 0.0, %v2662
      %v2664 = vpop.f32.mrf.mxu0
      %2665 = vmatprep.mubr.bf16.mxu0 0
      %2666 = vmatmul.mubr.bf16.gmra.mxu0 %v1798
      %v2667 = vpop.f32.mrf.mxu0
      %v2668 = vadd.f32 0.0, %v2667
      %v2669 = vpop.f32.mrf.mxu0
      %v2670 = vpop.f32.mrf.mxu0
      %v2671 = vadd.f32 0.0, %v2670
      %v2672 = vpop.f32.mrf.mxu0
      %2673 = vmatprep.mubr.bf16.mxu0 0
      %2674 = vmatmul.mubr.bf16.gmra.mxu0 %v1801
      %v2675 = vpop.f32.mrf.mxu0
      %v2676 = vadd.f32 0.0, %v2675
      %v2677 = vpop.f32.mrf.mxu0
      %v2678 = vpop.f32.mrf.mxu0
      %v2679 = vadd.f32 0.0, %v2678
      %v2680 = vpop.f32.mrf.mxu0
      %2681 = vmatprep.mubr.bf16.mxu0 0
      %2682 = vmatmul.mubr.bf16.gmra.mxu0 %v1804
      %v2683 = vpop.f32.mrf.mxu0
      %v2684 = vadd.f32 0.0, %v2683
      %v2685 = vpop.f32.mrf.mxu0
      %v2686 = vpop.f32.mrf.mxu0
      %v2687 = vadd.f32 0.0, %v2686
      %v2688 = vpop.f32.mrf.mxu0
      %2689 = vmatprep.mubr.bf16.mxu0 0
      %2690 = vmatmul.mubr.bf16.gmra.mxu0 %v1807
      %v2691 = vpop.f32.mrf.mxu0
      %v2692 = vadd.f32 0.0, %v2691
      %v2693 = vpop.f32.mrf.mxu0
      %v2694 = vpop.f32.mrf.mxu0
      %v2695 = vadd.f32 0.0, %v2694
      %v2696 = vpop.f32.mrf.mxu0
      %2697 = vmatprep.mubr.bf16.mxu0 0
      %2698 = vmatmul.mubr.bf16.gmra.mxu0 %v1810
      %v2699 = vpop.f32.mrf.mxu0
      %v2700 = vadd.f32 0.0, %v2699
      %v2701 = vpop.f32.mrf.mxu0
      %v2702 = vpop.f32.mrf.mxu0
      %v2703 = vadd.f32 0.0, %v2702
      %v2704 = vpop.f32.mrf.mxu0
      %2705 = vmatprep.mubr.bf16.mxu0 0
      %2706 = vmatmul.mubr.bf16.gmra.mxu0 %v1813
      %v2707 = vpop.f32.mrf.mxu0
      %v2708 = vadd.f32 0.0, %v2707
      %v2709 = vpop.f32.mrf.mxu0
      %v2710 = vpop.f32.mrf.mxu0
      %v2711 = vadd.f32 0.0, %v2710
      %v2712 = vpop.f32.mrf.mxu0
      %2713 = vmatprep.mubr.bf16.mxu0 0
      %2714 = vmatmul.mubr.bf16.gmra.mxu0 %v1816
      %v2715 = vpop.f32.mrf.mxu0
      %v2716 = vadd.f32 0.0, %v2715
      %v2717 = vpop.f32.mrf.mxu0
      %v2718 = vpop.f32.mrf.mxu0
      %v2719 = vadd.f32 0.0, %v2718
      %v2720 = vpop.f32.mrf.mxu0
      %2721 = vmatprep.mubr.bf16.mxu0 0
      %2722 = vmatmul.mubr.bf16.gmra.mxu0 %v1819
      %v2723 = vpop.f32.mrf.mxu0
      %v2724 = vadd.f32 0.0, %v2723
      %v2725 = vpop.f32.mrf.mxu0
      %v2726 = vpop.f32.mrf.mxu0
      %v2727 = vadd.f32 0.0, %v2726
      %v2728 = vpop.f32.mrf.mxu0
      %2729 = vmatprep.mubr.bf16.mxu0 0
      %2730 = vmatmul.mubr.bf16.gmra.mxu0 %v1822
      %v2731 = vpop.f32.mrf.mxu0
      %v2732 = vadd.f32 0.0, %v2731
      %v2733 = vpop.f32.mrf.mxu0
      %v2734 = vpop.f32.mrf.mxu0
      %v2735 = vadd.f32 0.0, %v2734
      %v2736 = vpop.f32.mrf.mxu0
      %2737 = vmatprep.mubr.bf16.mxu0 0
      %2738 = vmatmul.mubr.bf16.gmra.mxu0 %v1825
      %v2739 = vpop.f32.mrf.mxu0
      %v2740 = vadd.f32 0.0, %v2739
      %v2741 = vpop.f32.mrf.mxu0
      %v2742 = vpop.f32.mrf.mxu0
      %v2743 = vadd.f32 0.0, %v2742
      %v2744 = vpop.f32.mrf.mxu0
      %2745 = vmatprep.mubr.bf16.mxu0 0
      %2746 = vmatmul.mubr.bf16.gmra.mxu0 %v1828
      %v2747 = vpop.f32.mrf.mxu0
      %v2748 = vadd.f32 0.0, %v2747
      %v2749 = vpop.f32.mrf.mxu0
      %v2750 = vpop.f32.mrf.mxu0
      %v2751 = vadd.f32 0.0, %v2750
      %v2752 = vpop.f32.mrf.mxu0
      %2753 = vmatprep.mubr.bf16.mxu0 0
      %2754 = vmatmul.mubr.bf16.gmra.mxu0 %v1831
      %v2755 = vpop.f32.mrf.mxu0
      %v2756 = vadd.f32 0.0, %v2755
      %v2757 = vpop.f32.mrf.mxu0
      %v2758 = vpop.f32.mrf.mxu0
      %v2759 = vadd.f32 0.0, %v2758
      %v2760 = vpop.f32.mrf.mxu0
      %2761 = vmatprep.mubr.bf16.mxu0 0
      %2762 = vmatmul.mubr.bf16.gmra.mxu0 %v1834
      %v2763 = vpop.f32.mrf.mxu0
      %v2764 = vadd.f32 0.0, %v2763
      %v2765 = vpop.f32.mrf.mxu0
      %v2766 = vpop.f32.mrf.mxu0
      %v2767 = vadd.f32 0.0, %v2766
      %v2768 = vpop.f32.mrf.mxu0
      %2769 = vmatprep.mubr.bf16.mxu0 0
      %2770 = vmatmul.mubr.bf16.gmra.mxu0 %v1837
      %v2771 = vpop.f32.mrf.mxu0
      %v2772 = vadd.f32 0.0, %v2771
      %v2773 = vpop.f32.mrf.mxu0
      %v2774 = vpop.f32.mrf.mxu0
      %v2775 = vadd.f32 0.0, %v2774
      %v2776 = vpop.f32.mrf.mxu0
      %2777 = vmatprep.mubr.bf16.mxu0 0
      %2778 = vmatmul.mubr.bf16.gmra.mxu0 %v1840
      %v2779 = vpop.f32.mrf.mxu0
      %v2780 = vadd.f32 0.0, %v2779
      %v2781 = vpop.f32.mrf.mxu0
      %v2782 = vpop.f32.mrf.mxu0
      %v2783 = vadd.f32 0.0, %v2782
      %v2784 = vpop.f32.mrf.mxu0
      %2785 = vmatprep.mubr.bf16.mxu0 0
      %2786 = vmatmul.mubr.bf16.gmra.mxu0 %v1843
      %v2787 = vpop.f32.mrf.mxu0
      %v2788 = vadd.f32 0.0, %v2787
      %v2789 = vpop.f32.mrf.mxu0
      %v2790 = vpop.f32.mrf.mxu0
      %v2791 = vadd.f32 0.0, %v2790
      %v2792 = vpop.f32.mrf.mxu0
      %2793 = vdwg.mxu0
      %v2794 = vadd.f32 %v2422, %v2628
      %v2795 = vadd.f32 %v2425, %v2631
      %v2796 = vadd.f32 %v2430, %v2636
      %v2797 = vadd.f32 %v2433, %v2639
      %v2798 = vadd.f32 %v2438, %v2644
      %v2799 = vadd.f32 %v2441, %v2647
      %v2800 = vadd.f32 %v2446, %v2652
      %v2801 = vadd.f32 %v2449, %v2655
      %v2802 = vadd.f32 %v2454, %v2660
      %v2803 = vadd.f32 %v2457, %v2663
      %v2804 = vadd.f32 %v2462, %v2668
      %v2805 = vadd.f32 %v2465, %v2671
      %v2806 = vadd.f32 %v2470, %v2676
      %v2807 = vadd.f32 %v2473, %v2679
      %v2808 = vadd.f32 %v2478, %v2684
      %v2809 = vadd.f32 %v2481, %v2687
      %v2810 = vadd.f32 %v2486, %v2692
      %v2811 = vadd.f32 %v2489, %v2695
      %v2812 = vadd.f32 %v2494, %v2700
      %v2813 = vadd.f32 %v2497, %v2703
      %v2814 = vadd.f32 %v2502, %v2708
      %v2815 = vadd.f32 %v2505, %v2711
      %v2816 = vadd.f32 %v2510, %v2716
      %v2817 = vadd.f32 %v2513, %v2719
      %v2818 = vadd.f32 %v2518, %v2724
      %v2819 = vadd.f32 %v2521, %v2727
      %v2820 = vadd.f32 %v2526, %v2732
      %v2821 = vadd.f32 %v2529, %v2735
      %v2822 = vadd.f32 %v2534, %v2740
      %v2823 = vadd.f32 %v2537, %v2743
      %v2824 = vadd.f32 %v2542, %v2748
      %v2825 = vadd.f32 %v2545, %v2751
      %v2826 = vadd.f32 %v2550, %v2756
      %v2827 = vadd.f32 %v2553, %v2759
      %v2828 = vadd.f32 %v2558, %v2764
      %v2829 = vadd.f32 %v2561, %v2767
      %v2830 = vadd.f32 %v2566, %v2772
      %v2831 = vadd.f32 %v2569, %v2775
      %v2832 = vadd.f32 %v2574, %v2780
      %v2833 = vadd.f32 %v2577, %v2783
      %v2834 = vadd.f32 %v2582, %v2788
      %v2835 = vadd.f32 %v2585, %v2791
      %v2836 = vadd.f32 %v2175, %v2794
      %v2837 = vadd.f32 %v2174, %v2795
      %v2838 = vadd.f32 %v2173, %v2796
      %v2839 = vadd.f32 %v2172, %v2797
      %v2840 = vadd.f32 %v2171, %v2798
      %v2841 = vadd.f32 %v2170, %v2799
      %v2842 = vadd.f32 %v2169, %v2800
      %v2843 = vadd.f32 %v2168, %v2801
      %v2844 = vadd.f32 %v2167, %v2802
      %v2845 = vadd.f32 %v2166, %v2803
      %v2846 = vadd.f32 %v2165, %v2804
      %v2847 = vadd.f32 %v2164, %v2805
      %v2848 = vadd.f32 %v2163, %v2806
      %v2849 = vadd.f32 %v2162, %v2807
      %v2850 = vadd.f32 %v2161, %v2808
      %v2851 = vadd.f32 %v2160, %v2809
      %v2852 = vadd.f32 %v2159, %v2810
      %v2853 = vadd.f32 %v2158, %v2811
      %v2854 = vadd.f32 %v2157, %v2812
      %v2855 = vadd.f32 %v2156, %v2813
      %v2856 = vadd.f32 %v2155, %v2814
      %v2857 = vadd.f32 %v2154, %v2815
      %v2858 = vadd.f32 %v2153, %v2816
      %v2859 = vadd.f32 %v2152, %v2817
      %v2860 = vadd.f32 %v2151, %v2818
      %v2861 = vadd.f32 %v2150, %v2819
      %v2862 = vadd.f32 %v2149, %v2820
      %v2863 = vadd.f32 %v2148, %v2821
      %v2864 = vadd.f32 %v2147, %v2822
      %v2865 = vadd.f32 %v2146, %v2823
      %v2866 = vadd.f32 %v2145, %v2824
      %v2867 = vadd.f32 %v2144, %v2825
      %v2868 = vadd.f32 %v2143, %v2826
      %v2869 = vadd.f32 %v2142, %v2827
      %v2870 = vadd.f32 %v2141, %v2828
      %v2871 = vadd.f32 %v2140, %v2829
      %v2872 = vadd.f32 %v2139, %v2830
      %v2873 = vadd.f32 %v2138, %v2831
      %v2874 = vadd.f32 %v2137, %v2832
      %v2875 = vadd.f32 %v2136, %v2833
      %v2876 = vadd.f32 %v2135, %v2834
      %v2877 = vadd.f32 %v2134, %v2835
      %s2878 = scalar_lea.vmem %s237, 4
      %v2879 = vld [vmem:[%s2878] sm:$0x3]
      %s2880 = scalar_lea.vmem %s237, 10
      %v2881 = vld [vmem:[%s2880] sm:$0x3]
      %v2883 = vsel %vm1308, %v2881, 0
      %2885 = vmatprep.subr.bf16.mxu0 0
      %2886 = vmatpush1.bf16.msra.mxu0 0
      %2887 = vmatprep.subr.bf16.mxu0 0
      %2888 = vmatpush1.bf16.msra.mxu0 0
      %2889 = vmatprep.subr.bf16.mxu0 0
      %2890 = vmatpush1.bf16.msra.mxu0 0
      %2891 = vmatprep.subr.bf16.mxu0 0
      %2892 = vmatpush1.bf16.msra.mxu0 0
      %2893 = vmatprep.subr.bf16.mxu0 0
      %2894 = vmatpush1.bf16.msra.mxu0 0
      %2895 = vmatprep.subr.bf16.mxu0 0
      %2896 = vmatpush1.bf16.msra.mxu0 0
      %2897 = vmatprep.subr.bf16.mxu0 0
      %2898 = vmatpush1.bf16.msra.mxu0 0
      %2899 = vmatprep.subr.bf16.mxu0 0
      %2900 = vmatpush1.bf16.msra.mxu0 %v2883
      %2901 = vmatprep.subr.bf16.mxu0 0
      %2902 = vmatpush2.bf16.msra.mxu0 0
      %2903 = vmatprep.subr.bf16.mxu0 0
      %2904 = vmatpush2.bf16.msra.mxu0 0
      %2905 = vmatprep.subr.bf16.mxu0 0
      %2906 = vmatpush2.bf16.msra.mxu0 0
      %2907 = vmatprep.subr.bf16.mxu0 0
      %2908 = vmatpush2.bf16.msra.mxu0 0
      %2909 = vmatprep.subr.bf16.mxu0 0
      %2910 = vmatpush2.bf16.msra.mxu0 0
      %2911 = vmatprep.subr.bf16.mxu0 0
      %2912 = vmatpush2.bf16.msra.mxu0 0
      %2913 = vmatprep.subr.bf16.mxu0 0
      %2914 = vmatpush2.bf16.msra.mxu0 0
      %2915 = vmatprep.subr.bf16.mxu0 0
      %2916 = vmatpush2.bf16.msra.mxu0 0
      %2917 = vmatprep.mubr.bf16.mxu0 0
      %2918 = vmatmul.mubr.bf16.gmra.mxu0 %v1246
      %v2919 = vpop.f32.mrf.mxu0
      %v2920 = vadd.f32 0.0, %v2919
      %v2921 = vpop.f32.mrf.mxu0
      %v2922 = vpop.f32.mrf.mxu0
      %v2923 = vadd.f32 0.0, %v2922
      %v2924 = vpop.f32.mrf.mxu0
      %2925 = vmatprep.mubr.bf16.mxu0 0
      %2926 = vmatmul.mubr.bf16.gmra.mxu0 %v1249
      %v2927 = vpop.f32.mrf.mxu0
      %v2928 = vadd.f32 0.0, %v2927
      %v2929 = vpop.f32.mrf.mxu0
      %v2930 = vpop.f32.mrf.mxu0
      %v2931 = vadd.f32 0.0, %v2930
      %v2932 = vpop.f32.mrf.mxu0
      %2933 = vmatprep.mubr.bf16.mxu0 0
      %2934 = vmatmul.mubr.bf16.gmra.mxu0 %v1252
      %v2935 = vpop.f32.mrf.mxu0
      %v2936 = vadd.f32 0.0, %v2935
      %v2937 = vpop.f32.mrf.mxu0
      %v2938 = vpop.f32.mrf.mxu0
      %v2939 = vadd.f32 0.0, %v2938
      %v2940 = vpop.f32.mrf.mxu0
      %2941 = vmatprep.mubr.bf16.mxu0 0
      %2942 = vmatmul.mubr.bf16.gmra.mxu0 %v1255
      %v2943 = vpop.f32.mrf.mxu0
      %v2944 = vadd.f32 0.0, %v2943
      %v2945 = vpop.f32.mrf.mxu0
      %v2946 = vpop.f32.mrf.mxu0
      %v2947 = vadd.f32 0.0, %v2946
      %v2948 = vpop.f32.mrf.mxu0
      %2949 = vmatprep.mubr.bf16.mxu0 0
      %2950 = vmatmul.mubr.bf16.gmra.mxu0 %v1258
      %v2951 = vpop.f32.mrf.mxu0
      %v2952 = vadd.f32 0.0, %v2951
      %v2953 = vpop.f32.mrf.mxu0
      %v2954 = vpop.f32.mrf.mxu0
      %v2955 = vadd.f32 0.0, %v2954
      %v2956 = vpop.f32.mrf.mxu0
      %2957 = vmatprep.mubr.bf16.mxu0 0
      %2958 = vmatmul.mubr.bf16.gmra.mxu0 %v1261
      %v2959 = vpop.f32.mrf.mxu0
      %v2960 = vadd.f32 0.0, %v2959
      %v2961 = vpop.f32.mrf.mxu0
      %v2962 = vpop.f32.mrf.mxu0
      %v2963 = vadd.f32 0.0, %v2962
      %v2964 = vpop.f32.mrf.mxu0
      %2965 = vmatprep.mubr.bf16.mxu0 0
      %2966 = vmatmul.mubr.bf16.gmra.mxu0 %v1264
      %v2967 = vpop.f32.mrf.mxu0
      %v2968 = vadd.f32 0.0, %v2967
      %v2969 = vpop.f32.mrf.mxu0
      %v2970 = vpop.f32.mrf.mxu0
      %v2971 = vadd.f32 0.0, %v2970
      %v2972 = vpop.f32.mrf.mxu0
      %2973 = vmatprep.mubr.bf16.mxu0 0
      %2974 = vmatmul.mubr.bf16.gmra.mxu0 %v1267
      %v2975 = vpop.f32.mrf.mxu0
      %v2976 = vadd.f32 0.0, %v2975
      %v2977 = vpop.f32.mrf.mxu0
      %v2978 = vpop.f32.mrf.mxu0
      %v2979 = vadd.f32 0.0, %v2978
      %v2980 = vpop.f32.mrf.mxu0
      %2981 = vmatprep.mubr.bf16.mxu0 0
      %2982 = vmatmul.mubr.bf16.gmra.mxu0 %v1270
      %v2983 = vpop.f32.mrf.mxu0
      %v2984 = vadd.f32 0.0, %v2983
      %v2985 = vpop.f32.mrf.mxu0
      %v2986 = vpop.f32.mrf.mxu0
      %v2987 = vadd.f32 0.0, %v2986
      %v2988 = vpop.f32.mrf.mxu0
      %2989 = vmatprep.mubr.bf16.mxu0 0
      %2990 = vmatmul.mubr.bf16.gmra.mxu0 %v1273
      %v2991 = vpop.f32.mrf.mxu0
      %v2992 = vadd.f32 0.0, %v2991
      %v2993 = vpop.f32.mrf.mxu0
      %v2994 = vpop.f32.mrf.mxu0
      %v2995 = vadd.f32 0.0, %v2994
      %v2996 = vpop.f32.mrf.mxu0
      %2997 = vmatprep.mubr.bf16.mxu0 0
      %2998 = vmatmul.mubr.bf16.gmra.mxu0 %v1276
      %v2999 = vpop.f32.mrf.mxu0
      %v3000 = vadd.f32 0.0, %v2999
      %v3001 = vpop.f32.mrf.mxu0
      %v3002 = vpop.f32.mrf.mxu0
      %v3003 = vadd.f32 0.0, %v3002
      %v3004 = vpop.f32.mrf.mxu0
      %3005 = vmatprep.mubr.bf16.mxu0 0
      %3006 = vmatmul.mubr.bf16.gmra.mxu0 %v1279
      %v3007 = vpop.f32.mrf.mxu0
      %v3008 = vadd.f32 0.0, %v3007
      %v3009 = vpop.f32.mrf.mxu0
      %v3010 = vpop.f32.mrf.mxu0
      %v3011 = vadd.f32 0.0, %v3010
      %v3012 = vpop.f32.mrf.mxu0
      %3013 = vmatprep.mubr.bf16.mxu0 0
      %3014 = vmatmul.mubr.bf16.gmra.mxu0 %v1282
      %v3015 = vpop.f32.mrf.mxu0
      %v3016 = vadd.f32 0.0, %v3015
      %v3017 = vpop.f32.mrf.mxu0
      %v3018 = vpop.f32.mrf.mxu0
      %v3019 = vadd.f32 0.0, %v3018
      %v3020 = vpop.f32.mrf.mxu0
      %3021 = vmatprep.mubr.bf16.mxu0 0
      %3022 = vmatmul.mubr.bf16.gmra.mxu0 %v1285
      %v3023 = vpop.f32.mrf.mxu0
      %v3024 = vadd.f32 0.0, %v3023
      %v3025 = vpop.f32.mrf.mxu0
      %v3026 = vpop.f32.mrf.mxu0
      %v3027 = vadd.f32 0.0, %v3026
      %v3028 = vpop.f32.mrf.mxu0
      %3029 = vmatprep.mubr.bf16.mxu0 0
      %3030 = vmatmul.mubr.bf16.gmra.mxu0 %v1288
      %v3031 = vpop.f32.mrf.mxu0
      %v3032 = vadd.f32 0.0, %v3031
      %v3033 = vpop.f32.mrf.mxu0
      %v3034 = vpop.f32.mrf.mxu0
      %v3035 = vadd.f32 0.0, %v3034
      %v3036 = vpop.f32.mrf.mxu0
      %3037 = vmatprep.mubr.bf16.mxu0 0
      %3038 = vmatmul.mubr.bf16.gmra.mxu0 %v1291
      %v3039 = vpop.f32.mrf.mxu0
      %v3040 = vadd.f32 0.0, %v3039
      %v3041 = vpop.f32.mrf.mxu0
      %v3042 = vpop.f32.mrf.mxu0
      %v3043 = vadd.f32 0.0, %v3042
      %v3044 = vpop.f32.mrf.mxu0
      %3045 = vmatprep.mubr.bf16.mxu0 0
      %3046 = vmatmul.mubr.bf16.gmra.mxu0 %v1294
      %v3047 = vpop.f32.mrf.mxu0
      %v3048 = vadd.f32 0.0, %v3047
      %v3049 = vpop.f32.mrf.mxu0
      %v3050 = vpop.f32.mrf.mxu0
      %v3051 = vadd.f32 0.0, %v3050
      %v3052 = vpop.f32.mrf.mxu0
      %3053 = vmatprep.mubr.bf16.mxu0 0
      %3054 = vmatmul.mubr.bf16.gmra.mxu0 %v1297
      %v3055 = vpop.f32.mrf.mxu0
      %v3056 = vadd.f32 0.0, %v3055
      %v3057 = vpop.f32.mrf.mxu0
      %v3058 = vpop.f32.mrf.mxu0
      %v3059 = vadd.f32 0.0, %v3058
      %v3060 = vpop.f32.mrf.mxu0
      %3061 = vmatprep.mubr.bf16.mxu0 0
      %3062 = vmatmul.mubr.bf16.gmra.mxu0 %v1300
      %v3063 = vpop.f32.mrf.mxu0
      %v3064 = vadd.f32 0.0, %v3063
      %v3065 = vpop.f32.mrf.mxu0
      %v3066 = vpop.f32.mrf.mxu0
      %v3067 = vadd.f32 0.0, %v3066
      %v3068 = vpop.f32.mrf.mxu0
      %3069 = vmatprep.mubr.bf16.mxu0 0
      %3070 = vmatmul.mubr.bf16.gmra.mxu0 %v1303
      %v3071 = vpop.f32.mrf.mxu0
      %v3072 = vadd.f32 0.0, %v3071
      %v3073 = vpop.f32.mrf.mxu0
      %v3074 = vpop.f32.mrf.mxu0
      %v3075 = vadd.f32 0.0, %v3074
      %v3076 = vpop.f32.mrf.mxu0
      %3077 = vmatprep.mubr.bf16.mxu0 0
      %3078 = vmatmul.mubr.bf16.gmra.mxu0 %v1306
      %v3079 = vpop.f32.mrf.mxu0
      %v3080 = vadd.f32 0.0, %v3079
      %v3081 = vpop.f32.mrf.mxu0
      %v3082 = vpop.f32.mrf.mxu0
      %v3083 = vadd.f32 0.0, %v3082
      %v3084 = vpop.f32.mrf.mxu0
      %3085 = vdwg.mxu0
      %v3087 = vsel %vm1308, %v2879, 0
      %3089 = vmatprep.subr.bf16.mxu0 0
      %3090 = vmatpush1.bf16.msra.mxu0 0
      %3091 = vmatprep.subr.bf16.mxu0 0
      %3092 = vmatpush1.bf16.msra.mxu0 0
      %3093 = vmatprep.subr.bf16.mxu0 0
      %3094 = vmatpush1.bf16.msra.mxu0 0
      %3095 = vmatprep.subr.bf16.mxu0 0
      %3096 = vmatpush1.bf16.msra.mxu0 0
      %3097 = vmatprep.subr.bf16.mxu0 0
      %3098 = vmatpush1.bf16.msra.mxu0 0
      %3099 = vmatprep.subr.bf16.mxu0 0
      %3100 = vmatpush1.bf16.msra.mxu0 0
      %3101 = vmatprep.subr.bf16.mxu0 0
      %3102 = vmatpush1.bf16.msra.mxu0 0
      %3103 = vmatprep.subr.bf16.mxu0 0
      %3104 = vmatpush1.bf16.msra.mxu0 %v3087
      %3105 = vmatprep.subr.bf16.mxu0 0
      %3106 = vmatpush2.bf16.msra.mxu0 0
      %3107 = vmatprep.subr.bf16.mxu0 0
      %3108 = vmatpush2.bf16.msra.mxu0 0
      %3109 = vmatprep.subr.bf16.mxu0 0
      %3110 = vmatpush2.bf16.msra.mxu0 0
      %3111 = vmatprep.subr.bf16.mxu0 0
      %3112 = vmatpush2.bf16.msra.mxu0 0
      %3113 = vmatprep.subr.bf16.mxu0 0
      %3114 = vmatpush2.bf16.msra.mxu0 0
      %3115 = vmatprep.subr.bf16.mxu0 0
      %3116 = vmatpush2.bf16.msra.mxu0 0
      %3117 = vmatprep.subr.bf16.mxu0 0
      %3118 = vmatpush2.bf16.msra.mxu0 0
      %3119 = vmatprep.subr.bf16.mxu0 0
      %3120 = vmatpush2.bf16.msra.mxu0 0
      %3121 = vmatprep.mubr.bf16.mxu0 0
      %3122 = vmatmul.mubr.bf16.gmra.mxu0 %v1514
      %v3123 = vpop.f32.mrf.mxu0
      %v3124 = vadd.f32 %v2920, %v3123
      %v3125 = vpop.f32.mrf.mxu0
      %v3126 = vpop.f32.mrf.mxu0
      %v3127 = vadd.f32 %v2923, %v3126
      %v3128 = vpop.f32.mrf.mxu0
      %3129 = vmatprep.mubr.bf16.mxu0 0
      %3130 = vmatmul.mubr.bf16.gmra.mxu0 %v1517
      %v3131 = vpop.f32.mrf.mxu0
      %v3132 = vadd.f32 %v2928, %v3131
      %v3133 = vpop.f32.mrf.mxu0
      %v3134 = vpop.f32.mrf.mxu0
      %v3135 = vadd.f32 %v2931, %v3134
      %v3136 = vpop.f32.mrf.mxu0
      %3137 = vmatprep.mubr.bf16.mxu0 0
      %3138 = vmatmul.mubr.bf16.gmra.mxu0 %v1520
      %v3139 = vpop.f32.mrf.mxu0
      %v3140 = vadd.f32 %v2936, %v3139
      %v3141 = vpop.f32.mrf.mxu0
      %v3142 = vpop.f32.mrf.mxu0
      %v3143 = vadd.f32 %v2939, %v3142
      %v3144 = vpop.f32.mrf.mxu0
      %3145 = vmatprep.mubr.bf16.mxu0 0
      %3146 = vmatmul.mubr.bf16.gmra.mxu0 %v1523
      %v3147 = vpop.f32.mrf.mxu0
      %v3148 = vadd.f32 %v2944, %v3147
      %v3149 = vpop.f32.mrf.mxu0
      %v3150 = vpop.f32.mrf.mxu0
      %v3151 = vadd.f32 %v2947, %v3150
      %v3152 = vpop.f32.mrf.mxu0
      %3153 = vmatprep.mubr.bf16.mxu0 0
      %3154 = vmatmul.mubr.bf16.gmra.mxu0 %v1526
      %v3155 = vpop.f32.mrf.mxu0
      %v3156 = vadd.f32 %v2952, %v3155
      %v3157 = vpop.f32.mrf.mxu0
      %v3158 = vpop.f32.mrf.mxu0
      %v3159 = vadd.f32 %v2955, %v3158
      %v3160 = vpop.f32.mrf.mxu0
      %3161 = vmatprep.mubr.bf16.mxu0 0
      %3162 = vmatmul.mubr.bf16.gmra.mxu0 %v1529
      %v3163 = vpop.f32.mrf.mxu0
      %v3164 = vadd.f32 %v2960, %v3163
      %v3165 = vpop.f32.mrf.mxu0
      %v3166 = vpop.f32.mrf.mxu0
      %v3167 = vadd.f32 %v2963, %v3166
      %v3168 = vpop.f32.mrf.mxu0
      %3169 = vmatprep.mubr.bf16.mxu0 0
      %3170 = vmatmul.mubr.bf16.gmra.mxu0 %v1532
      %v3171 = vpop.f32.mrf.mxu0
      %v3172 = vadd.f32 %v2968, %v3171
      %v3173 = vpop.f32.mrf.mxu0
      %v3174 = vpop.f32.mrf.mxu0
      %v3175 = vadd.f32 %v2971, %v3174
      %v3176 = vpop.f32.mrf.mxu0
      %3177 = vmatprep.mubr.bf16.mxu0 0
      %3178 = vmatmul.mubr.bf16.gmra.mxu0 %v1535
      %v3179 = vpop.f32.mrf.mxu0
      %v3180 = vadd.f32 %v2976, %v3179
      %v3181 = vpop.f32.mrf.mxu0
      %v3182 = vpop.f32.mrf.mxu0
      %v3183 = vadd.f32 %v2979, %v3182
      %v3184 = vpop.f32.mrf.mxu0
      %3185 = vmatprep.mubr.bf16.mxu0 0
      %3186 = vmatmul.mubr.bf16.gmra.mxu0 %v1538
      %v3187 = vpop.f32.mrf.mxu0
      %v3188 = vadd.f32 %v2984, %v3187
      %v3189 = vpop.f32.mrf.mxu0
      %v3190 = vpop.f32.mrf.mxu0
      %v3191 = vadd.f32 %v2987, %v3190
      %v3192 = vpop.f32.mrf.mxu0
      %3193 = vmatprep.mubr.bf16.mxu0 0
      %3194 = vmatmul.mubr.bf16.gmra.mxu0 %v1541
      %v3195 = vpop.f32.mrf.mxu0
      %v3196 = vadd.f32 %v2992, %v3195
      %v3197 = vpop.f32.mrf.mxu0
      %v3198 = vpop.f32.mrf.mxu0
      %v3199 = vadd.f32 %v2995, %v3198
      %v3200 = vpop.f32.mrf.mxu0
      %3201 = vmatprep.mubr.bf16.mxu0 0
      %3202 = vmatmul.mubr.bf16.gmra.mxu0 %v1544
      %v3203 = vpop.f32.mrf.mxu0
      %v3204 = vadd.f32 %v3000, %v3203
      %v3205 = vpop.f32.mrf.mxu0
      %v3206 = vpop.f32.mrf.mxu0
      %v3207 = vadd.f32 %v3003, %v3206
      %v3208 = vpop.f32.mrf.mxu0
      %3209 = vmatprep.mubr.bf16.mxu0 0
      %3210 = vmatmul.mubr.bf16.gmra.mxu0 %v1547
      %v3211 = vpop.f32.mrf.mxu0
      %v3212 = vadd.f32 %v3008, %v3211
      %v3213 = vpop.f32.mrf.mxu0
      %v3214 = vpop.f32.mrf.mxu0
      %v3215 = vadd.f32 %v3011, %v3214
      %v3216 = vpop.f32.mrf.mxu0
      %3217 = vmatprep.mubr.bf16.mxu0 0
      %3218 = vmatmul.mubr.bf16.gmra.mxu0 %v1550
      %v3219 = vpop.f32.mrf.mxu0
      %v3220 = vadd.f32 %v3016, %v3219
      %v3221 = vpop.f32.mrf.mxu0
      %v3222 = vpop.f32.mrf.mxu0
      %v3223 = vadd.f32 %v3019, %v3222
      %v3224 = vpop.f32.mrf.mxu0
      %3225 = vmatprep.mubr.bf16.mxu0 0
      %3226 = vmatmul.mubr.bf16.gmra.mxu0 %v1553
      %v3227 = vpop.f32.mrf.mxu0
      %v3228 = vadd.f32 %v3024, %v3227
      %v3229 = vpop.f32.mrf.mxu0
      %v3230 = vpop.f32.mrf.mxu0
      %v3231 = vadd.f32 %v3027, %v3230
      %v3232 = vpop.f32.mrf.mxu0
      %3233 = vmatprep.mubr.bf16.mxu0 0
      %3234 = vmatmul.mubr.bf16.gmra.mxu0 %v1556
      %v3235 = vpop.f32.mrf.mxu0
      %v3236 = vadd.f32 %v3032, %v3235
      %v3237 = vpop.f32.mrf.mxu0
      %v3238 = vpop.f32.mrf.mxu0
      %v3239 = vadd.f32 %v3035, %v3238
      %v3240 = vpop.f32.mrf.mxu0
      %3241 = vmatprep.mubr.bf16.mxu0 0
      %3242 = vmatmul.mubr.bf16.gmra.mxu0 %v1559
      %v3243 = vpop.f32.mrf.mxu0
      %v3244 = vadd.f32 %v3040, %v3243
      %v3245 = vpop.f32.mrf.mxu0
      %v3246 = vpop.f32.mrf.mxu0
      %v3247 = vadd.f32 %v3043, %v3246
      %v3248 = vpop.f32.mrf.mxu0
      %3249 = vmatprep.mubr.bf16.mxu0 0
      %3250 = vmatmul.mubr.bf16.gmra.mxu0 %v1562
      %v3251 = vpop.f32.mrf.mxu0
      %v3252 = vadd.f32 %v3048, %v3251
      %v3253 = vpop.f32.mrf.mxu0
      %v3254 = vpop.f32.mrf.mxu0
      %v3255 = vadd.f32 %v3051, %v3254
      %v3256 = vpop.f32.mrf.mxu0
      %3257 = vmatprep.mubr.bf16.mxu0 0
      %3258 = vmatmul.mubr.bf16.gmra.mxu0 %v1565
      %v3259 = vpop.f32.mrf.mxu0
      %v3260 = vadd.f32 %v3056, %v3259
      %v3261 = vpop.f32.mrf.mxu0
      %v3262 = vpop.f32.mrf.mxu0
      %v3263 = vadd.f32 %v3059, %v3262
      %v3264 = vpop.f32.mrf.mxu0
      %3265 = vmatprep.mubr.bf16.mxu0 0
      %3266 = vmatmul.mubr.bf16.gmra.mxu0 %v1568
      %v3267 = vpop.f32.mrf.mxu0
      %v3268 = vadd.f32 %v3064, %v3267
      %v3269 = vpop.f32.mrf.mxu0
      %v3270 = vpop.f32.mrf.mxu0
      %v3271 = vadd.f32 %v3067, %v3270
      %v3272 = vpop.f32.mrf.mxu0
      %3273 = vmatprep.mubr.bf16.mxu0 0
      %3274 = vmatmul.mubr.bf16.gmra.mxu0 %v1571
      %v3275 = vpop.f32.mrf.mxu0
      %v3276 = vadd.f32 %v3072, %v3275
      %v3277 = vpop.f32.mrf.mxu0
      %v3278 = vpop.f32.mrf.mxu0
      %v3279 = vadd.f32 %v3075, %v3278
      %v3280 = vpop.f32.mrf.mxu0
      %3281 = vmatprep.mubr.bf16.mxu0 0
      %3282 = vmatmul.mubr.bf16.gmra.mxu0 %v1574
      %v3283 = vpop.f32.mrf.mxu0
      %v3284 = vadd.f32 %v3080, %v3283
      %v3285 = vpop.f32.mrf.mxu0
      %v3286 = vpop.f32.mrf.mxu0
      %v3287 = vadd.f32 %v3083, %v3286
      %v3288 = vpop.f32.mrf.mxu0
      %3289 = vdwg.mxu0
      %s3290 = scalar_lea.vmem %s237, 16
      %v3291 = vld [vmem:[%s3290] sm:$0x3]
      %v3293 = vsel %vm1308, %v3291, 0
      %3295 = vmatprep.subr.bf16.mxu0 0
      %3296 = vmatpush1.bf16.msra.mxu0 0
      %3297 = vmatprep.subr.bf16.mxu0 0
      %3298 = vmatpush1.bf16.msra.mxu0 0
      %3299 = vmatprep.subr.bf16.mxu0 0
      %3300 = vmatpush1.bf16.msra.mxu0 0
      %3301 = vmatprep.subr.bf16.mxu0 0
      %3302 = vmatpush1.bf16.msra.mxu0 0
      %3303 = vmatprep.subr.bf16.mxu0 0
      %3304 = vmatpush1.bf16.msra.mxu0 0
      %3305 = vmatprep.subr.bf16.mxu0 0
      %3306 = vmatpush1.bf16.msra.mxu0 0
      %3307 = vmatprep.subr.bf16.mxu0 0
      %3308 = vmatpush1.bf16.msra.mxu0 0
      %3309 = vmatprep.subr.bf16.mxu0 0
      %3310 = vmatpush1.bf16.msra.mxu0 %v3293
      %3311 = vmatprep.subr.bf16.mxu0 0
      %3312 = vmatpush2.bf16.msra.mxu0 0
      %3313 = vmatprep.subr.bf16.mxu0 0
      %3314 = vmatpush2.bf16.msra.mxu0 0
      %3315 = vmatprep.subr.bf16.mxu0 0
      %3316 = vmatpush2.bf16.msra.mxu0 0
      %3317 = vmatprep.subr.bf16.mxu0 0
      %3318 = vmatpush2.bf16.msra.mxu0 0
      %3319 = vmatprep.subr.bf16.mxu0 0
      %3320 = vmatpush2.bf16.msra.mxu0 0
      %3321 = vmatprep.subr.bf16.mxu0 0
      %3322 = vmatpush2.bf16.msra.mxu0 0
      %3323 = vmatprep.subr.bf16.mxu0 0
      %3324 = vmatpush2.bf16.msra.mxu0 0
      %3325 = vmatprep.subr.bf16.mxu0 0
      %3326 = vmatpush2.bf16.msra.mxu0 0
      %3327 = vmatprep.mubr.bf16.mxu0 0
      %3328 = vmatmul.mubr.bf16.gmra.mxu0 %v1783
      %v3329 = vpop.f32.mrf.mxu0
      %v3330 = vadd.f32 0.0, %v3329
      %v3331 = vpop.f32.mrf.mxu0
      %v3332 = vpop.f32.mrf.mxu0
      %v3333 = vadd.f32 0.0, %v3332
      %v3334 = vpop.f32.mrf.mxu0
      %3335 = vmatprep.mubr.bf16.mxu0 0
      %3336 = vmatmul.mubr.bf16.gmra.mxu0 %v1786
      %v3337 = vpop.f32.mrf.mxu0
      %v3338 = vadd.f32 0.0, %v3337
      %v3339 = vpop.f32.mrf.mxu0
      %v3340 = vpop.f32.mrf.mxu0
      %v3341 = vadd.f32 0.0, %v3340
      %v3342 = vpop.f32.mrf.mxu0
      %3343 = vmatprep.mubr.bf16.mxu0 0
      %3344 = vmatmul.mubr.bf16.gmra.mxu0 %v1789
      %v3345 = vpop.f32.mrf.mxu0
      %v3346 = vadd.f32 0.0, %v3345
      %v3347 = vpop.f32.mrf.mxu0
      %v3348 = vpop.f32.mrf.mxu0
      %v3349 = vadd.f32 0.0, %v3348
      %v3350 = vpop.f32.mrf.mxu0
      %3351 = vmatprep.mubr.bf16.mxu0 0
      %3352 = vmatmul.mubr.bf16.gmra.mxu0 %v1792
      %v3353 = vpop.f32.mrf.mxu0
      %v3354 = vadd.f32 0.0, %v3353
      %v3355 = vpop.f32.mrf.mxu0
      %v3356 = vpop.f32.mrf.mxu0
      %v3357 = vadd.f32 0.0, %v3356
      %v3358 = vpop.f32.mrf.mxu0
      %3359 = vmatprep.mubr.bf16.mxu0 0
      %3360 = vmatmul.mubr.bf16.gmra.mxu0 %v1795
      %v3361 = vpop.f32.mrf.mxu0
      %v3362 = vadd.f32 0.0, %v3361
      %v3363 = vpop.f32.mrf.mxu0
      %v3364 = vpop.f32.mrf.mxu0
      %v3365 = vadd.f32 0.0, %v3364
      %v3366 = vpop.f32.mrf.mxu0
      %3367 = vmatprep.mubr.bf16.mxu0 0
      %3368 = vmatmul.mubr.bf16.gmra.mxu0 %v1798
      %v3369 = vpop.f32.mrf.mxu0
      %v3370 = vadd.f32 0.0, %v3369
      %v3371 = vpop.f32.mrf.mxu0
      %v3372 = vpop.f32.mrf.mxu0
      %v3373 = vadd.f32 0.0, %v3372
      %v3374 = vpop.f32.mrf.mxu0
      %3375 = vmatprep.mubr.bf16.mxu0 0
      %3376 = vmatmul.mubr.bf16.gmra.mxu0 %v1801
      %v3377 = vpop.f32.mrf.mxu0
      %v3378 = vadd.f32 0.0, %v3377
      %v3379 = vpop.f32.mrf.mxu0
      %v3380 = vpop.f32.mrf.mxu0
      %v3381 = vadd.f32 0.0, %v3380
      %v3382 = vpop.f32.mrf.mxu0
      %3383 = vmatprep.mubr.bf16.mxu0 0
      %3384 = vmatmul.mubr.bf16.gmra.mxu0 %v1804
      %v3385 = vpop.f32.mrf.mxu0
      %v3386 = vadd.f32 0.0, %v3385
      %v3387 = vpop.f32.mrf.mxu0
      %v3388 = vpop.f32.mrf.mxu0
      %v3389 = vadd.f32 0.0, %v3388
      %v3390 = vpop.f32.mrf.mxu0
      %3391 = vmatprep.mubr.bf16.mxu0 0
      %3392 = vmatmul.mubr.bf16.gmra.mxu0 %v1807
      %v3393 = vpop.f32.mrf.mxu0
      %v3394 = vadd.f32 0.0, %v3393
      %v3395 = vpop.f32.mrf.mxu0
      %v3396 = vpop.f32.mrf.mxu0
      %v3397 = vadd.f32 0.0, %v3396
      %v3398 = vpop.f32.mrf.mxu0
      %3399 = vmatprep.mubr.bf16.mxu0 0
      %3400 = vmatmul.mubr.bf16.gmra.mxu0 %v1810
      %v3401 = vpop.f32.mrf.mxu0
      %v3402 = vadd.f32 0.0, %v3401
      %v3403 = vpop.f32.mrf.mxu0
      %v3404 = vpop.f32.mrf.mxu0
      %v3405 = vadd.f32 0.0, %v3404
      %v3406 = vpop.f32.mrf.mxu0
      %3407 = vmatprep.mubr.bf16.mxu0 0
      %3408 = vmatmul.mubr.bf16.gmra.mxu0 %v1813
      %v3409 = vpop.f32.mrf.mxu0
      %v3410 = vadd.f32 0.0, %v3409
      %v3411 = vpop.f32.mrf.mxu0
      %v3412 = vpop.f32.mrf.mxu0
      %v3413 = vadd.f32 0.0, %v3412
      %v3414 = vpop.f32.mrf.mxu0
      %3415 = vmatprep.mubr.bf16.mxu0 0
      %3416 = vmatmul.mubr.bf16.gmra.mxu0 %v1816
      %v3417 = vpop.f32.mrf.mxu0
      %v3418 = vadd.f32 0.0, %v3417
      %v3419 = vpop.f32.mrf.mxu0
      %v3420 = vpop.f32.mrf.mxu0
      %v3421 = vadd.f32 0.0, %v3420
      %v3422 = vpop.f32.mrf.mxu0
      %3423 = vmatprep.mubr.bf16.mxu0 0
      %3424 = vmatmul.mubr.bf16.gmra.mxu0 %v1819
      %v3425 = vpop.f32.mrf.mxu0
      %v3426 = vadd.f32 0.0, %v3425
      %v3427 = vpop.f32.mrf.mxu0
      %v3428 = vpop.f32.mrf.mxu0
      %v3429 = vadd.f32 0.0, %v3428
      %v3430 = vpop.f32.mrf.mxu0
      %3431 = vmatprep.mubr.bf16.mxu0 0
      %3432 = vmatmul.mubr.bf16.gmra.mxu0 %v1822
      %v3433 = vpop.f32.mrf.mxu0
      %v3434 = vadd.f32 0.0, %v3433
      %v3435 = vpop.f32.mrf.mxu0
      %v3436 = vpop.f32.mrf.mxu0
      %v3437 = vadd.f32 0.0, %v3436
      %v3438 = vpop.f32.mrf.mxu0
      %3439 = vmatprep.mubr.bf16.mxu0 0
      %3440 = vmatmul.mubr.bf16.gmra.mxu0 %v1825
      %v3441 = vpop.f32.mrf.mxu0
      %v3442 = vadd.f32 0.0, %v3441
      %v3443 = vpop.f32.mrf.mxu0
      %v3444 = vpop.f32.mrf.mxu0
      %v3445 = vadd.f32 0.0, %v3444
      %v3446 = vpop.f32.mrf.mxu0
      %3447 = vmatprep.mubr.bf16.mxu0 0
      %3448 = vmatmul.mubr.bf16.gmra.mxu0 %v1828
      %v3449 = vpop.f32.mrf.mxu0
      %v3450 = vadd.f32 0.0, %v3449
      %v3451 = vpop.f32.mrf.mxu0
      %v3452 = vpop.f32.mrf.mxu0
      %v3453 = vadd.f32 0.0, %v3452
      %v3454 = vpop.f32.mrf.mxu0
      %3455 = vmatprep.mubr.bf16.mxu0 0
      %3456 = vmatmul.mubr.bf16.gmra.mxu0 %v1831
      %v3457 = vpop.f32.mrf.mxu0
      %v3458 = vadd.f32 0.0, %v3457
      %v3459 = vpop.f32.mrf.mxu0
      %v3460 = vpop.f32.mrf.mxu0
      %v3461 = vadd.f32 0.0, %v3460
      %v3462 = vpop.f32.mrf.mxu0
      %3463 = vmatprep.mubr.bf16.mxu0 0
      %3464 = vmatmul.mubr.bf16.gmra.mxu0 %v1834
      %v3465 = vpop.f32.mrf.mxu0
      %v3466 = vadd.f32 0.0, %v3465
      %v3467 = vpop.f32.mrf.mxu0
      %v3468 = vpop.f32.mrf.mxu0
      %v3469 = vadd.f32 0.0, %v3468
      %v3470 = vpop.f32.mrf.mxu0
      %3471 = vmatprep.mubr.bf16.mxu0 0
      %3472 = vmatmul.mubr.bf16.gmra.mxu0 %v1837
      %v3473 = vpop.f32.mrf.mxu0
      %v3474 = vadd.f32 0.0, %v3473
      %v3475 = vpop.f32.mrf.mxu0
      %v3476 = vpop.f32.mrf.mxu0
      %v3477 = vadd.f32 0.0, %v3476
      %v3478 = vpop.f32.mrf.mxu0
      %3479 = vmatprep.mubr.bf16.mxu0 0
      %3480 = vmatmul.mubr.bf16.gmra.mxu0 %v1840
      %v3481 = vpop.f32.mrf.mxu0
      %v3482 = vadd.f32 0.0, %v3481
      %v3483 = vpop.f32.mrf.mxu0
      %v3484 = vpop.f32.mrf.mxu0
      %v3485 = vadd.f32 0.0, %v3484
      %v3486 = vpop.f32.mrf.mxu0
      %3487 = vmatprep.mubr.bf16.mxu0 0
      %3488 = vmatmul.mubr.bf16.gmra.mxu0 %v1843
      %v3489 = vpop.f32.mrf.mxu0
      %v3490 = vadd.f32 0.0, %v3489
      %v3491 = vpop.f32.mrf.mxu0
      %v3492 = vpop.f32.mrf.mxu0
      %v3493 = vadd.f32 0.0, %v3492
      %v3494 = vpop.f32.mrf.mxu0
      %3495 = vdwg.mxu0
      %v3496 = vadd.f32 %v3124, %v3330
      %v3497 = vadd.f32 %v3127, %v3333
      %v3498 = vadd.f32 %v3132, %v3338
      %v3499 = vadd.f32 %v3135, %v3341
      %v3500 = vadd.f32 %v3140, %v3346
      %v3501 = vadd.f32 %v3143, %v3349
      %v3502 = vadd.f32 %v3148, %v3354
      %v3503 = vadd.f32 %v3151, %v3357
      %v3504 = vadd.f32 %v3156, %v3362
      %v3505 = vadd.f32 %v3159, %v3365
      %v3506 = vadd.f32 %v3164, %v3370
      %v3507 = vadd.f32 %v3167, %v3373
      %v3508 = vadd.f32 %v3172, %v3378
      %v3509 = vadd.f32 %v3175, %v3381
      %v3510 = vadd.f32 %v3180, %v3386
      %v3511 = vadd.f32 %v3183, %v3389
      %v3512 = vadd.f32 %v3188, %v3394
      %v3513 = vadd.f32 %v3191, %v3397
      %v3514 = vadd.f32 %v3196, %v3402
      %v3515 = vadd.f32 %v3199, %v3405
      %v3516 = vadd.f32 %v3204, %v3410
      %v3517 = vadd.f32 %v3207, %v3413
      %v3518 = vadd.f32 %v3212, %v3418
      %v3519 = vadd.f32 %v3215, %v3421
      %v3520 = vadd.f32 %v3220, %v3426
      %v3521 = vadd.f32 %v3223, %v3429
      %v3522 = vadd.f32 %v3228, %v3434
      %v3523 = vadd.f32 %v3231, %v3437
      %v3524 = vadd.f32 %v3236, %v3442
      %v3525 = vadd.f32 %v3239, %v3445
      %v3526 = vadd.f32 %v3244, %v3450
      %v3527 = vadd.f32 %v3247, %v3453
      %v3528 = vadd.f32 %v3252, %v3458
      %v3529 = vadd.f32 %v3255, %v3461
      %v3530 = vadd.f32 %v3260, %v3466
      %v3531 = vadd.f32 %v3263, %v3469
      %v3532 = vadd.f32 %v3268, %v3474
      %v3533 = vadd.f32 %v3271, %v3477
      %v3534 = vadd.f32 %v3276, %v3482
      %v3535 = vadd.f32 %v3279, %v3485
      %v3536 = vadd.f32 %v3284, %v3490
      %v3537 = vadd.f32 %v3287, %v3493
      %v3538 = vrot.slane %v3496, 1
      %v3539 = vrot.slane %v3497, 1
      %v3540 = vrot.slane %v3498, 1
      %v3541 = vrot.slane %v3499, 1
      %v3542 = vrot.slane %v3500, 1
      %v3543 = vrot.slane %v3501, 1
      %v3544 = vrot.slane %v3502, 1
      %v3545 = vrot.slane %v3503, 1
      %v3546 = vrot.slane %v3504, 1
      %v3547 = vrot.slane %v3505, 1
      %v3548 = vrot.slane %v3506, 1
      %v3549 = vrot.slane %v3507, 1
      %v3550 = vrot.slane %v3508, 1
      %v3551 = vrot.slane %v3509, 1
      %v3552 = vrot.slane %v3510, 1
      %v3553 = vrot.slane %v3511, 1
      %v3554 = vrot.slane %v3512, 1
      %v3555 = vrot.slane %v3513, 1
      %v3556 = vrot.slane %v3514, 1
      %v3557 = vrot.slane %v3515, 1
      %v3558 = vrot.slane %v3516, 1
      %v3559 = vrot.slane %v3517, 1
      %v3560 = vrot.slane %v3518, 1
      %v3561 = vrot.slane %v3519, 1
      %v3562 = vrot.slane %v3520, 1
      %v3563 = vrot.slane %v3521, 1
      %v3564 = vrot.slane %v3522, 1
      %v3565 = vrot.slane %v3523, 1
      %v3566 = vrot.slane %v3524, 1
      %v3567 = vrot.slane %v3525, 1
      %v3568 = vrot.slane %v3526, 1
      %v3569 = vrot.slane %v3527, 1
      %v3570 = vrot.slane %v3528, 1
      %v3571 = vrot.slane %v3529, 1
      %v3572 = vrot.slane %v3530, 1
      %v3573 = vrot.slane %v3531, 1
      %v3574 = vrot.slane %v3532, 1
      %v3575 = vrot.slane %v3533, 1
      %v3576 = vrot.slane %v3534, 1
      %v3577 = vrot.slane %v3535, 1
      %v3578 = vrot.slane %v3536, 1
      %v3579 = vrot.slane %v3537, 1
      %vm3580 = vcmp.lt.s32.totalorder %v965, 7
      %v3581 = vsel %vm3580, %v3578, %v3579
      %v3582 = vsel %vm3580, %v3577, %v3578
      %v3583 = vsel %vm3580, %v3576, %v3577
      %v3584 = vsel %vm3580, %v3575, %v3576
      %v3585 = vsel %vm3580, %v3574, %v3575
      %v3586 = vsel %vm3580, %v3573, %v3574
      %v3587 = vsel %vm3580, %v3572, %v3573
      %v3588 = vsel %vm3580, %v3571, %v3572
      %v3589 = vsel %vm3580, %v3570, %v3571
      %v3590 = vsel %vm3580, %v3569, %v3570
      %v3591 = vsel %vm3580, %v3568, %v3569
      %v3592 = vsel %vm3580, %v3567, %v3568
      %v3593 = vsel %vm3580, %v3566, %v3567
      %v3594 = vsel %vm3580, %v3565, %v3566
      %v3595 = vsel %vm3580, %v3564, %v3565
      %v3596 = vsel %vm3580, %v3563, %v3564
      %v3597 = vsel %vm3580, %v3562, %v3563
      %v3598 = vsel %vm3580, %v3561, %v3562
      %v3599 = vsel %vm3580, %v3560, %v3561
      %v3600 = vsel %vm3580, %v3559, %v3560
      %v3601 = vsel %vm3580, %v3558, %v3559
      %v3602 = vsel %vm3580, %v3557, %v3558
      %v3603 = vsel %vm3580, %v3556, %v3557
      %v3604 = vsel %vm3580, %v3555, %v3556
      %v3605 = vsel %vm3580, %v3554, %v3555
      %v3606 = vsel %vm3580, %v3553, %v3554
      %v3607 = vsel %vm3580, %v3552, %v3553
      %v3608 = vsel %vm3580, %v3551, %v3552
      %v3609 = vsel %vm3580, %v3550, %v3551
      %v3610 = vsel %vm3580, %v3549, %v3550
      %v3611 = vsel %vm3580, %v3548, %v3549
      %v3612 = vsel %vm3580, %v3547, %v3548
      %v3613 = vsel %vm3580, %v3546, %v3547
      %v3614 = vsel %vm3580, %v3545, %v3546
      %v3615 = vsel %vm3580, %v3544, %v3545
      %v3616 = vsel %vm3580, %v3543, %v3544
      %v3617 = vsel %vm3580, %v3542, %v3543
      %v3618 = vsel %vm3580, %v3541, %v3542
      %v3619 = vsel %vm3580, %v3540, %v3541
      %v3620 = vsel %vm3580, %v3539, %v3540
      %v3621 = vsel %vm3580, %v3538, %v3539
      %v3622 = vsel %vm3580, %v3579, %v3538
      %v3623 = vadd.f32 %v2836, %v3621
      %v3624 = vadd.f32 %v2837, %v3620
      %v3625 = vadd.f32 %v2838, %v3619
      %v3626 = vadd.f32 %v2839, %v3618
      %v3627 = vadd.f32 %v2840, %v3617
      %v3628 = vadd.f32 %v2841, %v3616
      %v3629 = vadd.f32 %v2842, %v3615
      %v3630 = vadd.f32 %v2843, %v3614
      %v3631 = vadd.f32 %v2844, %v3613
      %v3632 = vadd.f32 %v2845, %v3612
      %v3633 = vadd.f32 %v2846, %v3611
      %v3634 = vadd.f32 %v2847, %v3610
      %v3635 = vadd.f32 %v2848, %v3609
      %v3636 = vadd.f32 %v2849, %v3608
      %v3637 = vadd.f32 %v2850, %v3607
      %v3638 = vadd.f32 %v2851, %v3606
      %v3639 = vadd.f32 %v2852, %v3605
      %v3640 = vadd.f32 %v2853, %v3604
      %v3641 = vadd.f32 %v2854, %v3603
      %v3642 = vadd.f32 %v2855, %v3602
      %v3643 = vadd.f32 %v2856, %v3601
      %v3644 = vadd.f32 %v2857, %v3600
      %v3645 = vadd.f32 %v2858, %v3599
      %v3646 = vadd.f32 %v2859, %v3598
      %v3647 = vadd.f32 %v2860, %v3597
      %v3648 = vadd.f32 %v2861, %v3596
      %v3649 = vadd.f32 %v2862, %v3595
      %v3650 = vadd.f32 %v2863, %v3594
      %v3651 = vadd.f32 %v2864, %v3593
      %v3652 = vadd.f32 %v2865, %v3592
      %v3653 = vadd.f32 %v2866, %v3591
      %v3654 = vadd.f32 %v2867, %v3590
      %v3655 = vadd.f32 %v2868, %v3589
      %v3656 = vadd.f32 %v2869, %v3588
      %v3657 = vadd.f32 %v2870, %v3587
      %v3658 = vadd.f32 %v2871, %v3586
      %v3659 = vadd.f32 %v2872, %v3585
      %v3660 = vadd.f32 %v2873, %v3584
      %v3661 = vadd.f32 %v2874, %v3583
      %v3662 = vadd.f32 %v2875, %v3582
      %v3663 = vadd.f32 %v2876, %v3581
      %v3664 = vadd.f32 %v2877, %v3622
      %v3665 = vld [vmem:[%s240] sm:$0x1]
      %v3667 = vlaneseq
      %v3668 = vshrl.u32 %v3667, 7
      %v3669 = vsub.s32 0, %v3668
      %v3670 = vrot.slane %v3665, %v3669
      %v3672 = vadd.f32 %v3623, %v3670
      %v3673 = vadd.f32 %v3624, %v3670
      %v3674 = vadd.f32 %v3625, %v3670
      %v3675 = vadd.f32 %v3626, %v3670
      %v3676 = vadd.f32 %v3627, %v3670
      %v3677 = vadd.f32 %v3628, %v3670
      %v3678 = vadd.f32 %v3629, %v3670
      %v3679 = vadd.f32 %v3630, %v3670
      %v3680 = vadd.f32 %v3631, %v3670
      %v3681 = vadd.f32 %v3632, %v3670
      %v3682 = vadd.f32 %v3633, %v3670
      %v3683 = vadd.f32 %v3634, %v3670
      %v3684 = vadd.f32 %v3635, %v3670
      %v3685 = vadd.f32 %v3636, %v3670
      %v3686 = vadd.f32 %v3637, %v3670
      %v3687 = vadd.f32 %v3638, %v3670
      %v3688 = vadd.f32 %v3639, %v3670
      %v3689 = vadd.f32 %v3640, %v3670
      %v3690 = vadd.f32 %v3641, %v3670
      %v3691 = vadd.f32 %v3642, %v3670
      %v3692 = vadd.f32 %v3643, %v3670
      %v3693 = vadd.f32 %v3644, %v3670
      %v3694 = vadd.f32 %v3645, %v3670
      %v3695 = vadd.f32 %v3646, %v3670
      %v3696 = vadd.f32 %v3647, %v3670
      %v3697 = vadd.f32 %v3648, %v3670
      %v3698 = vadd.f32 %v3649, %v3670
      %v3699 = vadd.f32 %v3650, %v3670
      %v3700 = vadd.f32 %v3651, %v3670
      %v3701 = vadd.f32 %v3652, %v3670
      %v3702 = vadd.f32 %v3653, %v3670
      %v3703 = vadd.f32 %v3654, %v3670
      %v3704 = vadd.f32 %v3655, %v3670
      %v3705 = vadd.f32 %v3656, %v3670
      %v3706 = vadd.f32 %v3657, %v3670
      %v3707 = vadd.f32 %v3658, %v3670
      %v3708 = vadd.f32 %v3659, %v3670
      %v3709 = vadd.f32 %v3660, %v3670
      %v3710 = vadd.f32 %v3661, %v3670
      %v3711 = vadd.f32 %v3662, %v3670
      %v3712 = vadd.f32 %v3663, %v3670
      %v3713 = vadd.f32 %v3664, %v3670
      %v3714 = vsub.f32 0.0, %v3672
      %v3715 = vsub.f32 0.0, %v3673
      %v3716 = vsub.f32 0.0, %v3674
      %v3717 = vsub.f32 0.0, %v3675
      %v3718 = vsub.f32 0.0, %v3676
      %v3719 = vsub.f32 0.0, %v3677
      %v3720 = vsub.f32 0.0, %v3678
      %v3721 = vsub.f32 0.0, %v3679
      %v3722 = vsub.f32 0.0, %v3680
      %v3723 = vsub.f32 0.0, %v3681
      %v3724 = vsub.f32 0.0, %v3682
      %v3725 = vsub.f32 0.0, %v3683
      %v3726 = vsub.f32 0.0, %v3684
      %v3727 = vsub.f32 0.0, %v3685
      %v3728 = vsub.f32 0.0, %v3686
      %v3729 = vsub.f32 0.0, %v3687
      %v3730 = vsub.f32 0.0, %v3688
      %v3731 = vsub.f32 0.0, %v3689
      %v3732 = vsub.f32 0.0, %v3690
      %v3733 = vsub.f32 0.0, %v3691
      %v3734 = vsub.f32 0.0, %v3692
      %v3735 = vsub.f32 0.0, %v3693
      %v3736 = vsub.f32 0.0, %v3694
      %v3737 = vsub.f32 0.0, %v3695
      %v3738 = vsub.f32 0.0, %v3696
      %v3739 = vsub.f32 0.0, %v3697
      %v3740 = vsub.f32 0.0, %v3698
      %v3741 = vsub.f32 0.0, %v3699
      %v3742 = vsub.f32 0.0, %v3700
      %v3743 = vsub.f32 0.0, %v3701
      %v3744 = vsub.f32 0.0, %v3702
      %v3745 = vsub.f32 0.0, %v3703
      %v3746 = vsub.f32 0.0, %v3704
      %v3747 = vsub.f32 0.0, %v3705
      %v3748 = vsub.f32 0.0, %v3706
      %v3749 = vsub.f32 0.0, %v3707
      %v3750 = vsub.f32 0.0, %v3708
      %v3751 = vsub.f32 0.0, %v3709
      %v3752 = vsub.f32 0.0, %v3710
      %v3753 = vsub.f32 0.0, %v3711
      %v3754 = vsub.f32 0.0, %v3712
      %v3755 = vsub.f32 0.0, %v3713
      %v3756 = vmul.f32 %v3714, 1.442695
      %v3757 = vpow.pop %v3756
      %v3758 = vmul.f32 %v3715, 1.442695
      %v3759 = vpow.pop %v3758
      %v3760 = vmul.f32 %v3716, 1.442695
      %v3761 = vpow.pop %v3760
      %v3762 = vmul.f32 %v3717, 1.442695
      %v3763 = vpow.pop %v3762
      %v3764 = vmul.f32 %v3718, 1.442695
      %v3765 = vpow.pop %v3764
      %v3766 = vmul.f32 %v3719, 1.442695
      %v3767 = vpow.pop %v3766
      %v3768 = vmul.f32 %v3720, 1.442695
      %v3769 = vpow.pop %v3768
      %v3770 = vmul.f32 %v3721, 1.442695
      %v3771 = vpow.pop %v3770
      %v3772 = vmul.f32 %v3722, 1.442695
      %v3773 = vpow.pop %v3772
      %v3774 = vmul.f32 %v3723, 1.442695
      %v3775 = vpow.pop %v3774
      %v3776 = vmul.f32 %v3724, 1.442695
      %v3777 = vpow.pop %v3776
      %v3778 = vmul.f32 %v3725, 1.442695
      %v3779 = vpow.pop %v3778
      %v3780 = vmul.f32 %v3726, 1.442695
      %v3781 = vpow.pop %v3780
      %v3782 = vmul.f32 %v3727, 1.442695
      %v3783 = vpow.pop %v3782
      %v3784 = vmul.f32 %v3728, 1.442695
      %v3785 = vpow.pop %v3784
      %v3786 = vmul.f32 %v3729, 1.442695
      %v3787 = vpow.pop %v3786
      %v3788 = vmul.f32 %v3730, 1.442695
      %v3789 = vpow.pop %v3788
      %v3790 = vmul.f32 %v3731, 1.442695
      %v3791 = vpow.pop %v3790
      %v3792 = vmul.f32 %v3732, 1.442695
      %v3793 = vpow.pop %v3792
      %v3794 = vmul.f32 %v3733, 1.442695
      %v3795 = vpow.pop %v3794
      %v3796 = vmul.f32 %v3734, 1.442695
      %v3797 = vpow.pop %v3796
      %v3798 = vmul.f32 %v3735, 1.442695
      %v3799 = vpow.pop %v3798
      %v3800 = vmul.f32 %v3736, 1.442695
      %v3801 = vpow.pop %v3800
      %v3802 = vmul.f32 %v3737, 1.442695
      %v3803 = vpow.pop %v3802
      %v3804 = vmul.f32 %v3738, 1.442695
      %v3805 = vpow.pop %v3804
      %v3806 = vmul.f32 %v3739, 1.442695
      %v3807 = vpow.pop %v3806
      %v3808 = vmul.f32 %v3740, 1.442695
      %v3809 = vpow.pop %v3808
      %v3810 = vmul.f32 %v3741, 1.442695
      %v3811 = vpow.pop %v3810
      %v3812 = vmul.f32 %v3742, 1.442695
      %v3813 = vpow.pop %v3812
      %v3814 = vmul.f32 %v3743, 1.442695
      %v3815 = vpow.pop %v3814
      %v3816 = vmul.f32 %v3744, 1.442695
      %v3817 = vpow.pop %v3816
      %v3818 = vmul.f32 %v3745, 1.442695
      %v3819 = vpow.pop %v3818
      %v3820 = vmul.f32 %v3746, 1.442695
      %v3821 = vpow.pop %v3820
      %v3822 = vmul.f32 %v3747, 1.442695
      %v3823 = vpow.pop %v3822
      %v3824 = vmul.f32 %v3748, 1.442695
      %v3825 = vpow.pop %v3824
      %v3826 = vmul.f32 %v3749, 1.442695
      %v3827 = vpow.pop %v3826
      %v3828 = vmul.f32 %v3750, 1.442695
      %v3829 = vpow.pop %v3828
      %v3830 = vmul.f32 %v3751, 1.442695
      %v3831 = vpow.pop %v3830
      %v3832 = vmul.f32 %v3752, 1.442695
      %v3833 = vpow.pop %v3832
      %v3834 = vmul.f32 %v3753, 1.442695
      %v3835 = vpow.pop %v3834
      %v3836 = vmul.f32 %v3754, 1.442695
      %v3837 = vpow.pop %v3836
      %v3838 = vmul.f32 %v3755, 1.442695
      %v3839 = vpow.pop %v3838
      %v3840 = vadd.f32 %v3757, 1.0
      %v3841 = vadd.f32 %v3759, 1.0
      %v3842 = vadd.f32 %v3761, 1.0
      %v3843 = vadd.f32 %v3763, 1.0
      %v3844 = vadd.f32 %v3765, 1.0
      %v3845 = vadd.f32 %v3767, 1.0
      %v3846 = vadd.f32 %v3769, 1.0
      %v3847 = vadd.f32 %v3771, 1.0
      %v3848 = vadd.f32 %v3773, 1.0
      %v3849 = vadd.f32 %v3775, 1.0
      %v3850 = vadd.f32 %v3777, 1.0
      %v3851 = vadd.f32 %v3779, 1.0
      %v3852 = vadd.f32 %v3781, 1.0
      %v3853 = vadd.f32 %v3783, 1.0
      %v3854 = vadd.f32 %v3785, 1.0
      %v3855 = vadd.f32 %v3787, 1.0
      %v3856 = vadd.f32 %v3789, 1.0
      %v3857 = vadd.f32 %v3791, 1.0
      %v3858 = vadd.f32 %v3793, 1.0
      %v3859 = vadd.f32 %v3795, 1.0
      %v3860 = vadd.f32 %v3797, 1.0
      %v3861 = vadd.f32 %v3799, 1.0
      %v3862 = vadd.f32 %v3801, 1.0
      %v3863 = vadd.f32 %v3803, 1.0
      %v3864 = vadd.f32 %v3805, 1.0
      %v3865 = vadd.f32 %v3807, 1.0
      %v3866 = vadd.f32 %v3809, 1.0
      %v3867 = vadd.f32 %v3811, 1.0
      %v3868 = vadd.f32 %v3813, 1.0
      %v3869 = vadd.f32 %v3815, 1.0
      %v3870 = vadd.f32 %v3817, 1.0
      %v3871 = vadd.f32 %v3819, 1.0
      %v3872 = vadd.f32 %v3821, 1.0
      %v3873 = vadd.f32 %v3823, 1.0
      %v3874 = vadd.f32 %v3825, 1.0
      %v3875 = vadd.f32 %v3827, 1.0
      %v3876 = vadd.f32 %v3829, 1.0
      %v3877 = vadd.f32 %v3831, 1.0
      %v3878 = vadd.f32 %v3833, 1.0
      %v3879 = vadd.f32 %v3835, 1.0
      %v3880 = vadd.f32 %v3837, 1.0
      %v3881 = vadd.f32 %v3839, 1.0
      %v3882 = vrcp.pop %v3840
      %v3883 = vrcp.pop %v3841
      %v3884 = vrcp.pop %v3842
      %v3885 = vrcp.pop %v3843
      %v3886 = vrcp.pop %v3844
      %v3887 = vrcp.pop %v3845
      %v3888 = vrcp.pop %v3846
      %v3889 = vrcp.pop %v3847
      %v3890 = vrcp.pop %v3848
      %v3891 = vrcp.pop %v3849
      %v3892 = vrcp.pop %v3850
      %v3893 = vrcp.pop %v3851
      %v3894 = vrcp.pop %v3852
      %v3895 = vrcp.pop %v3853
      %v3896 = vrcp.pop %v3854
      %v3897 = vrcp.pop %v3855
      %v3898 = vrcp.pop %v3856
      %v3899 = vrcp.pop %v3857
      %v3900 = vrcp.pop %v3858
      %v3901 = vrcp.pop %v3859
      %v3902 = vrcp.pop %v3860
      %v3903 = vrcp.pop %v3861
      %v3904 = vrcp.pop %v3862
      %v3905 = vrcp.pop %v3863
      %v3906 = vrcp.pop %v3864
      %v3907 = vrcp.pop %v3865
      %v3908 = vrcp.pop %v3866
      %v3909 = vrcp.pop %v3867
      %v3910 = vrcp.pop %v3868
      %v3911 = vrcp.pop %v3869
      %v3912 = vrcp.pop %v3870
      %v3913 = vrcp.pop %v3871
      %v3914 = vrcp.pop %v3872
      %v3915 = vrcp.pop %v3873
      %v3916 = vrcp.pop %v3874
      %v3917 = vrcp.pop %v3875
      %v3918 = vrcp.pop %v3876
      %v3919 = vrcp.pop %v3877
      %v3920 = vrcp.pop %v3878
      %v3921 = vrcp.pop %v3879
      %v3922 = vrcp.pop %v3880
      %v3923 = vrcp.pop %v3881
      %v3924 = vmul.f32 %v3672, %v3882
      %v3925 = vmul.f32 %v3673, %v3883
      %v3926 = vmul.f32 %v3674, %v3884
      %v3927 = vmul.f32 %v3675, %v3885
      %v3928 = vmul.f32 %v3676, %v3886
      %v3929 = vmul.f32 %v3677, %v3887
      %v3930 = vmul.f32 %v3678, %v3888
      %v3931 = vmul.f32 %v3679, %v3889
      %v3932 = vmul.f32 %v3680, %v3890
      %v3933 = vmul.f32 %v3681, %v3891
      %v3934 = vmul.f32 %v3682, %v3892
      %v3935 = vmul.f32 %v3683, %v3893
      %v3936 = vmul.f32 %v3684, %v3894
      %v3937 = vmul.f32 %v3685, %v3895
      %v3938 = vmul.f32 %v3686, %v3896
      %v3939 = vmul.f32 %v3687, %v3897
      %v3940 = vmul.f32 %v3688, %v3898
      %v3941 = vmul.f32 %v3689, %v3899
      %v3942 = vmul.f32 %v3690, %v3900
      %v3943 = vmul.f32 %v3691, %v3901
      %v3944 = vmul.f32 %v3692, %v3902
      %v3945 = vmul.f32 %v3693, %v3903
      %v3946 = vmul.f32 %v3694, %v3904
      %v3947 = vmul.f32 %v3695, %v3905
      %v3948 = vmul.f32 %v3696, %v3906
      %v3949 = vmul.f32 %v3697, %v3907
      %v3950 = vmul.f32 %v3698, %v3908
      %v3951 = vmul.f32 %v3699, %v3909
      %v3952 = vmul.f32 %v3700, %v3910
      %v3953 = vmul.f32 %v3701, %v3911
      %v3954 = vmul.f32 %v3702, %v3912
      %v3955 = vmul.f32 %v3703, %v3913
      %v3956 = vmul.f32 %v3704, %v3914
      %v3957 = vmul.f32 %v3705, %v3915
      %v3958 = vmul.f32 %v3706, %v3916
      %v3959 = vmul.f32 %v3707, %v3917
      %v3960 = vmul.f32 %v3708, %v3918
      %v3961 = vmul.f32 %v3709, %v3919
      %v3962 = vmul.f32 %v3710, %v3920
      %v3963 = vmul.f32 %v3711, %v3921
      %v3964 = vmul.f32 %v3712, %v3922
      %v3965 = vmul.f32 %v3713, %v3923
      %v3966 = vpack.c.bf16 %v3925, %v3924
      %v3967 = vpack.c.bf16 %v3927, %v3926
      %v3968 = vpack.c.bf16 %v3929, %v3928
      %v3969 = vpack.c.bf16 %v3931, %v3930
      %v3970 = vpack.c.bf16 %v3933, %v3932
      %v3971 = vpack.c.bf16 %v3935, %v3934
      %v3972 = vpack.c.bf16 %v3937, %v3936
      %v3973 = vpack.c.bf16 %v3939, %v3938
      %v3974 = vpack.c.bf16 %v3941, %v3940
      %v3975 = vpack.c.bf16 %v3943, %v3942
      %v3976 = vpack.c.bf16 %v3945, %v3944
      %v3977 = vpack.c.bf16 %v3947, %v3946
      %v3978 = vpack.c.bf16 %v3949, %v3948
      %v3979 = vpack.c.bf16 %v3951, %v3950
      %v3980 = vpack.c.bf16 %v3953, %v3952
      %v3981 = vpack.c.bf16 %v3955, %v3954
      %v3982 = vpack.c.bf16 %v3957, %v3956
      %v3983 = vpack.c.bf16 %v3959, %v3958
      %v3984 = vpack.c.bf16 %v3961, %v3960
      %v3985 = vpack.c.bf16 %v3963, %v3962
      %v3986 = vpack.c.bf16 %v3965, %v3964
      %v4008 = vunpack.c.l.b16 %v3966
      %v4009 = vunpack.c.h.b16 %v3966
      %v4010 = vunpack.c.l.b16 %v3967
      %v4011 = vunpack.c.h.b16 %v3967
      %v4012 = vunpack.c.l.b16 %v3968
      %v4013 = vunpack.c.h.b16 %v3968
      %v4014 = vunpack.c.l.b16 %v3969
      %v4015 = vunpack.c.h.b16 %v3969
      %v4016 = vunpack.c.l.b16 %v3970
      %v4017 = vunpack.c.h.b16 %v3970
      %v4018 = vunpack.c.l.b16 %v3971
      %v4019 = vunpack.c.h.b16 %v3971
      %v4020 = vunpack.c.l.b16 %v3972
      %v4021 = vunpack.c.h.b16 %v3972
      %v4022 = vunpack.c.l.b16 %v3973
      %v4023 = vunpack.c.h.b16 %v3973
      %v4024 = vunpack.c.l.b16 %v3974
      %v4025 = vunpack.c.h.b16 %v3974
      %v4026 = vunpack.c.l.b16 %v3975
      %v4027 = vunpack.c.h.b16 %v3975
      %v4028 = vunpack.c.l.b16 %v3976
      %v4029 = vunpack.c.h.b16 %v3976
      %v4030 = vunpack.c.l.b16 %v3977
      %v4031 = vunpack.c.h.b16 %v3977
      %v4032 = vunpack.c.l.b16 %v3978
      %v4033 = vunpack.c.h.b16 %v3978
      %v4034 = vunpack.c.l.b16 %v3979
      %v4035 = vunpack.c.h.b16 %v3979
      %v4036 = vunpack.c.l.b16 %v3980
      %v4037 = vunpack.c.h.b16 %v3980
      %v4038 = vunpack.c.l.b16 %v3981
      %v4039 = vunpack.c.h.b16 %v3981
      %v4040 = vunpack.c.l.b16 %v3982
      %v4041 = vunpack.c.h.b16 %v3982
      %v4042 = vunpack.c.l.b16 %v3983
      %v4043 = vunpack.c.h.b16 %v3983
      %v4044 = vunpack.c.l.b16 %v3984
      %v4045 = vunpack.c.h.b16 %v3984
      %v4046 = vunpack.c.l.b16 %v3985
      %v4047 = vunpack.c.h.b16 %v3985
      %v4048 = vunpack.c.l.b16 %v3986
      %v4049 = vunpack.c.h.b16 %v3986
      %v4050 = vpack.c.b16 %v4008, %v4008
      %v4051 = vpack.c.b16 %v4009, %v4009
      %v4052 = vpack.c.b16 %v4010, %v4010
      %v4053 = vpack.c.b16 %v4011, %v4011
      %v4054 = vpack.c.b16 %v4012, %v4012
      %v4055 = vpack.c.b16 %v4013, %v4013
      %v4056 = vpack.c.b16 %v4014, %v4014
      %v4057 = vpack.c.b16 %v4015, %v4015
      %v4058 = vpack.c.b16 %v4016, %v4016
      %v4059 = vpack.c.b16 %v4017, %v4017
      %v4060 = vpack.c.b16 %v4018, %v4018
      %v4061 = vpack.c.b16 %v4019, %v4019
      %v4062 = vpack.c.b16 %v4020, %v4020
      %v4063 = vpack.c.b16 %v4021, %v4021
      %v4064 = vpack.c.b16 %v4022, %v4022
      %v4065 = vpack.c.b16 %v4023, %v4023
      %v4066 = vpack.c.b16 %v4024, %v4024
      %v4067 = vpack.c.b16 %v4025, %v4025
      %v4068 = vpack.c.b16 %v4026, %v4026
      %v4069 = vpack.c.b16 %v4027, %v4027
      %v4070 = vpack.c.b16 %v4028, %v4028
      %v4071 = vpack.c.b16 %v4029, %v4029
      %v4072 = vpack.c.b16 %v4030, %v4030
      %v4073 = vpack.c.b16 %v4031, %v4031
      %v4074 = vpack.c.b16 %v4032, %v4032
      %v4075 = vpack.c.b16 %v4033, %v4033
      %v4076 = vpack.c.b16 %v4034, %v4034
      %v4077 = vpack.c.b16 %v4035, %v4035
      %v4078 = vpack.c.b16 %v4036, %v4036
      %v4079 = vpack.c.b16 %v4037, %v4037
      %v4080 = vpack.c.b16 %v4038, %v4038
      %v4081 = vpack.c.b16 %v4039, %v4039
      %v4082 = vpack.c.b16 %v4040, %v4040
      %v4083 = vpack.c.b16 %v4041, %v4041
      %v4084 = vpack.c.b16 %v4042, %v4042
      %v4085 = vpack.c.b16 %v4043, %v4043
      %v4086 = vpack.c.b16 %v4044, %v4044
      %v4087 = vpack.c.b16 %v4045, %v4045
      %v4088 = vpack.c.b16 %v4046, %v4046
      %v4089 = vpack.c.b16 %v4047, %v4047
      %v4090 = vpack.c.b16 %v4048, %v4048
      %v4091 = vpack.c.b16 %v4049, %v4049
      %vm4134 = vcmask 27648
      %4135 = vst.msk [vmem:[%s248] sm:$0xf] %vm4134, %v4050
      %4136 = vst.msk [vmem:[%s248 + $0x4] sm:$0xf] %vm4134, %v4051
      %4137 = vst.msk [vmem:[%s248 + $0x8] sm:$0xf] %vm4134, %v4052
      %4138 = vst.msk [vmem:[%s248 + $0xc] sm:$0xf] %vm4134, %v4053
      %4139 = vst.msk [vmem:[%s248 + $0x10] sm:$0xf] %vm4134, %v4054
      %4140 = vst.msk [vmem:[%s248 + $0x14] sm:$0xf] %vm4134, %v4055
      %4141 = vst.msk [vmem:[%s248 + $0x18] sm:$0xf] %vm4134, %v4056
      %4142 = vst.msk [vmem:[%s248 + $0x1c] sm:$0xf] %vm4134, %v4057
      %4143 = vst.msk [vmem:[%s248 + $0x20] sm:$0xf] %vm4134, %v4058
      %4144 = vst.msk [vmem:[%s248 + $0x24] sm:$0xf] %vm4134, %v4059
      %4145 = vst.msk [vmem:[%s248 + $0x28] sm:$0xf] %vm4134, %v4060
      %4146 = vst.msk [vmem:[%s248 + $0x2c] sm:$0xf] %vm4134, %v4061
      %4147 = vst.msk [vmem:[%s248 + $0x30] sm:$0xf] %vm4134, %v4062
      %4148 = vst.msk [vmem:[%s248 + $0x34] sm:$0xf] %vm4134, %v4063
      %4149 = vst.msk [vmem:[%s248 + $0x38] sm:$0xf] %vm4134, %v4064
      %4150 = vst.msk [vmem:[%s248 + $0x3c] sm:$0xf] %vm4134, %v4065
      %4151 = vst.msk [vmem:[%s248 + $0x40] sm:$0xf] %vm4134, %v4066
      %4152 = vst.msk [vmem:[%s248 + $0x44] sm:$0xf] %vm4134, %v4067
      %4153 = vst.msk [vmem:[%s248 + $0x48] sm:$0xf] %vm4134, %v4068
      %4154 = vst.msk [vmem:[%s248 + $0x4c] sm:$0xf] %vm4134, %v4069
      %4155 = vst.msk [vmem:[%s248 + $0x50] sm:$0xf] %vm4134, %v4070
      %4156 = vst.msk [vmem:[%s248 + $0x54] sm:$0xf] %vm4134, %v4071
      %4157 = vst.msk [vmem:[%s248 + $0x58] sm:$0xf] %vm4134, %v4072
      %4158 = vst.msk [vmem:[%s248 + $0x5c] sm:$0xf] %vm4134, %v4073
      %4159 = vst.msk [vmem:[%s248 + $0x60] sm:$0xf] %vm4134, %v4074
      %4160 = vst.msk [vmem:[%s248 + $0x64] sm:$0xf] %vm4134, %v4075
      %4161 = vst.msk [vmem:[%s248 + $0x68] sm:$0xf] %vm4134, %v4076
      %4162 = vst.msk [vmem:[%s248 + $0x6c] sm:$0xf] %vm4134, %v4077
      %4163 = vst.msk [vmem:[%s248 + $0x70] sm:$0xf] %vm4134, %v4078
      %4164 = vst.msk [vmem:[%s248 + $0x74] sm:$0xf] %vm4134, %v4079
      %4165 = vst.msk [vmem:[%s248 + $0x78] sm:$0xf] %vm4134, %v4080
      %4166 = vst.msk [vmem:[%s248 + $0x7c] sm:$0xf] %vm4134, %v4081
      %4167 = vst.msk [vmem:[%s248 + $0x80] sm:$0xf] %vm4134, %v4082
      %4168 = vst.msk [vmem:[%s248 + $0x84] sm:$0xf] %vm4134, %v4083
      %4169 = vst.msk [vmem:[%s248 + $0x88] sm:$0xf] %vm4134, %v4084
      %4170 = vst.msk [vmem:[%s248 + $0x8c] sm:$0xf] %vm4134, %v4085
      %4171 = vst.msk [vmem:[%s248 + $0x90] sm:$0xf] %vm4134, %v4086
      %4172 = vst.msk [vmem:[%s248 + $0x94] sm:$0xf] %vm4134, %v4087
      %4173 = vst.msk [vmem:[%s248 + $0x98] sm:$0xf] %vm4134, %v4088
      %4174 = vst.msk [vmem:[%s248 + $0x9c] sm:$0xf] %vm4134, %v4089
      %4175 = vst.msk [vmem:[%s248 + $0xa0] sm:$0xf] %vm4134, %v4090
      %4176 = vst.msk [vmem:[%s248 + $0xa4] sm:$0xf] %vm4134, %v4091
      %p4177 = scmp.lt.s32.totalorder %s19, 1
      %s4178 = scalar_select %p4177, %s19, 1
      %p4179 = scmp.lt.s32.totalorder %s20, 0
      %s4180 = scalar_select %p4179, %s20, 0
      %s4181 = smul.addr %s4178, 42
      %s4182 = sadd.s32 %s4180, %s4181
      %s4183 = smul.addr %s4182, 4
      %s4184 = scalar_lea.vmem %s4, %s4183
      // Predicated region
      $region37: #{_lambda_.7} parent=35 // pred_check
        %p4185 = pneg %p146
      $region38: #{_lambda_.7} parent=35 // pred_check_branch
        %4187 = sbr.rel (%p4185) target = $region40
      $region39: #{_lambda_.7} parent=35 // pred_region
        _
      $region40: #{_lambda_.7} parent=35 // pred_fallthru
        _
    $region36: #{_lambda_.7} parent=5 // pred_fallthru
      _
    %p4188 = scmp.le.s32.totalorder 2, %s10
    // Predicated region
    $region41: #{_lambda_.7} parent=5 // pred_check
      %p4189 = pneg %p4188
    $region42: #{_lambda_.7} parent=5 // pred_check_branch
      %4191 = sbr.rel (%p4189) target = $region44
    $region43: #{_lambda_.7} parent=5 // pred_region
      %s4192 = ssub.s32 %s10, 2
      // Predicated region
      $region45: #{_lambda_.7} parent=43 // pred_check
        %p4193 = pneg %p152
      $region46: #{_lambda_.7} parent=43 // pred_check_branch
        %4195 = sbr.rel (%p4193) target = $region48
      $region47: #{_lambda_.7} parent=43 // pred_region
        %p4196 = scmp.lt.s32.totalorder %s21, 1
        %s4197 = scalar_select %p4196, %s21, 1
        %p4198 = scmp.lt.s32.totalorder %s22, 0
        %s4199 = scalar_select %p4198, %s22, 0
        %s4200 = smul.addr %s4197, 42
        %s4201 = sadd.s32 %s4199, %s4200
        %s4202 = smul.addr %s4201, 4
        %s4203 = scalar_lea.vmem %s4, %s4202
      $region48: #{_lambda_.7} parent=43 // pred_fallthru
        _
    $region44: #{_lambda_.7} parent=5 // pred_fallthru
      _
  $region6: #{_lambda_.7} parent=0 // loop_footer
    %s14 = sadd.s32 1, %s10
  $region7: #{_lambda_.7} parent=0 // loop_footer_branch
    %9 = sbr.rel target = $region3
  $region8: #{_lambda_.7} parent=0 // loop_exit
    _

// kernel: _lambda_.8
$region0: #{_lambda_.8}
  #allocation0 [shape = 'u32[]', space=smem, size = 0x4, offset = 0x4, fixed_abs, tag = 'smem constant byte address 0x4 - core index']
  #allocation1 [shape = 'u32[144,128]{1,0:T(1,128)}', space=vmem, size = 0x12000, scoped, tag = 'internal scratch']
  %s0 = inlined_call_operand.vmem [shape: bf16[2,336,4], index: 0, kind: input, shape index: {}]
  %s1 = inlined_call_operand.vmem [shape: bf16[2,336,4], index: 1, kind: input, shape index: {}]
  %s2 = inlined_call_operand.vmem [shape: bf16[9,4,4], index: 2, kind: input, shape index: {}]
  %s3 = inlined_call_operand.vmem [shape: f32[1,4], index: 3, kind: input, shape index: {}]
  %s4 = inlined_call_operand.vmem [shape: bf16[336,1], index: 4, kind: input, shape index: {}]
  %s5 = inlined_call_operand.vmem [shape: bf16[2,336,4], index: 5, kind: output, shape index: {}]
  %s6 = sld [smem:[#allocation0]]
  $region53: #{_lambda_.8} parent=0
    _
  %s8 = ssub.s32 1, %s6
  %s9 = scalar_select 0, %s8, %s6
  loop: start=0, step=1, limit=4
  $region2: #{_lambda_.8} parent=0 // loop_pre_header
    _
  $region3: #{_lambda_.8} parent=0 // loop_header
    %s11 = sphi 0, %s15
    %p12 = scmp.ge.s32.totalorder %s11, 4
    %s18 = sphi 0, %s30
    %s19 = sphi 0, %s26
    %s20 = sphi 0, %s18
    %s21 = sphi 0, %s19
    %s22 = sphi 0, %s20
    %s23 = sphi 0, %s21
    %s33 = sphi 0, %s35
    %s36 = sphi 0, %s33
    %s37 = sphi 0, %s36
    %s53 = sphi 0, %s37
    %s61 = sphi 0, %s63
    %s64 = sphi 0, %s61
    %s65 = sphi 0, %s64
    %s81 = sphi 0, %s65
    %s87 = sphi 0, %s89
    %s90 = sphi 0, %s87
    %s91 = sphi 0, %s90
    %s107 = sphi 0, %s91
    %s113 = sphi 0, %s115
    %s116 = sphi 0, %s113
    %s117 = sphi 0, %s116
    %s133 = sphi 0, %s117
    %s137 = sphi 0, %s137
    %s139 = sphi 0, %s137
    %s140 = sphi 0, %s139
    %s154 = sphi 0, %s140
    %s162 = sphi 0, %s164
    %s165 = sphi 0, %s162
    %s166 = sphi 0, %s165
    %s182 = sphi 0, %s166
  $region4: #{_lambda_.8} parent=0 // loop_header_branch
    %14 = sbr.rel (%p12) target = $region8
  $region5: #{_lambda_.8} parent=0 // loop_body
    %s16 = ssub.s32 %s11, 1
    %s17 = ssub.s32 %s11, 2
    %s24 = sadd.s32 1, %s19
    %p25 = scmp.ge.s32.totalorder %s24, 1
    %s26 = scalar_select %p25, 0, %s24
    %s27 = sadd.s32 1, %s18
    %s28 = scalar_select %p25, %s27, %s18
    %p29 = scmp.ge.s32.totalorder %s28, 2
    %s30 = scalar_select %p29, 0, %s28
    %s31 = ssub.s32 %s18, %s30
    %p32 = scmp.eq.s32.totalorder %s31, 0
    %s34 = sadd.s32 %s33, 1
    %s35 = scalar_select %p32, %s33, %s34
    %p38 = pneg %p32
    %p39 = scmp.eq.s32.totalorder %s11, 1
    %p40 = por %p38, %p39
    %p41 = scmp.ne.s32.totalorder %s33, %s36
    %p42 = scmp.eq.s32.totalorder %s11, 0
    %p43 = por %p41, %p42
    %p44 = scmp.ne.s32.totalorder %s33, %s36
    %p45 = scmp.eq.s32.totalorder %s16, 1
    %p46 = por %p44, %p45
    %p47 = scmp.ne.s32.totalorder %s36, %s37
    %p48 = scmp.eq.s32.totalorder %s16, 0
    %p49 = por %p47, %p48
    %p50 = scmp.ne.s32.totalorder %s36, %s37
    %p51 = scmp.eq.s32.totalorder %s17, 1
    %p52 = por %p50, %p51
    %p54 = scmp.ne.s32.totalorder %s37, %s53
    %p55 = scmp.eq.s32.totalorder %s17, 0
    %p56 = por %p54, %p55
    %s57 = ssub.s32 %s18, %s30
    %s58 = ssub.s32 %s19, %s26
    %s59 = sor.u32 %s57, %s58
    %p60 = scmp.eq.s32.totalorder %s59, 0
    %s62 = sadd.s32 %s61, 1
    %s63 = scalar_select %p60, %s61, %s62
    %p66 = pneg %p60
    %p67 = scmp.eq.s32.totalorder %s11, 1
    %p68 = por %p66, %p67
    %p69 = scmp.ne.s32.totalorder %s61, %s64
    %p70 = scmp.eq.s32.totalorder %s11, 0
    %p71 = por %p69, %p70
    %p72 = scmp.ne.s32.totalorder %s61, %s64
    %p73 = scmp.eq.s32.totalorder %s16, 1
    %p74 = por %p72, %p73
    %p75 = scmp.ne.s32.totalorder %s64, %s65
    %p76 = scmp.eq.s32.totalorder %s16, 0
    %p77 = por %p75, %p76
    %p78 = scmp.ne.s32.totalorder %s64, %s65
    %p79 = scmp.eq.s32.totalorder %s17, 1
    %p80 = por %p78, %p79
    %p82 = scmp.ne.s32.totalorder %s65, %s81
    %p83 = scmp.eq.s32.totalorder %s17, 0
    %p84 = por %p82, %p83
    %s85 = ssub.s32 %s19, %s26
    %p86 = scmp.eq.s32.totalorder %s85, 0
    %s88 = sadd.s32 %s87, 1
    %s89 = scalar_select %p86, %s87, %s88
    %p92 = pneg %p86
    %p93 = scmp.eq.s32.totalorder %s11, 1
    %p94 = por %p92, %p93
    %p95 = scmp.ne.s32.totalorder %s87, %s90
    %p96 = scmp.eq.s32.totalorder %s11, 0
    %p97 = por %p95, %p96
    %p98 = scmp.ne.s32.totalorder %s87, %s90
    %p99 = scmp.eq.s32.totalorder %s16, 1
    %p100 = por %p98, %p99
    %p101 = scmp.ne.s32.totalorder %s90, %s91
    %p102 = scmp.eq.s32.totalorder %s16, 0
    %p103 = por %p101, %p102
    %p104 = scmp.ne.s32.totalorder %s90, %s91
    %p105 = scmp.eq.s32.totalorder %s17, 1
    %p106 = por %p104, %p105
    %p108 = scmp.ne.s32.totalorder %s91, %s107
    %p109 = scmp.eq.s32.totalorder %s17, 0
    %p110 = por %p108, %p109
    %s111 = ssub.s32 %s19, %s26
    %p112 = scmp.eq.s32.totalorder %s111, 0
    %s114 = sadd.s32 %s113, 1
    %s115 = scalar_select %p112, %s113, %s114
    %p118 = pneg %p112
    %p119 = scmp.eq.s32.totalorder %s11, 1
    %p120 = por %p118, %p119
    %p121 = scmp.ne.s32.totalorder %s113, %s116
    %p122 = scmp.eq.s32.totalorder %s11, 0
    %p123 = por %p121, %p122
    %p124 = scmp.ne.s32.totalorder %s113, %s116
    %p125 = scmp.eq.s32.totalorder %s16, 1
    %p126 = por %p124, %p125
    %p127 = scmp.ne.s32.totalorder %s116, %s117
    %p128 = scmp.eq.s32.totalorder %s16, 0
    %p129 = por %p127, %p128
    %p130 = scmp.ne.s32.totalorder %s116, %s117
    %p131 = scmp.eq.s32.totalorder %s17, 1
    %p132 = por %p130, %p131
    %p134 = scmp.ne.s32.totalorder %s117, %s133
    %p135 = scmp.eq.s32.totalorder %s17, 0
    %p136 = por %p134, %p135
    %s138 = sadd.s32 %s137, 1
    %p141 = scmp.eq.s32.totalorder %s11, 1
    %p142 = scmp.ne.s32.totalorder %s137, %s139
    %p143 = scmp.eq.s32.totalorder %s11, 0
    %p144 = por %p142, %p143
    %p145 = scmp.ne.s32.totalorder %s137, %s139
    %p146 = scmp.eq.s32.totalorder %s16, 1
    %p147 = por %p145, %p146
    %p148 = scmp.ne.s32.totalorder %s139, %s140
    %p149 = scmp.eq.s32.totalorder %s16, 0
    %p150 = por %p148, %p149
    %p151 = scmp.ne.s32.totalorder %s139, %s140
    %p152 = scmp.eq.s32.totalorder %s17, 1
    %p153 = por %p151, %p152
    %p155 = scmp.ne.s32.totalorder %s140, %s154
    %p156 = scmp.eq.s32.totalorder %s17, 0
    %p157 = por %p155, %p156
    %s158 = ssub.s32 %s18, %s30
    %s159 = ssub.s32 %s19, %s26
    %s160 = sor.u32 %s158, %s159
    %p161 = scmp.eq.s32.totalorder %s160, 0
    %s163 = sadd.s32 %s162, 1
    %s164 = scalar_select %p161, %s162, %s163
    %p167 = pneg %p161
    %p168 = scmp.eq.s32.totalorder %s11, 1
    %p169 = por %p167, %p168
    %p170 = scmp.ne.s32.totalorder %s162, %s165
    %p171 = scmp.eq.s32.totalorder %s11, 0
    %p172 = por %p170, %p171
    %p173 = scmp.ne.s32.totalorder %s162, %s165
    %p174 = scmp.eq.s32.totalorder %s16, 1
    %p175 = por %p173, %p174
    %p176 = scmp.ne.s32.totalorder %s165, %s166
    %p177 = scmp.eq.s32.totalorder %s16, 0
    %p178 = por %p176, %p177
    %p179 = scmp.ne.s32.totalorder %s165, %s166
    %p180 = scmp.eq.s32.totalorder %s17, 1
    %p181 = por %p179, %p180
    %p183 = scmp.ne.s32.totalorder %s166, %s182
    %p184 = scmp.eq.s32.totalorder %s17, 0
    %p185 = por %p183, %p184
    %p186 = scmp.le.s32.totalorder 1, %s11
    %p187 = scmp.lt.s32.totalorder %s11, 3
    %p188 = pnand %p186, %p187
    %p189 = pneg %p188
    // Predicated region
    $region9: #{_lambda_.8} parent=5 // pred_check
      _
    $region10: #{_lambda_.8} parent=5 // pred_check_branch
      %191 = sbr.rel (%p188) target = $region12
    $region11: #{_lambda_.8} parent=5 // pred_region
      %s192 = ssub.s32 %s11, 1
      // Predicated region
      $region13: #{_lambda_.8} parent=11 // pred_check
        %p193 = pneg %p103
      $region14: #{_lambda_.8} parent=11 // pred_check_branch
        %195 = sbr.rel (%p193) target = $region16
      $region15: #{_lambda_.8} parent=11 // pred_region
        %p196 = scmp.lt.s32.totalorder %s21, 0
        %s197 = scalar_select %p196, %s21, 0
        %s198 = smul.addr %s197, 2
        %s199 = scalar_lea.vmem %s2, %s198
      $region16: #{_lambda_.8} parent=11 // pred_fallthru
        _
      // Predicated region
      $region17: #{_lambda_.8} parent=11 // pred_check
        %p200 = pneg %p129
      $region18: #{_lambda_.8} parent=11 // pred_check_branch
        %202 = sbr.rel (%p200) target = $region20
      $region19: #{_lambda_.8} parent=11 // pred_region
        %p203 = scmp.lt.s32.totalorder %s21, 0
        %s204 = scalar_select %p203, %s21, 0
        %s205 = scalar_lea.vmem %s3, %s204
      $region20: #{_lambda_.8} parent=11 // pred_fallthru
        _
      // Predicated region
      $region21: #{_lambda_.8} parent=11 // pred_check
        %p206 = pneg %p150
      $region22: #{_lambda_.8} parent=11 // pred_check_branch
        %208 = sbr.rel (%p206) target = $region24
      $region23: #{_lambda_.8} parent=11 // pred_region
        _
      $region24: #{_lambda_.8} parent=11 // pred_fallthru
        _
    $region12: #{_lambda_.8} parent=5 // pred_fallthru
      _
    %p209 = scmp.lt.s32.totalorder %s11, 2
    // Predicated region
    $region25: #{_lambda_.8} parent=5 // pred_check
      %p210 = pneg %p209
    $region26: #{_lambda_.8} parent=5 // pred_check_branch
      %212 = sbr.rel (%p210) target = $region28
    $region27: #{_lambda_.8} parent=5 // pred_region
      // Predicated region
      $region29: #{_lambda_.8} parent=27 // pred_check
        %p213 = pneg %p43
      $region30: #{_lambda_.8} parent=27 // pred_check_branch
        %215 = sbr.rel (%p213) target = $region32
      $region31: #{_lambda_.8} parent=27 // pred_region
        %p216 = scmp.lt.s32.totalorder %s18, 1
        %s217 = scalar_select %p216, %s18, 1
        %s218 = smul.addr %s217, 42
        %s219 = smul.addr %s218, 4
        %s220 = scalar_lea.vmem %s0, %s219
      $region32: #{_lambda_.8} parent=27 // pred_fallthru
        _
      // Predicated region
      $region33: #{_lambda_.8} parent=27 // pred_check
        %p221 = pneg %p71
      $region34: #{_lambda_.8} parent=27 // pred_check_branch
        %223 = sbr.rel (%p221) target = $region36
      $region35: #{_lambda_.8} parent=27 // pred_region
        %p224 = scmp.lt.s32.totalorder %s18, 1
        %s225 = scalar_select %p224, %s18, 1
        %p226 = scmp.lt.s32.totalorder %s19, 0
        %s227 = scalar_select %p226, %s19, 0
        %s228 = smul.addr %s225, 42
        %s229 = sadd.s32 %s227, %s228
        %s230 = smul.addr %s229, 4
        %s231 = scalar_lea.vmem %s1, %s230
      $region36: #{_lambda_.8} parent=27 // pred_fallthru
        _
    $region28: #{_lambda_.8} parent=5 // pred_fallthru
      _
    %p232 = scmp.le.s32.totalorder 1, %s11
    %p233 = scmp.lt.s32.totalorder %s11, 3
    %p234 = pnand %p232, %p233
    %p235 = pneg %p234
    // Predicated region
    $region37: #{_lambda_.8} parent=5 // pred_check
      _
    $region38: #{_lambda_.8} parent=5 // pred_check_branch
      %237 = sbr.rel (%p234) target = $region40
    $region39: #{_lambda_.8} parent=5 // pred_region
      %s238 = ssub.s32 %s11, 1
      %p239 = scmp.lt.s32.totalorder %s20, 1
      %s240 = scalar_select %p239, %s20, 1
      %s241 = smul.addr %s240, 42
      %s242 = smul.addr %s241, 4
      %s243 = scalar_lea.vmem %s0, %s242
      %p244 = pneg %p49
      %p245 = pneg %p46
      %p246 = scmp.lt.s32.totalorder %s20, 1
      %s247 = scalar_select %p246, %s20, 1
      %p248 = scmp.lt.s32.totalorder %s21, 0
      %s249 = scalar_select %p248, %s21, 0
      %s250 = smul.addr %s247, 42
      %s251 = sadd.s32 %s249, %s250
      %s252 = smul.addr %s251, 4
      %s253 = scalar_lea.vmem %s1, %s252
      %p254 = pneg %p77
      %p255 = pneg %p74
      %p256 = scmp.lt.s32.totalorder %s21, 0
      %s257 = scalar_select %p256, %s21, 0
      %s258 = smul.addr %s257, 2
      %s259 = scalar_lea.vmem %s2, %s258
      %p260 = pneg %p103
      %p261 = pneg %p100
      %p262 = scmp.lt.s32.totalorder %s21, 0
      %s263 = scalar_select %p262, %s21, 0
      %s264 = scalar_lea.vmem %s3, %s263
      %p265 = pneg %p129
      %p266 = pneg %p126
      %p267 = pneg %p150
      %p268 = pneg %p147
      %p269 = pneg %p178
      %p270 = pneg %p175
      %p271 = scmp.lt.s32.totalorder %s20, 1
      %s272 = scalar_select %p271, %s20, 1
      %p273 = scmp.lt.s32.totalorder %s21, 0
      %s274 = scalar_select %p273, %s21, 0
      %s275 = smul.addr %s272, 42
      %s276 = sadd.s32 %s274, %s275
      %s277 = smul.addr %s276, 4
      %s278 = scalar_lea.vmem %s5, %s277
      %p279 = scmp.lt.s32.totalorder %s20, 1
      %s280 = scalar_select %p279, %s20, 1
      %s281 = smul.addr %s280, 42
      %s282 = smul.addr %s281, 4
      %s283 = scalar_lea.vmem %s0, %s282
      %p284 = scmp.lt.s32.totalorder %s20, 1
      %s285 = scalar_select %p284, %s20, 1
      %p286 = scmp.lt.s32.totalorder %s21, 0
      %s287 = scalar_select %p286, %s21, 0
      %s288 = smul.addr %s285, 42
      %s289 = sadd.s32 %s287, %s288
      %s290 = smul.addr %s289, 4
      %s291 = scalar_lea.vmem %s1, %s290
      %p292 = scmp.lt.s32.totalorder %s21, 0
      %s293 = scalar_select %p292, %s21, 0
      %s294 = smul.addr %s293, 2
      %s295 = scalar_lea.vmem %s2, %s294
      %p296 = scmp.lt.s32.totalorder %s21, 0
      %s297 = scalar_select %p296, %s21, 0
      %s298 = scalar_lea.vmem %s3, %s297
      %p299 = scmp.lt.s32.totalorder %s20, 1
      %s300 = scalar_select %p299, %s20, 1
      %p301 = scmp.lt.s32.totalorder %s21, 0
      %s302 = scalar_select %p301, %s21, 0
      %s303 = smul.addr %s300, 42
      %s304 = sadd.s32 %s302, %s303
      %s305 = smul.addr %s304, 4
      %s306 = scalar_lea.vmem %s5, %s305
      %v308 = vld [vmem:[%s283] sm:$0xf]
      %v309 = vld [vmem:[%s283 + $0x4] sm:$0xf]
      %v310 = vld [vmem:[%s283 + $0x8] sm:$0xf]
      %v311 = vld [vmem:[%s283 + $0xc] sm:$0xf]
      %v312 = vld [vmem:[%s283 + $0x10] sm:$0xf]
      %v313 = vld [vmem:[%s283 + $0x14] sm:$0xf]
      %v314 = vld [vmem:[%s283 + $0x18] sm:$0xf]
      %v315 = vld [vmem:[%s283 + $0x1c] sm:$0xf]
      %v316 = vld [vmem:[%s283 + $0x20] sm:$0xf]
      %v317 = vld [vmem:[%s283 + $0x24] sm:$0xf]
      %v318 = vld [vmem:[%s283 + $0x28] sm:$0xf]
      %v319 = vld [vmem:[%s283 + $0x2c] sm:$0xf]
      %v320 = vld [vmem:[%s283 + $0x30] sm:$0xf]
      %v321 = vld [vmem:[%s283 + $0x34] sm:$0xf]
      %v322 = vld [vmem:[%s283 + $0x38] sm:$0xf]
      %v323 = vld [vmem:[%s283 + $0x3c] sm:$0xf]
      %v324 = vld [vmem:[%s283 + $0x40] sm:$0xf]
      %v325 = vld [vmem:[%s283 + $0x44] sm:$0xf]
      %v326 = vld [vmem:[%s283 + $0x48] sm:$0xf]
      %v327 = vld [vmem:[%s283 + $0x4c] sm:$0xf]
      %v328 = vld [vmem:[%s283 + $0x50] sm:$0xf]
      %v329 = vld [vmem:[%s283 + $0x54] sm:$0xf]
      %v330 = vld [vmem:[%s283 + $0x58] sm:$0xf]
      %v331 = vld [vmem:[%s283 + $0x5c] sm:$0xf]
      %v332 = vld [vmem:[%s283 + $0x60] sm:$0xf]
      %v333 = vld [vmem:[%s283 + $0x64] sm:$0xf]
      %v334 = vld [vmem:[%s283 + $0x68] sm:$0xf]
      %v335 = vld [vmem:[%s283 + $0x6c] sm:$0xf]
      %v336 = vld [vmem:[%s283 + $0x70] sm:$0xf]
      %v337 = vld [vmem:[%s283 + $0x74] sm:$0xf]
      %v338 = vld [vmem:[%s283 + $0x78] sm:$0xf]
      %v339 = vld [vmem:[%s283 + $0x7c] sm:$0xf]
      %v340 = vld [vmem:[%s283 + $0x80] sm:$0xf]
      %v341 = vld [vmem:[%s283 + $0x84] sm:$0xf]
      %v342 = vld [vmem:[%s283 + $0x88] sm:$0xf]
      %v343 = vld [vmem:[%s283 + $0x8c] sm:$0xf]
      %v344 = vld [vmem:[%s283 + $0x90] sm:$0xf]
      %v345 = vld [vmem:[%s283 + $0x94] sm:$0xf]
      %v346 = vld [vmem:[%s283 + $0x98] sm:$0xf]
      %v347 = vld [vmem:[%s283 + $0x9c] sm:$0xf]
      %v348 = vld [vmem:[%s283 + $0xa0] sm:$0xf]
      %v349 = vld [vmem:[%s283 + $0xa4] sm:$0xf]
      %v350 = vld [vmem:[%s4] sm:$0xf]
      %v351 = vld [vmem:[%s4 + $0x4] sm:$0xf]
      %v352 = vld [vmem:[%s4 + $0x8] sm:$0xf]
      %v353 = vld [vmem:[%s4 + $0xc] sm:$0xf]
      %v354 = vld [vmem:[%s4 + $0x10] sm:$0xf]
      %v355 = vld [vmem:[%s4 + $0x14] sm:$0xf]
      %v356 = vld [vmem:[%s4 + $0x18] sm:$0xf]
      %v357 = vld [vmem:[%s4 + $0x1c] sm:$0xf]
      %v358 = vld [vmem:[%s4 + $0x20] sm:$0xf]
      %v359 = vld [vmem:[%s4 + $0x24] sm:$0xf]
      %v360 = vld [vmem:[%s4 + $0x28] sm:$0xf]
      %v361 = vld [vmem:[%s4 + $0x2c] sm:$0xf]
      %v362 = vld [vmem:[%s4 + $0x30] sm:$0xf]
      %v363 = vld [vmem:[%s4 + $0x34] sm:$0xf]
      %v364 = vld [vmem:[%s4 + $0x38] sm:$0xf]
      %v365 = vld [vmem:[%s4 + $0x3c] sm:$0xf]
      %v366 = vld [vmem:[%s4 + $0x40] sm:$0xf]
      %v367 = vld [vmem:[%s4 + $0x44] sm:$0xf]
      %v368 = vld [vmem:[%s4 + $0x48] sm:$0xf]
      %v369 = vld [vmem:[%s4 + $0x4c] sm:$0xf]
      %v370 = vld [vmem:[%s4 + $0x50] sm:$0xf]
      %v371 = vld [vmem:[%s4 + $0x54] sm:$0xf]
      %v372 = vld [vmem:[%s4 + $0x58] sm:$0xf]
      %v373 = vld [vmem:[%s4 + $0x5c] sm:$0xf]
      %v374 = vld [vmem:[%s4 + $0x60] sm:$0xf]
      %v375 = vld [vmem:[%s4 + $0x64] sm:$0xf]
      %v376 = vld [vmem:[%s4 + $0x68] sm:$0xf]
      %v377 = vld [vmem:[%s4 + $0x6c] sm:$0xf]
      %v378 = vld [vmem:[%s4 + $0x70] sm:$0xf]
      %v379 = vld [vmem:[%s4 + $0x74] sm:$0xf]
      %v380 = vld [vmem:[%s4 + $0x78] sm:$0xf]
      %v381 = vld [vmem:[%s4 + $0x7c] sm:$0xf]
      %v382 = vld [vmem:[%s4 + $0x80] sm:$0xf]
      %v383 = vld [vmem:[%s4 + $0x84] sm:$0xf]
      %v384 = vld [vmem:[%s4 + $0x88] sm:$0xf]
      %v385 = vld [vmem:[%s4 + $0x8c] sm:$0xf]
      %v386 = vld [vmem:[%s4 + $0x90] sm:$0xf]
      %v387 = vld [vmem:[%s4 + $0x94] sm:$0xf]
      %v388 = vld [vmem:[%s4 + $0x98] sm:$0xf]
      %v389 = vld [vmem:[%s4 + $0x9c] sm:$0xf]
      %v390 = vld [vmem:[%s4 + $0xa0] sm:$0xf]
      %v391 = vld [vmem:[%s4 + $0xa4] sm:$0xf]
      %393 = vset.pattern.permute.xlu0 0
      %394 = vperm.xlu0 %393, %v350
      %v395 = vpop.permute.xlu0 %394
      %v398 = vunpack.c.l.s4 839922192
      %v399 = vunpack.c.0.s8 %v398
      %v400 = vlaneseq
      %v401 = vshrl.u32 %v400, 7
      %v402 = vsub.s32 %v399, %v401
      %v403 = vrot.slane %v395, %v402
      %405 = vset.pattern.permute.xlu0 0
      %406 = vperm.xlu0 %405, %v351
      %v407 = vpop.permute.xlu0 %406
      %v410 = vunpack.c.l.s4 839922192
      %v411 = vunpack.c.0.s8 %v410
      %v412 = vlaneseq
      %v413 = vshrl.u32 %v412, 7
      %v414 = vsub.s32 %v411, %v413
      %v415 = vrot.slane %v407, %v414
      %417 = vset.pattern.permute.xlu0 0
      %418 = vperm.xlu0 %417, %v352
      %v419 = vpop.permute.xlu0 %418
      %v422 = vunpack.c.l.s4 839922192
      %v423 = vunpack.c.0.s8 %v422
      %v424 = vlaneseq
      %v425 = vshrl.u32 %v424, 7
      %v426 = vsub.s32 %v423, %v425
      %v427 = vrot.slane %v419, %v426
      %429 = vset.pattern.permute.xlu0 0
      %430 = vperm.xlu0 %429, %v353
      %v431 = vpop.permute.xlu0 %430
      %v434 = vunpack.c.l.s4 839922192
      %v435 = vunpack.c.0.s8 %v434
      %v436 = vlaneseq
      %v437 = vshrl.u32 %v436, 7
      %v438 = vsub.s32 %v435, %v437
      %v439 = vrot.slane %v431, %v438
      %441 = vset.pattern.permute.xlu0 0
      %442 = vperm.xlu0 %441, %v354
      %v443 = vpop.permute.xlu0 %442
      %v446 = vunpack.c.l.s4 839922192
      %v447 = vunpack.c.0.s8 %v446
      %v448 = vlaneseq
      %v449 = vshrl.u32 %v448, 7
      %v450 = vsub.s32 %v447, %v449
      %v451 = vrot.slane %v443, %v450
      %453 = vset.pattern.permute.xlu0 0
      %454 = vperm.xlu0 %453, %v355
      %v455 = vpop.permute.xlu0 %454
      %v458 = vunpack.c.l.s4 839922192
      %v459 = vunpack.c.0.s8 %v458
      %v460 = vlaneseq
      %v461 = vshrl.u32 %v460, 7
      %v462 = vsub.s32 %v459, %v461
      %v463 = vrot.slane %v455, %v462
      %465 = vset.pattern.permute.xlu0 0
      %466 = vperm.xlu0 %465, %v356
      %v467 = vpop.permute.xlu0 %466
      %v470 = vunpack.c.l.s4 839922192
      %v471 = vunpack.c.0.s8 %v470
      %v472 = vlaneseq
      %v473 = vshrl.u32 %v472, 7
      %v474 = vsub.s32 %v471, %v473
      %v475 = vrot.slane %v467, %v474
      %477 = vset.pattern.permute.xlu0 0
      %478 = vperm.xlu0 %477, %v357
      %v479 = vpop.permute.xlu0 %478
      %v482 = vunpack.c.l.s4 839922192
      %v483 = vunpack.c.0.s8 %v482
      %v484 = vlaneseq
      %v485 = vshrl.u32 %v484, 7
      %v486 = vsub.s32 %v483, %v485
      %v487 = vrot.slane %v479, %v486
      %489 = vset.pattern.permute.xlu0 0
      %490 = vperm.xlu0 %489, %v358
      %v491 = vpop.permute.xlu0 %490
      %v494 = vunpack.c.l.s4 839922192
      %v495 = vunpack.c.0.s8 %v494
      %v496 = vlaneseq
      %v497 = vshrl.u32 %v496, 7
      %v498 = vsub.s32 %v495, %v497
      %v499 = vrot.slane %v491, %v498
      %501 = vset.pattern.permute.xlu0 0
      %502 = vperm.xlu0 %501, %v359
      %v503 = vpop.permute.xlu0 %502
      %v506 = vunpack.c.l.s4 839922192
      %v507 = vunpack.c.0.s8 %v506
      %v508 = vlaneseq
      %v509 = vshrl.u32 %v508, 7
      %v510 = vsub.s32 %v507, %v509
      %v511 = vrot.slane %v503, %v510
      %513 = vset.pattern.permute.xlu0 0
      %514 = vperm.xlu0 %513, %v360
      %v515 = vpop.permute.xlu0 %514
      %v518 = vunpack.c.l.s4 839922192
      %v519 = vunpack.c.0.s8 %v518
      %v520 = vlaneseq
      %v521 = vshrl.u32 %v520, 7
      %v522 = vsub.s32 %v519, %v521
      %v523 = vrot.slane %v515, %v522
      %525 = vset.pattern.permute.xlu0 0
      %526 = vperm.xlu0 %525, %v361
      %v527 = vpop.permute.xlu0 %526
      %v530 = vunpack.c.l.s4 839922192
      %v531 = vunpack.c.0.s8 %v530
      %v532 = vlaneseq
      %v533 = vshrl.u32 %v532, 7
      %v534 = vsub.s32 %v531, %v533
      %v535 = vrot.slane %v527, %v534
      %537 = vset.pattern.permute.xlu0 0
      %538 = vperm.xlu0 %537, %v362
      %v539 = vpop.permute.xlu0 %538
      %v542 = vunpack.c.l.s4 839922192
      %v543 = vunpack.c.0.s8 %v542
      %v544 = vlaneseq
      %v545 = vshrl.u32 %v544, 7
      %v546 = vsub.s32 %v543, %v545
      %v547 = vrot.slane %v539, %v546
      %549 = vset.pattern.permute.xlu0 0
      %550 = vperm.xlu0 %549, %v363
      %v551 = vpop.permute.xlu0 %550
      %v554 = vunpack.c.l.s4 839922192
      %v555 = vunpack.c.0.s8 %v554
      %v556 = vlaneseq
      %v557 = vshrl.u32 %v556, 7
      %v558 = vsub.s32 %v555, %v557
      %v559 = vrot.slane %v551, %v558
      %561 = vset.pattern.permute.xlu0 0
      %562 = vperm.xlu0 %561, %v364
      %v563 = vpop.permute.xlu0 %562
      %v566 = vunpack.c.l.s4 839922192
      %v567 = vunpack.c.0.s8 %v566
      %v568 = vlaneseq
      %v569 = vshrl.u32 %v568, 7
      %v570 = vsub.s32 %v567, %v569
      %v571 = vrot.slane %v563, %v570
      %573 = vset.pattern.permute.xlu0 0
      %574 = vperm.xlu0 %573, %v365
      %v575 = vpop.permute.xlu0 %574
      %v578 = vunpack.c.l.s4 839922192
      %v579 = vunpack.c.0.s8 %v578
      %v580 = vlaneseq
      %v581 = vshrl.u32 %v580, 7
      %v582 = vsub.s32 %v579, %v581
      %v583 = vrot.slane %v575, %v582
      %585 = vset.pattern.permute.xlu0 0
      %586 = vperm.xlu0 %585, %v366
      %v587 = vpop.permute.xlu0 %586
      %v590 = vunpack.c.l.s4 839922192
      %v591 = vunpack.c.0.s8 %v590
      %v592 = vlaneseq
      %v593 = vshrl.u32 %v592, 7
      %v594 = vsub.s32 %v591, %v593
      %v595 = vrot.slane %v587, %v594
      %597 = vset.pattern.permute.xlu0 0
      %598 = vperm.xlu0 %597, %v367
      %v599 = vpop.permute.xlu0 %598
      %v602 = vunpack.c.l.s4 839922192
      %v603 = vunpack.c.0.s8 %v602
      %v604 = vlaneseq
      %v605 = vshrl.u32 %v604, 7
      %v606 = vsub.s32 %v603, %v605
      %v607 = vrot.slane %v599, %v606
      %609 = vset.pattern.permute.xlu0 0
      %610 = vperm.xlu0 %609, %v368
      %v611 = vpop.permute.xlu0 %610
      %v614 = vunpack.c.l.s4 839922192
      %v615 = vunpack.c.0.s8 %v614
      %v616 = vlaneseq
      %v617 = vshrl.u32 %v616, 7
      %v618 = vsub.s32 %v615, %v617
      %v619 = vrot.slane %v611, %v618
      %621 = vset.pattern.permute.xlu0 0
      %622 = vperm.xlu0 %621, %v369
      %v623 = vpop.permute.xlu0 %622
      %v626 = vunpack.c.l.s4 839922192
      %v627 = vunpack.c.0.s8 %v626
      %v628 = vlaneseq
      %v629 = vshrl.u32 %v628, 7
      %v630 = vsub.s32 %v627, %v629
      %v631 = vrot.slane %v623, %v630
      %633 = vset.pattern.permute.xlu0 0
      %634 = vperm.xlu0 %633, %v370
      %v635 = vpop.permute.xlu0 %634
      %v638 = vunpack.c.l.s4 839922192
      %v639 = vunpack.c.0.s8 %v638
      %v640 = vlaneseq
      %v641 = vshrl.u32 %v640, 7
      %v642 = vsub.s32 %v639, %v641
      %v643 = vrot.slane %v635, %v642
      %645 = vset.pattern.permute.xlu0 0
      %646 = vperm.xlu0 %645, %v371
      %v647 = vpop.permute.xlu0 %646
      %v650 = vunpack.c.l.s4 839922192
      %v651 = vunpack.c.0.s8 %v650
      %v652 = vlaneseq
      %v653 = vshrl.u32 %v652, 7
      %v654 = vsub.s32 %v651, %v653
      %v655 = vrot.slane %v647, %v654
      %657 = vset.pattern.permute.xlu0 0
      %658 = vperm.xlu0 %657, %v372
      %v659 = vpop.permute.xlu0 %658
      %v662 = vunpack.c.l.s4 839922192
      %v663 = vunpack.c.0.s8 %v662
      %v664 = vlaneseq
      %v665 = vshrl.u32 %v664, 7
      %v666 = vsub.s32 %v663, %v665
      %v667 = vrot.slane %v659, %v666
      %669 = vset.pattern.permute.xlu0 0
      %670 = vperm.xlu0 %669, %v373
      %v671 = vpop.permute.xlu0 %670
      %v674 = vunpack.c.l.s4 839922192
      %v675 = vunpack.c.0.s8 %v674
      %v676 = vlaneseq
      %v677 = vshrl.u32 %v676, 7
      %v678 = vsub.s32 %v675, %v677
      %v679 = vrot.slane %v671, %v678
      %681 = vset.pattern.permute.xlu0 0
      %682 = vperm.xlu0 %681, %v374
      %v683 = vpop.permute.xlu0 %682
      %v686 = vunpack.c.l.s4 839922192
      %v687 = vunpack.c.0.s8 %v686
      %v688 = vlaneseq
      %v689 = vshrl.u32 %v688, 7
      %v690 = vsub.s32 %v687, %v689
      %v691 = vrot.slane %v683, %v690
      %693 = vset.pattern.permute.xlu0 0
      %694 = vperm.xlu0 %693, %v375
      %v695 = vpop.permute.xlu0 %694
      %v698 = vunpack.c.l.s4 839922192
      %v699 = vunpack.c.0.s8 %v698
      %v700 = vlaneseq
      %v701 = vshrl.u32 %v700, 7
      %v702 = vsub.s32 %v699, %v701
      %v703 = vrot.slane %v695, %v702
      %705 = vset.pattern.permute.xlu0 0
      %706 = vperm.xlu0 %705, %v376
      %v707 = vpop.permute.xlu0 %706
      %v710 = vunpack.c.l.s4 839922192
      %v711 = vunpack.c.0.s8 %v710
      %v712 = vlaneseq
      %v713 = vshrl.u32 %v712, 7
      %v714 = vsub.s32 %v711, %v713
      %v715 = vrot.slane %v707, %v714
      %717 = vset.pattern.permute.xlu0 0
      %718 = vperm.xlu0 %717, %v377
      %v719 = vpop.permute.xlu0 %718
      %v722 = vunpack.c.l.s4 839922192
      %v723 = vunpack.c.0.s8 %v722
      %v724 = vlaneseq
      %v725 = vshrl.u32 %v724, 7
      %v726 = vsub.s32 %v723, %v725
      %v727 = vrot.slane %v719, %v726
      %729 = vset.pattern.permute.xlu0 0
      %730 = vperm.xlu0 %729, %v378
      %v731 = vpop.permute.xlu0 %730
      %v734 = vunpack.c.l.s4 839922192
      %v735 = vunpack.c.0.s8 %v734
      %v736 = vlaneseq
      %v737 = vshrl.u32 %v736, 7
      %v738 = vsub.s32 %v735, %v737
      %v739 = vrot.slane %v731, %v738
      %741 = vset.pattern.permute.xlu0 0
      %742 = vperm.xlu0 %741, %v379
      %v743 = vpop.permute.xlu0 %742
      %v746 = vunpack.c.l.s4 839922192
      %v747 = vunpack.c.0.s8 %v746
      %v748 = vlaneseq
      %v749 = vshrl.u32 %v748, 7
      %v750 = vsub.s32 %v747, %v749
      %v751 = vrot.slane %v743, %v750
      %753 = vset.pattern.permute.xlu0 0
      %754 = vperm.xlu0 %753, %v380
      %v755 = vpop.permute.xlu0 %754
      %v758 = vunpack.c.l.s4 839922192
      %v759 = vunpack.c.0.s8 %v758
      %v760 = vlaneseq
      %v761 = vshrl.u32 %v760, 7
      %v762 = vsub.s32 %v759, %v761
      %v763 = vrot.slane %v755, %v762
      %765 = vset.pattern.permute.xlu0 0
      %766 = vperm.xlu0 %765, %v381
      %v767 = vpop.permute.xlu0 %766
      %v770 = vunpack.c.l.s4 839922192
      %v771 = vunpack.c.0.s8 %v770
      %v772 = vlaneseq
      %v773 = vshrl.u32 %v772, 7
      %v774 = vsub.s32 %v771, %v773
      %v775 = vrot.slane %v767, %v774
      %777 = vset.pattern.permute.xlu0 0
      %778 = vperm.xlu0 %777, %v382
      %v779 = vpop.permute.xlu0 %778
      %v782 = vunpack.c.l.s4 839922192
      %v783 = vunpack.c.0.s8 %v782
      %v784 = vlaneseq
      %v785 = vshrl.u32 %v784, 7
      %v786 = vsub.s32 %v783, %v785
      %v787 = vrot.slane %v779, %v786
      %789 = vset.pattern.permute.xlu0 0
      %790 = vperm.xlu0 %789, %v383
      %v791 = vpop.permute.xlu0 %790
      %v794 = vunpack.c.l.s4 839922192
      %v795 = vunpack.c.0.s8 %v794
      %v796 = vlaneseq
      %v797 = vshrl.u32 %v796, 7
      %v798 = vsub.s32 %v795, %v797
      %v799 = vrot.slane %v791, %v798
      %801 = vset.pattern.permute.xlu0 0
      %802 = vperm.xlu0 %801, %v384
      %v803 = vpop.permute.xlu0 %802
      %v806 = vunpack.c.l.s4 839922192
      %v807 = vunpack.c.0.s8 %v806
      %v808 = vlaneseq
      %v809 = vshrl.u32 %v808, 7
      %v810 = vsub.s32 %v807, %v809
      %v811 = vrot.slane %v803, %v810
      %813 = vset.pattern.permute.xlu0 0
      %814 = vperm.xlu0 %813, %v385
      %v815 = vpop.permute.xlu0 %814
      %v818 = vunpack.c.l.s4 839922192
      %v819 = vunpack.c.0.s8 %v818
      %v820 = vlaneseq
      %v821 = vshrl.u32 %v820, 7
      %v822 = vsub.s32 %v819, %v821
      %v823 = vrot.slane %v815, %v822
      %825 = vset.pattern.permute.xlu0 0
      %826 = vperm.xlu0 %825, %v386
      %v827 = vpop.permute.xlu0 %826
      %v830 = vunpack.c.l.s4 839922192
      %v831 = vunpack.c.0.s8 %v830
      %v832 = vlaneseq
      %v833 = vshrl.u32 %v832, 7
      %v834 = vsub.s32 %v831, %v833
      %v835 = vrot.slane %v827, %v834
      %837 = vset.pattern.permute.xlu0 0
      %838 = vperm.xlu0 %837, %v387
      %v839 = vpop.permute.xlu0 %838
      %v842 = vunpack.c.l.s4 839922192
      %v843 = vunpack.c.0.s8 %v842
      %v844 = vlaneseq
      %v845 = vshrl.u32 %v844, 7
      %v846 = vsub.s32 %v843, %v845
      %v847 = vrot.slane %v839, %v846
      %849 = vset.pattern.permute.xlu0 0
      %850 = vperm.xlu0 %849, %v388
      %v851 = vpop.permute.xlu0 %850
      %v854 = vunpack.c.l.s4 839922192
      %v855 = vunpack.c.0.s8 %v854
      %v856 = vlaneseq
      %v857 = vshrl.u32 %v856, 7
      %v858 = vsub.s32 %v855, %v857
      %v859 = vrot.slane %v851, %v858
      %861 = vset.pattern.permute.xlu0 0
      %862 = vperm.xlu0 %861, %v389
      %v863 = vpop.permute.xlu0 %862
      %v866 = vunpack.c.l.s4 839922192
      %v867 = vunpack.c.0.s8 %v866
      %v868 = vlaneseq
      %v869 = vshrl.u32 %v868, 7
      %v870 = vsub.s32 %v867, %v869
      %v871 = vrot.slane %v863, %v870
      %873 = vset.pattern.permute.xlu0 0
      %874 = vperm.xlu0 %873, %v390
      %v875 = vpop.permute.xlu0 %874
      %v878 = vunpack.c.l.s4 839922192
      %v879 = vunpack.c.0.s8 %v878
      %v880 = vlaneseq
      %v881 = vshrl.u32 %v880, 7
      %v882 = vsub.s32 %v879, %v881
      %v883 = vrot.slane %v875, %v882
      %885 = vset.pattern.permute.xlu0 0
      %886 = vperm.xlu0 %885, %v391
      %v887 = vpop.permute.xlu0 %886
      %v890 = vunpack.c.l.s4 839922192
      %v891 = vunpack.c.0.s8 %v890
      %v892 = vlaneseq
      %v893 = vshrl.u32 %v892, 7
      %v894 = vsub.s32 %v891, %v893
      %v895 = vrot.slane %v887, %v894
      %v896 = vmul.bf16 %v308, %v403
      %v897 = vmul.bf16 %v309, %v415
      %v898 = vmul.bf16 %v310, %v427
      %v899 = vmul.bf16 %v311, %v439
      %v900 = vmul.bf16 %v312, %v451
      %v901 = vmul.bf16 %v313, %v463
      %v902 = vmul.bf16 %v314, %v475
      %v903 = vmul.bf16 %v315, %v487
      %v904 = vmul.bf16 %v316, %v499
      %v905 = vmul.bf16 %v317, %v511
      %v906 = vmul.bf16 %v318, %v523
      %v907 = vmul.bf16 %v319, %v535
      %v908 = vmul.bf16 %v320, %v547
      %v909 = vmul.bf16 %v321, %v559
      %v910 = vmul.bf16 %v322, %v571
      %v911 = vmul.bf16 %v323, %v583
      %v912 = vmul.bf16 %v324, %v595
      %v913 = vmul.bf16 %v325, %v607
      %v914 = vmul.bf16 %v326, %v619
      %v915 = vmul.bf16 %v327, %v631
      %v916 = vmul.bf16 %v328, %v643
      %v917 = vmul.bf16 %v329, %v655
      %v918 = vmul.bf16 %v330, %v667
      %v919 = vmul.bf16 %v331, %v679
      %v920 = vmul.bf16 %v332, %v691
      %v921 = vmul.bf16 %v333, %v703
      %v922 = vmul.bf16 %v334, %v715
      %v923 = vmul.bf16 %v335, %v727
      %v924 = vmul.bf16 %v336, %v739
      %v925 = vmul.bf16 %v337, %v751
      %v926 = vmul.bf16 %v338, %v763
      %v927 = vmul.bf16 %v339, %v775
      %v928 = vmul.bf16 %v340, %v787
      %v929 = vmul.bf16 %v341, %v799
      %v930 = vmul.bf16 %v342, %v811
      %v931 = vmul.bf16 %v343, %v823
      %v932 = vmul.bf16 %v344, %v835
      %v933 = vmul.bf16 %v345, %v847
      %v934 = vmul.bf16 %v346, %v859
      %v935 = vmul.bf16 %v347, %v871
      %v936 = vmul.bf16 %v348, %v883
      %v937 = vmul.bf16 %v349, %v895
      %v938 = vunpack.c.l.bf16 %v896
      %v939 = vunpack.c.l.bf16 %v897
      %v940 = vunpack.c.l.bf16 %v898
      %v941 = vunpack.c.l.bf16 %v899
      %v942 = vunpack.c.l.bf16 %v900
      %v943 = vunpack.c.l.bf16 %v901
      %v944 = vunpack.c.l.bf16 %v902
      %v945 = vunpack.c.l.bf16 %v903
      %v946 = vunpack.c.l.bf16 %v904
      %v947 = vunpack.c.l.bf16 %v905
      %v948 = vunpack.c.l.bf16 %v906
      %v949 = vunpack.c.l.bf16 %v907
      %v950 = vunpack.c.l.bf16 %v908
      %v951 = vunpack.c.l.bf16 %v909
      %v952 = vunpack.c.l.bf16 %v910
      %v953 = vunpack.c.l.bf16 %v911
      %v954 = vunpack.c.l.bf16 %v912
      %v955 = vunpack.c.l.bf16 %v913
      %v956 = vunpack.c.l.bf16 %v914
      %v957 = vunpack.c.l.bf16 %v915
      %v958 = vunpack.c.l.bf16 %v916
      %v959 = vunpack.c.l.bf16 %v917
      %v960 = vunpack.c.l.bf16 %v918
      %v961 = vunpack.c.l.bf16 %v919
      %v962 = vunpack.c.l.bf16 %v920
      %v963 = vunpack.c.l.bf16 %v921
      %v964 = vunpack.c.l.bf16 %v922
      %v965 = vunpack.c.l.bf16 %v923
      %v966 = vunpack.c.l.bf16 %v924
      %v967 = vunpack.c.l.bf16 %v925
      %v968 = vunpack.c.l.bf16 %v926
      %v969 = vunpack.c.l.bf16 %v927
      %v970 = vunpack.c.l.bf16 %v928
      %v971 = vunpack.c.l.bf16 %v929
      %v972 = vunpack.c.l.bf16 %v930
      %v973 = vunpack.c.l.bf16 %v931
      %v974 = vunpack.c.l.bf16 %v932
      %v975 = vunpack.c.l.bf16 %v933
      %v976 = vunpack.c.l.bf16 %v934
      %v977 = vunpack.c.l.bf16 %v935
      %v978 = vunpack.c.l.bf16 %v936
      %v979 = vunpack.c.l.bf16 %v937
      %v980 = vrot.slane %v938, 6
      %v981 = vrot.slane %v939, 6
      %v982 = vrot.slane %v940, 6
      %v983 = vrot.slane %v941, 6
      %v984 = vrot.slane %v942, 6
      %v985 = vrot.slane %v943, 6
      %v986 = vrot.slane %v944, 6
      %v987 = vrot.slane %v945, 6
      %v988 = vrot.slane %v946, 6
      %v989 = vrot.slane %v947, 6
      %v990 = vrot.slane %v948, 6
      %v991 = vrot.slane %v949, 6
      %v992 = vrot.slane %v950, 6
      %v993 = vrot.slane %v951, 6
      %v994 = vrot.slane %v952, 6
      %v995 = vrot.slane %v953, 6
      %v996 = vrot.slane %v954, 6
      %v997 = vrot.slane %v955, 6
      %v998 = vrot.slane %v956, 6
      %v999 = vrot.slane %v957, 6
      %v1000 = vrot.slane %v958, 6
      %v1001 = vrot.slane %v959, 6
      %v1002 = vrot.slane %v960, 6
      %v1003 = vrot.slane %v961, 6
      %v1004 = vrot.slane %v962, 6
      %v1005 = vrot.slane %v963, 6
      %v1006 = vrot.slane %v964, 6
      %v1007 = vrot.slane %v965, 6
      %v1008 = vrot.slane %v966, 6
      %v1009 = vrot.slane %v967, 6
      %v1010 = vrot.slane %v968, 6
      %v1011 = vrot.slane %v969, 6
      %v1012 = vrot.slane %v970, 6
      %v1013 = vrot.slane %v971, 6
      %v1014 = vrot.slane %v972, 6
      %v1015 = vrot.slane %v973, 6
      %v1016 = vrot.slane %v974, 6
      %v1017 = vrot.slane %v975, 6
      %v1018 = vrot.slane %v976, 6
      %v1019 = vrot.slane %v977, 6
      %v1020 = vrot.slane %v978, 6
      %v1021 = vrot.slane %v979, 6
      %v1022 = vlaneseq
      %v1023 = vshrl.u32 %v1022, 7
      %vm1024 = vcmp.lt.s32.totalorder %v1023, 2
      %v1025 = vsel %vm1024, %v1020, %v1021
      %v1026 = vsel %vm1024, %v1019, %v1020
      %v1027 = vsel %vm1024, %v1018, %v1019
      %v1028 = vsel %vm1024, %v1017, %v1018
      %v1029 = vsel %vm1024, %v1016, %v1017
      %v1030 = vsel %vm1024, %v1015, %v1016
      %v1031 = vsel %vm1024, %v1014, %v1015
      %v1032 = vsel %vm1024, %v1013, %v1014
      %v1033 = vsel %vm1024, %v1012, %v1013
      %v1034 = vsel %vm1024, %v1011, %v1012
      %v1035 = vsel %vm1024, %v1010, %v1011
      %v1036 = vsel %vm1024, %v1009, %v1010
      %v1037 = vsel %vm1024, %v1008, %v1009
      %v1038 = vsel %vm1024, %v1007, %v1008
      %v1039 = vsel %vm1024, %v1006, %v1007
      %v1040 = vsel %vm1024, %v1005, %v1006
      %v1041 = vsel %vm1024, %v1004, %v1005
      %v1042 = vsel %vm1024, %v1003, %v1004
      %v1043 = vsel %vm1024, %v1002, %v1003
      %v1044 = vsel %vm1024, %v1001, %v1002
      %v1045 = vsel %vm1024, %v1000, %v1001
      %v1046 = vsel %vm1024, %v999, %v1000
      %v1047 = vsel %vm1024, %v998, %v999
      %v1048 = vsel %vm1024, %v997, %v998
      %v1049 = vsel %vm1024, %v996, %v997
      %v1050 = vsel %vm1024, %v995, %v996
      %v1051 = vsel %vm1024, %v994, %v995
      %v1052 = vsel %vm1024, %v993, %v994
      %v1053 = vsel %vm1024, %v992, %v993
      %v1054 = vsel %vm1024, %v991, %v992
      %v1055 = vsel %vm1024, %v990, %v991
      %v1056 = vsel %vm1024, %v989, %v990
      %v1057 = vsel %vm1024, %v988, %v989
      %v1058 = vsel %vm1024, %v987, %v988
      %v1059 = vsel %vm1024, %v986, %v987
      %v1060 = vsel %vm1024, %v985, %v986
      %v1061 = vsel %vm1024, %v984, %v985
      %v1062 = vsel %vm1024, %v983, %v984
      %v1063 = vsel %vm1024, %v982, %v983
      %v1064 = vsel %vm1024, %v981, %v982
      %v1065 = vsel %vm1024, %v980, %v981
      %v1066 = vsel %vm1024, %v1021, %v980
      %v1067 = vpack.c.bf16 %v1025, %v1026
      %v1068 = vpack.c.bf16 %v1065, %v1066
      %v1069 = vpack.c.bf16 %v1063, %v1064
      %v1070 = vpack.c.bf16 %v1061, %v1062
      %v1071 = vpack.c.bf16 %v1059, %v1060
      %v1072 = vpack.c.bf16 %v1057, %v1058
      %v1073 = vpack.c.bf16 %v1055, %v1056
      %v1074 = vpack.c.bf16 %v1053, %v1054
      %v1075 = vpack.c.bf16 %v1051, %v1052
      %v1076 = vpack.c.bf16 %v1049, %v1050
      %v1077 = vpack.c.bf16 %v1047, %v1048
      %v1078 = vpack.c.bf16 %v1045, %v1046
      %v1079 = vpack.c.bf16 %v1043, %v1044
      %v1080 = vpack.c.bf16 %v1041, %v1042
      %v1081 = vpack.c.bf16 %v1039, %v1040
      %v1082 = vpack.c.bf16 %v1037, %v1038
      %v1083 = vpack.c.bf16 %v1035, %v1036
      %v1084 = vpack.c.bf16 %v1033, %v1034
      %v1085 = vpack.c.bf16 %v1031, %v1032
      %v1086 = vpack.c.bf16 %v1029, %v1030
      %v1087 = vpack.c.bf16 %v1027, %v1028
      %v1088 = vrot.slane %v938, 2
      %v1089 = vrot.slane %v939, 2
      %v1090 = vrot.slane %v940, 2
      %v1091 = vrot.slane %v941, 2
      %v1092 = vrot.slane %v942, 2
      %v1093 = vrot.slane %v943, 2
      %v1094 = vrot.slane %v944, 2
      %v1095 = vrot.slane %v945, 2
      %v1096 = vrot.slane %v946, 2
      %v1097 = vrot.slane %v947, 2
      %v1098 = vrot.slane %v948, 2
      %v1099 = vrot.slane %v949, 2
      %v1100 = vrot.slane %v950, 2
      %v1101 = vrot.slane %v951, 2
      %v1102 = vrot.slane %v952, 2
      %v1103 = vrot.slane %v953, 2
      %v1104 = vrot.slane %v954, 2
      %v1105 = vrot.slane %v955, 2
      %v1106 = vrot.slane %v956, 2
      %v1107 = vrot.slane %v957, 2
      %v1108 = vrot.slane %v958, 2
      %v1109 = vrot.slane %v959, 2
      %v1110 = vrot.slane %v960, 2
      %v1111 = vrot.slane %v961, 2
      %v1112 = vrot.slane %v962, 2
      %v1113 = vrot.slane %v963, 2
      %v1114 = vrot.slane %v964, 2
      %v1115 = vrot.slane %v965, 2
      %v1116 = vrot.slane %v966, 2
      %v1117 = vrot.slane %v967, 2
      %v1118 = vrot.slane %v968, 2
      %v1119 = vrot.slane %v969, 2
      %v1120 = vrot.slane %v970, 2
      %v1121 = vrot.slane %v971, 2
      %v1122 = vrot.slane %v972, 2
      %v1123 = vrot.slane %v973, 2
      %v1124 = vrot.slane %v974, 2
      %v1125 = vrot.slane %v975, 2
      %v1126 = vrot.slane %v976, 2
      %v1127 = vrot.slane %v977, 2
      %v1128 = vrot.slane %v978, 2
      %v1129 = vrot.slane %v979, 2
      %vm1130 = vcmp.lt.s32.totalorder %v1023, 6
      %v1131 = vsel %vm1130, %v1128, %v1129
      %v1132 = vsel %vm1130, %v1127, %v1128
      %v1133 = vsel %vm1130, %v1126, %v1127
      %v1134 = vsel %vm1130, %v1125, %v1126
      %v1135 = vsel %vm1130, %v1124, %v1125
      %v1136 = vsel %vm1130, %v1123, %v1124
      %v1137 = vsel %vm1130, %v1122, %v1123
      %v1138 = vsel %vm1130, %v1121, %v1122
      %v1139 = vsel %vm1130, %v1120, %v1121
      %v1140 = vsel %vm1130, %v1119, %v1120
      %v1141 = vsel %vm1130, %v1118, %v1119
      %v1142 = vsel %vm1130, %v1117, %v1118
      %v1143 = vsel %vm1130, %v1116, %v1117
      %v1144 = vsel %vm1130, %v1115, %v1116
      %v1145 = vsel %vm1130, %v1114, %v1115
      %v1146 = vsel %vm1130, %v1113, %v1114
      %v1147 = vsel %vm1130, %v1112, %v1113
      %v1148 = vsel %vm1130, %v1111, %v1112
      %v1149 = vsel %vm1130, %v1110, %v1111
      %v1150 = vsel %vm1130, %v1109, %v1110
      %v1151 = vsel %vm1130, %v1108, %v1109
      %v1152 = vsel %vm1130, %v1107, %v1108
      %v1153 = vsel %vm1130, %v1106, %v1107
      %v1154 = vsel %vm1130, %v1105, %v1106
      %v1155 = vsel %vm1130, %v1104, %v1105
      %v1156 = vsel %vm1130, %v1103, %v1104
      %v1157 = vsel %vm1130, %v1102, %v1103
      %v1158 = vsel %vm1130, %v1101, %v1102
      %v1159 = vsel %vm1130, %v1100, %v1101
      %v1160 = vsel %vm1130, %v1099, %v1100
      %v1161 = vsel %vm1130, %v1098, %v1099
      %v1162 = vsel %vm1130, %v1097, %v1098
      %v1163 = vsel %vm1130, %v1096, %v1097
      %v1164 = vsel %vm1130, %v1095, %v1096
      %v1165 = vsel %vm1130, %v1094, %v1095
      %v1166 = vsel %vm1130, %v1093, %v1094
      %v1167 = vsel %vm1130, %v1092, %v1093
      %v1168 = vsel %vm1130, %v1091, %v1092
      %v1169 = vsel %vm1130, %v1090, %v1091
      %v1170 = vsel %vm1130, %v1089, %v1090
      %v1171 = vsel %vm1130, %v1088, %v1089
      %v1172 = vsel %vm1130, %v1129, %v1088
      %v1173 = vpack.c.bf16 %v1168, %v1169
      %v1174 = vpack.c.bf16 %v1166, %v1167
      %v1175 = vpack.c.bf16 %v1164, %v1165
      %v1176 = vpack.c.bf16 %v1162, %v1163
      %v1177 = vpack.c.bf16 %v1160, %v1161
      %v1178 = vpack.c.bf16 %v1158, %v1159
      %v1179 = vpack.c.bf16 %v1156, %v1157
      %v1180 = vpack.c.bf16 %v1154, %v1155
      %v1181 = vpack.c.bf16 %v1152, %v1153
      %v1182 = vpack.c.bf16 %v1150, %v1151
      %v1183 = vpack.c.bf16 %v1148, %v1149
      %v1184 = vpack.c.bf16 %v1146, %v1147
      %v1185 = vpack.c.bf16 %v1144, %v1145
      %v1186 = vpack.c.bf16 %v1142, %v1143
      %v1187 = vpack.c.bf16 %v1140, %v1141
      %v1188 = vpack.c.bf16 %v1138, %v1139
      %v1189 = vpack.c.bf16 %v1136, %v1137
      %v1190 = vpack.c.bf16 %v1134, %v1135
      %v1191 = vpack.c.bf16 %v1132, %v1133
      %v1192 = vpack.c.bf16 %v1172, %v1131
      %v1193 = vpack.c.bf16 %v1170, %v1171
      %v1194 = vld [vmem:[%s295] sm:$0x3]
      %s1195 = scalar_lea.vmem %s295, 6
      %v1196 = vld [vmem:[%s1195] sm:$0x3]
      %v1239 = vunpack.c.l.b16 %v896
      %v1240 = vunpack.c.l.b16 %v897
      %v1241 = vunpack.c.l.b16 %v898
      %v1242 = vunpack.c.l.b16 %v899
      %v1243 = vunpack.c.l.b16 %v900
      %v1244 = vunpack.c.l.b16 %v901
      %v1245 = vunpack.c.l.b16 %v902
      %v1246 = vunpack.c.l.b16 %v903
      %v1247 = vunpack.c.l.b16 %v904
      %v1248 = vunpack.c.l.b16 %v905
      %v1249 = vunpack.c.l.b16 %v906
      %v1250 = vunpack.c.l.b16 %v907
      %v1251 = vunpack.c.l.b16 %v908
      %v1252 = vunpack.c.l.b16 %v909
      %v1253 = vunpack.c.l.b16 %v910
      %v1254 = vunpack.c.l.b16 %v911
      %v1255 = vunpack.c.l.b16 %v912
      %v1256 = vunpack.c.l.b16 %v913
      %v1257 = vunpack.c.l.b16 %v914
      %v1258 = vunpack.c.l.b16 %v915
      %v1259 = vunpack.c.l.b16 %v916
      %v1260 = vunpack.c.l.b16 %v917
      %v1261 = vunpack.c.l.b16 %v918
      %v1262 = vunpack.c.l.b16 %v919
      %v1263 = vunpack.c.l.b16 %v920
      %v1264 = vunpack.c.l.b16 %v921
      %v1265 = vunpack.c.l.b16 %v922
      %v1266 = vunpack.c.l.b16 %v923
      %v1267 = vunpack.c.l.b16 %v924
      %v1268 = vunpack.c.l.b16 %v925
      %v1269 = vunpack.c.l.b16 %v926
      %v1270 = vunpack.c.l.b16 %v927
      %v1271 = vunpack.c.l.b16 %v928
      %v1272 = vunpack.c.l.b16 %v929
      %v1273 = vunpack.c.l.b16 %v930
      %v1274 = vunpack.c.l.b16 %v931
      %v1275 = vunpack.c.l.b16 %v932
      %v1276 = vunpack.c.l.b16 %v933
      %v1277 = vunpack.c.l.b16 %v934
      %v1278 = vunpack.c.l.b16 %v935
      %v1279 = vunpack.c.l.b16 %v936
      %v1280 = vunpack.c.l.b16 %v937
      %v1281 = vpack.c.b16 %v1240, %v1239
      %v1282 = vpack.c.b16 %v1242, %v1241
      %v1283 = vpack.c.b16 %v1244, %v1243
      %v1284 = vpack.c.b16 %v1246, %v1245
      %v1285 = vpack.c.b16 %v1248, %v1247
      %v1286 = vpack.c.b16 %v1250, %v1249
      %v1287 = vpack.c.b16 %v1252, %v1251
      %v1288 = vpack.c.b16 %v1254, %v1253
      %v1289 = vpack.c.b16 %v1256, %v1255
      %v1290 = vpack.c.b16 %v1258, %v1257
      %v1291 = vpack.c.b16 %v1260, %v1259
      %v1292 = vpack.c.b16 %v1262, %v1261
      %v1293 = vpack.c.b16 %v1264, %v1263
      %v1294 = vpack.c.b16 %v1266, %v1265
      %v1295 = vpack.c.b16 %v1268, %v1267
      %v1296 = vpack.c.b16 %v1270, %v1269
      %v1297 = vpack.c.b16 %v1272, %v1271
      %v1298 = vpack.c.b16 %v1274, %v1273
      %v1299 = vpack.c.b16 %v1276, %v1275
      %v1300 = vpack.c.b16 %v1278, %v1277
      %v1301 = vpack.c.b16 %v1280, %v1279
      %vm1302 = vcmask 31744
      %v1304 = vsel %vm1302, %v1281, 0
      %v1307 = vsel %vm1302, %v1282, 0
      %v1310 = vsel %vm1302, %v1283, 0
      %v1313 = vsel %vm1302, %v1284, 0
      %v1316 = vsel %vm1302, %v1285, 0
      %v1319 = vsel %vm1302, %v1286, 0
      %v1322 = vsel %vm1302, %v1287, 0
      %v1325 = vsel %vm1302, %v1288, 0
      %v1328 = vsel %vm1302, %v1289, 0
      %v1331 = vsel %vm1302, %v1290, 0
      %v1334 = vsel %vm1302, %v1291, 0
      %v1337 = vsel %vm1302, %v1292, 0
      %v1340 = vsel %vm1302, %v1293, 0
      %v1343 = vsel %vm1302, %v1294, 0
      %v1346 = vsel %vm1302, %v1295, 0
      %v1349 = vsel %vm1302, %v1296, 0
      %v1352 = vsel %vm1302, %v1297, 0
      %v1355 = vsel %vm1302, %v1298, 0
      %v1358 = vsel %vm1302, %v1299, 0
      %v1361 = vsel %vm1302, %v1300, 0
      %v1364 = vsel %vm1302, %v1301, 0
      %vm1366 = vcmask 1041408
      %v1368 = vsel %vm1366, %v1196, 0
      %1370 = vmatprep.subr.bf16.mxu0 0
      %1371 = vmatpush1.bf16.msra.mxu0 0
      %1372 = vmatprep.subr.bf16.mxu0 0
      %1373 = vmatpush1.bf16.msra.mxu0 0
      %1374 = vmatprep.subr.bf16.mxu0 0
      %1375 = vmatpush1.bf16.msra.mxu0 0
      %1376 = vmatprep.subr.bf16.mxu0 0
      %1377 = vmatpush1.bf16.msra.mxu0 0
      %1378 = vmatprep.subr.bf16.mxu0 0
      %1379 = vmatpush1.bf16.msra.mxu0 0
      %1380 = vmatprep.subr.bf16.mxu0 0
      %1381 = vmatpush1.bf16.msra.mxu0 0
      %1382 = vmatprep.subr.bf16.mxu0 0
      %1383 = vmatpush1.bf16.msra.mxu0 0
      %1384 = vmatprep.subr.bf16.mxu0 0
      %1385 = vmatpush1.bf16.msra.mxu0 %v1368
      %1386 = vmatprep.subr.bf16.mxu0 0
      %1387 = vmatpush2.bf16.msra.mxu0 0
      %1388 = vmatprep.subr.bf16.mxu0 0
      %1389 = vmatpush2.bf16.msra.mxu0 0
      %1390 = vmatprep.subr.bf16.mxu0 0
      %1391 = vmatpush2.bf16.msra.mxu0 0
      %1392 = vmatprep.subr.bf16.mxu0 0
      %1393 = vmatpush2.bf16.msra.mxu0 0
      %1394 = vmatprep.subr.bf16.mxu0 0
      %1395 = vmatpush2.bf16.msra.mxu0 0
      %1396 = vmatprep.subr.bf16.mxu0 0
      %1397 = vmatpush2.bf16.msra.mxu0 0
      %1398 = vmatprep.subr.bf16.mxu0 0
      %1399 = vmatpush2.bf16.msra.mxu0 0
      %1400 = vmatprep.subr.bf16.mxu0 0
      %1401 = vmatpush2.bf16.msra.mxu0 0
      %1402 = vmatprep.mubr.bf16.mxu0 0
      %1403 = vmatmul.mubr.bf16.gmra.mxu0 %v1304
      %v1404 = vpop.f32.mrf.mxu0
      %v1405 = vadd.f32 0.0, %v1404
      %v1406 = vpop.f32.mrf.mxu0
      %v1407 = vpop.f32.mrf.mxu0
      %v1408 = vadd.f32 0.0, %v1407
      %v1409 = vpop.f32.mrf.mxu0
      %1410 = vmatprep.mubr.bf16.mxu0 0
      %1411 = vmatmul.mubr.bf16.gmra.mxu0 %v1307
      %v1412 = vpop.f32.mrf.mxu0
      %v1413 = vadd.f32 0.0, %v1412
      %v1414 = vpop.f32.mrf.mxu0
      %v1415 = vpop.f32.mrf.mxu0
      %v1416 = vadd.f32 0.0, %v1415
      %v1417 = vpop.f32.mrf.mxu0
      %1418 = vmatprep.mubr.bf16.mxu0 0
      %1419 = vmatmul.mubr.bf16.gmra.mxu0 %v1310
      %v1420 = vpop.f32.mrf.mxu0
      %v1421 = vadd.f32 0.0, %v1420
      %v1422 = vpop.f32.mrf.mxu0
      %v1423 = vpop.f32.mrf.mxu0
      %v1424 = vadd.f32 0.0, %v1423
      %v1425 = vpop.f32.mrf.mxu0
      %1426 = vmatprep.mubr.bf16.mxu0 0
      %1427 = vmatmul.mubr.bf16.gmra.mxu0 %v1313
      %v1428 = vpop.f32.mrf.mxu0
      %v1429 = vadd.f32 0.0, %v1428
      %v1430 = vpop.f32.mrf.mxu0
      %v1431 = vpop.f32.mrf.mxu0
      %v1432 = vadd.f32 0.0, %v1431
      %v1433 = vpop.f32.mrf.mxu0
      %1434 = vmatprep.mubr.bf16.mxu0 0
      %1435 = vmatmul.mubr.bf16.gmra.mxu0 %v1316
      %v1436 = vpop.f32.mrf.mxu0
      %v1437 = vadd.f32 0.0, %v1436
      %v1438 = vpop.f32.mrf.mxu0
      %v1439 = vpop.f32.mrf.mxu0
      %v1440 = vadd.f32 0.0, %v1439
      %v1441 = vpop.f32.mrf.mxu0
      %1442 = vmatprep.mubr.bf16.mxu0 0
      %1443 = vmatmul.mubr.bf16.gmra.mxu0 %v1319
      %v1444 = vpop.f32.mrf.mxu0
      %v1445 = vadd.f32 0.0, %v1444
      %v1446 = vpop.f32.mrf.mxu0
      %v1447 = vpop.f32.mrf.mxu0
      %v1448 = vadd.f32 0.0, %v1447
      %v1449 = vpop.f32.mrf.mxu0
      %1450 = vmatprep.mubr.bf16.mxu0 0
      %1451 = vmatmul.mubr.bf16.gmra.mxu0 %v1322
      %v1452 = vpop.f32.mrf.mxu0
      %v1453 = vadd.f32 0.0, %v1452
      %v1454 = vpop.f32.mrf.mxu0
      %v1455 = vpop.f32.mrf.mxu0
      %v1456 = vadd.f32 0.0, %v1455
      %v1457 = vpop.f32.mrf.mxu0
      %1458 = vmatprep.mubr.bf16.mxu0 0
      %1459 = vmatmul.mubr.bf16.gmra.mxu0 %v1325
      %v1460 = vpop.f32.mrf.mxu0
      %v1461 = vadd.f32 0.0, %v1460
      %v1462 = vpop.f32.mrf.mxu0
      %v1463 = vpop.f32.mrf.mxu0
      %v1464 = vadd.f32 0.0, %v1463
      %v1465 = vpop.f32.mrf.mxu0
      %1466 = vmatprep.mubr.bf16.mxu0 0
      %1467 = vmatmul.mubr.bf16.gmra.mxu0 %v1328
      %v1468 = vpop.f32.mrf.mxu0
      %v1469 = vadd.f32 0.0, %v1468
      %v1470 = vpop.f32.mrf.mxu0
      %v1471 = vpop.f32.mrf.mxu0
      %v1472 = vadd.f32 0.0, %v1471
      %v1473 = vpop.f32.mrf.mxu0
      %1474 = vmatprep.mubr.bf16.mxu0 0
      %1475 = vmatmul.mubr.bf16.gmra.mxu0 %v1331
      %v1476 = vpop.f32.mrf.mxu0
      %v1477 = vadd.f32 0.0, %v1476
      %v1478 = vpop.f32.mrf.mxu0
      %v1479 = vpop.f32.mrf.mxu0
      %v1480 = vadd.f32 0.0, %v1479
      %v1481 = vpop.f32.mrf.mxu0
      %1482 = vmatprep.mubr.bf16.mxu0 0
      %1483 = vmatmul.mubr.bf16.gmra.mxu0 %v1334
      %v1484 = vpop.f32.mrf.mxu0
      %v1485 = vadd.f32 0.0, %v1484
      %v1486 = vpop.f32.mrf.mxu0
      %v1487 = vpop.f32.mrf.mxu0
      %v1488 = vadd.f32 0.0, %v1487
      %v1489 = vpop.f32.mrf.mxu0
      %1490 = vmatprep.mubr.bf16.mxu0 0
      %1491 = vmatmul.mubr.bf16.gmra.mxu0 %v1337
      %v1492 = vpop.f32.mrf.mxu0
      %v1493 = vadd.f32 0.0, %v1492
      %v1494 = vpop.f32.mrf.mxu0
      %v1495 = vpop.f32.mrf.mxu0
      %v1496 = vadd.f32 0.0, %v1495
      %v1497 = vpop.f32.mrf.mxu0
      %1498 = vmatprep.mubr.bf16.mxu0 0
      %1499 = vmatmul.mubr.bf16.gmra.mxu0 %v1340
      %v1500 = vpop.f32.mrf.mxu0
      %v1501 = vadd.f32 0.0, %v1500
      %v1502 = vpop.f32.mrf.mxu0
      %v1503 = vpop.f32.mrf.mxu0
      %v1504 = vadd.f32 0.0, %v1503
      %v1505 = vpop.f32.mrf.mxu0
      %1506 = vmatprep.mubr.bf16.mxu0 0
      %1507 = vmatmul.mubr.bf16.gmra.mxu0 %v1343
      %v1508 = vpop.f32.mrf.mxu0
      %v1509 = vadd.f32 0.0, %v1508
      %v1510 = vpop.f32.mrf.mxu0
      %v1511 = vpop.f32.mrf.mxu0
      %v1512 = vadd.f32 0.0, %v1511
      %v1513 = vpop.f32.mrf.mxu0
      %1514 = vmatprep.mubr.bf16.mxu0 0
      %1515 = vmatmul.mubr.bf16.gmra.mxu0 %v1346
      %v1516 = vpop.f32.mrf.mxu0
      %v1517 = vadd.f32 0.0, %v1516
      %v1518 = vpop.f32.mrf.mxu0
      %v1519 = vpop.f32.mrf.mxu0
      %v1520 = vadd.f32 0.0, %v1519
      %v1521 = vpop.f32.mrf.mxu0
      %1522 = vmatprep.mubr.bf16.mxu0 0
      %1523 = vmatmul.mubr.bf16.gmra.mxu0 %v1349
      %v1524 = vpop.f32.mrf.mxu0
      %v1525 = vadd.f32 0.0, %v1524
      %v1526 = vpop.f32.mrf.mxu0
      %v1527 = vpop.f32.mrf.mxu0
      %v1528 = vadd.f32 0.0, %v1527
      %v1529 = vpop.f32.mrf.mxu0
      %1530 = vmatprep.mubr.bf16.mxu0 0
      %1531 = vmatmul.mubr.bf16.gmra.mxu0 %v1352
      %v1532 = vpop.f32.mrf.mxu0
      %v1533 = vadd.f32 0.0, %v1532
      %v1534 = vpop.f32.mrf.mxu0
      %v1535 = vpop.f32.mrf.mxu0
      %v1536 = vadd.f32 0.0, %v1535
      %v1537 = vpop.f32.mrf.mxu0
      %1538 = vmatprep.mubr.bf16.mxu0 0
      %1539 = vmatmul.mubr.bf16.gmra.mxu0 %v1355
      %v1540 = vpop.f32.mrf.mxu0
      %v1541 = vadd.f32 0.0, %v1540
      %v1542 = vpop.f32.mrf.mxu0
      %v1543 = vpop.f32.mrf.mxu0
      %v1544 = vadd.f32 0.0, %v1543
      %v1545 = vpop.f32.mrf.mxu0
      %1546 = vmatprep.mubr.bf16.mxu0 0
      %1547 = vmatmul.mubr.bf16.gmra.mxu0 %v1358
      %v1548 = vpop.f32.mrf.mxu0
      %v1549 = vadd.f32 0.0, %v1548
      %v1550 = vpop.f32.mrf.mxu0
      %v1551 = vpop.f32.mrf.mxu0
      %v1552 = vadd.f32 0.0, %v1551
      %v1553 = vpop.f32.mrf.mxu0
      %1554 = vmatprep.mubr.bf16.mxu0 0
      %1555 = vmatmul.mubr.bf16.gmra.mxu0 %v1361
      %v1556 = vpop.f32.mrf.mxu0
      %v1557 = vadd.f32 0.0, %v1556
      %v1558 = vpop.f32.mrf.mxu0
      %v1559 = vpop.f32.mrf.mxu0
      %v1560 = vadd.f32 0.0, %v1559
      %v1561 = vpop.f32.mrf.mxu0
      %1562 = vmatprep.mubr.bf16.mxu0 0
      %1563 = vmatmul.mubr.bf16.gmra.mxu0 %v1364
      %v1564 = vpop.f32.mrf.mxu0
      %v1565 = vadd.f32 0.0, %v1564
      %v1566 = vpop.f32.mrf.mxu0
      %v1567 = vpop.f32.mrf.mxu0
      %v1568 = vadd.f32 0.0, %v1567
      %v1569 = vpop.f32.mrf.mxu0
      %1570 = vdwg.mxu0
      %v1572 = vsel %vm1302, %v1067, 0
      %v1575 = vsel %vm1302, %v1068, 0
      %v1578 = vsel %vm1302, %v1069, 0
      %v1581 = vsel %vm1302, %v1070, 0
      %v1584 = vsel %vm1302, %v1071, 0
      %v1587 = vsel %vm1302, %v1072, 0
      %v1590 = vsel %vm1302, %v1073, 0
      %v1593 = vsel %vm1302, %v1074, 0
      %v1596 = vsel %vm1302, %v1075, 0
      %v1599 = vsel %vm1302, %v1076, 0
      %v1602 = vsel %vm1302, %v1077, 0
      %v1605 = vsel %vm1302, %v1078, 0
      %v1608 = vsel %vm1302, %v1079, 0
      %v1611 = vsel %vm1302, %v1080, 0
      %v1614 = vsel %vm1302, %v1081, 0
      %v1617 = vsel %vm1302, %v1082, 0
      %v1620 = vsel %vm1302, %v1083, 0
      %v1623 = vsel %vm1302, %v1084, 0
      %v1626 = vsel %vm1302, %v1085, 0
      %v1629 = vsel %vm1302, %v1086, 0
      %v1632 = vsel %vm1302, %v1087, 0
      %v1635 = vsel %vm1366, %v1194, 0
      %1637 = vmatprep.subr.bf16.mxu0 0
      %1638 = vmatpush1.bf16.msra.mxu0 0
      %1639 = vmatprep.subr.bf16.mxu0 0
      %1640 = vmatpush1.bf16.msra.mxu0 0
      %1641 = vmatprep.subr.bf16.mxu0 0
      %1642 = vmatpush1.bf16.msra.mxu0 0
      %1643 = vmatprep.subr.bf16.mxu0 0
      %1644 = vmatpush1.bf16.msra.mxu0 0
      %1645 = vmatprep.subr.bf16.mxu0 0
      %1646 = vmatpush1.bf16.msra.mxu0 0
      %1647 = vmatprep.subr.bf16.mxu0 0
      %1648 = vmatpush1.bf16.msra.mxu0 0
      %1649 = vmatprep.subr.bf16.mxu0 0
      %1650 = vmatpush1.bf16.msra.mxu0 0
      %1651 = vmatprep.subr.bf16.mxu0 0
      %1652 = vmatpush1.bf16.msra.mxu0 %v1635
      %1653 = vmatprep.subr.bf16.mxu0 0
      %1654 = vmatpush2.bf16.msra.mxu0 0
      %1655 = vmatprep.subr.bf16.mxu0 0
      %1656 = vmatpush2.bf16.msra.mxu0 0
      %1657 = vmatprep.subr.bf16.mxu0 0
      %1658 = vmatpush2.bf16.msra.mxu0 0
      %1659 = vmatprep.subr.bf16.mxu0 0
      %1660 = vmatpush2.bf16.msra.mxu0 0
      %1661 = vmatprep.subr.bf16.mxu0 0
      %1662 = vmatpush2.bf16.msra.mxu0 0
      %1663 = vmatprep.subr.bf16.mxu0 0
      %1664 = vmatpush2.bf16.msra.mxu0 0
      %1665 = vmatprep.subr.bf16.mxu0 0
      %1666 = vmatpush2.bf16.msra.mxu0 0
      %1667 = vmatprep.subr.bf16.mxu0 0
      %1668 = vmatpush2.bf16.msra.mxu0 0
      %1669 = vmatprep.mubr.bf16.mxu0 0
      %1670 = vmatmul.mubr.bf16.gmra.mxu0 %v1572
      %v1671 = vpop.f32.mrf.mxu0
      %v1672 = vadd.f32 %v1405, %v1671
      %v1673 = vpop.f32.mrf.mxu0
      %v1674 = vpop.f32.mrf.mxu0
      %v1675 = vadd.f32 %v1408, %v1674
      %v1676 = vpop.f32.mrf.mxu0
      %1677 = vmatprep.mubr.bf16.mxu0 0
      %1678 = vmatmul.mubr.bf16.gmra.mxu0 %v1575
      %v1679 = vpop.f32.mrf.mxu0
      %v1680 = vadd.f32 %v1413, %v1679
      %v1681 = vpop.f32.mrf.mxu0
      %v1682 = vpop.f32.mrf.mxu0
      %v1683 = vadd.f32 %v1416, %v1682
      %v1684 = vpop.f32.mrf.mxu0
      %1685 = vmatprep.mubr.bf16.mxu0 0
      %1686 = vmatmul.mubr.bf16.gmra.mxu0 %v1578
      %v1687 = vpop.f32.mrf.mxu0
      %v1688 = vadd.f32 %v1421, %v1687
      %v1689 = vpop.f32.mrf.mxu0
      %v1690 = vpop.f32.mrf.mxu0
      %v1691 = vadd.f32 %v1424, %v1690
      %v1692 = vpop.f32.mrf.mxu0
      %1693 = vmatprep.mubr.bf16.mxu0 0
      %1694 = vmatmul.mubr.bf16.gmra.mxu0 %v1581
      %v1695 = vpop.f32.mrf.mxu0
      %v1696 = vadd.f32 %v1429, %v1695
      %v1697 = vpop.f32.mrf.mxu0
      %v1698 = vpop.f32.mrf.mxu0
      %v1699 = vadd.f32 %v1432, %v1698
      %v1700 = vpop.f32.mrf.mxu0
      %1701 = vmatprep.mubr.bf16.mxu0 0
      %1702 = vmatmul.mubr.bf16.gmra.mxu0 %v1584
      %v1703 = vpop.f32.mrf.mxu0
      %v1704 = vadd.f32 %v1437, %v1703
      %v1705 = vpop.f32.mrf.mxu0
      %v1706 = vpop.f32.mrf.mxu0
      %v1707 = vadd.f32 %v1440, %v1706
      %v1708 = vpop.f32.mrf.mxu0
      %1709 = vmatprep.mubr.bf16.mxu0 0
      %1710 = vmatmul.mubr.bf16.gmra.mxu0 %v1587
      %v1711 = vpop.f32.mrf.mxu0
      %v1712 = vadd.f32 %v1445, %v1711
      %v1713 = vpop.f32.mrf.mxu0
      %v1714 = vpop.f32.mrf.mxu0
      %v1715 = vadd.f32 %v1448, %v1714
      %v1716 = vpop.f32.mrf.mxu0
      %1717 = vmatprep.mubr.bf16.mxu0 0
      %1718 = vmatmul.mubr.bf16.gmra.mxu0 %v1590
      %v1719 = vpop.f32.mrf.mxu0
      %v1720 = vadd.f32 %v1453, %v1719
      %v1721 = vpop.f32.mrf.mxu0
      %v1722 = vpop.f32.mrf.mxu0
      %v1723 = vadd.f32 %v1456, %v1722
      %v1724 = vpop.f32.mrf.mxu0
      %1725 = vmatprep.mubr.bf16.mxu0 0
      %1726 = vmatmul.mubr.bf16.gmra.mxu0 %v1593
      %v1727 = vpop.f32.mrf.mxu0
      %v1728 = vadd.f32 %v1461, %v1727
      %v1729 = vpop.f32.mrf.mxu0
      %v1730 = vpop.f32.mrf.mxu0
      %v1731 = vadd.f32 %v1464, %v1730
      %v1732 = vpop.f32.mrf.mxu0
      %1733 = vmatprep.mubr.bf16.mxu0 0
      %1734 = vmatmul.mubr.bf16.gmra.mxu0 %v1596
      %v1735 = vpop.f32.mrf.mxu0
      %v1736 = vadd.f32 %v1469, %v1735
      %v1737 = vpop.f32.mrf.mxu0
      %v1738 = vpop.f32.mrf.mxu0
      %v1739 = vadd.f32 %v1472, %v1738
      %v1740 = vpop.f32.mrf.mxu0
      %1741 = vmatprep.mubr.bf16.mxu0 0
      %1742 = vmatmul.mubr.bf16.gmra.mxu0 %v1599
      %v1743 = vpop.f32.mrf.mxu0
      %v1744 = vadd.f32 %v1477, %v1743
      %v1745 = vpop.f32.mrf.mxu0
      %v1746 = vpop.f32.mrf.mxu0
      %v1747 = vadd.f32 %v1480, %v1746
      %v1748 = vpop.f32.mrf.mxu0
      %1749 = vmatprep.mubr.bf16.mxu0 0
      %1750 = vmatmul.mubr.bf16.gmra.mxu0 %v1602
      %v1751 = vpop.f32.mrf.mxu0
      %v1752 = vadd.f32 %v1485, %v1751
      %v1753 = vpop.f32.mrf.mxu0
      %v1754 = vpop.f32.mrf.mxu0
      %v1755 = vadd.f32 %v1488, %v1754
      %v1756 = vpop.f32.mrf.mxu0
      %1757 = vmatprep.mubr.bf16.mxu0 0
      %1758 = vmatmul.mubr.bf16.gmra.mxu0 %v1605
      %v1759 = vpop.f32.mrf.mxu0
      %v1760 = vadd.f32 %v1493, %v1759
      %v1761 = vpop.f32.mrf.mxu0
      %v1762 = vpop.f32.mrf.mxu0
      %v1763 = vadd.f32 %v1496, %v1762
      %v1764 = vpop.f32.mrf.mxu0
      %1765 = vmatprep.mubr.bf16.mxu0 0
      %1766 = vmatmul.mubr.bf16.gmra.mxu0 %v1608
      %v1767 = vpop.f32.mrf.mxu0
      %v1768 = vadd.f32 %v1501, %v1767
      %v1769 = vpop.f32.mrf.mxu0
      %v1770 = vpop.f32.mrf.mxu0
      %v1771 = vadd.f32 %v1504, %v1770
      %v1772 = vpop.f32.mrf.mxu0
      %1773 = vmatprep.mubr.bf16.mxu0 0
      %1774 = vmatmul.mubr.bf16.gmra.mxu0 %v1611
      %v1775 = vpop.f32.mrf.mxu0
      %v1776 = vadd.f32 %v1509, %v1775
      %v1777 = vpop.f32.mrf.mxu0
      %v1778 = vpop.f32.mrf.mxu0
      %v1779 = vadd.f32 %v1512, %v1778
      %v1780 = vpop.f32.mrf.mxu0
      %1781 = vmatprep.mubr.bf16.mxu0 0
      %1782 = vmatmul.mubr.bf16.gmra.mxu0 %v1614
      %v1783 = vpop.f32.mrf.mxu0
      %v1784 = vadd.f32 %v1517, %v1783
      %v1785 = vpop.f32.mrf.mxu0
      %v1786 = vpop.f32.mrf.mxu0
      %v1787 = vadd.f32 %v1520, %v1786
      %v1788 = vpop.f32.mrf.mxu0
      %1789 = vmatprep.mubr.bf16.mxu0 0
      %1790 = vmatmul.mubr.bf16.gmra.mxu0 %v1617
      %v1791 = vpop.f32.mrf.mxu0
      %v1792 = vadd.f32 %v1525, %v1791
      %v1793 = vpop.f32.mrf.mxu0
      %v1794 = vpop.f32.mrf.mxu0
      %v1795 = vadd.f32 %v1528, %v1794
      %v1796 = vpop.f32.mrf.mxu0
      %1797 = vmatprep.mubr.bf16.mxu0 0
      %1798 = vmatmul.mubr.bf16.gmra.mxu0 %v1620
      %v1799 = vpop.f32.mrf.mxu0
      %v1800 = vadd.f32 %v1533, %v1799
      %v1801 = vpop.f32.mrf.mxu0
      %v1802 = vpop.f32.mrf.mxu0
      %v1803 = vadd.f32 %v1536, %v1802
      %v1804 = vpop.f32.mrf.mxu0
      %1805 = vmatprep.mubr.bf16.mxu0 0
      %1806 = vmatmul.mubr.bf16.gmra.mxu0 %v1623
      %v1807 = vpop.f32.mrf.mxu0
      %v1808 = vadd.f32 %v1541, %v1807
      %v1809 = vpop.f32.mrf.mxu0
      %v1810 = vpop.f32.mrf.mxu0
      %v1811 = vadd.f32 %v1544, %v1810
      %v1812 = vpop.f32.mrf.mxu0
      %1813 = vmatprep.mubr.bf16.mxu0 0
      %1814 = vmatmul.mubr.bf16.gmra.mxu0 %v1626
      %v1815 = vpop.f32.mrf.mxu0
      %v1816 = vadd.f32 %v1549, %v1815
      %v1817 = vpop.f32.mrf.mxu0
      %v1818 = vpop.f32.mrf.mxu0
      %v1819 = vadd.f32 %v1552, %v1818
      %v1820 = vpop.f32.mrf.mxu0
      %1821 = vmatprep.mubr.bf16.mxu0 0
      %1822 = vmatmul.mubr.bf16.gmra.mxu0 %v1629
      %v1823 = vpop.f32.mrf.mxu0
      %v1824 = vadd.f32 %v1557, %v1823
      %v1825 = vpop.f32.mrf.mxu0
      %v1826 = vpop.f32.mrf.mxu0
      %v1827 = vadd.f32 %v1560, %v1826
      %v1828 = vpop.f32.mrf.mxu0
      %1829 = vmatprep.mubr.bf16.mxu0 0
      %1830 = vmatmul.mubr.bf16.gmra.mxu0 %v1632
      %v1831 = vpop.f32.mrf.mxu0
      %v1832 = vadd.f32 %v1565, %v1831
      %v1833 = vpop.f32.mrf.mxu0
      %v1834 = vpop.f32.mrf.mxu0
      %v1835 = vadd.f32 %v1568, %v1834
      %v1836 = vpop.f32.mrf.mxu0
      %1837 = vdwg.mxu0
      %s1838 = scalar_lea.vmem %s295, 12
      %v1839 = vld [vmem:[%s1838] sm:$0x3]
      %v1841 = vsel %vm1302, %v1173, 0
      %v1844 = vsel %vm1302, %v1174, 0
      %v1847 = vsel %vm1302, %v1175, 0
      %v1850 = vsel %vm1302, %v1176, 0
      %v1853 = vsel %vm1302, %v1177, 0
      %v1856 = vsel %vm1302, %v1178, 0
      %v1859 = vsel %vm1302, %v1179, 0
      %v1862 = vsel %vm1302, %v1180, 0
      %v1865 = vsel %vm1302, %v1181, 0
      %v1868 = vsel %vm1302, %v1182, 0
      %v1871 = vsel %vm1302, %v1183, 0
      %v1874 = vsel %vm1302, %v1184, 0
      %v1877 = vsel %vm1302, %v1185, 0
      %v1880 = vsel %vm1302, %v1186, 0
      %v1883 = vsel %vm1302, %v1187, 0
      %v1886 = vsel %vm1302, %v1188, 0
      %v1889 = vsel %vm1302, %v1189, 0
      %v1892 = vsel %vm1302, %v1190, 0
      %v1895 = vsel %vm1302, %v1191, 0
      %v1898 = vsel %vm1302, %v1192, 0
      %v1901 = vsel %vm1302, %v1193, 0
      %v1904 = vsel %vm1366, %v1839, 0
      %1906 = vmatprep.subr.bf16.mxu0 0
      %1907 = vmatpush1.bf16.msra.mxu0 0
      %1908 = vmatprep.subr.bf16.mxu0 0
      %1909 = vmatpush1.bf16.msra.mxu0 0
      %1910 = vmatprep.subr.bf16.mxu0 0
      %1911 = vmatpush1.bf16.msra.mxu0 0
      %1912 = vmatprep.subr.bf16.mxu0 0
      %1913 = vmatpush1.bf16.msra.mxu0 0
      %1914 = vmatprep.subr.bf16.mxu0 0
      %1915 = vmatpush1.bf16.msra.mxu0 0
      %1916 = vmatprep.subr.bf16.mxu0 0
      %1917 = vmatpush1.bf16.msra.mxu0 0
      %1918 = vmatprep.subr.bf16.mxu0 0
      %1919 = vmatpush1.bf16.msra.mxu0 0
      %1920 = vmatprep.subr.bf16.mxu0 0
      %1921 = vmatpush1.bf16.msra.mxu0 %v1904
      %1922 = vmatprep.subr.bf16.mxu0 0
      %1923 = vmatpush2.bf16.msra.mxu0 0
      %1924 = vmatprep.subr.bf16.mxu0 0
      %1925 = vmatpush2.bf16.msra.mxu0 0
      %1926 = vmatprep.subr.bf16.mxu0 0
      %1927 = vmatpush2.bf16.msra.mxu0 0
      %1928 = vmatprep.subr.bf16.mxu0 0
      %1929 = vmatpush2.bf16.msra.mxu0 0
      %1930 = vmatprep.subr.bf16.mxu0 0
      %1931 = vmatpush2.bf16.msra.mxu0 0
      %1932 = vmatprep.subr.bf16.mxu0 0
      %1933 = vmatpush2.bf16.msra.mxu0 0
      %1934 = vmatprep.subr.bf16.mxu0 0
      %1935 = vmatpush2.bf16.msra.mxu0 0
      %1936 = vmatprep.subr.bf16.mxu0 0
      %1937 = vmatpush2.bf16.msra.mxu0 0
      %1938 = vmatprep.mubr.bf16.mxu0 0
      %1939 = vmatmul.mubr.bf16.gmra.mxu0 %v1841
      %v1940 = vpop.f32.mrf.mxu0
      %v1941 = vadd.f32 0.0, %v1940
      %v1942 = vpop.f32.mrf.mxu0
      %v1943 = vpop.f32.mrf.mxu0
      %v1944 = vadd.f32 0.0, %v1943
      %v1945 = vpop.f32.mrf.mxu0
      %1946 = vmatprep.mubr.bf16.mxu0 0
      %1947 = vmatmul.mubr.bf16.gmra.mxu0 %v1844
      %v1948 = vpop.f32.mrf.mxu0
      %v1949 = vadd.f32 0.0, %v1948
      %v1950 = vpop.f32.mrf.mxu0
      %v1951 = vpop.f32.mrf.mxu0
      %v1952 = vadd.f32 0.0, %v1951
      %v1953 = vpop.f32.mrf.mxu0
      %1954 = vmatprep.mubr.bf16.mxu0 0
      %1955 = vmatmul.mubr.bf16.gmra.mxu0 %v1847
      %v1956 = vpop.f32.mrf.mxu0
      %v1957 = vadd.f32 0.0, %v1956
      %v1958 = vpop.f32.mrf.mxu0
      %v1959 = vpop.f32.mrf.mxu0
      %v1960 = vadd.f32 0.0, %v1959
      %v1961 = vpop.f32.mrf.mxu0
      %1962 = vmatprep.mubr.bf16.mxu0 0
      %1963 = vmatmul.mubr.bf16.gmra.mxu0 %v1850
      %v1964 = vpop.f32.mrf.mxu0
      %v1965 = vadd.f32 0.0, %v1964
      %v1966 = vpop.f32.mrf.mxu0
      %v1967 = vpop.f32.mrf.mxu0
      %v1968 = vadd.f32 0.0, %v1967
      %v1969 = vpop.f32.mrf.mxu0
      %1970 = vmatprep.mubr.bf16.mxu0 0
      %1971 = vmatmul.mubr.bf16.gmra.mxu0 %v1853
      %v1972 = vpop.f32.mrf.mxu0
      %v1973 = vadd.f32 0.0, %v1972
      %v1974 = vpop.f32.mrf.mxu0
      %v1975 = vpop.f32.mrf.mxu0
      %v1976 = vadd.f32 0.0, %v1975
      %v1977 = vpop.f32.mrf.mxu0
      %1978 = vmatprep.mubr.bf16.mxu0 0
      %1979 = vmatmul.mubr.bf16.gmra.mxu0 %v1856
      %v1980 = vpop.f32.mrf.mxu0
      %v1981 = vadd.f32 0.0, %v1980
      %v1982 = vpop.f32.mrf.mxu0
      %v1983 = vpop.f32.mrf.mxu0
      %v1984 = vadd.f32 0.0, %v1983
      %v1985 = vpop.f32.mrf.mxu0
      %1986 = vmatprep.mubr.bf16.mxu0 0
      %1987 = vmatmul.mubr.bf16.gmra.mxu0 %v1859
      %v1988 = vpop.f32.mrf.mxu0
      %v1989 = vadd.f32 0.0, %v1988
      %v1990 = vpop.f32.mrf.mxu0
      %v1991 = vpop.f32.mrf.mxu0
      %v1992 = vadd.f32 0.0, %v1991
      %v1993 = vpop.f32.mrf.mxu0
      %1994 = vmatprep.mubr.bf16.mxu0 0
      %1995 = vmatmul.mubr.bf16.gmra.mxu0 %v1862
      %v1996 = vpop.f32.mrf.mxu0
      %v1997 = vadd.f32 0.0, %v1996
      %v1998 = vpop.f32.mrf.mxu0
      %v1999 = vpop.f32.mrf.mxu0
      %v2000 = vadd.f32 0.0, %v1999
      %v2001 = vpop.f32.mrf.mxu0
      %2002 = vmatprep.mubr.bf16.mxu0 0
      %2003 = vmatmul.mubr.bf16.gmra.mxu0 %v1865
      %v2004 = vpop.f32.mrf.mxu0
      %v2005 = vadd.f32 0.0, %v2004
      %v2006 = vpop.f32.mrf.mxu0
      %v2007 = vpop.f32.mrf.mxu0
      %v2008 = vadd.f32 0.0, %v2007
      %v2009 = vpop.f32.mrf.mxu0
      %2010 = vmatprep.mubr.bf16.mxu0 0
      %2011 = vmatmul.mubr.bf16.gmra.mxu0 %v1868
      %v2012 = vpop.f32.mrf.mxu0
      %v2013 = vadd.f32 0.0, %v2012
      %v2014 = vpop.f32.mrf.mxu0
      %v2015 = vpop.f32.mrf.mxu0
      %v2016 = vadd.f32 0.0, %v2015
      %v2017 = vpop.f32.mrf.mxu0
      %2018 = vmatprep.mubr.bf16.mxu0 0
      %2019 = vmatmul.mubr.bf16.gmra.mxu0 %v1871
      %v2020 = vpop.f32.mrf.mxu0
      %v2021 = vadd.f32 0.0, %v2020
      %v2022 = vpop.f32.mrf.mxu0
      %v2023 = vpop.f32.mrf.mxu0
      %v2024 = vadd.f32 0.0, %v2023
      %v2025 = vpop.f32.mrf.mxu0
      %2026 = vmatprep.mubr.bf16.mxu0 0
      %2027 = vmatmul.mubr.bf16.gmra.mxu0 %v1874
      %v2028 = vpop.f32.mrf.mxu0
      %v2029 = vadd.f32 0.0, %v2028
      %v2030 = vpop.f32.mrf.mxu0
      %v2031 = vpop.f32.mrf.mxu0
      %v2032 = vadd.f32 0.0, %v2031
      %v2033 = vpop.f32.mrf.mxu0
      %2034 = vmatprep.mubr.bf16.mxu0 0
      %2035 = vmatmul.mubr.bf16.gmra.mxu0 %v1877
      %v2036 = vpop.f32.mrf.mxu0
      %v2037 = vadd.f32 0.0, %v2036
      %v2038 = vpop.f32.mrf.mxu0
      %v2039 = vpop.f32.mrf.mxu0
      %v2040 = vadd.f32 0.0, %v2039
      %v2041 = vpop.f32.mrf.mxu0
      %2042 = vmatprep.mubr.bf16.mxu0 0
      %2043 = vmatmul.mubr.bf16.gmra.mxu0 %v1880
      %v2044 = vpop.f32.mrf.mxu0
      %v2045 = vadd.f32 0.0, %v2044
      %v2046 = vpop.f32.mrf.mxu0
      %v2047 = vpop.f32.mrf.mxu0
      %v2048 = vadd.f32 0.0, %v2047
      %v2049 = vpop.f32.mrf.mxu0
      %2050 = vmatprep.mubr.bf16.mxu0 0
      %2051 = vmatmul.mubr.bf16.gmra.mxu0 %v1883
      %v2052 = vpop.f32.mrf.mxu0
      %v2053 = vadd.f32 0.0, %v2052
      %v2054 = vpop.f32.mrf.mxu0
      %v2055 = vpop.f32.mrf.mxu0
      %v2056 = vadd.f32 0.0, %v2055
      %v2057 = vpop.f32.mrf.mxu0
      %2058 = vmatprep.mubr.bf16.mxu0 0
      %2059 = vmatmul.mubr.bf16.gmra.mxu0 %v1886
      %v2060 = vpop.f32.mrf.mxu0
      %v2061 = vadd.f32 0.0, %v2060
      %v2062 = vpop.f32.mrf.mxu0
      %v2063 = vpop.f32.mrf.mxu0
      %v2064 = vadd.f32 0.0, %v2063
      %v2065 = vpop.f32.mrf.mxu0
      %2066 = vmatprep.mubr.bf16.mxu0 0
      %2067 = vmatmul.mubr.bf16.gmra.mxu0 %v1889
      %v2068 = vpop.f32.mrf.mxu0
      %v2069 = vadd.f32 0.0, %v2068
      %v2070 = vpop.f32.mrf.mxu0
      %v2071 = vpop.f32.mrf.mxu0
      %v2072 = vadd.f32 0.0, %v2071
      %v2073 = vpop.f32.mrf.mxu0
      %2074 = vmatprep.mubr.bf16.mxu0 0
      %2075 = vmatmul.mubr.bf16.gmra.mxu0 %v1892
      %v2076 = vpop.f32.mrf.mxu0
      %v2077 = vadd.f32 0.0, %v2076
      %v2078 = vpop.f32.mrf.mxu0
      %v2079 = vpop.f32.mrf.mxu0
      %v2080 = vadd.f32 0.0, %v2079
      %v2081 = vpop.f32.mrf.mxu0
      %2082 = vmatprep.mubr.bf16.mxu0 0
      %2083 = vmatmul.mubr.bf16.gmra.mxu0 %v1895
      %v2084 = vpop.f32.mrf.mxu0
      %v2085 = vadd.f32 0.0, %v2084
      %v2086 = vpop.f32.mrf.mxu0
      %v2087 = vpop.f32.mrf.mxu0
      %v2088 = vadd.f32 0.0, %v2087
      %v2089 = vpop.f32.mrf.mxu0
      %2090 = vmatprep.mubr.bf16.mxu0 0
      %2091 = vmatmul.mubr.bf16.gmra.mxu0 %v1898
      %v2092 = vpop.f32.mrf.mxu0
      %v2093 = vadd.f32 0.0, %v2092
      %v2094 = vpop.f32.mrf.mxu0
      %v2095 = vpop.f32.mrf.mxu0
      %v2096 = vadd.f32 0.0, %v2095
      %v2097 = vpop.f32.mrf.mxu0
      %2098 = vmatprep.mubr.bf16.mxu0 0
      %2099 = vmatmul.mubr.bf16.gmra.mxu0 %v1901
      %v2100 = vpop.f32.mrf.mxu0
      %v2101 = vadd.f32 0.0, %v2100
      %v2102 = vpop.f32.mrf.mxu0
      %v2103 = vpop.f32.mrf.mxu0
      %v2104 = vadd.f32 0.0, %v2103
      %v2105 = vpop.f32.mrf.mxu0
      %2106 = vdwg.mxu0
      %v2107 = vadd.f32 %v1672, %v1941
      %v2108 = vadd.f32 %v1675, %v1944
      %v2109 = vadd.f32 %v1680, %v1949
      %v2110 = vadd.f32 %v1683, %v1952
      %v2111 = vadd.f32 %v1688, %v1957
      %v2112 = vadd.f32 %v1691, %v1960
      %v2113 = vadd.f32 %v1696, %v1965
      %v2114 = vadd.f32 %v1699, %v1968
      %v2115 = vadd.f32 %v1704, %v1973
      %v2116 = vadd.f32 %v1707, %v1976
      %v2117 = vadd.f32 %v1712, %v1981
      %v2118 = vadd.f32 %v1715, %v1984
      %v2119 = vadd.f32 %v1720, %v1989
      %v2120 = vadd.f32 %v1723, %v1992
      %v2121 = vadd.f32 %v1728, %v1997
      %v2122 = vadd.f32 %v1731, %v2000
      %v2123 = vadd.f32 %v1736, %v2005
      %v2124 = vadd.f32 %v1739, %v2008
      %v2125 = vadd.f32 %v1744, %v2013
      %v2126 = vadd.f32 %v1747, %v2016
      %v2127 = vadd.f32 %v1752, %v2021
      %v2128 = vadd.f32 %v1755, %v2024
      %v2129 = vadd.f32 %v1760, %v2029
      %v2130 = vadd.f32 %v1763, %v2032
      %v2131 = vadd.f32 %v1768, %v2037
      %v2132 = vadd.f32 %v1771, %v2040
      %v2133 = vadd.f32 %v1776, %v2045
      %v2134 = vadd.f32 %v1779, %v2048
      %v2135 = vadd.f32 %v1784, %v2053
      %v2136 = vadd.f32 %v1787, %v2056
      %v2137 = vadd.f32 %v1792, %v2061
      %v2138 = vadd.f32 %v1795, %v2064
      %v2139 = vadd.f32 %v1800, %v2069
      %v2140 = vadd.f32 %v1803, %v2072
      %v2141 = vadd.f32 %v1808, %v2077
      %v2142 = vadd.f32 %v1811, %v2080
      %v2143 = vadd.f32 %v1816, %v2085
      %v2144 = vadd.f32 %v1819, %v2088
      %v2145 = vadd.f32 %v1824, %v2093
      %v2146 = vadd.f32 %v1827, %v2096
      %v2147 = vadd.f32 %v1832, %v2101
      %v2148 = vadd.f32 %v1835, %v2104
      %v2149 = vrot.slane %v2107, 7
      %v2150 = vrot.slane %v2108, 7
      %v2151 = vrot.slane %v2109, 7
      %v2152 = vrot.slane %v2110, 7
      %v2153 = vrot.slane %v2111, 7
      %v2154 = vrot.slane %v2112, 7
      %v2155 = vrot.slane %v2113, 7
      %v2156 = vrot.slane %v2114, 7
      %v2157 = vrot.slane %v2115, 7
      %v2158 = vrot.slane %v2116, 7
      %v2159 = vrot.slane %v2117, 7
      %v2160 = vrot.slane %v2118, 7
      %v2161 = vrot.slane %v2119, 7
      %v2162 = vrot.slane %v2120, 7
      %v2163 = vrot.slane %v2121, 7
      %v2164 = vrot.slane %v2122, 7
      %v2165 = vrot.slane %v2123, 7
      %v2166 = vrot.slane %v2124, 7
      %v2167 = vrot.slane %v2125, 7
      %v2168 = vrot.slane %v2126, 7
      %v2169 = vrot.slane %v2127, 7
      %v2170 = vrot.slane %v2128, 7
      %v2171 = vrot.slane %v2129, 7
      %v2172 = vrot.slane %v2130, 7
      %v2173 = vrot.slane %v2131, 7
      %v2174 = vrot.slane %v2132, 7
      %v2175 = vrot.slane %v2133, 7
      %v2176 = vrot.slane %v2134, 7
      %v2177 = vrot.slane %v2135, 7
      %v2178 = vrot.slane %v2136, 7
      %v2179 = vrot.slane %v2137, 7
      %v2180 = vrot.slane %v2138, 7
      %v2181 = vrot.slane %v2139, 7
      %v2182 = vrot.slane %v2140, 7
      %v2183 = vrot.slane %v2141, 7
      %v2184 = vrot.slane %v2142, 7
      %v2185 = vrot.slane %v2143, 7
      %v2186 = vrot.slane %v2144, 7
      %v2187 = vrot.slane %v2145, 7
      %v2188 = vrot.slane %v2146, 7
      %v2189 = vrot.slane %v2147, 7
      %v2190 = vrot.slane %v2148, 7
      %vm2191 = vcmp.lt.s32.totalorder %v1023, 1
      %v2192 = vsel %vm2191, %v2189, %v2190
      %v2193 = vsel %vm2191, %v2188, %v2189
      %v2194 = vsel %vm2191, %v2187, %v2188
      %v2195 = vsel %vm2191, %v2186, %v2187
      %v2196 = vsel %vm2191, %v2185, %v2186
      %v2197 = vsel %vm2191, %v2184, %v2185
      %v2198 = vsel %vm2191, %v2183, %v2184
      %v2199 = vsel %vm2191, %v2182, %v2183
      %v2200 = vsel %vm2191, %v2181, %v2182
      %v2201 = vsel %vm2191, %v2180, %v2181
      %v2202 = vsel %vm2191, %v2179, %v2180
      %v2203 = vsel %vm2191, %v2178, %v2179
      %v2204 = vsel %vm2191, %v2177, %v2178
      %v2205 = vsel %vm2191, %v2176, %v2177
      %v2206 = vsel %vm2191, %v2175, %v2176
      %v2207 = vsel %vm2191, %v2174, %v2175
      %v2208 = vsel %vm2191, %v2173, %v2174
      %v2209 = vsel %vm2191, %v2172, %v2173
      %v2210 = vsel %vm2191, %v2171, %v2172
      %v2211 = vsel %vm2191, %v2170, %v2171
      %v2212 = vsel %vm2191, %v2169, %v2170
      %v2213 = vsel %vm2191, %v2168, %v2169
      %v2214 = vsel %vm2191, %v2167, %v2168
      %v2215 = vsel %vm2191, %v2166, %v2167
      %v2216 = vsel %vm2191, %v2165, %v2166
      %v2217 = vsel %vm2191, %v2164, %v2165
      %v2218 = vsel %vm2191, %v2163, %v2164
      %v2219 = vsel %vm2191, %v2162, %v2163
      %v2220 = vsel %vm2191, %v2161, %v2162
      %v2221 = vsel %vm2191, %v2160, %v2161
      %v2222 = vsel %vm2191, %v2159, %v2160
      %v2223 = vsel %vm2191, %v2158, %v2159
      %v2224 = vsel %vm2191, %v2157, %v2158
      %v2225 = vsel %vm2191, %v2156, %v2157
      %v2226 = vsel %vm2191, %v2155, %v2156
      %v2227 = vsel %vm2191, %v2154, %v2155
      %v2228 = vsel %vm2191, %v2153, %v2154
      %v2229 = vsel %vm2191, %v2152, %v2153
      %v2230 = vsel %vm2191, %v2151, %v2152
      %v2231 = vsel %vm2191, %v2150, %v2151
      %v2232 = vsel %vm2191, %v2149, %v2150
      %v2233 = vsel %vm2191, %v2190, %v2149
      %s2234 = scalar_lea.vmem %s295, 2
      %v2235 = vld [vmem:[%s2234] sm:$0x3]
      %s2236 = scalar_lea.vmem %s295, 8
      %v2237 = vld [vmem:[%s2236] sm:$0x3]
      %v2239 = vsel %vm1366, %v2237, 0
      %2241 = vmatprep.subr.bf16.mxu0 0
      %2242 = vmatpush1.bf16.msra.mxu0 0
      %2243 = vmatprep.subr.bf16.mxu0 0
      %2244 = vmatpush1.bf16.msra.mxu0 0
      %2245 = vmatprep.subr.bf16.mxu0 0
      %2246 = vmatpush1.bf16.msra.mxu0 0
      %2247 = vmatprep.subr.bf16.mxu0 0
      %2248 = vmatpush1.bf16.msra.mxu0 0
      %2249 = vmatprep.subr.bf16.mxu0 0
      %2250 = vmatpush1.bf16.msra.mxu0 0
      %2251 = vmatprep.subr.bf16.mxu0 0
      %2252 = vmatpush1.bf16.msra.mxu0 0
      %2253 = vmatprep.subr.bf16.mxu0 0
      %2254 = vmatpush1.bf16.msra.mxu0 0
      %2255 = vmatprep.subr.bf16.mxu0 0
      %2256 = vmatpush1.bf16.msra.mxu0 %v2239
      %2257 = vmatprep.subr.bf16.mxu0 0
      %2258 = vmatpush2.bf16.msra.mxu0 0
      %2259 = vmatprep.subr.bf16.mxu0 0
      %2260 = vmatpush2.bf16.msra.mxu0 0
      %2261 = vmatprep.subr.bf16.mxu0 0
      %2262 = vmatpush2.bf16.msra.mxu0 0
      %2263 = vmatprep.subr.bf16.mxu0 0
      %2264 = vmatpush2.bf16.msra.mxu0 0
      %2265 = vmatprep.subr.bf16.mxu0 0
      %2266 = vmatpush2.bf16.msra.mxu0 0
      %2267 = vmatprep.subr.bf16.mxu0 0
      %2268 = vmatpush2.bf16.msra.mxu0 0
      %2269 = vmatprep.subr.bf16.mxu0 0
      %2270 = vmatpush2.bf16.msra.mxu0 0
      %2271 = vmatprep.subr.bf16.mxu0 0
      %2272 = vmatpush2.bf16.msra.mxu0 0
      %2273 = vmatprep.mubr.bf16.mxu0 0
      %2274 = vmatmul.mubr.bf16.gmra.mxu0 %v1304
      %v2275 = vpop.f32.mrf.mxu0
      %v2276 = vadd.f32 0.0, %v2275
      %v2277 = vpop.f32.mrf.mxu0
      %v2278 = vpop.f32.mrf.mxu0
      %v2279 = vadd.f32 0.0, %v2278
      %v2280 = vpop.f32.mrf.mxu0
      %2281 = vmatprep.mubr.bf16.mxu0 0
      %2282 = vmatmul.mubr.bf16.gmra.mxu0 %v1307
      %v2283 = vpop.f32.mrf.mxu0
      %v2284 = vadd.f32 0.0, %v2283
      %v2285 = vpop.f32.mrf.mxu0
      %v2286 = vpop.f32.mrf.mxu0
      %v2287 = vadd.f32 0.0, %v2286
      %v2288 = vpop.f32.mrf.mxu0
      %2289 = vmatprep.mubr.bf16.mxu0 0
      %2290 = vmatmul.mubr.bf16.gmra.mxu0 %v1310
      %v2291 = vpop.f32.mrf.mxu0
      %v2292 = vadd.f32 0.0, %v2291
      %v2293 = vpop.f32.mrf.mxu0
      %v2294 = vpop.f32.mrf.mxu0
      %v2295 = vadd.f32 0.0, %v2294
      %v2296 = vpop.f32.mrf.mxu0
      %2297 = vmatprep.mubr.bf16.mxu0 0
      %2298 = vmatmul.mubr.bf16.gmra.mxu0 %v1313
      %v2299 = vpop.f32.mrf.mxu0
      %v2300 = vadd.f32 0.0, %v2299
      %v2301 = vpop.f32.mrf.mxu0
      %v2302 = vpop.f32.mrf.mxu0
      %v2303 = vadd.f32 0.0, %v2302
      %v2304 = vpop.f32.mrf.mxu0
      %2305 = vmatprep.mubr.bf16.mxu0 0
      %2306 = vmatmul.mubr.bf16.gmra.mxu0 %v1316
      %v2307 = vpop.f32.mrf.mxu0
      %v2308 = vadd.f32 0.0, %v2307
      %v2309 = vpop.f32.mrf.mxu0
      %v2310 = vpop.f32.mrf.mxu0
      %v2311 = vadd.f32 0.0, %v2310
      %v2312 = vpop.f32.mrf.mxu0
      %2313 = vmatprep.mubr.bf16.mxu0 0
      %2314 = vmatmul.mubr.bf16.gmra.mxu0 %v1319
      %v2315 = vpop.f32.mrf.mxu0
      %v2316 = vadd.f32 0.0, %v2315
      %v2317 = vpop.f32.mrf.mxu0
      %v2318 = vpop.f32.mrf.mxu0
      %v2319 = vadd.f32 0.0, %v2318
      %v2320 = vpop.f32.mrf.mxu0
      %2321 = vmatprep.mubr.bf16.mxu0 0
      %2322 = vmatmul.mubr.bf16.gmra.mxu0 %v1322
      %v2323 = vpop.f32.mrf.mxu0
      %v2324 = vadd.f32 0.0, %v2323
      %v2325 = vpop.f32.mrf.mxu0
      %v2326 = vpop.f32.mrf.mxu0
      %v2327 = vadd.f32 0.0, %v2326
      %v2328 = vpop.f32.mrf.mxu0
      %2329 = vmatprep.mubr.bf16.mxu0 0
      %2330 = vmatmul.mubr.bf16.gmra.mxu0 %v1325
      %v2331 = vpop.f32.mrf.mxu0
      %v2332 = vadd.f32 0.0, %v2331
      %v2333 = vpop.f32.mrf.mxu0
      %v2334 = vpop.f32.mrf.mxu0
      %v2335 = vadd.f32 0.0, %v2334
      %v2336 = vpop.f32.mrf.mxu0
      %2337 = vmatprep.mubr.bf16.mxu0 0
      %2338 = vmatmul.mubr.bf16.gmra.mxu0 %v1328
      %v2339 = vpop.f32.mrf.mxu0
      %v2340 = vadd.f32 0.0, %v2339
      %v2341 = vpop.f32.mrf.mxu0
      %v2342 = vpop.f32.mrf.mxu0
      %v2343 = vadd.f32 0.0, %v2342
      %v2344 = vpop.f32.mrf.mxu0
      %2345 = vmatprep.mubr.bf16.mxu0 0
      %2346 = vmatmul.mubr.bf16.gmra.mxu0 %v1331
      %v2347 = vpop.f32.mrf.mxu0
      %v2348 = vadd.f32 0.0, %v2347
      %v2349 = vpop.f32.mrf.mxu0
      %v2350 = vpop.f32.mrf.mxu0
      %v2351 = vadd.f32 0.0, %v2350
      %v2352 = vpop.f32.mrf.mxu0
      %2353 = vmatprep.mubr.bf16.mxu0 0
      %2354 = vmatmul.mubr.bf16.gmra.mxu0 %v1334
      %v2355 = vpop.f32.mrf.mxu0
      %v2356 = vadd.f32 0.0, %v2355
      %v2357 = vpop.f32.mrf.mxu0
      %v2358 = vpop.f32.mrf.mxu0
      %v2359 = vadd.f32 0.0, %v2358
      %v2360 = vpop.f32.mrf.mxu0
      %2361 = vmatprep.mubr.bf16.mxu0 0
      %2362 = vmatmul.mubr.bf16.gmra.mxu0 %v1337
      %v2363 = vpop.f32.mrf.mxu0
      %v2364 = vadd.f32 0.0, %v2363
      %v2365 = vpop.f32.mrf.mxu0
      %v2366 = vpop.f32.mrf.mxu0
      %v2367 = vadd.f32 0.0, %v2366
      %v2368 = vpop.f32.mrf.mxu0
      %2369 = vmatprep.mubr.bf16.mxu0 0
      %2370 = vmatmul.mubr.bf16.gmra.mxu0 %v1340
      %v2371 = vpop.f32.mrf.mxu0
      %v2372 = vadd.f32 0.0, %v2371
      %v2373 = vpop.f32.mrf.mxu0
      %v2374 = vpop.f32.mrf.mxu0
      %v2375 = vadd.f32 0.0, %v2374
      %v2376 = vpop.f32.mrf.mxu0
      %2377 = vmatprep.mubr.bf16.mxu0 0
      %2378 = vmatmul.mubr.bf16.gmra.mxu0 %v1343
      %v2379 = vpop.f32.mrf.mxu0
      %v2380 = vadd.f32 0.0, %v2379
      %v2381 = vpop.f32.mrf.mxu0
      %v2382 = vpop.f32.mrf.mxu0
      %v2383 = vadd.f32 0.0, %v2382
      %v2384 = vpop.f32.mrf.mxu0
      %2385 = vmatprep.mubr.bf16.mxu0 0
      %2386 = vmatmul.mubr.bf16.gmra.mxu0 %v1346
      %v2387 = vpop.f32.mrf.mxu0
      %v2388 = vadd.f32 0.0, %v2387
      %v2389 = vpop.f32.mrf.mxu0
      %v2390 = vpop.f32.mrf.mxu0
      %v2391 = vadd.f32 0.0, %v2390
      %v2392 = vpop.f32.mrf.mxu0
      %2393 = vmatprep.mubr.bf16.mxu0 0
      %2394 = vmatmul.mubr.bf16.gmra.mxu0 %v1349
      %v2395 = vpop.f32.mrf.mxu0
      %v2396 = vadd.f32 0.0, %v2395
      %v2397 = vpop.f32.mrf.mxu0
      %v2398 = vpop.f32.mrf.mxu0
      %v2399 = vadd.f32 0.0, %v2398
      %v2400 = vpop.f32.mrf.mxu0
      %2401 = vmatprep.mubr.bf16.mxu0 0
      %2402 = vmatmul.mubr.bf16.gmra.mxu0 %v1352
      %v2403 = vpop.f32.mrf.mxu0
      %v2404 = vadd.f32 0.0, %v2403
      %v2405 = vpop.f32.mrf.mxu0
      %v2406 = vpop.f32.mrf.mxu0
      %v2407 = vadd.f32 0.0, %v2406
      %v2408 = vpop.f32.mrf.mxu0
      %2409 = vmatprep.mubr.bf16.mxu0 0
      %2410 = vmatmul.mubr.bf16.gmra.mxu0 %v1355
      %v2411 = vpop.f32.mrf.mxu0
      %v2412 = vadd.f32 0.0, %v2411
      %v2413 = vpop.f32.mrf.mxu0
      %v2414 = vpop.f32.mrf.mxu0
      %v2415 = vadd.f32 0.0, %v2414
      %v2416 = vpop.f32.mrf.mxu0
      %2417 = vmatprep.mubr.bf16.mxu0 0
      %2418 = vmatmul.mubr.bf16.gmra.mxu0 %v1358
      %v2419 = vpop.f32.mrf.mxu0
      %v2420 = vadd.f32 0.0, %v2419
      %v2421 = vpop.f32.mrf.mxu0
      %v2422 = vpop.f32.mrf.mxu0
      %v2423 = vadd.f32 0.0, %v2422
      %v2424 = vpop.f32.mrf.mxu0
      %2425 = vmatprep.mubr.bf16.mxu0 0
      %2426 = vmatmul.mubr.bf16.gmra.mxu0 %v1361
      %v2427 = vpop.f32.mrf.mxu0
      %v2428 = vadd.f32 0.0, %v2427
      %v2429 = vpop.f32.mrf.mxu0
      %v2430 = vpop.f32.mrf.mxu0
      %v2431 = vadd.f32 0.0, %v2430
      %v2432 = vpop.f32.mrf.mxu0
      %2433 = vmatprep.mubr.bf16.mxu0 0
      %2434 = vmatmul.mubr.bf16.gmra.mxu0 %v1364
      %v2435 = vpop.f32.mrf.mxu0
      %v2436 = vadd.f32 0.0, %v2435
      %v2437 = vpop.f32.mrf.mxu0
      %v2438 = vpop.f32.mrf.mxu0
      %v2439 = vadd.f32 0.0, %v2438
      %v2440 = vpop.f32.mrf.mxu0
      %2441 = vdwg.mxu0
      %v2443 = vsel %vm1366, %v2235, 0
      %2445 = vmatprep.subr.bf16.mxu0 0
      %2446 = vmatpush1.bf16.msra.mxu0 0
      %2447 = vmatprep.subr.bf16.mxu0 0
      %2448 = vmatpush1.bf16.msra.mxu0 0
      %2449 = vmatprep.subr.bf16.mxu0 0
      %2450 = vmatpush1.bf16.msra.mxu0 0
      %2451 = vmatprep.subr.bf16.mxu0 0
      %2452 = vmatpush1.bf16.msra.mxu0 0
      %2453 = vmatprep.subr.bf16.mxu0 0
      %2454 = vmatpush1.bf16.msra.mxu0 0
      %2455 = vmatprep.subr.bf16.mxu0 0
      %2456 = vmatpush1.bf16.msra.mxu0 0
      %2457 = vmatprep.subr.bf16.mxu0 0
      %2458 = vmatpush1.bf16.msra.mxu0 0
      %2459 = vmatprep.subr.bf16.mxu0 0
      %2460 = vmatpush1.bf16.msra.mxu0 %v2443
      %2461 = vmatprep.subr.bf16.mxu0 0
      %2462 = vmatpush2.bf16.msra.mxu0 0
      %2463 = vmatprep.subr.bf16.mxu0 0
      %2464 = vmatpush2.bf16.msra.mxu0 0
      %2465 = vmatprep.subr.bf16.mxu0 0
      %2466 = vmatpush2.bf16.msra.mxu0 0
      %2467 = vmatprep.subr.bf16.mxu0 0
      %2468 = vmatpush2.bf16.msra.mxu0 0
      %2469 = vmatprep.subr.bf16.mxu0 0
      %2470 = vmatpush2.bf16.msra.mxu0 0
      %2471 = vmatprep.subr.bf16.mxu0 0
      %2472 = vmatpush2.bf16.msra.mxu0 0
      %2473 = vmatprep.subr.bf16.mxu0 0
      %2474 = vmatpush2.bf16.msra.mxu0 0
      %2475 = vmatprep.subr.bf16.mxu0 0
      %2476 = vmatpush2.bf16.msra.mxu0 0
      %2477 = vmatprep.mubr.bf16.mxu0 0
      %2478 = vmatmul.mubr.bf16.gmra.mxu0 %v1572
      %v2479 = vpop.f32.mrf.mxu0
      %v2480 = vadd.f32 %v2276, %v2479
      %v2481 = vpop.f32.mrf.mxu0
      %v2482 = vpop.f32.mrf.mxu0
      %v2483 = vadd.f32 %v2279, %v2482
      %v2484 = vpop.f32.mrf.mxu0
      %2485 = vmatprep.mubr.bf16.mxu0 0
      %2486 = vmatmul.mubr.bf16.gmra.mxu0 %v1575
      %v2487 = vpop.f32.mrf.mxu0
      %v2488 = vadd.f32 %v2284, %v2487
      %v2489 = vpop.f32.mrf.mxu0
      %v2490 = vpop.f32.mrf.mxu0
      %v2491 = vadd.f32 %v2287, %v2490
      %v2492 = vpop.f32.mrf.mxu0
      %2493 = vmatprep.mubr.bf16.mxu0 0
      %2494 = vmatmul.mubr.bf16.gmra.mxu0 %v1578
      %v2495 = vpop.f32.mrf.mxu0
      %v2496 = vadd.f32 %v2292, %v2495
      %v2497 = vpop.f32.mrf.mxu0
      %v2498 = vpop.f32.mrf.mxu0
      %v2499 = vadd.f32 %v2295, %v2498
      %v2500 = vpop.f32.mrf.mxu0
      %2501 = vmatprep.mubr.bf16.mxu0 0
      %2502 = vmatmul.mubr.bf16.gmra.mxu0 %v1581
      %v2503 = vpop.f32.mrf.mxu0
      %v2504 = vadd.f32 %v2300, %v2503
      %v2505 = vpop.f32.mrf.mxu0
      %v2506 = vpop.f32.mrf.mxu0
      %v2507 = vadd.f32 %v2303, %v2506
      %v2508 = vpop.f32.mrf.mxu0
      %2509 = vmatprep.mubr.bf16.mxu0 0
      %2510 = vmatmul.mubr.bf16.gmra.mxu0 %v1584
      %v2511 = vpop.f32.mrf.mxu0
      %v2512 = vadd.f32 %v2308, %v2511
      %v2513 = vpop.f32.mrf.mxu0
      %v2514 = vpop.f32.mrf.mxu0
      %v2515 = vadd.f32 %v2311, %v2514
      %v2516 = vpop.f32.mrf.mxu0
      %2517 = vmatprep.mubr.bf16.mxu0 0
      %2518 = vmatmul.mubr.bf16.gmra.mxu0 %v1587
      %v2519 = vpop.f32.mrf.mxu0
      %v2520 = vadd.f32 %v2316, %v2519
      %v2521 = vpop.f32.mrf.mxu0
      %v2522 = vpop.f32.mrf.mxu0
      %v2523 = vadd.f32 %v2319, %v2522
      %v2524 = vpop.f32.mrf.mxu0
      %2525 = vmatprep.mubr.bf16.mxu0 0
      %2526 = vmatmul.mubr.bf16.gmra.mxu0 %v1590
      %v2527 = vpop.f32.mrf.mxu0
      %v2528 = vadd.f32 %v2324, %v2527
      %v2529 = vpop.f32.mrf.mxu0
      %v2530 = vpop.f32.mrf.mxu0
      %v2531 = vadd.f32 %v2327, %v2530
      %v2532 = vpop.f32.mrf.mxu0
      %2533 = vmatprep.mubr.bf16.mxu0 0
      %2534 = vmatmul.mubr.bf16.gmra.mxu0 %v1593
      %v2535 = vpop.f32.mrf.mxu0
      %v2536 = vadd.f32 %v2332, %v2535
      %v2537 = vpop.f32.mrf.mxu0
      %v2538 = vpop.f32.mrf.mxu0
      %v2539 = vadd.f32 %v2335, %v2538
      %v2540 = vpop.f32.mrf.mxu0
      %2541 = vmatprep.mubr.bf16.mxu0 0
      %2542 = vmatmul.mubr.bf16.gmra.mxu0 %v1596
      %v2543 = vpop.f32.mrf.mxu0
      %v2544 = vadd.f32 %v2340, %v2543
      %v2545 = vpop.f32.mrf.mxu0
      %v2546 = vpop.f32.mrf.mxu0
      %v2547 = vadd.f32 %v2343, %v2546
      %v2548 = vpop.f32.mrf.mxu0
      %2549 = vmatprep.mubr.bf16.mxu0 0
      %2550 = vmatmul.mubr.bf16.gmra.mxu0 %v1599
      %v2551 = vpop.f32.mrf.mxu0
      %v2552 = vadd.f32 %v2348, %v2551
      %v2553 = vpop.f32.mrf.mxu0
      %v2554 = vpop.f32.mrf.mxu0
      %v2555 = vadd.f32 %v2351, %v2554
      %v2556 = vpop.f32.mrf.mxu0
      %2557 = vmatprep.mubr.bf16.mxu0 0
      %2558 = vmatmul.mubr.bf16.gmra.mxu0 %v1602
      %v2559 = vpop.f32.mrf.mxu0
      %v2560 = vadd.f32 %v2356, %v2559
      %v2561 = vpop.f32.mrf.mxu0
      %v2562 = vpop.f32.mrf.mxu0
      %v2563 = vadd.f32 %v2359, %v2562
      %v2564 = vpop.f32.mrf.mxu0
      %2565 = vmatprep.mubr.bf16.mxu0 0
      %2566 = vmatmul.mubr.bf16.gmra.mxu0 %v1605
      %v2567 = vpop.f32.mrf.mxu0
      %v2568 = vadd.f32 %v2364, %v2567
      %v2569 = vpop.f32.mrf.mxu0
      %v2570 = vpop.f32.mrf.mxu0
      %v2571 = vadd.f32 %v2367, %v2570
      %v2572 = vpop.f32.mrf.mxu0
      %2573 = vmatprep.mubr.bf16.mxu0 0
      %2574 = vmatmul.mubr.bf16.gmra.mxu0 %v1608
      %v2575 = vpop.f32.mrf.mxu0
      %v2576 = vadd.f32 %v2372, %v2575
      %v2577 = vpop.f32.mrf.mxu0
      %v2578 = vpop.f32.mrf.mxu0
      %v2579 = vadd.f32 %v2375, %v2578
      %v2580 = vpop.f32.mrf.mxu0
      %2581 = vmatprep.mubr.bf16.mxu0 0
      %2582 = vmatmul.mubr.bf16.gmra.mxu0 %v1611
      %v2583 = vpop.f32.mrf.mxu0
      %v2584 = vadd.f32 %v2380, %v2583
      %v2585 = vpop.f32.mrf.mxu0
      %v2586 = vpop.f32.mrf.mxu0
      %v2587 = vadd.f32 %v2383, %v2586
      %v2588 = vpop.f32.mrf.mxu0
      %2589 = vmatprep.mubr.bf16.mxu0 0
      %2590 = vmatmul.mubr.bf16.gmra.mxu0 %v1614
      %v2591 = vpop.f32.mrf.mxu0
      %v2592 = vadd.f32 %v2388, %v2591
      %v2593 = vpop.f32.mrf.mxu0
      %v2594 = vpop.f32.mrf.mxu0
      %v2595 = vadd.f32 %v2391, %v2594
      %v2596 = vpop.f32.mrf.mxu0
      %2597 = vmatprep.mubr.bf16.mxu0 0
      %2598 = vmatmul.mubr.bf16.gmra.mxu0 %v1617
      %v2599 = vpop.f32.mrf.mxu0
      %v2600 = vadd.f32 %v2396, %v2599
      %v2601 = vpop.f32.mrf.mxu0
      %v2602 = vpop.f32.mrf.mxu0
      %v2603 = vadd.f32 %v2399, %v2602
      %v2604 = vpop.f32.mrf.mxu0
      %2605 = vmatprep.mubr.bf16.mxu0 0
      %2606 = vmatmul.mubr.bf16.gmra.mxu0 %v1620
      %v2607 = vpop.f32.mrf.mxu0
      %v2608 = vadd.f32 %v2404, %v2607
      %v2609 = vpop.f32.mrf.mxu0
      %v2610 = vpop.f32.mrf.mxu0
      %v2611 = vadd.f32 %v2407, %v2610
      %v2612 = vpop.f32.mrf.mxu0
      %2613 = vmatprep.mubr.bf16.mxu0 0
      %2614 = vmatmul.mubr.bf16.gmra.mxu0 %v1623
      %v2615 = vpop.f32.mrf.mxu0
      %v2616 = vadd.f32 %v2412, %v2615
      %v2617 = vpop.f32.mrf.mxu0
      %v2618 = vpop.f32.mrf.mxu0
      %v2619 = vadd.f32 %v2415, %v2618
      %v2620 = vpop.f32.mrf.mxu0
      %2621 = vmatprep.mubr.bf16.mxu0 0
      %2622 = vmatmul.mubr.bf16.gmra.mxu0 %v1626
      %v2623 = vpop.f32.mrf.mxu0
      %v2624 = vadd.f32 %v2420, %v2623
      %v2625 = vpop.f32.mrf.mxu0
      %v2626 = vpop.f32.mrf.mxu0
      %v2627 = vadd.f32 %v2423, %v2626
      %v2628 = vpop.f32.mrf.mxu0
      %2629 = vmatprep.mubr.bf16.mxu0 0
      %2630 = vmatmul.mubr.bf16.gmra.mxu0 %v1629
      %v2631 = vpop.f32.mrf.mxu0
      %v2632 = vadd.f32 %v2428, %v2631
      %v2633 = vpop.f32.mrf.mxu0
      %v2634 = vpop.f32.mrf.mxu0
      %v2635 = vadd.f32 %v2431, %v2634
      %v2636 = vpop.f32.mrf.mxu0
      %2637 = vmatprep.mubr.bf16.mxu0 0
      %2638 = vmatmul.mubr.bf16.gmra.mxu0 %v1632
      %v2639 = vpop.f32.mrf.mxu0
      %v2640 = vadd.f32 %v2436, %v2639
      %v2641 = vpop.f32.mrf.mxu0
      %v2642 = vpop.f32.mrf.mxu0
      %v2643 = vadd.f32 %v2439, %v2642
      %v2644 = vpop.f32.mrf.mxu0
      %2645 = vdwg.mxu0
      %s2646 = scalar_lea.vmem %s295, 14
      %v2647 = vld [vmem:[%s2646] sm:$0x3]
      %v2649 = vsel %vm1366, %v2647, 0
      %2651 = vmatprep.subr.bf16.mxu0 0
      %2652 = vmatpush1.bf16.msra.mxu0 0
      %2653 = vmatprep.subr.bf16.mxu0 0
      %2654 = vmatpush1.bf16.msra.mxu0 0
      %2655 = vmatprep.subr.bf16.mxu0 0
      %2656 = vmatpush1.bf16.msra.mxu0 0
      %2657 = vmatprep.subr.bf16.mxu0 0
      %2658 = vmatpush1.bf16.msra.mxu0 0
      %2659 = vmatprep.subr.bf16.mxu0 0
      %2660 = vmatpush1.bf16.msra.mxu0 0
      %2661 = vmatprep.subr.bf16.mxu0 0
      %2662 = vmatpush1.bf16.msra.mxu0 0
      %2663 = vmatprep.subr.bf16.mxu0 0
      %2664 = vmatpush1.bf16.msra.mxu0 0
      %2665 = vmatprep.subr.bf16.mxu0 0
      %2666 = vmatpush1.bf16.msra.mxu0 %v2649
      %2667 = vmatprep.subr.bf16.mxu0 0
      %2668 = vmatpush2.bf16.msra.mxu0 0
      %2669 = vmatprep.subr.bf16.mxu0 0
      %2670 = vmatpush2.bf16.msra.mxu0 0
      %2671 = vmatprep.subr.bf16.mxu0 0
      %2672 = vmatpush2.bf16.msra.mxu0 0
      %2673 = vmatprep.subr.bf16.mxu0 0
      %2674 = vmatpush2.bf16.msra.mxu0 0
      %2675 = vmatprep.subr.bf16.mxu0 0
      %2676 = vmatpush2.bf16.msra.mxu0 0
      %2677 = vmatprep.subr.bf16.mxu0 0
      %2678 = vmatpush2.bf16.msra.mxu0 0
      %2679 = vmatprep.subr.bf16.mxu0 0
      %2680 = vmatpush2.bf16.msra.mxu0 0
      %2681 = vmatprep.subr.bf16.mxu0 0
      %2682 = vmatpush2.bf16.msra.mxu0 0
      %2683 = vmatprep.mubr.bf16.mxu0 0
      %2684 = vmatmul.mubr.bf16.gmra.mxu0 %v1841
      %v2685 = vpop.f32.mrf.mxu0
      %v2686 = vadd.f32 0.0, %v2685
      %v2687 = vpop.f32.mrf.mxu0
      %v2688 = vpop.f32.mrf.mxu0
      %v2689 = vadd.f32 0.0, %v2688
      %v2690 = vpop.f32.mrf.mxu0
      %2691 = vmatprep.mubr.bf16.mxu0 0
      %2692 = vmatmul.mubr.bf16.gmra.mxu0 %v1844
      %v2693 = vpop.f32.mrf.mxu0
      %v2694 = vadd.f32 0.0, %v2693
      %v2695 = vpop.f32.mrf.mxu0
      %v2696 = vpop.f32.mrf.mxu0
      %v2697 = vadd.f32 0.0, %v2696
      %v2698 = vpop.f32.mrf.mxu0
      %2699 = vmatprep.mubr.bf16.mxu0 0
      %2700 = vmatmul.mubr.bf16.gmra.mxu0 %v1847
      %v2701 = vpop.f32.mrf.mxu0
      %v2702 = vadd.f32 0.0, %v2701
      %v2703 = vpop.f32.mrf.mxu0
      %v2704 = vpop.f32.mrf.mxu0
      %v2705 = vadd.f32 0.0, %v2704
      %v2706 = vpop.f32.mrf.mxu0
      %2707 = vmatprep.mubr.bf16.mxu0 0
      %2708 = vmatmul.mubr.bf16.gmra.mxu0 %v1850
      %v2709 = vpop.f32.mrf.mxu0
      %v2710 = vadd.f32 0.0, %v2709
      %v2711 = vpop.f32.mrf.mxu0
      %v2712 = vpop.f32.mrf.mxu0
      %v2713 = vadd.f32 0.0, %v2712
      %v2714 = vpop.f32.mrf.mxu0
      %2715 = vmatprep.mubr.bf16.mxu0 0
      %2716 = vmatmul.mubr.bf16.gmra.mxu0 %v1853
      %v2717 = vpop.f32.mrf.mxu0
      %v2718 = vadd.f32 0.0, %v2717
      %v2719 = vpop.f32.mrf.mxu0
      %v2720 = vpop.f32.mrf.mxu0
      %v2721 = vadd.f32 0.0, %v2720
      %v2722 = vpop.f32.mrf.mxu0
      %2723 = vmatprep.mubr.bf16.mxu0 0
      %2724 = vmatmul.mubr.bf16.gmra.mxu0 %v1856
      %v2725 = vpop.f32.mrf.mxu0
      %v2726 = vadd.f32 0.0, %v2725
      %v2727 = vpop.f32.mrf.mxu0
      %v2728 = vpop.f32.mrf.mxu0
      %v2729 = vadd.f32 0.0, %v2728
      %v2730 = vpop.f32.mrf.mxu0
      %2731 = vmatprep.mubr.bf16.mxu0 0
      %2732 = vmatmul.mubr.bf16.gmra.mxu0 %v1859
      %v2733 = vpop.f32.mrf.mxu0
      %v2734 = vadd.f32 0.0, %v2733
      %v2735 = vpop.f32.mrf.mxu0
      %v2736 = vpop.f32.mrf.mxu0
      %v2737 = vadd.f32 0.0, %v2736
      %v2738 = vpop.f32.mrf.mxu0
      %2739 = vmatprep.mubr.bf16.mxu0 0
      %2740 = vmatmul.mubr.bf16.gmra.mxu0 %v1862
      %v2741 = vpop.f32.mrf.mxu0
      %v2742 = vadd.f32 0.0, %v2741
      %v2743 = vpop.f32.mrf.mxu0
      %v2744 = vpop.f32.mrf.mxu0
      %v2745 = vadd.f32 0.0, %v2744
      %v2746 = vpop.f32.mrf.mxu0
      %2747 = vmatprep.mubr.bf16.mxu0 0
      %2748 = vmatmul.mubr.bf16.gmra.mxu0 %v1865
      %v2749 = vpop.f32.mrf.mxu0
      %v2750 = vadd.f32 0.0, %v2749
      %v2751 = vpop.f32.mrf.mxu0
      %v2752 = vpop.f32.mrf.mxu0
      %v2753 = vadd.f32 0.0, %v2752
      %v2754 = vpop.f32.mrf.mxu0
      %2755 = vmatprep.mubr.bf16.mxu0 0
      %2756 = vmatmul.mubr.bf16.gmra.mxu0 %v1868
      %v2757 = vpop.f32.mrf.mxu0
      %v2758 = vadd.f32 0.0, %v2757
      %v2759 = vpop.f32.mrf.mxu0
      %v2760 = vpop.f32.mrf.mxu0
      %v2761 = vadd.f32 0.0, %v2760
      %v2762 = vpop.f32.mrf.mxu0
      %2763 = vmatprep.mubr.bf16.mxu0 0
      %2764 = vmatmul.mubr.bf16.gmra.mxu0 %v1871
      %v2765 = vpop.f32.mrf.mxu0
      %v2766 = vadd.f32 0.0, %v2765
      %v2767 = vpop.f32.mrf.mxu0
      %v2768 = vpop.f32.mrf.mxu0
      %v2769 = vadd.f32 0.0, %v2768
      %v2770 = vpop.f32.mrf.mxu0
      %2771 = vmatprep.mubr.bf16.mxu0 0
      %2772 = vmatmul.mubr.bf16.gmra.mxu0 %v1874
      %v2773 = vpop.f32.mrf.mxu0
      %v2774 = vadd.f32 0.0, %v2773
      %v2775 = vpop.f32.mrf.mxu0
      %v2776 = vpop.f32.mrf.mxu0
      %v2777 = vadd.f32 0.0, %v2776
      %v2778 = vpop.f32.mrf.mxu0
      %2779 = vmatprep.mubr.bf16.mxu0 0
      %2780 = vmatmul.mubr.bf16.gmra.mxu0 %v1877
      %v2781 = vpop.f32.mrf.mxu0
      %v2782 = vadd.f32 0.0, %v2781
      %v2783 = vpop.f32.mrf.mxu0
      %v2784 = vpop.f32.mrf.mxu0
      %v2785 = vadd.f32 0.0, %v2784
      %v2786 = vpop.f32.mrf.mxu0
      %2787 = vmatprep.mubr.bf16.mxu0 0
      %2788 = vmatmul.mubr.bf16.gmra.mxu0 %v1880
      %v2789 = vpop.f32.mrf.mxu0
      %v2790 = vadd.f32 0.0, %v2789
      %v2791 = vpop.f32.mrf.mxu0
      %v2792 = vpop.f32.mrf.mxu0
      %v2793 = vadd.f32 0.0, %v2792
      %v2794 = vpop.f32.mrf.mxu0
      %2795 = vmatprep.mubr.bf16.mxu0 0
      %2796 = vmatmul.mubr.bf16.gmra.mxu0 %v1883
      %v2797 = vpop.f32.mrf.mxu0
      %v2798 = vadd.f32 0.0, %v2797
      %v2799 = vpop.f32.mrf.mxu0
      %v2800 = vpop.f32.mrf.mxu0
      %v2801 = vadd.f32 0.0, %v2800
      %v2802 = vpop.f32.mrf.mxu0
      %2803 = vmatprep.mubr.bf16.mxu0 0
      %2804 = vmatmul.mubr.bf16.gmra.mxu0 %v1886
      %v2805 = vpop.f32.mrf.mxu0
      %v2806 = vadd.f32 0.0, %v2805
      %v2807 = vpop.f32.mrf.mxu0
      %v2808 = vpop.f32.mrf.mxu0
      %v2809 = vadd.f32 0.0, %v2808
      %v2810 = vpop.f32.mrf.mxu0
      %2811 = vmatprep.mubr.bf16.mxu0 0
      %2812 = vmatmul.mubr.bf16.gmra.mxu0 %v1889
      %v2813 = vpop.f32.mrf.mxu0
      %v2814 = vadd.f32 0.0, %v2813
      %v2815 = vpop.f32.mrf.mxu0
      %v2816 = vpop.f32.mrf.mxu0
      %v2817 = vadd.f32 0.0, %v2816
      %v2818 = vpop.f32.mrf.mxu0
      %2819 = vmatprep.mubr.bf16.mxu0 0
      %2820 = vmatmul.mubr.bf16.gmra.mxu0 %v1892
      %v2821 = vpop.f32.mrf.mxu0
      %v2822 = vadd.f32 0.0, %v2821
      %v2823 = vpop.f32.mrf.mxu0
      %v2824 = vpop.f32.mrf.mxu0
      %v2825 = vadd.f32 0.0, %v2824
      %v2826 = vpop.f32.mrf.mxu0
      %2827 = vmatprep.mubr.bf16.mxu0 0
      %2828 = vmatmul.mubr.bf16.gmra.mxu0 %v1895
      %v2829 = vpop.f32.mrf.mxu0
      %v2830 = vadd.f32 0.0, %v2829
      %v2831 = vpop.f32.mrf.mxu0
      %v2832 = vpop.f32.mrf.mxu0
      %v2833 = vadd.f32 0.0, %v2832
      %v2834 = vpop.f32.mrf.mxu0
      %2835 = vmatprep.mubr.bf16.mxu0 0
      %2836 = vmatmul.mubr.bf16.gmra.mxu0 %v1898
      %v2837 = vpop.f32.mrf.mxu0
      %v2838 = vadd.f32 0.0, %v2837
      %v2839 = vpop.f32.mrf.mxu0
      %v2840 = vpop.f32.mrf.mxu0
      %v2841 = vadd.f32 0.0, %v2840
      %v2842 = vpop.f32.mrf.mxu0
      %2843 = vmatprep.mubr.bf16.mxu0 0
      %2844 = vmatmul.mubr.bf16.gmra.mxu0 %v1901
      %v2845 = vpop.f32.mrf.mxu0
      %v2846 = vadd.f32 0.0, %v2845
      %v2847 = vpop.f32.mrf.mxu0
      %v2848 = vpop.f32.mrf.mxu0
      %v2849 = vadd.f32 0.0, %v2848
      %v2850 = vpop.f32.mrf.mxu0
      %2851 = vdwg.mxu0
      %v2852 = vadd.f32 %v2480, %v2686
      %v2853 = vadd.f32 %v2483, %v2689
      %v2854 = vadd.f32 %v2488, %v2694
      %v2855 = vadd.f32 %v2491, %v2697
      %v2856 = vadd.f32 %v2496, %v2702
      %v2857 = vadd.f32 %v2499, %v2705
      %v2858 = vadd.f32 %v2504, %v2710
      %v2859 = vadd.f32 %v2507, %v2713
      %v2860 = vadd.f32 %v2512, %v2718
      %v2861 = vadd.f32 %v2515, %v2721
      %v2862 = vadd.f32 %v2520, %v2726
      %v2863 = vadd.f32 %v2523, %v2729
      %v2864 = vadd.f32 %v2528, %v2734
      %v2865 = vadd.f32 %v2531, %v2737
      %v2866 = vadd.f32 %v2536, %v2742
      %v2867 = vadd.f32 %v2539, %v2745
      %v2868 = vadd.f32 %v2544, %v2750
      %v2869 = vadd.f32 %v2547, %v2753
      %v2870 = vadd.f32 %v2552, %v2758
      %v2871 = vadd.f32 %v2555, %v2761
      %v2872 = vadd.f32 %v2560, %v2766
      %v2873 = vadd.f32 %v2563, %v2769
      %v2874 = vadd.f32 %v2568, %v2774
      %v2875 = vadd.f32 %v2571, %v2777
      %v2876 = vadd.f32 %v2576, %v2782
      %v2877 = vadd.f32 %v2579, %v2785
      %v2878 = vadd.f32 %v2584, %v2790
      %v2879 = vadd.f32 %v2587, %v2793
      %v2880 = vadd.f32 %v2592, %v2798
      %v2881 = vadd.f32 %v2595, %v2801
      %v2882 = vadd.f32 %v2600, %v2806
      %v2883 = vadd.f32 %v2603, %v2809
      %v2884 = vadd.f32 %v2608, %v2814
      %v2885 = vadd.f32 %v2611, %v2817
      %v2886 = vadd.f32 %v2616, %v2822
      %v2887 = vadd.f32 %v2619, %v2825
      %v2888 = vadd.f32 %v2624, %v2830
      %v2889 = vadd.f32 %v2627, %v2833
      %v2890 = vadd.f32 %v2632, %v2838
      %v2891 = vadd.f32 %v2635, %v2841
      %v2892 = vadd.f32 %v2640, %v2846
      %v2893 = vadd.f32 %v2643, %v2849
      %v2894 = vadd.f32 %v2233, %v2852
      %v2895 = vadd.f32 %v2232, %v2853
      %v2896 = vadd.f32 %v2231, %v2854
      %v2897 = vadd.f32 %v2230, %v2855
      %v2898 = vadd.f32 %v2229, %v2856
      %v2899 = vadd.f32 %v2228, %v2857
      %v2900 = vadd.f32 %v2227, %v2858
      %v2901 = vadd.f32 %v2226, %v2859
      %v2902 = vadd.f32 %v2225, %v2860
      %v2903 = vadd.f32 %v2224, %v2861
      %v2904 = vadd.f32 %v2223, %v2862
      %v2905 = vadd.f32 %v2222, %v2863
      %v2906 = vadd.f32 %v2221, %v2864
      %v2907 = vadd.f32 %v2220, %v2865
      %v2908 = vadd.f32 %v2219, %v2866
      %v2909 = vadd.f32 %v2218, %v2867
      %v2910 = vadd.f32 %v2217, %v2868
      %v2911 = vadd.f32 %v2216, %v2869
      %v2912 = vadd.f32 %v2215, %v2870
      %v2913 = vadd.f32 %v2214, %v2871
      %v2914 = vadd.f32 %v2213, %v2872
      %v2915 = vadd.f32 %v2212, %v2873
      %v2916 = vadd.f32 %v2211, %v2874
      %v2917 = vadd.f32 %v2210, %v2875
      %v2918 = vadd.f32 %v2209, %v2876
      %v2919 = vadd.f32 %v2208, %v2877
      %v2920 = vadd.f32 %v2207, %v2878
      %v2921 = vadd.f32 %v2206, %v2879
      %v2922 = vadd.f32 %v2205, %v2880
      %v2923 = vadd.f32 %v2204, %v2881
      %v2924 = vadd.f32 %v2203, %v2882
      %v2925 = vadd.f32 %v2202, %v2883
      %v2926 = vadd.f32 %v2201, %v2884
      %v2927 = vadd.f32 %v2200, %v2885
      %v2928 = vadd.f32 %v2199, %v2886
      %v2929 = vadd.f32 %v2198, %v2887
      %v2930 = vadd.f32 %v2197, %v2888
      %v2931 = vadd.f32 %v2196, %v2889
      %v2932 = vadd.f32 %v2195, %v2890
      %v2933 = vadd.f32 %v2194, %v2891
      %v2934 = vadd.f32 %v2193, %v2892
      %v2935 = vadd.f32 %v2192, %v2893
      %s2936 = scalar_lea.vmem %s295, 4
      %v2937 = vld [vmem:[%s2936] sm:$0x3]
      %s2938 = scalar_lea.vmem %s295, 10
      %v2939 = vld [vmem:[%s2938] sm:$0x3]
      %v2941 = vsel %vm1366, %v2939, 0
      %2943 = vmatprep.subr.bf16.mxu0 0
      %2944 = vmatpush1.bf16.msra.mxu0 0
      %2945 = vmatprep.subr.bf16.mxu0 0
      %2946 = vmatpush1.bf16.msra.mxu0 0
      %2947 = vmatprep.subr.bf16.mxu0 0
      %2948 = vmatpush1.bf16.msra.mxu0 0
      %2949 = vmatprep.subr.bf16.mxu0 0
      %2950 = vmatpush1.bf16.msra.mxu0 0
      %2951 = vmatprep.subr.bf16.mxu0 0
      %2952 = vmatpush1.bf16.msra.mxu0 0
      %2953 = vmatprep.subr.bf16.mxu0 0
      %2954 = vmatpush1.bf16.msra.mxu0 0
      %2955 = vmatprep.subr.bf16.mxu0 0
      %2956 = vmatpush1.bf16.msra.mxu0 0
      %2957 = vmatprep.subr.bf16.mxu0 0
      %2958 = vmatpush1.bf16.msra.mxu0 %v2941
      %2959 = vmatprep.subr.bf16.mxu0 0
      %2960 = vmatpush2.bf16.msra.mxu0 0
      %2961 = vmatprep.subr.bf16.mxu0 0
      %2962 = vmatpush2.bf16.msra.mxu0 0
      %2963 = vmatprep.subr.bf16.mxu0 0
      %2964 = vmatpush2.bf16.msra.mxu0 0
      %2965 = vmatprep.subr.bf16.mxu0 0
      %2966 = vmatpush2.bf16.msra.mxu0 0
      %2967 = vmatprep.subr.bf16.mxu0 0
      %2968 = vmatpush2.bf16.msra.mxu0 0
      %2969 = vmatprep.subr.bf16.mxu0 0
      %2970 = vmatpush2.bf16.msra.mxu0 0
      %2971 = vmatprep.subr.bf16.mxu0 0
      %2972 = vmatpush2.bf16.msra.mxu0 0
      %2973 = vmatprep.subr.bf16.mxu0 0
      %2974 = vmatpush2.bf16.msra.mxu0 0
      %2975 = vmatprep.mubr.bf16.mxu0 0
      %2976 = vmatmul.mubr.bf16.gmra.mxu0 %v1304
      %v2977 = vpop.f32.mrf.mxu0
      %v2978 = vadd.f32 0.0, %v2977
      %v2979 = vpop.f32.mrf.mxu0
      %v2980 = vpop.f32.mrf.mxu0
      %v2981 = vadd.f32 0.0, %v2980
      %v2982 = vpop.f32.mrf.mxu0
      %2983 = vmatprep.mubr.bf16.mxu0 0
      %2984 = vmatmul.mubr.bf16.gmra.mxu0 %v1307
      %v2985 = vpop.f32.mrf.mxu0
      %v2986 = vadd.f32 0.0, %v2985
      %v2987 = vpop.f32.mrf.mxu0
      %v2988 = vpop.f32.mrf.mxu0
      %v2989 = vadd.f32 0.0, %v2988
      %v2990 = vpop.f32.mrf.mxu0
      %2991 = vmatprep.mubr.bf16.mxu0 0
      %2992 = vmatmul.mubr.bf16.gmra.mxu0 %v1310
      %v2993 = vpop.f32.mrf.mxu0
      %v2994 = vadd.f32 0.0, %v2993
      %v2995 = vpop.f32.mrf.mxu0
      %v2996 = vpop.f32.mrf.mxu0
      %v2997 = vadd.f32 0.0, %v2996
      %v2998 = vpop.f32.mrf.mxu0
      %2999 = vmatprep.mubr.bf16.mxu0 0
      %3000 = vmatmul.mubr.bf16.gmra.mxu0 %v1313
      %v3001 = vpop.f32.mrf.mxu0
      %v3002 = vadd.f32 0.0, %v3001
      %v3003 = vpop.f32.mrf.mxu0
      %v3004 = vpop.f32.mrf.mxu0
      %v3005 = vadd.f32 0.0, %v3004
      %v3006 = vpop.f32.mrf.mxu0
      %3007 = vmatprep.mubr.bf16.mxu0 0
      %3008 = vmatmul.mubr.bf16.gmra.mxu0 %v1316
      %v3009 = vpop.f32.mrf.mxu0
      %v3010 = vadd.f32 0.0, %v3009
      %v3011 = vpop.f32.mrf.mxu0
      %v3012 = vpop.f32.mrf.mxu0
      %v3013 = vadd.f32 0.0, %v3012
      %v3014 = vpop.f32.mrf.mxu0
      %3015 = vmatprep.mubr.bf16.mxu0 0
      %3016 = vmatmul.mubr.bf16.gmra.mxu0 %v1319
      %v3017 = vpop.f32.mrf.mxu0
      %v3018 = vadd.f32 0.0, %v3017
      %v3019 = vpop.f32.mrf.mxu0
      %v3020 = vpop.f32.mrf.mxu0
      %v3021 = vadd.f32 0.0, %v3020
      %v3022 = vpop.f32.mrf.mxu0
      %3023 = vmatprep.mubr.bf16.mxu0 0
      %3024 = vmatmul.mubr.bf16.gmra.mxu0 %v1322
      %v3025 = vpop.f32.mrf.mxu0
      %v3026 = vadd.f32 0.0, %v3025
      %v3027 = vpop.f32.mrf.mxu0
      %v3028 = vpop.f32.mrf.mxu0
      %v3029 = vadd.f32 0.0, %v3028
      %v3030 = vpop.f32.mrf.mxu0
      %3031 = vmatprep.mubr.bf16.mxu0 0
      %3032 = vmatmul.mubr.bf16.gmra.mxu0 %v1325
      %v3033 = vpop.f32.mrf.mxu0
      %v3034 = vadd.f32 0.0, %v3033
      %v3035 = vpop.f32.mrf.mxu0
      %v3036 = vpop.f32.mrf.mxu0
      %v3037 = vadd.f32 0.0, %v3036
      %v3038 = vpop.f32.mrf.mxu0
      %3039 = vmatprep.mubr.bf16.mxu0 0
      %3040 = vmatmul.mubr.bf16.gmra.mxu0 %v1328
      %v3041 = vpop.f32.mrf.mxu0
      %v3042 = vadd.f32 0.0, %v3041
      %v3043 = vpop.f32.mrf.mxu0
      %v3044 = vpop.f32.mrf.mxu0
      %v3045 = vadd.f32 0.0, %v3044
      %v3046 = vpop.f32.mrf.mxu0
      %3047 = vmatprep.mubr.bf16.mxu0 0
      %3048 = vmatmul.mubr.bf16.gmra.mxu0 %v1331
      %v3049 = vpop.f32.mrf.mxu0
      %v3050 = vadd.f32 0.0, %v3049
      %v3051 = vpop.f32.mrf.mxu0
      %v3052 = vpop.f32.mrf.mxu0
      %v3053 = vadd.f32 0.0, %v3052
      %v3054 = vpop.f32.mrf.mxu0
      %3055 = vmatprep.mubr.bf16.mxu0 0
      %3056 = vmatmul.mubr.bf16.gmra.mxu0 %v1334
      %v3057 = vpop.f32.mrf.mxu0
      %v3058 = vadd.f32 0.0, %v3057
      %v3059 = vpop.f32.mrf.mxu0
      %v3060 = vpop.f32.mrf.mxu0
      %v3061 = vadd.f32 0.0, %v3060
      %v3062 = vpop.f32.mrf.mxu0
      %3063 = vmatprep.mubr.bf16.mxu0 0
      %3064 = vmatmul.mubr.bf16.gmra.mxu0 %v1337
      %v3065 = vpop.f32.mrf.mxu0
      %v3066 = vadd.f32 0.0, %v3065
      %v3067 = vpop.f32.mrf.mxu0
      %v3068 = vpop.f32.mrf.mxu0
      %v3069 = vadd.f32 0.0, %v3068
      %v3070 = vpop.f32.mrf.mxu0
      %3071 = vmatprep.mubr.bf16.mxu0 0
      %3072 = vmatmul.mubr.bf16.gmra.mxu0 %v1340
      %v3073 = vpop.f32.mrf.mxu0
      %v3074 = vadd.f32 0.0, %v3073
      %v3075 = vpop.f32.mrf.mxu0
      %v3076 = vpop.f32.mrf.mxu0
      %v3077 = vadd.f32 0.0, %v3076
      %v3078 = vpop.f32.mrf.mxu0
      %3079 = vmatprep.mubr.bf16.mxu0 0
      %3080 = vmatmul.mubr.bf16.gmra.mxu0 %v1343
      %v3081 = vpop.f32.mrf.mxu0
      %v3082 = vadd.f32 0.0, %v3081
      %v3083 = vpop.f32.mrf.mxu0
      %v3084 = vpop.f32.mrf.mxu0
      %v3085 = vadd.f32 0.0, %v3084
      %v3086 = vpop.f32.mrf.mxu0
      %3087 = vmatprep.mubr.bf16.mxu0 0
      %3088 = vmatmul.mubr.bf16.gmra.mxu0 %v1346
      %v3089 = vpop.f32.mrf.mxu0
      %v3090 = vadd.f32 0.0, %v3089
      %v3091 = vpop.f32.mrf.mxu0
      %v3092 = vpop.f32.mrf.mxu0
      %v3093 = vadd.f32 0.0, %v3092
      %v3094 = vpop.f32.mrf.mxu0
      %3095 = vmatprep.mubr.bf16.mxu0 0
      %3096 = vmatmul.mubr.bf16.gmra.mxu0 %v1349
      %v3097 = vpop.f32.mrf.mxu0
      %v3098 = vadd.f32 0.0, %v3097
      %v3099 = vpop.f32.mrf.mxu0
      %v3100 = vpop.f32.mrf.mxu0
      %v3101 = vadd.f32 0.0, %v3100
      %v3102 = vpop.f32.mrf.mxu0
      %3103 = vmatprep.mubr.bf16.mxu0 0
      %3104 = vmatmul.mubr.bf16.gmra.mxu0 %v1352
      %v3105 = vpop.f32.mrf.mxu0
      %v3106 = vadd.f32 0.0, %v3105
      %v3107 = vpop.f32.mrf.mxu0
      %v3108 = vpop.f32.mrf.mxu0
      %v3109 = vadd.f32 0.0, %v3108
      %v3110 = vpop.f32.mrf.mxu0
      %3111 = vmatprep.mubr.bf16.mxu0 0
      %3112 = vmatmul.mubr.bf16.gmra.mxu0 %v1355
      %v3113 = vpop.f32.mrf.mxu0
      %v3114 = vadd.f32 0.0, %v3113
      %v3115 = vpop.f32.mrf.mxu0
      %v3116 = vpop.f32.mrf.mxu0
      %v3117 = vadd.f32 0.0, %v3116
      %v3118 = vpop.f32.mrf.mxu0
      %3119 = vmatprep.mubr.bf16.mxu0 0
      %3120 = vmatmul.mubr.bf16.gmra.mxu0 %v1358
      %v3121 = vpop.f32.mrf.mxu0
      %v3122 = vadd.f32 0.0, %v3121
      %v3123 = vpop.f32.mrf.mxu0
      %v3124 = vpop.f32.mrf.mxu0
      %v3125 = vadd.f32 0.0, %v3124
      %v3126 = vpop.f32.mrf.mxu0
      %3127 = vmatprep.mubr.bf16.mxu0 0
      %3128 = vmatmul.mubr.bf16.gmra.mxu0 %v1361
      %v3129 = vpop.f32.mrf.mxu0
      %v3130 = vadd.f32 0.0, %v3129
      %v3131 = vpop.f32.mrf.mxu0
      %v3132 = vpop.f32.mrf.mxu0
      %v3133 = vadd.f32 0.0, %v3132
      %v3134 = vpop.f32.mrf.mxu0
      %3135 = vmatprep.mubr.bf16.mxu0 0
      %3136 = vmatmul.mubr.bf16.gmra.mxu0 %v1364
      %v3137 = vpop.f32.mrf.mxu0
      %v3138 = vadd.f32 0.0, %v3137
      %v3139 = vpop.f32.mrf.mxu0
      %v3140 = vpop.f32.mrf.mxu0
      %v3141 = vadd.f32 0.0, %v3140
      %v3142 = vpop.f32.mrf.mxu0
      %3143 = vdwg.mxu0
      %v3145 = vsel %vm1366, %v2937, 0
      %3147 = vmatprep.subr.bf16.mxu0 0
      %3148 = vmatpush1.bf16.msra.mxu0 0
      %3149 = vmatprep.subr.bf16.mxu0 0
      %3150 = vmatpush1.bf16.msra.mxu0 0
      %3151 = vmatprep.subr.bf16.mxu0 0
      %3152 = vmatpush1.bf16.msra.mxu0 0
      %3153 = vmatprep.subr.bf16.mxu0 0
      %3154 = vmatpush1.bf16.msra.mxu0 0
      %3155 = vmatprep.subr.bf16.mxu0 0
      %3156 = vmatpush1.bf16.msra.mxu0 0
      %3157 = vmatprep.subr.bf16.mxu0 0
      %3158 = vmatpush1.bf16.msra.mxu0 0
      %3159 = vmatprep.subr.bf16.mxu0 0
      %3160 = vmatpush1.bf16.msra.mxu0 0
      %3161 = vmatprep.subr.bf16.mxu0 0
      %3162 = vmatpush1.bf16.msra.mxu0 %v3145
      %3163 = vmatprep.subr.bf16.mxu0 0
      %3164 = vmatpush2.bf16.msra.mxu0 0
      %3165 = vmatprep.subr.bf16.mxu0 0
      %3166 = vmatpush2.bf16.msra.mxu0 0
      %3167 = vmatprep.subr.bf16.mxu0 0
      %3168 = vmatpush2.bf16.msra.mxu0 0
      %3169 = vmatprep.subr.bf16.mxu0 0
      %3170 = vmatpush2.bf16.msra.mxu0 0
      %3171 = vmatprep.subr.bf16.mxu0 0
      %3172 = vmatpush2.bf16.msra.mxu0 0
      %3173 = vmatprep.subr.bf16.mxu0 0
      %3174 = vmatpush2.bf16.msra.mxu0 0
      %3175 = vmatprep.subr.bf16.mxu0 0
      %3176 = vmatpush2.bf16.msra.mxu0 0
      %3177 = vmatprep.subr.bf16.mxu0 0
      %3178 = vmatpush2.bf16.msra.mxu0 0
      %3179 = vmatprep.mubr.bf16.mxu0 0
      %3180 = vmatmul.mubr.bf16.gmra.mxu0 %v1572
      %v3181 = vpop.f32.mrf.mxu0
      %v3182 = vadd.f32 %v2978, %v3181
      %v3183 = vpop.f32.mrf.mxu0
      %v3184 = vpop.f32.mrf.mxu0
      %v3185 = vadd.f32 %v2981, %v3184
      %v3186 = vpop.f32.mrf.mxu0
      %3187 = vmatprep.mubr.bf16.mxu0 0
      %3188 = vmatmul.mubr.bf16.gmra.mxu0 %v1575
      %v3189 = vpop.f32.mrf.mxu0
      %v3190 = vadd.f32 %v2986, %v3189
      %v3191 = vpop.f32.mrf.mxu0
      %v3192 = vpop.f32.mrf.mxu0
      %v3193 = vadd.f32 %v2989, %v3192
      %v3194 = vpop.f32.mrf.mxu0
      %3195 = vmatprep.mubr.bf16.mxu0 0
      %3196 = vmatmul.mubr.bf16.gmra.mxu0 %v1578
      %v3197 = vpop.f32.mrf.mxu0
      %v3198 = vadd.f32 %v2994, %v3197
      %v3199 = vpop.f32.mrf.mxu0
      %v3200 = vpop.f32.mrf.mxu0
      %v3201 = vadd.f32 %v2997, %v3200
      %v3202 = vpop.f32.mrf.mxu0
      %3203 = vmatprep.mubr.bf16.mxu0 0
      %3204 = vmatmul.mubr.bf16.gmra.mxu0 %v1581
      %v3205 = vpop.f32.mrf.mxu0
      %v3206 = vadd.f32 %v3002, %v3205
      %v3207 = vpop.f32.mrf.mxu0
      %v3208 = vpop.f32.mrf.mxu0
      %v3209 = vadd.f32 %v3005, %v3208
      %v3210 = vpop.f32.mrf.mxu0
      %3211 = vmatprep.mubr.bf16.mxu0 0
      %3212 = vmatmul.mubr.bf16.gmra.mxu0 %v1584
      %v3213 = vpop.f32.mrf.mxu0
      %v3214 = vadd.f32 %v3010, %v3213
      %v3215 = vpop.f32.mrf.mxu0
      %v3216 = vpop.f32.mrf.mxu0
      %v3217 = vadd.f32 %v3013, %v3216
      %v3218 = vpop.f32.mrf.mxu0
      %3219 = vmatprep.mubr.bf16.mxu0 0
      %3220 = vmatmul.mubr.bf16.gmra.mxu0 %v1587
      %v3221 = vpop.f32.mrf.mxu0
      %v3222 = vadd.f32 %v3018, %v3221
      %v3223 = vpop.f32.mrf.mxu0
      %v3224 = vpop.f32.mrf.mxu0
      %v3225 = vadd.f32 %v3021, %v3224
      %v3226 = vpop.f32.mrf.mxu0
      %3227 = vmatprep.mubr.bf16.mxu0 0
      %3228 = vmatmul.mubr.bf16.gmra.mxu0 %v1590
      %v3229 = vpop.f32.mrf.mxu0
      %v3230 = vadd.f32 %v3026, %v3229
      %v3231 = vpop.f32.mrf.mxu0
      %v3232 = vpop.f32.mrf.mxu0
      %v3233 = vadd.f32 %v3029, %v3232
      %v3234 = vpop.f32.mrf.mxu0
      %3235 = vmatprep.mubr.bf16.mxu0 0
      %3236 = vmatmul.mubr.bf16.gmra.mxu0 %v1593
      %v3237 = vpop.f32.mrf.mxu0
      %v3238 = vadd.f32 %v3034, %v3237
      %v3239 = vpop.f32.mrf.mxu0
      %v3240 = vpop.f32.mrf.mxu0
      %v3241 = vadd.f32 %v3037, %v3240
      %v3242 = vpop.f32.mrf.mxu0
      %3243 = vmatprep.mubr.bf16.mxu0 0
      %3244 = vmatmul.mubr.bf16.gmra.mxu0 %v1596
      %v3245 = vpop.f32.mrf.mxu0
      %v3246 = vadd.f32 %v3042, %v3245
      %v3247 = vpop.f32.mrf.mxu0
      %v3248 = vpop.f32.mrf.mxu0
      %v3249 = vadd.f32 %v3045, %v3248
      %v3250 = vpop.f32.mrf.mxu0
      %3251 = vmatprep.mubr.bf16.mxu0 0
      %3252 = vmatmul.mubr.bf16.gmra.mxu0 %v1599
      %v3253 = vpop.f32.mrf.mxu0
      %v3254 = vadd.f32 %v3050, %v3253
      %v3255 = vpop.f32.mrf.mxu0
      %v3256 = vpop.f32.mrf.mxu0
      %v3257 = vadd.f32 %v3053, %v3256
      %v3258 = vpop.f32.mrf.mxu0
      %3259 = vmatprep.mubr.bf16.mxu0 0
      %3260 = vmatmul.mubr.bf16.gmra.mxu0 %v1602
      %v3261 = vpop.f32.mrf.mxu0
      %v3262 = vadd.f32 %v3058, %v3261
      %v3263 = vpop.f32.mrf.mxu0
      %v3264 = vpop.f32.mrf.mxu0
      %v3265 = vadd.f32 %v3061, %v3264
      %v3266 = vpop.f32.mrf.mxu0
      %3267 = vmatprep.mubr.bf16.mxu0 0
      %3268 = vmatmul.mubr.bf16.gmra.mxu0 %v1605
      %v3269 = vpop.f32.mrf.mxu0
      %v3270 = vadd.f32 %v3066, %v3269
      %v3271 = vpop.f32.mrf.mxu0
      %v3272 = vpop.f32.mrf.mxu0
      %v3273 = vadd.f32 %v3069, %v3272
      %v3274 = vpop.f32.mrf.mxu0
      %3275 = vmatprep.mubr.bf16.mxu0 0
      %3276 = vmatmul.mubr.bf16.gmra.mxu0 %v1608
      %v3277 = vpop.f32.mrf.mxu0
      %v3278 = vadd.f32 %v3074, %v3277
      %v3279 = vpop.f32.mrf.mxu0
      %v3280 = vpop.f32.mrf.mxu0
      %v3281 = vadd.f32 %v3077, %v3280
      %v3282 = vpop.f32.mrf.mxu0
      %3283 = vmatprep.mubr.bf16.mxu0 0
      %3284 = vmatmul.mubr.bf16.gmra.mxu0 %v1611
      %v3285 = vpop.f32.mrf.mxu0
      %v3286 = vadd.f32 %v3082, %v3285
      %v3287 = vpop.f32.mrf.mxu0
      %v3288 = vpop.f32.mrf.mxu0
      %v3289 = vadd.f32 %v3085, %v3288
      %v3290 = vpop.f32.mrf.mxu0
      %3291 = vmatprep.mubr.bf16.mxu0 0
      %3292 = vmatmul.mubr.bf16.gmra.mxu0 %v1614
      %v3293 = vpop.f32.mrf.mxu0
      %v3294 = vadd.f32 %v3090, %v3293
      %v3295 = vpop.f32.mrf.mxu0
      %v3296 = vpop.f32.mrf.mxu0
      %v3297 = vadd.f32 %v3093, %v3296
      %v3298 = vpop.f32.mrf.mxu0
      %3299 = vmatprep.mubr.bf16.mxu0 0
      %3300 = vmatmul.mubr.bf16.gmra.mxu0 %v1617
      %v3301 = vpop.f32.mrf.mxu0
      %v3302 = vadd.f32 %v3098, %v3301
      %v3303 = vpop.f32.mrf.mxu0
      %v3304 = vpop.f32.mrf.mxu0
      %v3305 = vadd.f32 %v3101, %v3304
      %v3306 = vpop.f32.mrf.mxu0
      %3307 = vmatprep.mubr.bf16.mxu0 0
      %3308 = vmatmul.mubr.bf16.gmra.mxu0 %v1620
      %v3309 = vpop.f32.mrf.mxu0
      %v3310 = vadd.f32 %v3106, %v3309
      %v3311 = vpop.f32.mrf.mxu0
      %v3312 = vpop.f32.mrf.mxu0
      %v3313 = vadd.f32 %v3109, %v3312
      %v3314 = vpop.f32.mrf.mxu0
      %3315 = vmatprep.mubr.bf16.mxu0 0
      %3316 = vmatmul.mubr.bf16.gmra.mxu0 %v1623
      %v3317 = vpop.f32.mrf.mxu0
      %v3318 = vadd.f32 %v3114, %v3317
      %v3319 = vpop.f32.mrf.mxu0
      %v3320 = vpop.f32.mrf.mxu0
      %v3321 = vadd.f32 %v3117, %v3320
      %v3322 = vpop.f32.mrf.mxu0
      %3323 = vmatprep.mubr.bf16.mxu0 0
      %3324 = vmatmul.mubr.bf16.gmra.mxu0 %v1626
      %v3325 = vpop.f32.mrf.mxu0
      %v3326 = vadd.f32 %v3122, %v3325
      %v3327 = vpop.f32.mrf.mxu0
      %v3328 = vpop.f32.mrf.mxu0
      %v3329 = vadd.f32 %v3125, %v3328
      %v3330 = vpop.f32.mrf.mxu0
      %3331 = vmatprep.mubr.bf16.mxu0 0
      %3332 = vmatmul.mubr.bf16.gmra.mxu0 %v1629
      %v3333 = vpop.f32.mrf.mxu0
      %v3334 = vadd.f32 %v3130, %v3333
      %v3335 = vpop.f32.mrf.mxu0
      %v3336 = vpop.f32.mrf.mxu0
      %v3337 = vadd.f32 %v3133, %v3336
      %v3338 = vpop.f32.mrf.mxu0
      %3339 = vmatprep.mubr.bf16.mxu0 0
      %3340 = vmatmul.mubr.bf16.gmra.mxu0 %v1632
      %v3341 = vpop.f32.mrf.mxu0
      %v3342 = vadd.f32 %v3138, %v3341
      %v3343 = vpop.f32.mrf.mxu0
      %v3344 = vpop.f32.mrf.mxu0
      %v3345 = vadd.f32 %v3141, %v3344
      %v3346 = vpop.f32.mrf.mxu0
      %3347 = vdwg.mxu0
      %s3348 = scalar_lea.vmem %s295, 16
      %v3349 = vld [vmem:[%s3348] sm:$0x3]
      %v3351 = vsel %vm1366, %v3349, 0
      %3353 = vmatprep.subr.bf16.mxu0 0
      %3354 = vmatpush1.bf16.msra.mxu0 0
      %3355 = vmatprep.subr.bf16.mxu0 0
      %3356 = vmatpush1.bf16.msra.mxu0 0
      %3357 = vmatprep.subr.bf16.mxu0 0
      %3358 = vmatpush1.bf16.msra.mxu0 0
      %3359 = vmatprep.subr.bf16.mxu0 0
      %3360 = vmatpush1.bf16.msra.mxu0 0
      %3361 = vmatprep.subr.bf16.mxu0 0
      %3362 = vmatpush1.bf16.msra.mxu0 0
      %3363 = vmatprep.subr.bf16.mxu0 0
      %3364 = vmatpush1.bf16.msra.mxu0 0
      %3365 = vmatprep.subr.bf16.mxu0 0
      %3366 = vmatpush1.bf16.msra.mxu0 0
      %3367 = vmatprep.subr.bf16.mxu0 0
      %3368 = vmatpush1.bf16.msra.mxu0 %v3351
      %3369 = vmatprep.subr.bf16.mxu0 0
      %3370 = vmatpush2.bf16.msra.mxu0 0
      %3371 = vmatprep.subr.bf16.mxu0 0
      %3372 = vmatpush2.bf16.msra.mxu0 0
      %3373 = vmatprep.subr.bf16.mxu0 0
      %3374 = vmatpush2.bf16.msra.mxu0 0
      %3375 = vmatprep.subr.bf16.mxu0 0
      %3376 = vmatpush2.bf16.msra.mxu0 0
      %3377 = vmatprep.subr.bf16.mxu0 0
      %3378 = vmatpush2.bf16.msra.mxu0 0
      %3379 = vmatprep.subr.bf16.mxu0 0
      %3380 = vmatpush2.bf16.msra.mxu0 0
      %3381 = vmatprep.subr.bf16.mxu0 0
      %3382 = vmatpush2.bf16.msra.mxu0 0
      %3383 = vmatprep.subr.bf16.mxu0 0
      %3384 = vmatpush2.bf16.msra.mxu0 0
      %3385 = vmatprep.mubr.bf16.mxu0 0
      %3386 = vmatmul.mubr.bf16.gmra.mxu0 %v1841
      %v3387 = vpop.f32.mrf.mxu0
      %v3388 = vadd.f32 0.0, %v3387
      %v3389 = vpop.f32.mrf.mxu0
      %v3390 = vpop.f32.mrf.mxu0
      %v3391 = vadd.f32 0.0, %v3390
      %v3392 = vpop.f32.mrf.mxu0
      %3393 = vmatprep.mubr.bf16.mxu0 0
      %3394 = vmatmul.mubr.bf16.gmra.mxu0 %v1844
      %v3395 = vpop.f32.mrf.mxu0
      %v3396 = vadd.f32 0.0, %v3395
      %v3397 = vpop.f32.mrf.mxu0
      %v3398 = vpop.f32.mrf.mxu0
      %v3399 = vadd.f32 0.0, %v3398
      %v3400 = vpop.f32.mrf.mxu0
      %3401 = vmatprep.mubr.bf16.mxu0 0
      %3402 = vmatmul.mubr.bf16.gmra.mxu0 %v1847
      %v3403 = vpop.f32.mrf.mxu0
      %v3404 = vadd.f32 0.0, %v3403
      %v3405 = vpop.f32.mrf.mxu0
      %v3406 = vpop.f32.mrf.mxu0
      %v3407 = vadd.f32 0.0, %v3406
      %v3408 = vpop.f32.mrf.mxu0
      %3409 = vmatprep.mubr.bf16.mxu0 0
      %3410 = vmatmul.mubr.bf16.gmra.mxu0 %v1850
      %v3411 = vpop.f32.mrf.mxu0
      %v3412 = vadd.f32 0.0, %v3411
      %v3413 = vpop.f32.mrf.mxu0
      %v3414 = vpop.f32.mrf.mxu0
      %v3415 = vadd.f32 0.0, %v3414
      %v3416 = vpop.f32.mrf.mxu0
      %3417 = vmatprep.mubr.bf16.mxu0 0
      %3418 = vmatmul.mubr.bf16.gmra.mxu0 %v1853
      %v3419 = vpop.f32.mrf.mxu0
      %v3420 = vadd.f32 0.0, %v3419
      %v3421 = vpop.f32.mrf.mxu0
      %v3422 = vpop.f32.mrf.mxu0
      %v3423 = vadd.f32 0.0, %v3422
      %v3424 = vpop.f32.mrf.mxu0
      %3425 = vmatprep.mubr.bf16.mxu0 0
      %3426 = vmatmul.mubr.bf16.gmra.mxu0 %v1856
      %v3427 = vpop.f32.mrf.mxu0
      %v3428 = vadd.f32 0.0, %v3427
      %v3429 = vpop.f32.mrf.mxu0
      %v3430 = vpop.f32.mrf.mxu0
      %v3431 = vadd.f32 0.0, %v3430
      %v3432 = vpop.f32.mrf.mxu0
      %3433 = vmatprep.mubr.bf16.mxu0 0
      %3434 = vmatmul.mubr.bf16.gmra.mxu0 %v1859
      %v3435 = vpop.f32.mrf.mxu0
      %v3436 = vadd.f32 0.0, %v3435
      %v3437 = vpop.f32.mrf.mxu0
      %v3438 = vpop.f32.mrf.mxu0
      %v3439 = vadd.f32 0.0, %v3438
      %v3440 = vpop.f32.mrf.mxu0
      %3441 = vmatprep.mubr.bf16.mxu0 0
      %3442 = vmatmul.mubr.bf16.gmra.mxu0 %v1862
      %v3443 = vpop.f32.mrf.mxu0
      %v3444 = vadd.f32 0.0, %v3443
      %v3445 = vpop.f32.mrf.mxu0
      %v3446 = vpop.f32.mrf.mxu0
      %v3447 = vadd.f32 0.0, %v3446
      %v3448 = vpop.f32.mrf.mxu0
      %3449 = vmatprep.mubr.bf16.mxu0 0
      %3450 = vmatmul.mubr.bf16.gmra.mxu0 %v1865
      %v3451 = vpop.f32.mrf.mxu0
      %v3452 = vadd.f32 0.0, %v3451
      %v3453 = vpop.f32.mrf.mxu0
      %v3454 = vpop.f32.mrf.mxu0
      %v3455 = vadd.f32 0.0, %v3454
      %v3456 = vpop.f32.mrf.mxu0
      %3457 = vmatprep.mubr.bf16.mxu0 0
      %3458 = vmatmul.mubr.bf16.gmra.mxu0 %v1868
      %v3459 = vpop.f32.mrf.mxu0
      %v3460 = vadd.f32 0.0, %v3459
      %v3461 = vpop.f32.mrf.mxu0
      %v3462 = vpop.f32.mrf.mxu0
      %v3463 = vadd.f32 0.0, %v3462
      %v3464 = vpop.f32.mrf.mxu0
      %3465 = vmatprep.mubr.bf16.mxu0 0
      %3466 = vmatmul.mubr.bf16.gmra.mxu0 %v1871
      %v3467 = vpop.f32.mrf.mxu0
      %v3468 = vadd.f32 0.0, %v3467
      %v3469 = vpop.f32.mrf.mxu0
      %v3470 = vpop.f32.mrf.mxu0
      %v3471 = vadd.f32 0.0, %v3470
      %v3472 = vpop.f32.mrf.mxu0
      %3473 = vmatprep.mubr.bf16.mxu0 0
      %3474 = vmatmul.mubr.bf16.gmra.mxu0 %v1874
      %v3475 = vpop.f32.mrf.mxu0
      %v3476 = vadd.f32 0.0, %v3475
      %v3477 = vpop.f32.mrf.mxu0
      %v3478 = vpop.f32.mrf.mxu0
      %v3479 = vadd.f32 0.0, %v3478
      %v3480 = vpop.f32.mrf.mxu0
      %3481 = vmatprep.mubr.bf16.mxu0 0
      %3482 = vmatmul.mubr.bf16.gmra.mxu0 %v1877
      %v3483 = vpop.f32.mrf.mxu0
      %v3484 = vadd.f32 0.0, %v3483
      %v3485 = vpop.f32.mrf.mxu0
      %v3486 = vpop.f32.mrf.mxu0
      %v3487 = vadd.f32 0.0, %v3486
      %v3488 = vpop.f32.mrf.mxu0
      %3489 = vmatprep.mubr.bf16.mxu0 0
      %3490 = vmatmul.mubr.bf16.gmra.mxu0 %v1880
      %v3491 = vpop.f32.mrf.mxu0
      %v3492 = vadd.f32 0.0, %v3491
      %v3493 = vpop.f32.mrf.mxu0
      %v3494 = vpop.f32.mrf.mxu0
      %v3495 = vadd.f32 0.0, %v3494
      %v3496 = vpop.f32.mrf.mxu0
      %3497 = vmatprep.mubr.bf16.mxu0 0
      %3498 = vmatmul.mubr.bf16.gmra.mxu0 %v1883
      %v3499 = vpop.f32.mrf.mxu0
      %v3500 = vadd.f32 0.0, %v3499
      %v3501 = vpop.f32.mrf.mxu0
      %v3502 = vpop.f32.mrf.mxu0
      %v3503 = vadd.f32 0.0, %v3502
      %v3504 = vpop.f32.mrf.mxu0
      %3505 = vmatprep.mubr.bf16.mxu0 0
      %3506 = vmatmul.mubr.bf16.gmra.mxu0 %v1886
      %v3507 = vpop.f32.mrf.mxu0
      %v3508 = vadd.f32 0.0, %v3507
      %v3509 = vpop.f32.mrf.mxu0
      %v3510 = vpop.f32.mrf.mxu0
      %v3511 = vadd.f32 0.0, %v3510
      %v3512 = vpop.f32.mrf.mxu0
      %3513 = vmatprep.mubr.bf16.mxu0 0
      %3514 = vmatmul.mubr.bf16.gmra.mxu0 %v1889
      %v3515 = vpop.f32.mrf.mxu0
      %v3516 = vadd.f32 0.0, %v3515
      %v3517 = vpop.f32.mrf.mxu0
      %v3518 = vpop.f32.mrf.mxu0
      %v3519 = vadd.f32 0.0, %v3518
      %v3520 = vpop.f32.mrf.mxu0
      %3521 = vmatprep.mubr.bf16.mxu0 0
      %3522 = vmatmul.mubr.bf16.gmra.mxu0 %v1892
      %v3523 = vpop.f32.mrf.mxu0
      %v3524 = vadd.f32 0.0, %v3523
      %v3525 = vpop.f32.mrf.mxu0
      %v3526 = vpop.f32.mrf.mxu0
      %v3527 = vadd.f32 0.0, %v3526
      %v3528 = vpop.f32.mrf.mxu0
      %3529 = vmatprep.mubr.bf16.mxu0 0
      %3530 = vmatmul.mubr.bf16.gmra.mxu0 %v1895
      %v3531 = vpop.f32.mrf.mxu0
      %v3532 = vadd.f32 0.0, %v3531
      %v3533 = vpop.f32.mrf.mxu0
      %v3534 = vpop.f32.mrf.mxu0
      %v3535 = vadd.f32 0.0, %v3534
      %v3536 = vpop.f32.mrf.mxu0
      %3537 = vmatprep.mubr.bf16.mxu0 0
      %3538 = vmatmul.mubr.bf16.gmra.mxu0 %v1898
      %v3539 = vpop.f32.mrf.mxu0
      %v3540 = vadd.f32 0.0, %v3539
      %v3541 = vpop.f32.mrf.mxu0
      %v3542 = vpop.f32.mrf.mxu0
      %v3543 = vadd.f32 0.0, %v3542
      %v3544 = vpop.f32.mrf.mxu0
      %3545 = vmatprep.mubr.bf16.mxu0 0
      %3546 = vmatmul.mubr.bf16.gmra.mxu0 %v1901
      %v3547 = vpop.f32.mrf.mxu0
      %v3548 = vadd.f32 0.0, %v3547
      %v3549 = vpop.f32.mrf.mxu0
      %v3550 = vpop.f32.mrf.mxu0
      %v3551 = vadd.f32 0.0, %v3550
      %v3552 = vpop.f32.mrf.mxu0
      %3553 = vdwg.mxu0
      %v3554 = vadd.f32 %v3182, %v3388
      %v3555 = vadd.f32 %v3185, %v3391
      %v3556 = vadd.f32 %v3190, %v3396
      %v3557 = vadd.f32 %v3193, %v3399
      %v3558 = vadd.f32 %v3198, %v3404
      %v3559 = vadd.f32 %v3201, %v3407
      %v3560 = vadd.f32 %v3206, %v3412
      %v3561 = vadd.f32 %v3209, %v3415
      %v3562 = vadd.f32 %v3214, %v3420
      %v3563 = vadd.f32 %v3217, %v3423
      %v3564 = vadd.f32 %v3222, %v3428
      %v3565 = vadd.f32 %v3225, %v3431
      %v3566 = vadd.f32 %v3230, %v3436
      %v3567 = vadd.f32 %v3233, %v3439
      %v3568 = vadd.f32 %v3238, %v3444
      %v3569 = vadd.f32 %v3241, %v3447
      %v3570 = vadd.f32 %v3246, %v3452
      %v3571 = vadd.f32 %v3249, %v3455
      %v3572 = vadd.f32 %v3254, %v3460
      %v3573 = vadd.f32 %v3257, %v3463
      %v3574 = vadd.f32 %v3262, %v3468
      %v3575 = vadd.f32 %v3265, %v3471
      %v3576 = vadd.f32 %v3270, %v3476
      %v3577 = vadd.f32 %v3273, %v3479
      %v3578 = vadd.f32 %v3278, %v3484
      %v3579 = vadd.f32 %v3281, %v3487
      %v3580 = vadd.f32 %v3286, %v3492
      %v3581 = vadd.f32 %v3289, %v3495
      %v3582 = vadd.f32 %v3294, %v3500
      %v3583 = vadd.f32 %v3297, %v3503
      %v3584 = vadd.f32 %v3302, %v3508
      %v3585 = vadd.f32 %v3305, %v3511
      %v3586 = vadd.f32 %v3310, %v3516
      %v3587 = vadd.f32 %v3313, %v3519
      %v3588 = vadd.f32 %v3318, %v3524
      %v3589 = vadd.f32 %v3321, %v3527
      %v3590 = vadd.f32 %v3326, %v3532
      %v3591 = vadd.f32 %v3329, %v3535
      %v3592 = vadd.f32 %v3334, %v3540
      %v3593 = vadd.f32 %v3337, %v3543
      %v3594 = vadd.f32 %v3342, %v3548
      %v3595 = vadd.f32 %v3345, %v3551
      %v3596 = vrot.slane %v3554, 1
      %v3597 = vrot.slane %v3555, 1
      %v3598 = vrot.slane %v3556, 1
      %v3599 = vrot.slane %v3557, 1
      %v3600 = vrot.slane %v3558, 1
      %v3601 = vrot.slane %v3559, 1
      %v3602 = vrot.slane %v3560, 1
      %v3603 = vrot.slane %v3561, 1
      %v3604 = vrot.slane %v3562, 1
      %v3605 = vrot.slane %v3563, 1
      %v3606 = vrot.slane %v3564, 1
      %v3607 = vrot.slane %v3565, 1
      %v3608 = vrot.slane %v3566, 1
      %v3609 = vrot.slane %v3567, 1
      %v3610 = vrot.slane %v3568, 1
      %v3611 = vrot.slane %v3569, 1
      %v3612 = vrot.slane %v3570, 1
      %v3613 = vrot.slane %v3571, 1
      %v3614 = vrot.slane %v3572, 1
      %v3615 = vrot.slane %v3573, 1
      %v3616 = vrot.slane %v3574, 1
      %v3617 = vrot.slane %v3575, 1
      %v3618 = vrot.slane %v3576, 1
      %v3619 = vrot.slane %v3577, 1
      %v3620 = vrot.slane %v3578, 1
      %v3621 = vrot.slane %v3579, 1
      %v3622 = vrot.slane %v3580, 1
      %v3623 = vrot.slane %v3581, 1
      %v3624 = vrot.slane %v3582, 1
      %v3625 = vrot.slane %v3583, 1
      %v3626 = vrot.slane %v3584, 1
      %v3627 = vrot.slane %v3585, 1
      %v3628 = vrot.slane %v3586, 1
      %v3629 = vrot.slane %v3587, 1
      %v3630 = vrot.slane %v3588, 1
      %v3631 = vrot.slane %v3589, 1
      %v3632 = vrot.slane %v3590, 1
      %v3633 = vrot.slane %v3591, 1
      %v3634 = vrot.slane %v3592, 1
      %v3635 = vrot.slane %v3593, 1
      %v3636 = vrot.slane %v3594, 1
      %v3637 = vrot.slane %v3595, 1
      %vm3638 = vcmp.lt.s32.totalorder %v1023, 7
      %v3639 = vsel %vm3638, %v3636, %v3637
      %v3640 = vsel %vm3638, %v3635, %v3636
      %v3641 = vsel %vm3638, %v3634, %v3635
      %v3642 = vsel %vm3638, %v3633, %v3634
      %v3643 = vsel %vm3638, %v3632, %v3633
      %v3644 = vsel %vm3638, %v3631, %v3632
      %v3645 = vsel %vm3638, %v3630, %v3631
      %v3646 = vsel %vm3638, %v3629, %v3630
      %v3647 = vsel %vm3638, %v3628, %v3629
      %v3648 = vsel %vm3638, %v3627, %v3628
      %v3649 = vsel %vm3638, %v3626, %v3627
      %v3650 = vsel %vm3638, %v3625, %v3626
      %v3651 = vsel %vm3638, %v3624, %v3625
      %v3652 = vsel %vm3638, %v3623, %v3624
      %v3653 = vsel %vm3638, %v3622, %v3623
      %v3654 = vsel %vm3638, %v3621, %v3622
      %v3655 = vsel %vm3638, %v3620, %v3621
      %v3656 = vsel %vm3638, %v3619, %v3620
      %v3657 = vsel %vm3638, %v3618, %v3619
      %v3658 = vsel %vm3638, %v3617, %v3618
      %v3659 = vsel %vm3638, %v3616, %v3617
      %v3660 = vsel %vm3638, %v3615, %v3616
      %v3661 = vsel %vm3638, %v3614, %v3615
      %v3662 = vsel %vm3638, %v3613, %v3614
      %v3663 = vsel %vm3638, %v3612, %v3613
      %v3664 = vsel %vm3638, %v3611, %v3612
      %v3665 = vsel %vm3638, %v3610, %v3611
      %v3666 = vsel %vm3638, %v3609, %v3610
      %v3667 = vsel %vm3638, %v3608, %v3609
      %v3668 = vsel %vm3638, %v3607, %v3608
      %v3669 = vsel %vm3638, %v3606, %v3607
      %v3670 = vsel %vm3638, %v3605, %v3606
      %v3671 = vsel %vm3638, %v3604, %v3605
      %v3672 = vsel %vm3638, %v3603, %v3604
      %v3673 = vsel %vm3638, %v3602, %v3603
      %v3674 = vsel %vm3638, %v3601, %v3602
      %v3675 = vsel %vm3638, %v3600, %v3601
      %v3676 = vsel %vm3638, %v3599, %v3600
      %v3677 = vsel %vm3638, %v3598, %v3599
      %v3678 = vsel %vm3638, %v3597, %v3598
      %v3679 = vsel %vm3638, %v3596, %v3597
      %v3680 = vsel %vm3638, %v3637, %v3596
      %v3681 = vadd.f32 %v2894, %v3679
      %v3682 = vadd.f32 %v2895, %v3678
      %v3683 = vadd.f32 %v2896, %v3677
      %v3684 = vadd.f32 %v2897, %v3676
      %v3685 = vadd.f32 %v2898, %v3675
      %v3686 = vadd.f32 %v2899, %v3674
      %v3687 = vadd.f32 %v2900, %v3673
      %v3688 = vadd.f32 %v2901, %v3672
      %v3689 = vadd.f32 %v2902, %v3671
      %v3690 = vadd.f32 %v2903, %v3670
      %v3691 = vadd.f32 %v2904, %v3669
      %v3692 = vadd.f32 %v2905, %v3668
      %v3693 = vadd.f32 %v2906, %v3667
      %v3694 = vadd.f32 %v2907, %v3666
      %v3695 = vadd.f32 %v2908, %v3665
      %v3696 = vadd.f32 %v2909, %v3664
      %v3697 = vadd.f32 %v2910, %v3663
      %v3698 = vadd.f32 %v2911, %v3662
      %v3699 = vadd.f32 %v2912, %v3661
      %v3700 = vadd.f32 %v2913, %v3660
      %v3701 = vadd.f32 %v2914, %v3659
      %v3702 = vadd.f32 %v2915, %v3658
      %v3703 = vadd.f32 %v2916, %v3657
      %v3704 = vadd.f32 %v2917, %v3656
      %v3705 = vadd.f32 %v2918, %v3655
      %v3706 = vadd.f32 %v2919, %v3654
      %v3707 = vadd.f32 %v2920, %v3653
      %v3708 = vadd.f32 %v2921, %v3652
      %v3709 = vadd.f32 %v2922, %v3651
      %v3710 = vadd.f32 %v2923, %v3650
      %v3711 = vadd.f32 %v2924, %v3649
      %v3712 = vadd.f32 %v2925, %v3648
      %v3713 = vadd.f32 %v2926, %v3647
      %v3714 = vadd.f32 %v2927, %v3646
      %v3715 = vadd.f32 %v2928, %v3645
      %v3716 = vadd.f32 %v2929, %v3644
      %v3717 = vadd.f32 %v2930, %v3643
      %v3718 = vadd.f32 %v2931, %v3642
      %v3719 = vadd.f32 %v2932, %v3641
      %v3720 = vadd.f32 %v2933, %v3640
      %v3721 = vadd.f32 %v2934, %v3639
      %v3722 = vadd.f32 %v2935, %v3680
      %v3723 = vld [vmem:[%s298] sm:$0x1]
      %v3725 = vlaneseq
      %v3726 = vshrl.u32 %v3725, 7
      %v3727 = vsub.s32 0, %v3726
      %v3728 = vrot.slane %v3723, %v3727
      %v3730 = vadd.f32 %v3681, %v3728
      %v3731 = vadd.f32 %v3682, %v3728
      %v3732 = vadd.f32 %v3683, %v3728
      %v3733 = vadd.f32 %v3684, %v3728
      %v3734 = vadd.f32 %v3685, %v3728
      %v3735 = vadd.f32 %v3686, %v3728
      %v3736 = vadd.f32 %v3687, %v3728
      %v3737 = vadd.f32 %v3688, %v3728
      %v3738 = vadd.f32 %v3689, %v3728
      %v3739 = vadd.f32 %v3690, %v3728
      %v3740 = vadd.f32 %v3691, %v3728
      %v3741 = vadd.f32 %v3692, %v3728
      %v3742 = vadd.f32 %v3693, %v3728
      %v3743 = vadd.f32 %v3694, %v3728
      %v3744 = vadd.f32 %v3695, %v3728
      %v3745 = vadd.f32 %v3696, %v3728
      %v3746 = vadd.f32 %v3697, %v3728
      %v3747 = vadd.f32 %v3698, %v3728
      %v3748 = vadd.f32 %v3699, %v3728
      %v3749 = vadd.f32 %v3700, %v3728
      %v3750 = vadd.f32 %v3701, %v3728
      %v3751 = vadd.f32 %v3702, %v3728
      %v3752 = vadd.f32 %v3703, %v3728
      %v3753 = vadd.f32 %v3704, %v3728
      %v3754 = vadd.f32 %v3705, %v3728
      %v3755 = vadd.f32 %v3706, %v3728
      %v3756 = vadd.f32 %v3707, %v3728
      %v3757 = vadd.f32 %v3708, %v3728
      %v3758 = vadd.f32 %v3709, %v3728
      %v3759 = vadd.f32 %v3710, %v3728
      %v3760 = vadd.f32 %v3711, %v3728
      %v3761 = vadd.f32 %v3712, %v3728
      %v3762 = vadd.f32 %v3713, %v3728
      %v3763 = vadd.f32 %v3714, %v3728
      %v3764 = vadd.f32 %v3715, %v3728
      %v3765 = vadd.f32 %v3716, %v3728
      %v3766 = vadd.f32 %v3717, %v3728
      %v3767 = vadd.f32 %v3718, %v3728
      %v3768 = vadd.f32 %v3719, %v3728
      %v3769 = vadd.f32 %v3720, %v3728
      %v3770 = vadd.f32 %v3721, %v3728
      %v3771 = vadd.f32 %v3722, %v3728
      %v3772 = vsub.f32 0.0, %v3730
      %v3773 = vsub.f32 0.0, %v3731
      %v3774 = vsub.f32 0.0, %v3732
      %v3775 = vsub.f32 0.0, %v3733
      %v3776 = vsub.f32 0.0, %v3734
      %v3777 = vsub.f32 0.0, %v3735
      %v3778 = vsub.f32 0.0, %v3736
      %v3779 = vsub.f32 0.0, %v3737
      %v3780 = vsub.f32 0.0, %v3738
      %v3781 = vsub.f32 0.0, %v3739
      %v3782 = vsub.f32 0.0, %v3740
      %v3783 = vsub.f32 0.0, %v3741
      %v3784 = vsub.f32 0.0, %v3742
      %v3785 = vsub.f32 0.0, %v3743
      %v3786 = vsub.f32 0.0, %v3744
      %v3787 = vsub.f32 0.0, %v3745
      %v3788 = vsub.f32 0.0, %v3746
      %v3789 = vsub.f32 0.0, %v3747
      %v3790 = vsub.f32 0.0, %v3748
      %v3791 = vsub.f32 0.0, %v3749
      %v3792 = vsub.f32 0.0, %v3750
      %v3793 = vsub.f32 0.0, %v3751
      %v3794 = vsub.f32 0.0, %v3752
      %v3795 = vsub.f32 0.0, %v3753
      %v3796 = vsub.f32 0.0, %v3754
      %v3797 = vsub.f32 0.0, %v3755
      %v3798 = vsub.f32 0.0, %v3756
      %v3799 = vsub.f32 0.0, %v3757
      %v3800 = vsub.f32 0.0, %v3758
      %v3801 = vsub.f32 0.0, %v3759
      %v3802 = vsub.f32 0.0, %v3760
      %v3803 = vsub.f32 0.0, %v3761
      %v3804 = vsub.f32 0.0, %v3762
      %v3805 = vsub.f32 0.0, %v3763
      %v3806 = vsub.f32 0.0, %v3764
      %v3807 = vsub.f32 0.0, %v3765
      %v3808 = vsub.f32 0.0, %v3766
      %v3809 = vsub.f32 0.0, %v3767
      %v3810 = vsub.f32 0.0, %v3768
      %v3811 = vsub.f32 0.0, %v3769
      %v3812 = vsub.f32 0.0, %v3770
      %v3813 = vsub.f32 0.0, %v3771
      %v3814 = vmul.f32 %v3772, 1.442695
      %v3815 = vpow.pop %v3814
      %v3816 = vmul.f32 %v3773, 1.442695
      %v3817 = vpow.pop %v3816
      %v3818 = vmul.f32 %v3774, 1.442695
      %v3819 = vpow.pop %v3818
      %v3820 = vmul.f32 %v3775, 1.442695
      %v3821 = vpow.pop %v3820
      %v3822 = vmul.f32 %v3776, 1.442695
      %v3823 = vpow.pop %v3822
      %v3824 = vmul.f32 %v3777, 1.442695
      %v3825 = vpow.pop %v3824
      %v3826 = vmul.f32 %v3778, 1.442695
      %v3827 = vpow.pop %v3826
      %v3828 = vmul.f32 %v3779, 1.442695
      %v3829 = vpow.pop %v3828
      %v3830 = vmul.f32 %v3780, 1.442695
      %v3831 = vpow.pop %v3830
      %v3832 = vmul.f32 %v3781, 1.442695
      %v3833 = vpow.pop %v3832
      %v3834 = vmul.f32 %v3782, 1.442695
      %v3835 = vpow.pop %v3834
      %v3836 = vmul.f32 %v3783, 1.442695
      %v3837 = vpow.pop %v3836
      %v3838 = vmul.f32 %v3784, 1.442695
      %v3839 = vpow.pop %v3838
      %v3840 = vmul.f32 %v3785, 1.442695
      %v3841 = vpow.pop %v3840
      %v3842 = vmul.f32 %v3786, 1.442695
      %v3843 = vpow.pop %v3842
      %v3844 = vmul.f32 %v3787, 1.442695
      %v3845 = vpow.pop %v3844
      %v3846 = vmul.f32 %v3788, 1.442695
      %v3847 = vpow.pop %v3846
      %v3848 = vmul.f32 %v3789, 1.442695
      %v3849 = vpow.pop %v3848
      %v3850 = vmul.f32 %v3790, 1.442695
      %v3851 = vpow.pop %v3850
      %v3852 = vmul.f32 %v3791, 1.442695
      %v3853 = vpow.pop %v3852
      %v3854 = vmul.f32 %v3792, 1.442695
      %v3855 = vpow.pop %v3854
      %v3856 = vmul.f32 %v3793, 1.442695
      %v3857 = vpow.pop %v3856
      %v3858 = vmul.f32 %v3794, 1.442695
      %v3859 = vpow.pop %v3858
      %v3860 = vmul.f32 %v3795, 1.442695
      %v3861 = vpow.pop %v3860
      %v3862 = vmul.f32 %v3796, 1.442695
      %v3863 = vpow.pop %v3862
      %v3864 = vmul.f32 %v3797, 1.442695
      %v3865 = vpow.pop %v3864
      %v3866 = vmul.f32 %v3798, 1.442695
      %v3867 = vpow.pop %v3866
      %v3868 = vmul.f32 %v3799, 1.442695
      %v3869 = vpow.pop %v3868
      %v3870 = vmul.f32 %v3800, 1.442695
      %v3871 = vpow.pop %v3870
      %v3872 = vmul.f32 %v3801, 1.442695
      %v3873 = vpow.pop %v3872
      %v3874 = vmul.f32 %v3802, 1.442695
      %v3875 = vpow.pop %v3874
      %v3876 = vmul.f32 %v3803, 1.442695
      %v3877 = vpow.pop %v3876
      %v3878 = vmul.f32 %v3804, 1.442695
      %v3879 = vpow.pop %v3878
      %v3880 = vmul.f32 %v3805, 1.442695
      %v3881 = vpow.pop %v3880
      %v3882 = vmul.f32 %v3806, 1.442695
      %v3883 = vpow.pop %v3882
      %v3884 = vmul.f32 %v3807, 1.442695
      %v3885 = vpow.pop %v3884
      %v3886 = vmul.f32 %v3808, 1.442695
      %v3887 = vpow.pop %v3886
      %v3888 = vmul.f32 %v3809, 1.442695
      %v3889 = vpow.pop %v3888
      %v3890 = vmul.f32 %v3810, 1.442695
      %v3891 = vpow.pop %v3890
      %v3892 = vmul.f32 %v3811, 1.442695
      %v3893 = vpow.pop %v3892
      %v3894 = vmul.f32 %v3812, 1.442695
      %v3895 = vpow.pop %v3894
      %v3896 = vmul.f32 %v3813, 1.442695
      %v3897 = vpow.pop %v3896
      %v3898 = vadd.f32 %v3815, 1.0
      %v3899 = vadd.f32 %v3817, 1.0
      %v3900 = vadd.f32 %v3819, 1.0
      %v3901 = vadd.f32 %v3821, 1.0
      %v3902 = vadd.f32 %v3823, 1.0
      %v3903 = vadd.f32 %v3825, 1.0
      %v3904 = vadd.f32 %v3827, 1.0
      %v3905 = vadd.f32 %v3829, 1.0
      %v3906 = vadd.f32 %v3831, 1.0
      %v3907 = vadd.f32 %v3833, 1.0
      %v3908 = vadd.f32 %v3835, 1.0
      %v3909 = vadd.f32 %v3837, 1.0
      %v3910 = vadd.f32 %v3839, 1.0
      %v3911 = vadd.f32 %v3841, 1.0
      %v3912 = vadd.f32 %v3843, 1.0
      %v3913 = vadd.f32 %v3845, 1.0
      %v3914 = vadd.f32 %v3847, 1.0
      %v3915 = vadd.f32 %v3849, 1.0
      %v3916 = vadd.f32 %v3851, 1.0
      %v3917 = vadd.f32 %v3853, 1.0
      %v3918 = vadd.f32 %v3855, 1.0
      %v3919 = vadd.f32 %v3857, 1.0
      %v3920 = vadd.f32 %v3859, 1.0
      %v3921 = vadd.f32 %v3861, 1.0
      %v3922 = vadd.f32 %v3863, 1.0
      %v3923 = vadd.f32 %v3865, 1.0
      %v3924 = vadd.f32 %v3867, 1.0
      %v3925 = vadd.f32 %v3869, 1.0
      %v3926 = vadd.f32 %v3871, 1.0
      %v3927 = vadd.f32 %v3873, 1.0
      %v3928 = vadd.f32 %v3875, 1.0
      %v3929 = vadd.f32 %v3877, 1.0
      %v3930 = vadd.f32 %v3879, 1.0
      %v3931 = vadd.f32 %v3881, 1.0
      %v3932 = vadd.f32 %v3883, 1.0
      %v3933 = vadd.f32 %v3885, 1.0
      %v3934 = vadd.f32 %v3887, 1.0
      %v3935 = vadd.f32 %v3889, 1.0
      %v3936 = vadd.f32 %v3891, 1.0
      %v3937 = vadd.f32 %v3893, 1.0
      %v3938 = vadd.f32 %v3895, 1.0
      %v3939 = vadd.f32 %v3897, 1.0
      %v3940 = vrcp.pop %v3898
      %v3941 = vrcp.pop %v3899
      %v3942 = vrcp.pop %v3900
      %v3943 = vrcp.pop %v3901
      %v3944 = vrcp.pop %v3902
      %v3945 = vrcp.pop %v3903
      %v3946 = vrcp.pop %v3904
      %v3947 = vrcp.pop %v3905
      %v3948 = vrcp.pop %v3906
      %v3949 = vrcp.pop %v3907
      %v3950 = vrcp.pop %v3908
      %v3951 = vrcp.pop %v3909
      %v3952 = vrcp.pop %v3910
      %v3953 = vrcp.pop %v3911
      %v3954 = vrcp.pop %v3912
      %v3955 = vrcp.pop %v3913
      %v3956 = vrcp.pop %v3914
      %v3957 = vrcp.pop %v3915
      %v3958 = vrcp.pop %v3916
      %v3959 = vrcp.pop %v3917
      %v3960 = vrcp.pop %v3918
      %v3961 = vrcp.pop %v3919
      %v3962 = vrcp.pop %v3920
      %v3963 = vrcp.pop %v3921
      %v3964 = vrcp.pop %v3922
      %v3965 = vrcp.pop %v3923
      %v3966 = vrcp.pop %v3924
      %v3967 = vrcp.pop %v3925
      %v3968 = vrcp.pop %v3926
      %v3969 = vrcp.pop %v3927
      %v3970 = vrcp.pop %v3928
      %v3971 = vrcp.pop %v3929
      %v3972 = vrcp.pop %v3930
      %v3973 = vrcp.pop %v3931
      %v3974 = vrcp.pop %v3932
      %v3975 = vrcp.pop %v3933
      %v3976 = vrcp.pop %v3934
      %v3977 = vrcp.pop %v3935
      %v3978 = vrcp.pop %v3936
      %v3979 = vrcp.pop %v3937
      %v3980 = vrcp.pop %v3938
      %v3981 = vrcp.pop %v3939
      %v3982 = vmul.f32 %v3730, %v3940
      %v3983 = vmul.f32 %v3731, %v3941
      %v3984 = vmul.f32 %v3732, %v3942
      %v3985 = vmul.f32 %v3733, %v3943
      %v3986 = vmul.f32 %v3734, %v3944
      %v3987 = vmul.f32 %v3735, %v3945
      %v3988 = vmul.f32 %v3736, %v3946
      %v3989 = vmul.f32 %v3737, %v3947
      %v3990 = vmul.f32 %v3738, %v3948
      %v3991 = vmul.f32 %v3739, %v3949
      %v3992 = vmul.f32 %v3740, %v3950
      %v3993 = vmul.f32 %v3741, %v3951
      %v3994 = vmul.f32 %v3742, %v3952
      %v3995 = vmul.f32 %v3743, %v3953
      %v3996 = vmul.f32 %v3744, %v3954
      %v3997 = vmul.f32 %v3745, %v3955
      %v3998 = vmul.f32 %v3746, %v3956
      %v3999 = vmul.f32 %v3747, %v3957
      %v4000 = vmul.f32 %v3748, %v3958
      %v4001 = vmul.f32 %v3749, %v3959
      %v4002 = vmul.f32 %v3750, %v3960
      %v4003 = vmul.f32 %v3751, %v3961
      %v4004 = vmul.f32 %v3752, %v3962
      %v4005 = vmul.f32 %v3753, %v3963
      %v4006 = vmul.f32 %v3754, %v3964
      %v4007 = vmul.f32 %v3755, %v3965
      %v4008 = vmul.f32 %v3756, %v3966
      %v4009 = vmul.f32 %v3757, %v3967
      %v4010 = vmul.f32 %v3758, %v3968
      %v4011 = vmul.f32 %v3759, %v3969
      %v4012 = vmul.f32 %v3760, %v3970
      %v4013 = vmul.f32 %v3761, %v3971
      %v4014 = vmul.f32 %v3762, %v3972
      %v4015 = vmul.f32 %v3763, %v3973
      %v4016 = vmul.f32 %v3764, %v3974
      %v4017 = vmul.f32 %v3765, %v3975
      %v4018 = vmul.f32 %v3766, %v3976
      %v4019 = vmul.f32 %v3767, %v3977
      %v4020 = vmul.f32 %v3768, %v3978
      %v4021 = vmul.f32 %v3769, %v3979
      %v4022 = vmul.f32 %v3770, %v3980
      %v4023 = vmul.f32 %v3771, %v3981
      %v4024 = vld [vmem:[%s291] sm:$0xf]
      %v4025 = vld [vmem:[%s291 + $0x4] sm:$0xf]
      %v4026 = vld [vmem:[%s291 + $0x8] sm:$0xf]
      %v4027 = vld [vmem:[%s291 + $0xc] sm:$0xf]
      %v4028 = vld [vmem:[%s291 + $0x10] sm:$0xf]
      %v4029 = vld [vmem:[%s291 + $0x14] sm:$0xf]
      %v4030 = vld [vmem:[%s291 + $0x18] sm:$0xf]
      %v4031 = vld [vmem:[%s291 + $0x1c] sm:$0xf]
      %v4032 = vld [vmem:[%s291 + $0x20] sm:$0xf]
      %v4033 = vld [vmem:[%s291 + $0x24] sm:$0xf]
      %v4034 = vld [vmem:[%s291 + $0x28] sm:$0xf]
      %v4035 = vld [vmem:[%s291 + $0x2c] sm:$0xf]
      %v4036 = vld [vmem:[%s291 + $0x30] sm:$0xf]
      %v4037 = vld [vmem:[%s291 + $0x34] sm:$0xf]
      %v4038 = vld [vmem:[%s291 + $0x38] sm:$0xf]
      %v4039 = vld [vmem:[%s291 + $0x3c] sm:$0xf]
      %v4040 = vld [vmem:[%s291 + $0x40] sm:$0xf]
      %v4041 = vld [vmem:[%s291 + $0x44] sm:$0xf]
      %v4042 = vld [vmem:[%s291 + $0x48] sm:$0xf]
      %v4043 = vld [vmem:[%s291 + $0x4c] sm:$0xf]
      %v4044 = vld [vmem:[%s291 + $0x50] sm:$0xf]
      %v4045 = vld [vmem:[%s291 + $0x54] sm:$0xf]
      %v4046 = vld [vmem:[%s291 + $0x58] sm:$0xf]
      %v4047 = vld [vmem:[%s291 + $0x5c] sm:$0xf]
      %v4048 = vld [vmem:[%s291 + $0x60] sm:$0xf]
      %v4049 = vld [vmem:[%s291 + $0x64] sm:$0xf]
      %v4050 = vld [vmem:[%s291 + $0x68] sm:$0xf]
      %v4051 = vld [vmem:[%s291 + $0x6c] sm:$0xf]
      %v4052 = vld [vmem:[%s291 + $0x70] sm:$0xf]
      %v4053 = vld [vmem:[%s291 + $0x74] sm:$0xf]
      %v4054 = vld [vmem:[%s291 + $0x78] sm:$0xf]
      %v4055 = vld [vmem:[%s291 + $0x7c] sm:$0xf]
      %v4056 = vld [vmem:[%s291 + $0x80] sm:$0xf]
      %v4057 = vld [vmem:[%s291 + $0x84] sm:$0xf]
      %v4058 = vld [vmem:[%s291 + $0x88] sm:$0xf]
      %v4059 = vld [vmem:[%s291 + $0x8c] sm:$0xf]
      %v4060 = vld [vmem:[%s291 + $0x90] sm:$0xf]
      %v4061 = vld [vmem:[%s291 + $0x94] sm:$0xf]
      %v4062 = vld [vmem:[%s291 + $0x98] sm:$0xf]
      %v4063 = vld [vmem:[%s291 + $0x9c] sm:$0xf]
      %v4064 = vld [vmem:[%s291 + $0xa0] sm:$0xf]
      %v4065 = vld [vmem:[%s291 + $0xa4] sm:$0xf]
      %v4066 = vunpack.c.l.bf16 %v4024
      %v4067 = vunpack.c.l.bf16 %v4025
      %v4068 = vunpack.c.l.bf16 %v4026
      %v4069 = vunpack.c.l.bf16 %v4027
      %v4070 = vunpack.c.l.bf16 %v4028
      %v4071 = vunpack.c.l.bf16 %v4029
      %v4072 = vunpack.c.l.bf16 %v4030
      %v4073 = vunpack.c.l.bf16 %v4031
      %v4074 = vunpack.c.l.bf16 %v4032
      %v4075 = vunpack.c.l.bf16 %v4033
      %v4076 = vunpack.c.l.bf16 %v4034
      %v4077 = vunpack.c.l.bf16 %v4035
      %v4078 = vunpack.c.l.bf16 %v4036
      %v4079 = vunpack.c.l.bf16 %v4037
      %v4080 = vunpack.c.l.bf16 %v4038
      %v4081 = vunpack.c.l.bf16 %v4039
      %v4082 = vunpack.c.l.bf16 %v4040
      %v4083 = vunpack.c.l.bf16 %v4041
      %v4084 = vunpack.c.l.bf16 %v4042
      %v4085 = vunpack.c.l.bf16 %v4043
      %v4086 = vunpack.c.l.bf16 %v4044
      %v4087 = vunpack.c.l.bf16 %v4045
      %v4088 = vunpack.c.l.bf16 %v4046
      %v4089 = vunpack.c.l.bf16 %v4047
      %v4090 = vunpack.c.l.bf16 %v4048
      %v4091 = vunpack.c.l.bf16 %v4049
      %v4092 = vunpack.c.l.bf16 %v4050
      %v4093 = vunpack.c.l.bf16 %v4051
      %v4094 = vunpack.c.l.bf16 %v4052
      %v4095 = vunpack.c.l.bf16 %v4053
      %v4096 = vunpack.c.l.bf16 %v4054
      %v4097 = vunpack.c.l.bf16 %v4055
      %v4098 = vunpack.c.l.bf16 %v4056
      %v4099 = vunpack.c.l.bf16 %v4057
      %v4100 = vunpack.c.l.bf16 %v4058
      %v4101 = vunpack.c.l.bf16 %v4059
      %v4102 = vunpack.c.l.bf16 %v4060
      %v4103 = vunpack.c.l.bf16 %v4061
      %v4104 = vunpack.c.l.bf16 %v4062
      %v4105 = vunpack.c.l.bf16 %v4063
      %v4106 = vunpack.c.l.bf16 %v4064
      %v4107 = vunpack.c.l.bf16 %v4065
      %v4108 = vadd.f32 %v3982, %v4066
      %v4109 = vadd.f32 %v3983, %v4067
      %v4110 = vadd.f32 %v3984, %v4068
      %v4111 = vadd.f32 %v3985, %v4069
      %v4112 = vadd.f32 %v3986, %v4070
      %v4113 = vadd.f32 %v3987, %v4071
      %v4114 = vadd.f32 %v3988, %v4072
      %v4115 = vadd.f32 %v3989, %v4073
      %v4116 = vadd.f32 %v3990, %v4074
      %v4117 = vadd.f32 %v3991, %v4075
      %v4118 = vadd.f32 %v3992, %v4076
      %v4119 = vadd.f32 %v3993, %v4077
      %v4120 = vadd.f32 %v3994, %v4078
      %v4121 = vadd.f32 %v3995, %v4079
      %v4122 = vadd.f32 %v3996, %v4080
      %v4123 = vadd.f32 %v3997, %v4081
      %v4124 = vadd.f32 %v3998, %v4082
      %v4125 = vadd.f32 %v3999, %v4083
      %v4126 = vadd.f32 %v4000, %v4084
      %v4127 = vadd.f32 %v4001, %v4085
      %v4128 = vadd.f32 %v4002, %v4086
      %v4129 = vadd.f32 %v4003, %v4087
      %v4130 = vadd.f32 %v4004, %v4088
      %v4131 = vadd.f32 %v4005, %v4089
      %v4132 = vadd.f32 %v4006, %v4090
      %v4133 = vadd.f32 %v4007, %v4091
      %v4134 = vadd.f32 %v4008, %v4092
      %v4135 = vadd.f32 %v4009, %v4093
      %v4136 = vadd.f32 %v4010, %v4094
      %v4137 = vadd.f32 %v4011, %v4095
      %v4138 = vadd.f32 %v4012, %v4096
      %v4139 = vadd.f32 %v4013, %v4097
      %v4140 = vadd.f32 %v4014, %v4098
      %v4141 = vadd.f32 %v4015, %v4099
      %v4142 = vadd.f32 %v4016, %v4100
      %v4143 = vadd.f32 %v4017, %v4101
      %v4144 = vadd.f32 %v4018, %v4102
      %v4145 = vadd.f32 %v4019, %v4103
      %v4146 = vadd.f32 %v4020, %v4104
      %v4147 = vadd.f32 %v4021, %v4105
      %v4148 = vadd.f32 %v4022, %v4106
      %v4149 = vadd.f32 %v4023, %v4107
      %v4150 = vpack.c.bf16 %v4109, %v4108
      %v4151 = vpack.c.bf16 %v4111, %v4110
      %v4152 = vpack.c.bf16 %v4113, %v4112
      %v4153 = vpack.c.bf16 %v4115, %v4114
      %v4154 = vpack.c.bf16 %v4117, %v4116
      %v4155 = vpack.c.bf16 %v4119, %v4118
      %v4156 = vpack.c.bf16 %v4121, %v4120
      %v4157 = vpack.c.bf16 %v4123, %v4122
      %v4158 = vpack.c.bf16 %v4125, %v4124
      %v4159 = vpack.c.bf16 %v4127, %v4126
      %v4160 = vpack.c.bf16 %v4129, %v4128
      %v4161 = vpack.c.bf16 %v4131, %v4130
      %v4162 = vpack.c.bf16 %v4133, %v4132
      %v4163 = vpack.c.bf16 %v4135, %v4134
      %v4164 = vpack.c.bf16 %v4137, %v4136
      %v4165 = vpack.c.bf16 %v4139, %v4138
      %v4166 = vpack.c.bf16 %v4141, %v4140
      %v4167 = vpack.c.bf16 %v4143, %v4142
      %v4168 = vpack.c.bf16 %v4145, %v4144
      %v4169 = vpack.c.bf16 %v4147, %v4146
      %v4170 = vpack.c.bf16 %v4149, %v4148
      %v4192 = vunpack.c.l.b16 %v4150
      %v4193 = vunpack.c.h.b16 %v4150
      %v4194 = vunpack.c.l.b16 %v4151
      %v4195 = vunpack.c.h.b16 %v4151
      %v4196 = vunpack.c.l.b16 %v4152
      %v4197 = vunpack.c.h.b16 %v4152
      %v4198 = vunpack.c.l.b16 %v4153
      %v4199 = vunpack.c.h.b16 %v4153
      %v4200 = vunpack.c.l.b16 %v4154
      %v4201 = vunpack.c.h.b16 %v4154
      %v4202 = vunpack.c.l.b16 %v4155
      %v4203 = vunpack.c.h.b16 %v4155
      %v4204 = vunpack.c.l.b16 %v4156
      %v4205 = vunpack.c.h.b16 %v4156
      %v4206 = vunpack.c.l.b16 %v4157
      %v4207 = vunpack.c.h.b16 %v4157
      %v4208 = vunpack.c.l.b16 %v4158
      %v4209 = vunpack.c.h.b16 %v4158
      %v4210 = vunpack.c.l.b16 %v4159
      %v4211 = vunpack.c.h.b16 %v4159
      %v4212 = vunpack.c.l.b16 %v4160
      %v4213 = vunpack.c.h.b16 %v4160
      %v4214 = vunpack.c.l.b16 %v4161
      %v4215 = vunpack.c.h.b16 %v4161
      %v4216 = vunpack.c.l.b16 %v4162
      %v4217 = vunpack.c.h.b16 %v4162
      %v4218 = vunpack.c.l.b16 %v4163
      %v4219 = vunpack.c.h.b16 %v4163
      %v4220 = vunpack.c.l.b16 %v4164
      %v4221 = vunpack.c.h.b16 %v4164
      %v4222 = vunpack.c.l.b16 %v4165
      %v4223 = vunpack.c.h.b16 %v4165
      %v4224 = vunpack.c.l.b16 %v4166
      %v4225 = vunpack.c.h.b16 %v4166
      %v4226 = vunpack.c.l.b16 %v4167
      %v4227 = vunpack.c.h.b16 %v4167
      %v4228 = vunpack.c.l.b16 %v4168
      %v4229 = vunpack.c.h.b16 %v4168
      %v4230 = vunpack.c.l.b16 %v4169
      %v4231 = vunpack.c.h.b16 %v4169
      %v4232 = vunpack.c.l.b16 %v4170
      %v4233 = vunpack.c.h.b16 %v4170
      %v4234 = vpack.c.b16 %v4192, %v4192
      %v4235 = vpack.c.b16 %v4193, %v4193
      %v4236 = vpack.c.b16 %v4194, %v4194
      %v4237 = vpack.c.b16 %v4195, %v4195
      %v4238 = vpack.c.b16 %v4196, %v4196
      %v4239 = vpack.c.b16 %v4197, %v4197
      %v4240 = vpack.c.b16 %v4198, %v4198
      %v4241 = vpack.c.b16 %v4199, %v4199
      %v4242 = vpack.c.b16 %v4200, %v4200
      %v4243 = vpack.c.b16 %v4201, %v4201
      %v4244 = vpack.c.b16 %v4202, %v4202
      %v4245 = vpack.c.b16 %v4203, %v4203
      %v4246 = vpack.c.b16 %v4204, %v4204
      %v4247 = vpack.c.b16 %v4205, %v4205
      %v4248 = vpack.c.b16 %v4206, %v4206
      %v4249 = vpack.c.b16 %v4207, %v4207
      %v4250 = vpack.c.b16 %v4208, %v4208
      %v4251 = vpack.c.b16 %v4209, %v4209
      %v4252 = vpack.c.b16 %v4210, %v4210
      %v4253 = vpack.c.b16 %v4211, %v4211
      %v4254 = vpack.c.b16 %v4212, %v4212
      %v4255 = vpack.c.b16 %v4213, %v4213
      %v4256 = vpack.c.b16 %v4214, %v4214
      %v4257 = vpack.c.b16 %v4215, %v4215
      %v4258 = vpack.c.b16 %v4216, %v4216
      %v4259 = vpack.c.b16 %v4217, %v4217
      %v4260 = vpack.c.b16 %v4218, %v4218
      %v4261 = vpack.c.b16 %v4219, %v4219
      %v4262 = vpack.c.b16 %v4220, %v4220
      %v4263 = vpack.c.b16 %v4221, %v4221
      %v4264 = vpack.c.b16 %v4222, %v4222
      %v4265 = vpack.c.b16 %v4223, %v4223
      %v4266 = vpack.c.b16 %v4224, %v4224
      %v4267 = vpack.c.b16 %v4225, %v4225
      %v4268 = vpack.c.b16 %v4226, %v4226
      %v4269 = vpack.c.b16 %v4227, %v4227
      %v4270 = vpack.c.b16 %v4228, %v4228
      %v4271 = vpack.c.b16 %v4229, %v4229
      %v4272 = vpack.c.b16 %v4230, %v4230
      %v4273 = vpack.c.b16 %v4231, %v4231
      %v4274 = vpack.c.b16 %v4232, %v4232
      %v4275 = vpack.c.b16 %v4233, %v4233
      %vm4318 = vcmask 27648
      %4319 = vst.msk [vmem:[%s306] sm:$0xf] %vm4318, %v4234
      %4320 = vst.msk [vmem:[%s306 + $0x4] sm:$0xf] %vm4318, %v4235
      %4321 = vst.msk [vmem:[%s306 + $0x8] sm:$0xf] %vm4318, %v4236
      %4322 = vst.msk [vmem:[%s306 + $0xc] sm:$0xf] %vm4318, %v4237
      %4323 = vst.msk [vmem:[%s306 + $0x10] sm:$0xf] %vm4318, %v4238
      %4324 = vst.msk [vmem:[%s306 + $0x14] sm:$0xf] %vm4318, %v4239
      %4325 = vst.msk [vmem:[%s306 + $0x18] sm:$0xf] %vm4318, %v4240
      %4326 = vst.msk [vmem:[%s306 + $0x1c] sm:$0xf] %vm4318, %v4241
      %4327 = vst.msk [vmem:[%s306 + $0x20] sm:$0xf] %vm4318, %v4242
      %4328 = vst.msk [vmem:[%s306 + $0x24] sm:$0xf] %vm4318, %v4243
      %4329 = vst.msk [vmem:[%s306 + $0x28] sm:$0xf] %vm4318, %v4244
      %4330 = vst.msk [vmem:[%s306 + $0x2c] sm:$0xf] %vm4318, %v4245
      %4331 = vst.msk [vmem:[%s306 + $0x30] sm:$0xf] %vm4318, %v4246
      %4332 = vst.msk [vmem:[%s306 + $0x34] sm:$0xf] %vm4318, %v4247
      %4333 = vst.msk [vmem:[%s306 + $0x38] sm:$0xf] %vm4318, %v4248
      %4334 = vst.msk [vmem:[%s306 + $0x3c] sm:$0xf] %vm4318, %v4249
      %4335 = vst.msk [vmem:[%s306 + $0x40] sm:$0xf] %vm4318, %v4250
      %4336 = vst.msk [vmem:[%s306 + $0x44] sm:$0xf] %vm4318, %v4251
      %4337 = vst.msk [vmem:[%s306 + $0x48] sm:$0xf] %vm4318, %v4252
      %4338 = vst.msk [vmem:[%s306 + $0x4c] sm:$0xf] %vm4318, %v4253
      %4339 = vst.msk [vmem:[%s306 + $0x50] sm:$0xf] %vm4318, %v4254
      %4340 = vst.msk [vmem:[%s306 + $0x54] sm:$0xf] %vm4318, %v4255
      %4341 = vst.msk [vmem:[%s306 + $0x58] sm:$0xf] %vm4318, %v4256
      %4342 = vst.msk [vmem:[%s306 + $0x5c] sm:$0xf] %vm4318, %v4257
      %4343 = vst.msk [vmem:[%s306 + $0x60] sm:$0xf] %vm4318, %v4258
      %4344 = vst.msk [vmem:[%s306 + $0x64] sm:$0xf] %vm4318, %v4259
      %4345 = vst.msk [vmem:[%s306 + $0x68] sm:$0xf] %vm4318, %v4260
      %4346 = vst.msk [vmem:[%s306 + $0x6c] sm:$0xf] %vm4318, %v4261
      %4347 = vst.msk [vmem:[%s306 + $0x70] sm:$0xf] %vm4318, %v4262
      %4348 = vst.msk [vmem:[%s306 + $0x74] sm:$0xf] %vm4318, %v4263
      %4349 = vst.msk [vmem:[%s306 + $0x78] sm:$0xf] %vm4318, %v4264
      %4350 = vst.msk [vmem:[%s306 + $0x7c] sm:$0xf] %vm4318, %v4265
      %4351 = vst.msk [vmem:[%s306 + $0x80] sm:$0xf] %vm4318, %v4266
      %4352 = vst.msk [vmem:[%s306 + $0x84] sm:$0xf] %vm4318, %v4267
      %4353 = vst.msk [vmem:[%s306 + $0x88] sm:$0xf] %vm4318, %v4268
      %4354 = vst.msk [vmem:[%s306 + $0x8c] sm:$0xf] %vm4318, %v4269
      %4355 = vst.msk [vmem:[%s306 + $0x90] sm:$0xf] %vm4318, %v4270
      %4356 = vst.msk [vmem:[%s306 + $0x94] sm:$0xf] %vm4318, %v4271
      %4357 = vst.msk [vmem:[%s306 + $0x98] sm:$0xf] %vm4318, %v4272
      %4358 = vst.msk [vmem:[%s306 + $0x9c] sm:$0xf] %vm4318, %v4273
      %4359 = vst.msk [vmem:[%s306 + $0xa0] sm:$0xf] %vm4318, %v4274
      %4360 = vst.msk [vmem:[%s306 + $0xa4] sm:$0xf] %vm4318, %v4275
      %p4361 = scmp.lt.s32.totalorder %s20, 1
      %s4362 = scalar_select %p4361, %s20, 1
      %p4363 = scmp.lt.s32.totalorder %s21, 0
      %s4364 = scalar_select %p4363, %s21, 0
      %s4365 = smul.addr %s4362, 42
      %s4366 = sadd.s32 %s4364, %s4365
      %s4367 = smul.addr %s4366, 4
      %s4368 = scalar_lea.vmem %s5, %s4367
      // Predicated region
      $region41: #{_lambda_.8} parent=39 // pred_check
        %p4369 = pneg %p175
      $region42: #{_lambda_.8} parent=39 // pred_check_branch
        %4371 = sbr.rel (%p4369) target = $region44
      $region43: #{_lambda_.8} parent=39 // pred_region
        _
      $region44: #{_lambda_.8} parent=39 // pred_fallthru
        _
    $region40: #{_lambda_.8} parent=5 // pred_fallthru
      _
    %p4372 = scmp.le.s32.totalorder 2, %s11
    // Predicated region
    $region45: #{_lambda_.8} parent=5 // pred_check
      %p4373 = pneg %p4372
    $region46: #{_lambda_.8} parent=5 // pred_check_branch
      %4375 = sbr.rel (%p4373) target = $region48
    $region47: #{_lambda_.8} parent=5 // pred_region
      %s4376 = ssub.s32 %s11, 2
      // Predicated region
      $region49: #{_lambda_.8} parent=47 // pred_check
        %p4377 = pneg %p181
      $region50: #{_lambda_.8} parent=47 // pred_check_branch
        %4379 = sbr.rel (%p4377) target = $region52
      $region51: #{_lambda_.8} parent=47 // pred_region
        %p4380 = scmp.lt.s32.totalorder %s22, 1
        %s4381 = scalar_select %p4380, %s22, 1
        %p4382 = scmp.lt.s32.totalorder %s23, 0
        %s4383 = scalar_select %p4382, %s23, 0
        %s4384 = smul.addr %s4381, 42
        %s4385 = sadd.s32 %s4383, %s4384
        %s4386 = smul.addr %s4385, 4
        %s4387 = scalar_lea.vmem %s5, %s4386
      $region52: #{_lambda_.8} parent=47 // pred_fallthru
        _
    $region48: #{_lambda_.8} parent=5 // pred_fallthru
      _
  $region6: #{_lambda_.8} parent=0 // loop_footer
    %s15 = sadd.s32 1, %s11
  $region7: #{_lambda_.8} parent=0 // loop_footer_branch
    %10 = sbr.rel target = $region3
  $region8: #{_lambda_.8} parent=0 // loop_exit
    _

</llo_original>
